<compile_context>
chip_gen: v6e
topology: v6e:2x2x1
jax: 0.10.0
libtpu: 0.0.40
codegen_flags: <defaults>
</compile_context>

<pallas_src>
import functools

import numpy as np
import jax
import jax.numpy as jnp
from jax.experimental import pallas as pl
from jax.experimental.pallas import tpu as pltpu


# ---------------------------------------------------------------------------
# Fused kernel: conv3x3(pad=1) + bias + ReLU + global-avg-pool + linear head.
#
#   x_ref     : (Q, Cin)      flattened, spatially padded NHWC input rows
#                             (row q = n*Hp*Wp + i*Wp + j holds xpad[n, i, j, :])
#   wtap_ref  : (9, Cin, Cout) conv weight per (kh, kw) tap
#   bconv_ref : (1, Cout)      conv bias
#   pool_ref  : (N, R)         constant averaging matrix (1/HW on valid rows)
#   wfc_ref   : (Cout, NC)     classifier weight (already transposed)
#   bfc_ref   : (1, NC)        classifier bias
#   outputs   : logits (N, NC), feat (N, Cout)
# ---------------------------------------------------------------------------
def fused_classifier_kernel(x_ref, wtap_ref, bconv_ref, pool_ref, wfc_ref, bfc_ref,
                            logits_ref, feat_ref, *, wp):
    R = pool_ref.shape[1]          # rows carrying conv-output candidates
    Cout = wtap_ref.shape[2]

    # 3x3 conv as 9 accumulated shifted GEMMs on the MXU. `off` is the static flat
    # row offset of tap (dh, dw); rows whose shifted read crosses a batch/row
    # boundary produce garbage, but those rows get weight 0 in `pool`.
    acc = jnp.zeros((R, Cout), jnp.float32)
    for dh in range(3):
        for dw in range(3):
            off = dh * wp + dw
            xs = x_ref[off:off + R, :]                       # (R, Cin)
            acc = acc + jnp.dot(xs, wtap_ref[dh * 3 + dw],
                                preferred_element_type=jnp.float32)

    h = jnp.maximum(acc + bconv_ref[...], 0.0)               # bias + ReLU, (R, Cout)

    # Global average pool on the MXU: (N, R) @ (R, Cout) -> (N, Cout).
    feat = jnp.dot(pool_ref[...], h, preferred_element_type=jnp.float32)
    feat_ref[...] = feat

    # Classifier head: (N, Cout) @ (Cout, NC) + bias.
    logits_ref[...] = (
        jnp.dot(feat, wfc_ref[...], preferred_element_type=jnp.float32) + bfc_ref[...]
    )


# ---------------------------------------------------------------------------
# Wrapper: minimal JAX glue (one transpose + pad + flatten + tiny weight reshapes),
# then a single fused pallas_call.
# ---------------------------------------------------------------------------
def classifier_forward(x_nchw, params):
    w_conv, b_conv, w_fc, b_fc = params
    N, Cin, H, W = x_nchw.shape
    Cout = w_conv.shape[0]
    NC = w_fc.shape[0]
    Hp, Wp = H + 2, W + 2
    Q = N * Hp * Wp
    # Rows needed so every shifted window (max offset 2*Wp+2) stays in-bounds;
    # all valid output rows are < R, the rest are masked out by `pool`.
    R = Q - (2 * Wp + 2)

    # NCHW -> padded NHWC -> flat (Q, Cin). No im2col.
    x_nhwc = jnp.transpose(x_nchw.astype(jnp.float32), (0, 2, 3, 1))
    xflat = jnp.pad(x_nhwc, ((0, 0), (1, 1), (1, 1), (0, 0))).reshape(Q, Cin)

    # Conv taps: (Cout, Cin, kh, kw) -> (kh, kw, Cin, Cout) -> (9, Cin, Cout)
    w_taps = jnp.transpose(w_conv, (2, 3, 1, 0)).reshape(9, Cin, Cout)

    # Compile-time constant pooling/averaging matrix (numpy -> folded into program).
    q_idx = (np.arange(N)[:, None, None] * (Hp * Wp)
             + np.arange(H)[None, :, None] * Wp
             + np.arange(W)[None, None, :]).reshape(N, H * W)
    pool_np = np.zeros((N, R), np.float32)
    pool_np[np.arange(N)[:, None], q_idx] = 1.0 / (H * W)
    pool = jnp.asarray(pool_np)

    logits, feat = pl.pallas_call(
        functools.partial(fused_classifier_kernel, wp=Wp),
        out_shape=(
            jax.ShapeDtypeStruct((N, NC), jnp.float32),    # logits
            jax.ShapeDtypeStruct((N, Cout), jnp.float32),  # pooled encoder features
        ),
        in_specs=[pl.BlockSpec(memory_space=pltpu.MemorySpace.VMEM) for _ in range(6)],
        out_specs=(pl.BlockSpec(memory_space=pltpu.MemorySpace.VMEM),
                   pl.BlockSpec(memory_space=pltpu.MemorySpace.VMEM)),
    )(xflat, w_taps, b_conv.reshape(1, Cout), pool, w_fc.T, b_fc.reshape(1, NC))

    # matches PyTorch: return (x, encoder)
    return logits, feat


def init_params(key, cin=4, cout=32, num_classes=10):
    k1, k2, k3, k4 = jax.random.split(key, 4)
    fan_in_conv = cin * 9
    w_conv = jax.random.normal(k1, (cout, cin, 3, 3), jnp.float32) * (
        1.0 / jnp.sqrt(fan_in_conv)
    )
    b_conv = jax.random.normal(k2, (cout,), jnp.float32) * 0.01
    w_fc = jax.random.normal(k3, (num_classes, cout), jnp.float32) * (
        1.0 / jnp.sqrt(cout)
    )
    b_fc = jax.random.normal(k4, (num_classes,), jnp.float32) * 0.01
    return w_conv, b_conv, w_fc, b_fc


def reference_forward(x_nchw, params):
    """Pure-JAX reference for correctness checking."""
    w_conv, b_conv, w_fc, b_fc = params
    y = jax.lax.conv_general_dilated(
        x_nchw.astype(jnp.float32),
        w_conv,
        window_strides=(1, 1),
        padding=((1, 1), (1, 1)),
        dimension_numbers=("NCHW", "OIHW", "NCHW"),
    )
    y = jnp.maximum(y + b_conv[None, :, None, None], 0.0)
    feat = jnp.mean(y, axis=(2, 3))                 # (N, Cout)
    logits = feat @ w_fc.T + b_fc                   # (N, NC)
    return logits, feat


if __name__ == "__main__":
    key = jax.random.PRNGKey(0)
    kx, kp = jax.random.split(key)
    x = jax.random.normal(kx, (2, 4, 16, 16), jnp.float32)  # NCHW like PyTorch
    params = init_params(kp)

    fwd = jax.jit(classifier_forward)
    logits, feat = fwd(x, params)
    jax.block_until_ready((logits, feat))

    ref_logits, ref_feat = reference_forward(x, params)
    assert jnp.allclose(feat, ref_feat, atol=1e-4, rtol=1e-4)
    assert jnp.allclose(logits, ref_logits, atol=1e-4, rtol=1e-4)

    print("KERNEL_OK")
</pallas_src>

<mosaic_0001>
module attributes {stable_mosaic.version = 11 : i64} {
  func.func @fused_classifier_kernel(%arg0: memref<648x4xf32, #tpu.memory_space<vmem>>, %arg1: memref<9x4x32xf32, #tpu.memory_space<vmem>>, %arg2: memref<1x32xf32, #tpu.memory_space<vmem>>, %arg3: memref<2x610xf32, #tpu.memory_space<vmem>>, %arg4: memref<32x10xf32, #tpu.memory_space<vmem>>, %arg5: memref<1x10xf32, #tpu.memory_space<vmem>>, %arg6: memref<2x10xf32, #tpu.memory_space<vmem>>, %arg7: memref<2x32xf32, #tpu.memory_space<vmem>>) attributes {dimension_semantics = [], scalar_prefetch = 0 : i64, scratch_operands = 0 : i64, tpu.core_type = #tpu.core_type<tc>} {
    %cst = arith.constant 0.000000e+00 : f32
    %0 = vector.broadcast %cst : f32 to vector<610x32xf32>
    %c0 = arith.constant 0 : index
    %c0_0 = arith.constant 0 : index
    %1 = vector.load %arg0[%c0, %c0_0] : memref<648x4xf32, #tpu.memory_space<vmem>>, vector<610x4xf32>
    %c0_1 = arith.constant 0 : index
    %c0_2 = arith.constant 0 : index
    %c0_3 = arith.constant 0 : index
    %2 = vector.load %arg1[%c0_1, %c0_2, %c0_3] : memref<9x4x32xf32, #tpu.memory_space<vmem>>, vector<1x4x32xf32>
    %3 = vector.shape_cast %2 : vector<1x4x32xf32> to vector<4x32xf32>
    %cst_4 = arith.constant dense<0.000000e+00> : vector<610x32xf32>
    %4 = tpu.matmul %1, %3, %cst_4 {dimension_numbers = #tpu.dot_dimension_numbers<[1], [0], [0], [1], [0, 0, 1, 1], [], []>} : vector<610x4xf32>, vector<4x32xf32>, vector<610x32xf32> -> vector<610x32xf32>
    %5 = arith.addf %0, %4 : vector<610x32xf32>
    %c1 = arith.constant 1 : index
    %c0_5 = arith.constant 0 : index
    %6 = vector.load %arg0[%c1, %c0_5] : memref<648x4xf32, #tpu.memory_space<vmem>>, vector<610x4xf32>
    %c1_6 = arith.constant 1 : index
    %c0_7 = arith.constant 0 : index
    %c0_8 = arith.constant 0 : index
    %7 = vector.load %arg1[%c1_6, %c0_7, %c0_8] : memref<9x4x32xf32, #tpu.memory_space<vmem>>, vector<1x4x32xf32>
    %8 = vector.shape_cast %7 : vector<1x4x32xf32> to vector<4x32xf32>
    %cst_9 = arith.constant dense<0.000000e+00> : vector<610x32xf32>
    %9 = tpu.matmul %6, %8, %cst_9 {dimension_numbers = #tpu.dot_dimension_numbers<[1], [0], [0], [1], [0, 0, 1, 1], [], []>} : vector<610x4xf32>, vector<4x32xf32>, vector<610x32xf32> -> vector<610x32xf32>
    %10 = arith.addf %5, %9 : vector<610x32xf32>
    %c2 = arith.constant 2 : index
    %c0_10 = arith.constant 0 : index
    %11 = vector.load %arg0[%c2, %c0_10] : memref<648x4xf32, #tpu.memory_space<vmem>>, vector<610x4xf32>
    %c2_11 = arith.constant 2 : index
    %c0_12 = arith.constant 0 : index
    %c0_13 = arith.constant 0 : index
    %12 = vector.load %arg1[%c2_11, %c0_12, %c0_13] : memref<9x4x32xf32, #tpu.memory_space<vmem>>, vector<1x4x32xf32>
    %13 = vector.shape_cast %12 : vector<1x4x32xf32> to vector<4x32xf32>
    %cst_14 = arith.constant dense<0.000000e+00> : vector<610x32xf32>
    %14 = tpu.matmul %11, %13, %cst_14 {dimension_numbers = #tpu.dot_dimension_numbers<[1], [0], [0], [1], [0, 0, 1, 1], [], []>} : vector<610x4xf32>, vector<4x32xf32>, vector<610x32xf32> -> vector<610x32xf32>
    %15 = arith.addf %10, %14 : vector<610x32xf32>
    %c18 = arith.constant 18 : index
    %c0_15 = arith.constant 0 : index
    %16 = vector.load %arg0[%c18, %c0_15] : memref<648x4xf32, #tpu.memory_space<vmem>>, vector<610x4xf32>
    %c3 = arith.constant 3 : index
    %c0_16 = arith.constant 0 : index
    %c0_17 = arith.constant 0 : index
    %17 = vector.load %arg1[%c3, %c0_16, %c0_17] : memref<9x4x32xf32, #tpu.memory_space<vmem>>, vector<1x4x32xf32>
    %18 = vector.shape_cast %17 : vector<1x4x32xf32> to vector<4x32xf32>
    %cst_18 = arith.constant dense<0.000000e+00> : vector<610x32xf32>
    %19 = tpu.matmul %16, %18, %cst_18 {dimension_numbers = #tpu.dot_dimension_numbers<[1], [0], [0], [1], [0, 0, 1, 1], [], []>} : vector<610x4xf32>, vector<4x32xf32>, vector<610x32xf32> -> vector<610x32xf32>
    %20 = arith.addf %15, %19 : vector<610x32xf32>
    %c19 = arith.constant 19 : index
    %c0_19 = arith.constant 0 : index
    %21 = vector.load %arg0[%c19, %c0_19] : memref<648x4xf32, #tpu.memory_space<vmem>>, vector<610x4xf32>
    %c4 = arith.constant 4 : index
    %c0_20 = arith.constant 0 : index
    %c0_21 = arith.constant 0 : index
    %22 = vector.load %arg1[%c4, %c0_20, %c0_21] : memref<9x4x32xf32, #tpu.memory_space<vmem>>, vector<1x4x32xf32>
    %23 = vector.shape_cast %22 : vector<1x4x32xf32> to vector<4x32xf32>
    %cst_22 = arith.constant dense<0.000000e+00> : vector<610x32xf32>
    %24 = tpu.matmul %21, %23, %cst_22 {dimension_numbers = #tpu.dot_dimension_numbers<[1], [0], [0], [1], [0, 0, 1, 1], [], []>} : vector<610x4xf32>, vector<4x32xf32>, vector<610x32xf32> -> vector<610x32xf32>
    %25 = arith.addf %20, %24 : vector<610x32xf32>
    %c20 = arith.constant 20 : index
    %c0_23 = arith.constant 0 : index
    %26 = vector.load %arg0[%c20, %c0_23] : memref<648x4xf32, #tpu.memory_space<vmem>>, vector<610x4xf32>
    %c5 = arith.constant 5 : index
    %c0_24 = arith.constant 0 : index
    %c0_25 = arith.constant 0 : index
    %27 = vector.load %arg1[%c5, %c0_24, %c0_25] : memref<9x4x32xf32, #tpu.memory_space<vmem>>, vector<1x4x32xf32>
    %28 = vector.shape_cast %27 : vector<1x4x32xf32> to vector<4x32xf32>
    %cst_26 = arith.constant dense<0.000000e+00> : vector<610x32xf32>
    %29 = tpu.matmul %26, %28, %cst_26 {dimension_numbers = #tpu.dot_dimension_numbers<[1], [0], [0], [1], [0, 0, 1, 1], [], []>} : vector<610x4xf32>, vector<4x32xf32>, vector<610x32xf32> -> vector<610x32xf32>
    %30 = arith.addf %25, %29 : vector<610x32xf32>
    %c36 = arith.constant 36 : index
    %c0_27 = arith.constant 0 : index
    %31 = vector.load %arg0[%c36, %c0_27] : memref<648x4xf32, #tpu.memory_space<vmem>>, vector<610x4xf32>
    %c6 = arith.constant 6 : index
    %c0_28 = arith.constant 0 : index
    %c0_29 = arith.constant 0 : index
    %32 = vector.load %arg1[%c6, %c0_28, %c0_29] : memref<9x4x32xf32, #tpu.memory_space<vmem>>, vector<1x4x32xf32>
    %33 = vector.shape_cast %32 : vector<1x4x32xf32> to vector<4x32xf32>
    %cst_30 = arith.constant dense<0.000000e+00> : vector<610x32xf32>
    %34 = tpu.matmul %31, %33, %cst_30 {dimension_numbers = #tpu.dot_dimension_numbers<[1], [0], [0], [1], [0, 0, 1, 1], [], []>} : vector<610x4xf32>, vector<4x32xf32>, vector<610x32xf32> -> vector<610x32xf32>
    %35 = arith.addf %30, %34 : vector<610x32xf32>
    %c37 = arith.constant 37 : index
    %c0_31 = arith.constant 0 : index
    %36 = vector.load %arg0[%c37, %c0_31] : memref<648x4xf32, #tpu.memory_space<vmem>>, vector<610x4xf32>
    %c7 = arith.constant 7 : index
    %c0_32 = arith.constant 0 : index
    %c0_33 = arith.constant 0 : index
    %37 = vector.load %arg1[%c7, %c0_32, %c0_33] : memref<9x4x32xf32, #tpu.memory_space<vmem>>, vector<1x4x32xf32>
    %38 = vector.shape_cast %37 : vector<1x4x32xf32> to vector<4x32xf32>
    %cst_34 = arith.constant dense<0.000000e+00> : vector<610x32xf32>
    %39 = tpu.matmul %36, %38, %cst_34 {dimension_numbers = #tpu.dot_dimension_numbers<[1], [0], [0], [1], [0, 0, 1, 1], [], []>} : vector<610x4xf32>, vector<4x32xf32>, vector<610x32xf32> -> vector<610x32xf32>
    %40 = arith.addf %35, %39 : vector<610x32xf32>
    %c38 = arith.constant 38 : index
    %c0_35 = arith.constant 0 : index
    %41 = vector.load %arg0[%c38, %c0_35] : memref<648x4xf32, #tpu.memory_space<vmem>>, vector<610x4xf32>
    %c8 = arith.constant 8 : index
    %c0_36 = arith.constant 0 : index
    %c0_37 = arith.constant 0 : index
    %42 = vector.load %arg1[%c8, %c0_36, %c0_37] : memref<9x4x32xf32, #tpu.memory_space<vmem>>, vector<1x4x32xf32>
    %43 = vector.shape_cast %42 : vector<1x4x32xf32> to vector<4x32xf32>
    %cst_38 = arith.constant dense<0.000000e+00> : vector<610x32xf32>
    %44 = tpu.matmul %41, %43, %cst_38 {dimension_numbers = #tpu.dot_dimension_numbers<[1], [0], [0], [1], [0, 0, 1, 1], [], []>} : vector<610x4xf32>, vector<4x32xf32>, vector<610x32xf32> -> vector<610x32xf32>
    %45 = arith.addf %40, %44 : vector<610x32xf32>
    %c0_39 = arith.constant 0 : index
    %c0_40 = arith.constant 0 : index
    %46 = vector.load %arg2[%c0_39, %c0_40] : memref<1x32xf32, #tpu.memory_space<vmem>>, vector<1x32xf32>
    %47 = vector.broadcast %46 : vector<1x32xf32> to vector<610x32xf32>
    %48 = arith.addf %45, %47 : vector<610x32xf32>
    %cst_41 = arith.constant 0.000000e+00 : f32
    %49 = vector.broadcast %cst_41 : f32 to vector<610x32xf32>
    %50 = arith.maximumf %48, %49 : vector<610x32xf32>
    %c0_42 = arith.constant 0 : index
    %c0_43 = arith.constant 0 : index
    %51 = vector.load %arg3[%c0_42, %c0_43] : memref<2x610xf32, #tpu.memory_space<vmem>>, vector<2x610xf32>
    %cst_44 = arith.constant dense<0.000000e+00> : vector<2x32xf32>
    %52 = tpu.matmul %51, %50, %cst_44 {dimension_numbers = #tpu.dot_dimension_numbers<[1], [0], [0], [1], [0, 0, 1, 1], [], []>} : vector<2x610xf32>, vector<610x32xf32>, vector<2x32xf32> -> vector<2x32xf32>
    %c0_45 = arith.constant 0 : index
    %c0_46 = arith.constant 0 : index
    %53 = vector.load %arg7[%c0_45, %c0_46] : memref<2x32xf32, #tpu.memory_space<vmem>>, vector<2x32xf32>
    tpu.vector_store %arg7[%c0_45, %c0_46], %52 {strides = array<i32>} : memref<2x32xf32, #tpu.memory_space<vmem>>, vector<2x32xf32>,
    %c0_47 = arith.constant 0 : index
    %c0_48 = arith.constant 0 : index
    %54 = vector.load %arg4[%c0_47, %c0_48] : memref<32x10xf32, #tpu.memory_space<vmem>>, vector<32x10xf32>
    %cst_49 = arith.constant dense<0.000000e+00> : vector<2x10xf32>
    %55 = tpu.matmul %52, %54, %cst_49 {dimension_numbers = #tpu.dot_dimension_numbers<[1], [0], [0], [1], [0, 0, 1, 1], [], []>} : vector<2x32xf32>, vector<32x10xf32>, vector<2x10xf32> -> vector<2x10xf32>
    %c0_50 = arith.constant 0 : index
    %c0_51 = arith.constant 0 : index
    %56 = vector.load %arg5[%c0_50, %c0_51] : memref<1x10xf32, #tpu.memory_space<vmem>>, vector<1x10xf32>
    %57 = vector.broadcast %56 : vector<1x10xf32> to vector<2x10xf32>
    %58 = arith.addf %55, %57 : vector<2x10xf32>
    %c0_52 = arith.constant 0 : index
    %c0_53 = arith.constant 0 : index
    %59 = vector.load %arg6[%c0_52, %c0_53] : memref<2x10xf32, #tpu.memory_space<vmem>>, vector<2x10xf32>
    tpu.vector_store %arg6[%c0_52, %c0_53], %58 {strides = array<i32>} : memref<2x10xf32, #tpu.memory_space<vmem>>, vector<2x10xf32>,
    return
  }
}

</mosaic_0001>

<llo_original>
// kernel: classifier_forward.1
$region0: #{classifier_forward.1}
  #allocation0 [shape = 'u32[]', space=smem, size = 0x4, offset = 0x4, fixed_abs, tag = 'smem constant byte address 0x4 - core index']
  #allocation1 [shape = 'u32[144,128]{1,0:T(1,128)}', space=vmem, size = 0x12000, scoped, tag = 'internal scratch']
  %s0 = inlined_call_operand.vmem [shape: f32[648,4], index: 0, kind: input, shape index: {}]
  %s1 = inlined_call_operand.vmem [shape: f32[9,4,32], index: 1, kind: input, shape index: {}]
  %s2 = inlined_call_operand.vmem [shape: f32[1,32], index: 2, kind: input, shape index: {}]
  %s3 = inlined_call_operand.vmem [shape: f32[2,610], index: 3, kind: input, shape index: {}]
  %s4 = inlined_call_operand.vmem [shape: f32[32,10], index: 4, kind: input, shape index: {}]
  %s5 = inlined_call_operand.vmem [shape: f32[1,10], index: 5, kind: input, shape index: {}]
  %s6 = inlined_call_operand.hbm [shape: f32[2,10], index: 6, kind: output, shape index: {0}]
  %s7 = inlined_call_operand.hbm [shape: f32[2,32], index: 7, kind: output, shape index: {1}]
  %8 = xla_tuple %s6, %s7
  %s9 = sld [smem:[#allocation0]]
  $region42: #{classifier_forward.1} parent=0
    _
  %s11 = ssub.s32 1, %s9
  %s12 = scalar_select 0, %s11, %s9
  $region1: #{classifier_forward.1} parent=0
    #allocation2 [shape = 'u8[1024]{0}', space=vmem, size = 0x400, scoped, tag = 'output window, operand 0, single buffered']
    #allocation3 [shape = 's32[1]{0}', space=sflag, size = 0x4, scoped, tag = 'scoped memory for classifier_forward.1']
    #allocation4 [shape = 'u8[1024]{0}', space=vmem, size = 0x400, scoped, tag = 'output window, operand 1, single buffered']
    #allocation5 [shape = 's32[1]{0}', space=sflag, size = 0x4, scoped, tag = 'scoped memory for classifier_forward.1']
    %13 = vsyncpa [#allocation3], 0
    %14 = vsyncpa [#allocation5], 0
    // Predicated region
    $region2: #{classifier_forward.1} parent=1 // pred_check
      _
    $region3: #{classifier_forward.1} parent=1 // pred_check_branch
      %16 = sbr.rel (0) target = $region5
    $region4: #{classifier_forward.1} parent=1 // pred_region
      _
    $region5: #{classifier_forward.1} parent=1 // pred_fallthru
      _
    // Predicated region
    $region6: #{classifier_forward.1} parent=1 // pred_check
      _
    $region7: #{classifier_forward.1} parent=1 // pred_check_branch
      %18 = sbr.rel (0) target = $region9
    $region8: #{classifier_forward.1} parent=1 // pred_region
      _
    $region9: #{classifier_forward.1} parent=1 // pred_fallthru
      _
    // Predicated region
    $region10: #{classifier_forward.1} parent=1 // pred_check
      _
    $region11: #{classifier_forward.1} parent=1 // pred_check_branch
      %20 = sbr.rel (0) target = $region13
    $region12: #{classifier_forward.1} parent=1 // pred_region
      _
    $region13: #{classifier_forward.1} parent=1 // pred_fallthru
      _
    // Predicated region
    $region14: #{classifier_forward.1} parent=1 // pred_check
      _
    $region15: #{classifier_forward.1} parent=1 // pred_check_branch
      %22 = sbr.rel (0) target = $region17
    $region16: #{classifier_forward.1} parent=1 // pred_region
      _
    $region17: #{classifier_forward.1} parent=1 // pred_fallthru
      _
    // Predicated region
    $region18: #{classifier_forward.1} parent=1 // pred_check
      _
    $region19: #{classifier_forward.1} parent=1 // pred_check_branch
      %24 = sbr.rel (0) target = $region21
    $region20: #{classifier_forward.1} parent=1 // pred_region
      _
    $region21: #{classifier_forward.1} parent=1 // pred_fallthru
      _
    // Predicated region
    $region22: #{classifier_forward.1} parent=1 // pred_check
      _
    $region23: #{classifier_forward.1} parent=1 // pred_check_branch
      %26 = sbr.rel (0) target = $region25
    $region24: #{classifier_forward.1} parent=1 // pred_region
      _
    $region25: #{classifier_forward.1} parent=1 // pred_fallthru
      _
    %v27 = vld [vmem:[%s0] sm:$0xff]
    %v28 = vld [vmem:[%s0 + $0x8] sm:$0xff]
    %v29 = vld [vmem:[%s0 + $0x10] sm:$0xff]
    %v30 = vld [vmem:[%s0 + $0x18] sm:$0xff]
    %v31 = vld [vmem:[%s0 + $0x20] sm:$0xff]
    %v32 = vld [vmem:[%s0 + $0x28] sm:$0xff]
    %v33 = vld [vmem:[%s0 + $0x30] sm:$0xff]
    %v34 = vld [vmem:[%s0 + $0x38] sm:$0xff]
    %v35 = vld [vmem:[%s0 + $0x40] sm:$0xff]
    %v36 = vld [vmem:[%s0 + $0x48] sm:$0xff]
    %v37 = vld [vmem:[%s0 + $0x50] sm:$0xff]
    %v38 = vld [vmem:[%s0 + $0x58] sm:$0xff]
    %v39 = vld [vmem:[%s0 + $0x60] sm:$0xff]
    %v40 = vld [vmem:[%s0 + $0x68] sm:$0xff]
    %v41 = vld [vmem:[%s0 + $0x70] sm:$0xff]
    %v42 = vld [vmem:[%s0 + $0x78] sm:$0xff]
    %v43 = vld [vmem:[%s0 + $0x80] sm:$0xff]
    %v44 = vld [vmem:[%s0 + $0x88] sm:$0xff]
    %v45 = vld [vmem:[%s0 + $0x90] sm:$0xff]
    %v46 = vld [vmem:[%s0 + $0x98] sm:$0xff]
    %v47 = vld [vmem:[%s0 + $0xa0] sm:$0xff]
    %v48 = vld [vmem:[%s0 + $0xa8] sm:$0xff]
    %v49 = vld [vmem:[%s0 + $0xb0] sm:$0xff]
    %v50 = vld [vmem:[%s0 + $0xb8] sm:$0xff]
    %v51 = vld [vmem:[%s0 + $0xc0] sm:$0xff]
    %v52 = vld [vmem:[%s0 + $0xc8] sm:$0xff]
    %v53 = vld [vmem:[%s0 + $0xd0] sm:$0xff]
    %v54 = vld [vmem:[%s0 + $0xd8] sm:$0xff]
    %v55 = vld [vmem:[%s0 + $0xe0] sm:$0xff]
    %v56 = vld [vmem:[%s0 + $0xe8] sm:$0xff]
    %v57 = vld [vmem:[%s0 + $0xf0] sm:$0xff]
    %v58 = vld [vmem:[%s0 + $0xf8] sm:$0xff]
    %v59 = vld [vmem:[%s0 + $0x100] sm:$0xff]
    %v60 = vld [vmem:[%s0 + $0x108] sm:$0xff]
    %v61 = vld [vmem:[%s0 + $0x110] sm:$0xff]
    %v62 = vld [vmem:[%s0 + $0x118] sm:$0xff]
    %v63 = vld [vmem:[%s0 + $0x120] sm:$0xff]
    %v64 = vld [vmem:[%s0 + $0x128] sm:$0xff]
    %v65 = vld [vmem:[%s0 + $0x130] sm:$0xff]
    %v66 = vld [vmem:[%s0 + $0x138] sm:$0xff]
    %v67 = vld [vmem:[%s0 + $0x140] sm:$0xff]
    %v68 = vld [vmem:[%s0 + $0x148] sm:$0xff]
    %v69 = vld [vmem:[%s0 + $0x150] sm:$0xff]
    %v70 = vld [vmem:[%s0 + $0x158] sm:$0xff]
    %v71 = vld [vmem:[%s0 + $0x160] sm:$0xff]
    %v72 = vld [vmem:[%s0 + $0x168] sm:$0xff]
    %v73 = vld [vmem:[%s0 + $0x170] sm:$0xff]
    %v74 = vld [vmem:[%s0 + $0x178] sm:$0xff]
    %v75 = vld [vmem:[%s0 + $0x180] sm:$0xff]
    %v76 = vld [vmem:[%s0 + $0x188] sm:$0xff]
    %v77 = vld [vmem:[%s0 + $0x190] sm:$0xff]
    %v78 = vld [vmem:[%s0 + $0x198] sm:$0xff]
    %v79 = vld [vmem:[%s0 + $0x1a0] sm:$0xff]
    %v80 = vld [vmem:[%s0 + $0x1a8] sm:$0xff]
    %v81 = vld [vmem:[%s0 + $0x1b0] sm:$0xff]
    %v82 = vld [vmem:[%s0 + $0x1b8] sm:$0xff]
    %v83 = vld [vmem:[%s0 + $0x1c0] sm:$0xff]
    %v84 = vld [vmem:[%s0 + $0x1c8] sm:$0xff]
    %v85 = vld [vmem:[%s0 + $0x1d0] sm:$0xff]
    %v86 = vld [vmem:[%s0 + $0x1d8] sm:$0xff]
    %v87 = vld [vmem:[%s0 + $0x1e0] sm:$0xff]
    %v88 = vld [vmem:[%s0 + $0x1e8] sm:$0xff]
    %v89 = vld [vmem:[%s0 + $0x1f0] sm:$0xff]
    %v90 = vld [vmem:[%s0 + $0x1f8] sm:$0xff]
    %v91 = vld [vmem:[%s0 + $0x200] sm:$0xff]
    %v92 = vld [vmem:[%s0 + $0x208] sm:$0xff]
    %v93 = vld [vmem:[%s0 + $0x210] sm:$0xff]
    %v94 = vld [vmem:[%s0 + $0x218] sm:$0xff]
    %v95 = vld [vmem:[%s0 + $0x220] sm:$0xff]
    %v96 = vld [vmem:[%s0 + $0x228] sm:$0xff]
    %v97 = vld [vmem:[%s0 + $0x230] sm:$0xff]
    %v98 = vld [vmem:[%s0 + $0x238] sm:$0xff]
    %v99 = vld [vmem:[%s0 + $0x240] sm:$0xff]
    %v100 = vld [vmem:[%s0 + $0x248] sm:$0xff]
    %v101 = vld [vmem:[%s0 + $0x250] sm:$0xff]
    %v102 = vld [vmem:[%s0 + $0x258] sm:$0xff]
    %v103 = vld [vmem:[%s0 + $0x260] sm:$0x3]
    %v104 = vld [vmem:[%s1] sm:$0xf]
    %v105 = vld [vmem:[%s0 + $0x1] sm:$0xff]
    %v106 = vld [vmem:[%s0 + $0x9] sm:$0xff]
    %v107 = vld [vmem:[%s0 + $0x11] sm:$0xff]
    %v108 = vld [vmem:[%s0 + $0x19] sm:$0xff]
    %v109 = vld [vmem:[%s0 + $0x21] sm:$0xff]
    %v110 = vld [vmem:[%s0 + $0x29] sm:$0xff]
    %v111 = vld [vmem:[%s0 + $0x31] sm:$0xff]
    %v112 = vld [vmem:[%s0 + $0x39] sm:$0xff]
    %v113 = vld [vmem:[%s0 + $0x41] sm:$0xff]
    %v114 = vld [vmem:[%s0 + $0x49] sm:$0xff]
    %v115 = vld [vmem:[%s0 + $0x51] sm:$0xff]
    %v116 = vld [vmem:[%s0 + $0x59] sm:$0xff]
    %v117 = vld [vmem:[%s0 + $0x61] sm:$0xff]
    %v118 = vld [vmem:[%s0 + $0x69] sm:$0xff]
    %v119 = vld [vmem:[%s0 + $0x71] sm:$0xff]
    %v120 = vld [vmem:[%s0 + $0x79] sm:$0xff]
    %v121 = vld [vmem:[%s0 + $0x81] sm:$0xff]
    %v122 = vld [vmem:[%s0 + $0x89] sm:$0xff]
    %v123 = vld [vmem:[%s0 + $0x91] sm:$0xff]
    %v124 = vld [vmem:[%s0 + $0x99] sm:$0xff]
    %v125 = vld [vmem:[%s0 + $0xa1] sm:$0xff]
    %v126 = vld [vmem:[%s0 + $0xa9] sm:$0xff]
    %v127 = vld [vmem:[%s0 + $0xb1] sm:$0xff]
    %v128 = vld [vmem:[%s0 + $0xb9] sm:$0xff]
    %v129 = vld [vmem:[%s0 + $0xc1] sm:$0xff]
    %v130 = vld [vmem:[%s0 + $0xc9] sm:$0xff]
    %v131 = vld [vmem:[%s0 + $0xd1] sm:$0xff]
    %v132 = vld [vmem:[%s0 + $0xd9] sm:$0xff]
    %v133 = vld [vmem:[%s0 + $0xe1] sm:$0xff]
    %v134 = vld [vmem:[%s0 + $0xe9] sm:$0xff]
    %v135 = vld [vmem:[%s0 + $0xf1] sm:$0xff]
    %v136 = vld [vmem:[%s0 + $0xf9] sm:$0xff]
    %v137 = vld [vmem:[%s0 + $0x101] sm:$0xff]
    %v138 = vld [vmem:[%s0 + $0x109] sm:$0xff]
    %v139 = vld [vmem:[%s0 + $0x111] sm:$0xff]
    %v140 = vld [vmem:[%s0 + $0x119] sm:$0xff]
    %v141 = vld [vmem:[%s0 + $0x121] sm:$0xff]
    %v142 = vld [vmem:[%s0 + $0x129] sm:$0xff]
    %v143 = vld [vmem:[%s0 + $0x131] sm:$0xff]
    %v144 = vld [vmem:[%s0 + $0x139] sm:$0xff]
    %v145 = vld [vmem:[%s0 + $0x141] sm:$0xff]
    %v146 = vld [vmem:[%s0 + $0x149] sm:$0xff]
    %v147 = vld [vmem:[%s0 + $0x151] sm:$0xff]
    %v148 = vld [vmem:[%s0 + $0x159] sm:$0xff]
    %v149 = vld [vmem:[%s0 + $0x161] sm:$0xff]
    %v150 = vld [vmem:[%s0 + $0x169] sm:$0xff]
    %v151 = vld [vmem:[%s0 + $0x171] sm:$0xff]
    %v152 = vld [vmem:[%s0 + $0x179] sm:$0xff]
    %v153 = vld [vmem:[%s0 + $0x181] sm:$0xff]
    %v154 = vld [vmem:[%s0 + $0x189] sm:$0xff]
    %v155 = vld [vmem:[%s0 + $0x191] sm:$0xff]
    %v156 = vld [vmem:[%s0 + $0x199] sm:$0xff]
    %v157 = vld [vmem:[%s0 + $0x1a1] sm:$0xff]
    %v158 = vld [vmem:[%s0 + $0x1a9] sm:$0xff]
    %v159 = vld [vmem:[%s0 + $0x1b1] sm:$0xff]
    %v160 = vld [vmem:[%s0 + $0x1b9] sm:$0xff]
    %v161 = vld [vmem:[%s0 + $0x1c1] sm:$0xff]
    %v162 = vld [vmem:[%s0 + $0x1c9] sm:$0xff]
    %v163 = vld [vmem:[%s0 + $0x1d1] sm:$0xff]
    %v164 = vld [vmem:[%s0 + $0x1d9] sm:$0xff]
    %v165 = vld [vmem:[%s0 + $0x1e1] sm:$0xff]
    %v166 = vld [vmem:[%s0 + $0x1e9] sm:$0xff]
    %v167 = vld [vmem:[%s0 + $0x1f1] sm:$0xff]
    %v168 = vld [vmem:[%s0 + $0x1f9] sm:$0xff]
    %v169 = vld [vmem:[%s0 + $0x201] sm:$0xff]
    %v170 = vld [vmem:[%s0 + $0x209] sm:$0xff]
    %v171 = vld [vmem:[%s0 + $0x211] sm:$0xff]
    %v172 = vld [vmem:[%s0 + $0x219] sm:$0xff]
    %v173 = vld [vmem:[%s0 + $0x221] sm:$0xff]
    %v174 = vld [vmem:[%s0 + $0x229] sm:$0xff]
    %v175 = vld [vmem:[%s0 + $0x231] sm:$0xff]
    %v176 = vld [vmem:[%s0 + $0x239] sm:$0xff]
    %v177 = vld [vmem:[%s0 + $0x241] sm:$0xff]
    %v178 = vld [vmem:[%s0 + $0x249] sm:$0xff]
    %v179 = vld [vmem:[%s0 + $0x251] sm:$0xff]
    %v180 = vld [vmem:[%s0 + $0x259] sm:$0xff]
    %v181 = vld [vmem:[%s0 + $0x261] sm:$0x3]
    %s182 = scalar_lea.vmem %s1, 4
    %v183 = vld [vmem:[%s182] sm:$0xf]
    %vm184 = vcmask 31744
    %v186 = vsel %vm184, %v105, 0
    %v189 = vsel %vm184, %v106, 0
    %v192 = vsel %vm184, %v107, 0
    %v195 = vsel %vm184, %v108, 0
    %v198 = vsel %vm184, %v109, 0
    %v201 = vsel %vm184, %v110, 0
    %v204 = vsel %vm184, %v111, 0
    %v207 = vsel %vm184, %v112, 0
    %v210 = vsel %vm184, %v113, 0
    %v213 = vsel %vm184, %v114, 0
    %v216 = vsel %vm184, %v115, 0
    %v219 = vsel %vm184, %v116, 0
    %v222 = vsel %vm184, %v117, 0
    %v225 = vsel %vm184, %v118, 0
    %v228 = vsel %vm184, %v119, 0
    %v231 = vsel %vm184, %v120, 0
    %v234 = vsel %vm184, %v121, 0
    %v237 = vsel %vm184, %v122, 0
    %v240 = vsel %vm184, %v123, 0
    %v243 = vsel %vm184, %v124, 0
    %v246 = vsel %vm184, %v125, 0
    %v249 = vsel %vm184, %v126, 0
    %v252 = vsel %vm184, %v127, 0
    %v255 = vsel %vm184, %v128, 0
    %v258 = vsel %vm184, %v129, 0
    %v261 = vsel %vm184, %v130, 0
    %v264 = vsel %vm184, %v131, 0
    %v267 = vsel %vm184, %v132, 0
    %v270 = vsel %vm184, %v133, 0
    %v273 = vsel %vm184, %v134, 0
    %v276 = vsel %vm184, %v135, 0
    %v279 = vsel %vm184, %v136, 0
    %v282 = vsel %vm184, %v137, 0
    %v285 = vsel %vm184, %v138, 0
    %v288 = vsel %vm184, %v139, 0
    %v291 = vsel %vm184, %v140, 0
    %v294 = vsel %vm184, %v141, 0
    %v297 = vsel %vm184, %v142, 0
    %v300 = vsel %vm184, %v143, 0
    %v303 = vsel %vm184, %v144, 0
    %v306 = vsel %vm184, %v145, 0
    %v309 = vsel %vm184, %v146, 0
    %v312 = vsel %vm184, %v147, 0
    %v315 = vsel %vm184, %v148, 0
    %v318 = vsel %vm184, %v149, 0
    %v321 = vsel %vm184, %v150, 0
    %v324 = vsel %vm184, %v151, 0
    %v327 = vsel %vm184, %v152, 0
    %v330 = vsel %vm184, %v153, 0
    %v333 = vsel %vm184, %v154, 0
    %v336 = vsel %vm184, %v155, 0
    %v339 = vsel %vm184, %v156, 0
    %v342 = vsel %vm184, %v157, 0
    %v345 = vsel %vm184, %v158, 0
    %v348 = vsel %vm184, %v159, 0
    %v351 = vsel %vm184, %v160, 0
    %v354 = vsel %vm184, %v161, 0
    %v357 = vsel %vm184, %v162, 0
    %v360 = vsel %vm184, %v163, 0
    %v363 = vsel %vm184, %v164, 0
    %v366 = vsel %vm184, %v165, 0
    %v369 = vsel %vm184, %v166, 0
    %v372 = vsel %vm184, %v167, 0
    %v375 = vsel %vm184, %v168, 0
    %v378 = vsel %vm184, %v169, 0
    %v381 = vsel %vm184, %v170, 0
    %v384 = vsel %vm184, %v171, 0
    %v387 = vsel %vm184, %v172, 0
    %v390 = vsel %vm184, %v173, 0
    %v393 = vsel %vm184, %v174, 0
    %v396 = vsel %vm184, %v175, 0
    %v399 = vsel %vm184, %v176, 0
    %v402 = vsel %vm184, %v177, 0
    %v405 = vsel %vm184, %v178, 0
    %v408 = vsel %vm184, %v179, 0
    %v411 = vsel %vm184, %v180, 0
    %v414 = vsel %vm184, %v181, 0
    %vm416 = vcmask 1043456
    %v418 = vsel %vm416, %v183, 0
    %420 = vmatprep.subr.mxu0 0.0
    %421 = vmatpush1.msra.mxu0 0.0
    %422 = vmatprep.subr.mxu0 0.0
    %423 = vmatpush1.msra.mxu0 0.0
    %424 = vmatprep.subr.mxu0 0.0
    %425 = vmatpush1.msra.mxu0 0.0
    %426 = vmatprep.subr.mxu0 0.0
    %427 = vmatpush1.msra.mxu0 0.0
    %428 = vmatprep.subr.mxu0 0.0
    %429 = vmatpush1.msra.mxu0 0.0
    %430 = vmatprep.subr.mxu0 0.0
    %431 = vmatpush1.msra.mxu0 0.0
    %432 = vmatprep.subr.mxu0 0.0
    %433 = vmatpush1.msra.mxu0 0.0
    %434 = vmatprep.subr.mxu0 0.0
    %435 = vmatpush1.msra.mxu0 0.0
    %436 = vmatprep.subr.mxu0 0.0
    %437 = vmatpush1.msra.mxu0 0.0
    %438 = vmatprep.subr.mxu0 0.0
    %439 = vmatpush1.msra.mxu0 0.0
    %440 = vmatprep.subr.mxu0 0.0
    %441 = vmatpush1.msra.mxu0 0.0
    %442 = vmatprep.subr.mxu0 0.0
    %443 = vmatpush1.msra.mxu0 0.0
    %444 = vmatprep.subr.mxu0 0.0
    %445 = vmatpush1.msra.mxu0 0.0
    %446 = vmatprep.subr.mxu0 0.0
    %447 = vmatpush1.msra.mxu0 0.0
    %448 = vmatprep.subr.mxu0 0.0
    %449 = vmatpush1.msra.mxu0 0.0
    %450 = vmatprep.subr.mxu0 0.0
    %451 = vmatpush1.msra.mxu0 %v418
    %452 = vmatprep.subr.mxu0 0.0
    %453 = vmatpush2.msra.mxu0 0.0
    %454 = vmatprep.subr.mxu0 0.0
    %455 = vmatpush2.msra.mxu0 0.0
    %456 = vmatprep.subr.mxu0 0.0
    %457 = vmatpush2.msra.mxu0 0.0
    %458 = vmatprep.subr.mxu0 0.0
    %459 = vmatpush2.msra.mxu0 0.0
    %460 = vmatprep.subr.mxu0 0.0
    %461 = vmatpush2.msra.mxu0 0.0
    %462 = vmatprep.subr.mxu0 0.0
    %463 = vmatpush2.msra.mxu0 0.0
    %464 = vmatprep.subr.mxu0 0.0
    %465 = vmatpush2.msra.mxu0 0.0
    %466 = vmatprep.subr.mxu0 0.0
    %467 = vmatpush2.msra.mxu0 0.0
    %468 = vmatprep.subr.mxu0 0.0
    %469 = vmatpush2.msra.mxu0 0.0
    %470 = vmatprep.subr.mxu0 0.0
    %471 = vmatpush2.msra.mxu0 0.0
    %472 = vmatprep.subr.mxu0 0.0
    %473 = vmatpush2.msra.mxu0 0.0
    %474 = vmatprep.subr.mxu0 0.0
    %475 = vmatpush2.msra.mxu0 0.0
    %476 = vmatprep.subr.mxu0 0.0
    %477 = vmatpush2.msra.mxu0 0.0
    %478 = vmatprep.subr.mxu0 0.0
    %479 = vmatpush2.msra.mxu0 0.0
    %480 = vmatprep.subr.mxu0 0.0
    %481 = vmatpush2.msra.mxu0 0.0
    %482 = vmatprep.subr.mxu0 0.0
    %483 = vmatpush2.msra.mxu0 0.0
    %484 = vmatprep.mubr.f32.mxu0 0.0
    %485 = vmatmul.mubr.f32.gmra.mxu0 %v186
    %v486 = vpop.f32.mrf.mxu0
    %v487 = vadd.f32 0.0, %v486
    %v488 = vpop.f32.mrf.mxu0
    %489 = vmatprep.mubr.f32.mxu0 0.0
    %490 = vmatmul.mubr.f32.gmra.mxu0 %v189
    %v491 = vpop.f32.mrf.mxu0
    %v492 = vadd.f32 0.0, %v491
    %v493 = vpop.f32.mrf.mxu0
    %494 = vmatprep.mubr.f32.mxu0 0.0
    %495 = vmatmul.mubr.f32.gmra.mxu0 %v192
    %v496 = vpop.f32.mrf.mxu0
    %v497 = vadd.f32 0.0, %v496
    %v498 = vpop.f32.mrf.mxu0
    %499 = vmatprep.mubr.f32.mxu0 0.0
    %500 = vmatmul.mubr.f32.gmra.mxu0 %v195
    %v501 = vpop.f32.mrf.mxu0
    %v502 = vadd.f32 0.0, %v501
    %v503 = vpop.f32.mrf.mxu0
    %504 = vmatprep.mubr.f32.mxu0 0.0
    %505 = vmatmul.mubr.f32.gmra.mxu0 %v198
    %v506 = vpop.f32.mrf.mxu0
    %v507 = vadd.f32 0.0, %v506
    %v508 = vpop.f32.mrf.mxu0
    %509 = vmatprep.mubr.f32.mxu0 0.0
    %510 = vmatmul.mubr.f32.gmra.mxu0 %v201
    %v511 = vpop.f32.mrf.mxu0
    %v512 = vadd.f32 0.0, %v511
    %v513 = vpop.f32.mrf.mxu0
    %514 = vmatprep.mubr.f32.mxu0 0.0
    %515 = vmatmul.mubr.f32.gmra.mxu0 %v204
    %v516 = vpop.f32.mrf.mxu0
    %v517 = vadd.f32 0.0, %v516
    %v518 = vpop.f32.mrf.mxu0
    %519 = vmatprep.mubr.f32.mxu0 0.0
    %520 = vmatmul.mubr.f32.gmra.mxu0 %v207
    %v521 = vpop.f32.mrf.mxu0
    %v522 = vadd.f32 0.0, %v521
    %v523 = vpop.f32.mrf.mxu0
    %524 = vmatprep.mubr.f32.mxu0 0.0
    %525 = vmatmul.mubr.f32.gmra.mxu0 %v210
    %v526 = vpop.f32.mrf.mxu0
    %v527 = vadd.f32 0.0, %v526
    %v528 = vpop.f32.mrf.mxu0
    %529 = vmatprep.mubr.f32.mxu0 0.0
    %530 = vmatmul.mubr.f32.gmra.mxu0 %v213
    %v531 = vpop.f32.mrf.mxu0
    %v532 = vadd.f32 0.0, %v531
    %v533 = vpop.f32.mrf.mxu0
    %534 = vmatprep.mubr.f32.mxu0 0.0
    %535 = vmatmul.mubr.f32.gmra.mxu0 %v216
    %v536 = vpop.f32.mrf.mxu0
    %v537 = vadd.f32 0.0, %v536
    %v538 = vpop.f32.mrf.mxu0
    %539 = vmatprep.mubr.f32.mxu0 0.0
    %540 = vmatmul.mubr.f32.gmra.mxu0 %v219
    %v541 = vpop.f32.mrf.mxu0
    %v542 = vadd.f32 0.0, %v541
    %v543 = vpop.f32.mrf.mxu0
    %544 = vmatprep.mubr.f32.mxu0 0.0
    %545 = vmatmul.mubr.f32.gmra.mxu0 %v222
    %v546 = vpop.f32.mrf.mxu0
    %v547 = vadd.f32 0.0, %v546
    %v548 = vpop.f32.mrf.mxu0
    %549 = vmatprep.mubr.f32.mxu0 0.0
    %550 = vmatmul.mubr.f32.gmra.mxu0 %v225
    %v551 = vpop.f32.mrf.mxu0
    %v552 = vadd.f32 0.0, %v551
    %v553 = vpop.f32.mrf.mxu0
    %554 = vmatprep.mubr.f32.mxu0 0.0
    %555 = vmatmul.mubr.f32.gmra.mxu0 %v228
    %v556 = vpop.f32.mrf.mxu0
    %v557 = vadd.f32 0.0, %v556
    %v558 = vpop.f32.mrf.mxu0
    %559 = vmatprep.mubr.f32.mxu0 0.0
    %560 = vmatmul.mubr.f32.gmra.mxu0 %v231
    %v561 = vpop.f32.mrf.mxu0
    %v562 = vadd.f32 0.0, %v561
    %v563 = vpop.f32.mrf.mxu0
    %564 = vmatprep.mubr.f32.mxu0 0.0
    %565 = vmatmul.mubr.f32.gmra.mxu0 %v234
    %v566 = vpop.f32.mrf.mxu0
    %v567 = vadd.f32 0.0, %v566
    %v568 = vpop.f32.mrf.mxu0
    %569 = vmatprep.mubr.f32.mxu0 0.0
    %570 = vmatmul.mubr.f32.gmra.mxu0 %v237
    %v571 = vpop.f32.mrf.mxu0
    %v572 = vadd.f32 0.0, %v571
    %v573 = vpop.f32.mrf.mxu0
    %574 = vmatprep.mubr.f32.mxu0 0.0
    %575 = vmatmul.mubr.f32.gmra.mxu0 %v240
    %v576 = vpop.f32.mrf.mxu0
    %v577 = vadd.f32 0.0, %v576
    %v578 = vpop.f32.mrf.mxu0
    %579 = vmatprep.mubr.f32.mxu0 0.0
    %580 = vmatmul.mubr.f32.gmra.mxu0 %v243
    %v581 = vpop.f32.mrf.mxu0
    %v582 = vadd.f32 0.0, %v581
    %v583 = vpop.f32.mrf.mxu0
    %584 = vmatprep.mubr.f32.mxu0 0.0
    %585 = vmatmul.mubr.f32.gmra.mxu0 %v246
    %v586 = vpop.f32.mrf.mxu0
    %v587 = vadd.f32 0.0, %v586
    %v588 = vpop.f32.mrf.mxu0
    %589 = vmatprep.mubr.f32.mxu0 0.0
    %590 = vmatmul.mubr.f32.gmra.mxu0 %v249
    %v591 = vpop.f32.mrf.mxu0
    %v592 = vadd.f32 0.0, %v591
    %v593 = vpop.f32.mrf.mxu0
    %594 = vmatprep.mubr.f32.mxu0 0.0
    %595 = vmatmul.mubr.f32.gmra.mxu0 %v252
    %v596 = vpop.f32.mrf.mxu0
    %v597 = vadd.f32 0.0, %v596
    %v598 = vpop.f32.mrf.mxu0
    %599 = vmatprep.mubr.f32.mxu0 0.0
    %600 = vmatmul.mubr.f32.gmra.mxu0 %v255
    %v601 = vpop.f32.mrf.mxu0
    %v602 = vadd.f32 0.0, %v601
    %v603 = vpop.f32.mrf.mxu0
    %604 = vmatprep.mubr.f32.mxu0 0.0
    %605 = vmatmul.mubr.f32.gmra.mxu0 %v258
    %v606 = vpop.f32.mrf.mxu0
    %v607 = vadd.f32 0.0, %v606
    %v608 = vpop.f32.mrf.mxu0
    %609 = vmatprep.mubr.f32.mxu0 0.0
    %610 = vmatmul.mubr.f32.gmra.mxu0 %v261
    %v611 = vpop.f32.mrf.mxu0
    %v612 = vadd.f32 0.0, %v611
    %v613 = vpop.f32.mrf.mxu0
    %614 = vmatprep.mubr.f32.mxu0 0.0
    %615 = vmatmul.mubr.f32.gmra.mxu0 %v264
    %v616 = vpop.f32.mrf.mxu0
    %v617 = vadd.f32 0.0, %v616
    %v618 = vpop.f32.mrf.mxu0
    %619 = vmatprep.mubr.f32.mxu0 0.0
    %620 = vmatmul.mubr.f32.gmra.mxu0 %v267
    %v621 = vpop.f32.mrf.mxu0
    %v622 = vadd.f32 0.0, %v621
    %v623 = vpop.f32.mrf.mxu0
    %624 = vmatprep.mubr.f32.mxu0 0.0
    %625 = vmatmul.mubr.f32.gmra.mxu0 %v270
    %v626 = vpop.f32.mrf.mxu0
    %v627 = vadd.f32 0.0, %v626
    %v628 = vpop.f32.mrf.mxu0
    %629 = vmatprep.mubr.f32.mxu0 0.0
    %630 = vmatmul.mubr.f32.gmra.mxu0 %v273
    %v631 = vpop.f32.mrf.mxu0
    %v632 = vadd.f32 0.0, %v631
    %v633 = vpop.f32.mrf.mxu0
    %634 = vmatprep.mubr.f32.mxu0 0.0
    %635 = vmatmul.mubr.f32.gmra.mxu0 %v276
    %v636 = vpop.f32.mrf.mxu0
    %v637 = vadd.f32 0.0, %v636
    %v638 = vpop.f32.mrf.mxu0
    %639 = vmatprep.mubr.f32.mxu0 0.0
    %640 = vmatmul.mubr.f32.gmra.mxu0 %v279
    %v641 = vpop.f32.mrf.mxu0
    %v642 = vadd.f32 0.0, %v641
    %v643 = vpop.f32.mrf.mxu0
    %644 = vmatprep.mubr.f32.mxu0 0.0
    %645 = vmatmul.mubr.f32.gmra.mxu0 %v282
    %v646 = vpop.f32.mrf.mxu0
    %v647 = vadd.f32 0.0, %v646
    %v648 = vpop.f32.mrf.mxu0
    %649 = vmatprep.mubr.f32.mxu0 0.0
    %650 = vmatmul.mubr.f32.gmra.mxu0 %v285
    %v651 = vpop.f32.mrf.mxu0
    %v652 = vadd.f32 0.0, %v651
    %v653 = vpop.f32.mrf.mxu0
    %654 = vmatprep.mubr.f32.mxu0 0.0
    %655 = vmatmul.mubr.f32.gmra.mxu0 %v288
    %v656 = vpop.f32.mrf.mxu0
    %v657 = vadd.f32 0.0, %v656
    %v658 = vpop.f32.mrf.mxu0
    %659 = vmatprep.mubr.f32.mxu0 0.0
    %660 = vmatmul.mubr.f32.gmra.mxu0 %v291
    %v661 = vpop.f32.mrf.mxu0
    %v662 = vadd.f32 0.0, %v661
    %v663 = vpop.f32.mrf.mxu0
    %664 = vmatprep.mubr.f32.mxu0 0.0
    %665 = vmatmul.mubr.f32.gmra.mxu0 %v294
    %v666 = vpop.f32.mrf.mxu0
    %v667 = vadd.f32 0.0, %v666
    %v668 = vpop.f32.mrf.mxu0
    %669 = vmatprep.mubr.f32.mxu0 0.0
    %670 = vmatmul.mubr.f32.gmra.mxu0 %v297
    %v671 = vpop.f32.mrf.mxu0
    %v672 = vadd.f32 0.0, %v671
    %v673 = vpop.f32.mrf.mxu0
    %674 = vmatprep.mubr.f32.mxu0 0.0
    %675 = vmatmul.mubr.f32.gmra.mxu0 %v300
    %v676 = vpop.f32.mrf.mxu0
    %v677 = vadd.f32 0.0, %v676
    %v678 = vpop.f32.mrf.mxu0
    %679 = vmatprep.mubr.f32.mxu0 0.0
    %680 = vmatmul.mubr.f32.gmra.mxu0 %v303
    %v681 = vpop.f32.mrf.mxu0
    %v682 = vadd.f32 0.0, %v681
    %v683 = vpop.f32.mrf.mxu0
    %684 = vmatprep.mubr.f32.mxu0 0.0
    %685 = vmatmul.mubr.f32.gmra.mxu0 %v306
    %v686 = vpop.f32.mrf.mxu0
    %v687 = vadd.f32 0.0, %v686
    %v688 = vpop.f32.mrf.mxu0
    %689 = vmatprep.mubr.f32.mxu0 0.0
    %690 = vmatmul.mubr.f32.gmra.mxu0 %v309
    %v691 = vpop.f32.mrf.mxu0
    %v692 = vadd.f32 0.0, %v691
    %v693 = vpop.f32.mrf.mxu0
    %694 = vmatprep.mubr.f32.mxu0 0.0
    %695 = vmatmul.mubr.f32.gmra.mxu0 %v312
    %v696 = vpop.f32.mrf.mxu0
    %v697 = vadd.f32 0.0, %v696
    %v698 = vpop.f32.mrf.mxu0
    %699 = vmatprep.mubr.f32.mxu0 0.0
    %700 = vmatmul.mubr.f32.gmra.mxu0 %v315
    %v701 = vpop.f32.mrf.mxu0
    %v702 = vadd.f32 0.0, %v701
    %v703 = vpop.f32.mrf.mxu0
    %704 = vmatprep.mubr.f32.mxu0 0.0
    %705 = vmatmul.mubr.f32.gmra.mxu0 %v318
    %v706 = vpop.f32.mrf.mxu0
    %v707 = vadd.f32 0.0, %v706
    %v708 = vpop.f32.mrf.mxu0
    %709 = vmatprep.mubr.f32.mxu0 0.0
    %710 = vmatmul.mubr.f32.gmra.mxu0 %v321
    %v711 = vpop.f32.mrf.mxu0
    %v712 = vadd.f32 0.0, %v711
    %v713 = vpop.f32.mrf.mxu0
    %714 = vmatprep.mubr.f32.mxu0 0.0
    %715 = vmatmul.mubr.f32.gmra.mxu0 %v324
    %v716 = vpop.f32.mrf.mxu0
    %v717 = vadd.f32 0.0, %v716
    %v718 = vpop.f32.mrf.mxu0
    %719 = vmatprep.mubr.f32.mxu0 0.0
    %720 = vmatmul.mubr.f32.gmra.mxu0 %v327
    %v721 = vpop.f32.mrf.mxu0
    %v722 = vadd.f32 0.0, %v721
    %v723 = vpop.f32.mrf.mxu0
    %724 = vmatprep.mubr.f32.mxu0 0.0
    %725 = vmatmul.mubr.f32.gmra.mxu0 %v330
    %v726 = vpop.f32.mrf.mxu0
    %v727 = vadd.f32 0.0, %v726
    %v728 = vpop.f32.mrf.mxu0
    %729 = vmatprep.mubr.f32.mxu0 0.0
    %730 = vmatmul.mubr.f32.gmra.mxu0 %v333
    %v731 = vpop.f32.mrf.mxu0
    %v732 = vadd.f32 0.0, %v731
    %v733 = vpop.f32.mrf.mxu0
    %734 = vmatprep.mubr.f32.mxu0 0.0
    %735 = vmatmul.mubr.f32.gmra.mxu0 %v336
    %v736 = vpop.f32.mrf.mxu0
    %v737 = vadd.f32 0.0, %v736
    %v738 = vpop.f32.mrf.mxu0
    %739 = vmatprep.mubr.f32.mxu0 0.0
    %740 = vmatmul.mubr.f32.gmra.mxu0 %v339
    %v741 = vpop.f32.mrf.mxu0
    %v742 = vadd.f32 0.0, %v741
    %v743 = vpop.f32.mrf.mxu0
    %744 = vmatprep.mubr.f32.mxu0 0.0
    %745 = vmatmul.mubr.f32.gmra.mxu0 %v342
    %v746 = vpop.f32.mrf.mxu0
    %v747 = vadd.f32 0.0, %v746
    %v748 = vpop.f32.mrf.mxu0
    %749 = vmatprep.mubr.f32.mxu0 0.0
    %750 = vmatmul.mubr.f32.gmra.mxu0 %v345
    %v751 = vpop.f32.mrf.mxu0
    %v752 = vadd.f32 0.0, %v751
    %v753 = vpop.f32.mrf.mxu0
    %754 = vmatprep.mubr.f32.mxu0 0.0
    %755 = vmatmul.mubr.f32.gmra.mxu0 %v348
    %v756 = vpop.f32.mrf.mxu0
    %v757 = vadd.f32 0.0, %v756
    %v758 = vpop.f32.mrf.mxu0
    %759 = vmatprep.mubr.f32.mxu0 0.0
    %760 = vmatmul.mubr.f32.gmra.mxu0 %v351
    %v761 = vpop.f32.mrf.mxu0
    %v762 = vadd.f32 0.0, %v761
    %v763 = vpop.f32.mrf.mxu0
    %764 = vmatprep.mubr.f32.mxu0 0.0
    %765 = vmatmul.mubr.f32.gmra.mxu0 %v354
    %v766 = vpop.f32.mrf.mxu0
    %v767 = vadd.f32 0.0, %v766
    %v768 = vpop.f32.mrf.mxu0
    %769 = vmatprep.mubr.f32.mxu0 0.0
    %770 = vmatmul.mubr.f32.gmra.mxu0 %v357
    %v771 = vpop.f32.mrf.mxu0
    %v772 = vadd.f32 0.0, %v771
    %v773 = vpop.f32.mrf.mxu0
    %774 = vmatprep.mubr.f32.mxu0 0.0
    %775 = vmatmul.mubr.f32.gmra.mxu0 %v360
    %v776 = vpop.f32.mrf.mxu0
    %v777 = vadd.f32 0.0, %v776
    %v778 = vpop.f32.mrf.mxu0
    %779 = vmatprep.mubr.f32.mxu0 0.0
    %780 = vmatmul.mubr.f32.gmra.mxu0 %v363
    %v781 = vpop.f32.mrf.mxu0
    %v782 = vadd.f32 0.0, %v781
    %v783 = vpop.f32.mrf.mxu0
    %784 = vmatprep.mubr.f32.mxu0 0.0
    %785 = vmatmul.mubr.f32.gmra.mxu0 %v366
    %v786 = vpop.f32.mrf.mxu0
    %v787 = vadd.f32 0.0, %v786
    %v788 = vpop.f32.mrf.mxu0
    %789 = vmatprep.mubr.f32.mxu0 0.0
    %790 = vmatmul.mubr.f32.gmra.mxu0 %v369
    %v791 = vpop.f32.mrf.mxu0
    %v792 = vadd.f32 0.0, %v791
    %v793 = vpop.f32.mrf.mxu0
    %794 = vmatprep.mubr.f32.mxu0 0.0
    %795 = vmatmul.mubr.f32.gmra.mxu0 %v372
    %v796 = vpop.f32.mrf.mxu0
    %v797 = vadd.f32 0.0, %v796
    %v798 = vpop.f32.mrf.mxu0
    %799 = vmatprep.mubr.f32.mxu0 0.0
    %800 = vmatmul.mubr.f32.gmra.mxu0 %v375
    %v801 = vpop.f32.mrf.mxu0
    %v802 = vadd.f32 0.0, %v801
    %v803 = vpop.f32.mrf.mxu0
    %804 = vmatprep.mubr.f32.mxu0 0.0
    %805 = vmatmul.mubr.f32.gmra.mxu0 %v378
    %v806 = vpop.f32.mrf.mxu0
    %v807 = vadd.f32 0.0, %v806
    %v808 = vpop.f32.mrf.mxu0
    %809 = vmatprep.mubr.f32.mxu0 0.0
    %810 = vmatmul.mubr.f32.gmra.mxu0 %v381
    %v811 = vpop.f32.mrf.mxu0
    %v812 = vadd.f32 0.0, %v811
    %v813 = vpop.f32.mrf.mxu0
    %814 = vmatprep.mubr.f32.mxu0 0.0
    %815 = vmatmul.mubr.f32.gmra.mxu0 %v384
    %v816 = vpop.f32.mrf.mxu0
    %v817 = vadd.f32 0.0, %v816
    %v818 = vpop.f32.mrf.mxu0
    %819 = vmatprep.mubr.f32.mxu0 0.0
    %820 = vmatmul.mubr.f32.gmra.mxu0 %v387
    %v821 = vpop.f32.mrf.mxu0
    %v822 = vadd.f32 0.0, %v821
    %v823 = vpop.f32.mrf.mxu0
    %824 = vmatprep.mubr.f32.mxu0 0.0
    %825 = vmatmul.mubr.f32.gmra.mxu0 %v390
    %v826 = vpop.f32.mrf.mxu0
    %v827 = vadd.f32 0.0, %v826
    %v828 = vpop.f32.mrf.mxu0
    %829 = vmatprep.mubr.f32.mxu0 0.0
    %830 = vmatmul.mubr.f32.gmra.mxu0 %v393
    %v831 = vpop.f32.mrf.mxu0
    %v832 = vadd.f32 0.0, %v831
    %v833 = vpop.f32.mrf.mxu0
    %834 = vmatprep.mubr.f32.mxu0 0.0
    %835 = vmatmul.mubr.f32.gmra.mxu0 %v396
    %v836 = vpop.f32.mrf.mxu0
    %v837 = vadd.f32 0.0, %v836
    %v838 = vpop.f32.mrf.mxu0
    %839 = vmatprep.mubr.f32.mxu0 0.0
    %840 = vmatmul.mubr.f32.gmra.mxu0 %v399
    %v841 = vpop.f32.mrf.mxu0
    %v842 = vadd.f32 0.0, %v841
    %v843 = vpop.f32.mrf.mxu0
    %844 = vmatprep.mubr.f32.mxu0 0.0
    %845 = vmatmul.mubr.f32.gmra.mxu0 %v402
    %v846 = vpop.f32.mrf.mxu0
    %v847 = vadd.f32 0.0, %v846
    %v848 = vpop.f32.mrf.mxu0
    %849 = vmatprep.mubr.f32.mxu0 0.0
    %850 = vmatmul.mubr.f32.gmra.mxu0 %v405
    %v851 = vpop.f32.mrf.mxu0
    %v852 = vadd.f32 0.0, %v851
    %v853 = vpop.f32.mrf.mxu0
    %854 = vmatprep.mubr.f32.mxu0 0.0
    %855 = vmatmul.mubr.f32.gmra.mxu0 %v408
    %v856 = vpop.f32.mrf.mxu0
    %v857 = vadd.f32 0.0, %v856
    %v858 = vpop.f32.mrf.mxu0
    %859 = vmatprep.mubr.f32.mxu0 0.0
    %860 = vmatmul.mubr.f32.gmra.mxu0 %v411
    %v861 = vpop.f32.mrf.mxu0
    %v862 = vadd.f32 0.0, %v861
    %v863 = vpop.f32.mrf.mxu0
    %864 = vmatprep.mubr.f32.mxu0 0.0
    %865 = vmatmul.mubr.f32.gmra.mxu0 %v414
    %v866 = vpop.f32.mrf.mxu0
    %v867 = vadd.f32 0.0, %v866
    %v868 = vpop.f32.mrf.mxu0
    %869 = vdwg.mxu0
    %v871 = vsel %vm184, %v27, 0
    %v874 = vsel %vm184, %v28, 0
    %v877 = vsel %vm184, %v29, 0
    %v880 = vsel %vm184, %v30, 0
    %v883 = vsel %vm184, %v31, 0
    %v886 = vsel %vm184, %v32, 0
    %v889 = vsel %vm184, %v33, 0
    %v892 = vsel %vm184, %v34, 0
    %v895 = vsel %vm184, %v35, 0
    %v898 = vsel %vm184, %v36, 0
    %v901 = vsel %vm184, %v37, 0
    %v904 = vsel %vm184, %v38, 0
    %v907 = vsel %vm184, %v39, 0
    %v910 = vsel %vm184, %v40, 0
    %v913 = vsel %vm184, %v41, 0
    %v916 = vsel %vm184, %v42, 0
    %v919 = vsel %vm184, %v43, 0
    %v922 = vsel %vm184, %v44, 0
    %v925 = vsel %vm184, %v45, 0
    %v928 = vsel %vm184, %v46, 0
    %v931 = vsel %vm184, %v47, 0
    %v934 = vsel %vm184, %v48, 0
    %v937 = vsel %vm184, %v49, 0
    %v940 = vsel %vm184, %v50, 0
    %v943 = vsel %vm184, %v51, 0
    %v946 = vsel %vm184, %v52, 0
    %v949 = vsel %vm184, %v53, 0
    %v952 = vsel %vm184, %v54, 0
    %v955 = vsel %vm184, %v55, 0
    %v958 = vsel %vm184, %v56, 0
    %v961 = vsel %vm184, %v57, 0
    %v964 = vsel %vm184, %v58, 0
    %v967 = vsel %vm184, %v59, 0
    %v970 = vsel %vm184, %v60, 0
    %v973 = vsel %vm184, %v61, 0
    %v976 = vsel %vm184, %v62, 0
    %v979 = vsel %vm184, %v63, 0
    %v982 = vsel %vm184, %v64, 0
    %v985 = vsel %vm184, %v65, 0
    %v988 = vsel %vm184, %v66, 0
    %v991 = vsel %vm184, %v67, 0
    %v994 = vsel %vm184, %v68, 0
    %v997 = vsel %vm184, %v69, 0
    %v1000 = vsel %vm184, %v70, 0
    %v1003 = vsel %vm184, %v71, 0
    %v1006 = vsel %vm184, %v72, 0
    %v1009 = vsel %vm184, %v73, 0
    %v1012 = vsel %vm184, %v74, 0
    %v1015 = vsel %vm184, %v75, 0
    %v1018 = vsel %vm184, %v76, 0
    %v1021 = vsel %vm184, %v77, 0
    %v1024 = vsel %vm184, %v78, 0
    %v1027 = vsel %vm184, %v79, 0
    %v1030 = vsel %vm184, %v80, 0
    %v1033 = vsel %vm184, %v81, 0
    %v1036 = vsel %vm184, %v82, 0
    %v1039 = vsel %vm184, %v83, 0
    %v1042 = vsel %vm184, %v84, 0
    %v1045 = vsel %vm184, %v85, 0
    %v1048 = vsel %vm184, %v86, 0
    %v1051 = vsel %vm184, %v87, 0
    %v1054 = vsel %vm184, %v88, 0
    %v1057 = vsel %vm184, %v89, 0
    %v1060 = vsel %vm184, %v90, 0
    %v1063 = vsel %vm184, %v91, 0
    %v1066 = vsel %vm184, %v92, 0
    %v1069 = vsel %vm184, %v93, 0
    %v1072 = vsel %vm184, %v94, 0
    %v1075 = vsel %vm184, %v95, 0
    %v1078 = vsel %vm184, %v96, 0
    %v1081 = vsel %vm184, %v97, 0
    %v1084 = vsel %vm184, %v98, 0
    %v1087 = vsel %vm184, %v99, 0
    %v1090 = vsel %vm184, %v100, 0
    %v1093 = vsel %vm184, %v101, 0
    %v1096 = vsel %vm184, %v102, 0
    %v1099 = vsel %vm184, %v103, 0
    %v1102 = vsel %vm416, %v104, 0
    %1104 = vmatprep.subr.mxu0 0.0
    %1105 = vmatpush1.msra.mxu0 0.0
    %1106 = vmatprep.subr.mxu0 0.0
    %1107 = vmatpush1.msra.mxu0 0.0
    %1108 = vmatprep.subr.mxu0 0.0
    %1109 = vmatpush1.msra.mxu0 0.0
    %1110 = vmatprep.subr.mxu0 0.0
    %1111 = vmatpush1.msra.mxu0 0.0
    %1112 = vmatprep.subr.mxu0 0.0
    %1113 = vmatpush1.msra.mxu0 0.0
    %1114 = vmatprep.subr.mxu0 0.0
    %1115 = vmatpush1.msra.mxu0 0.0
    %1116 = vmatprep.subr.mxu0 0.0
    %1117 = vmatpush1.msra.mxu0 0.0
    %1118 = vmatprep.subr.mxu0 0.0
    %1119 = vmatpush1.msra.mxu0 0.0
    %1120 = vmatprep.subr.mxu0 0.0
    %1121 = vmatpush1.msra.mxu0 0.0
    %1122 = vmatprep.subr.mxu0 0.0
    %1123 = vmatpush1.msra.mxu0 0.0
    %1124 = vmatprep.subr.mxu0 0.0
    %1125 = vmatpush1.msra.mxu0 0.0
    %1126 = vmatprep.subr.mxu0 0.0
    %1127 = vmatpush1.msra.mxu0 0.0
    %1128 = vmatprep.subr.mxu0 0.0
    %1129 = vmatpush1.msra.mxu0 0.0
    %1130 = vmatprep.subr.mxu0 0.0
    %1131 = vmatpush1.msra.mxu0 0.0
    %1132 = vmatprep.subr.mxu0 0.0
    %1133 = vmatpush1.msra.mxu0 0.0
    %1134 = vmatprep.subr.mxu0 0.0
    %1135 = vmatpush1.msra.mxu0 %v1102
    %1136 = vmatprep.subr.mxu0 0.0
    %1137 = vmatpush2.msra.mxu0 0.0
    %1138 = vmatprep.subr.mxu0 0.0
    %1139 = vmatpush2.msra.mxu0 0.0
    %1140 = vmatprep.subr.mxu0 0.0
    %1141 = vmatpush2.msra.mxu0 0.0
    %1142 = vmatprep.subr.mxu0 0.0
    %1143 = vmatpush2.msra.mxu0 0.0
    %1144 = vmatprep.subr.mxu0 0.0
    %1145 = vmatpush2.msra.mxu0 0.0
    %1146 = vmatprep.subr.mxu0 0.0
    %1147 = vmatpush2.msra.mxu0 0.0
    %1148 = vmatprep.subr.mxu0 0.0
    %1149 = vmatpush2.msra.mxu0 0.0
    %1150 = vmatprep.subr.mxu0 0.0
    %1151 = vmatpush2.msra.mxu0 0.0
    %1152 = vmatprep.subr.mxu0 0.0
    %1153 = vmatpush2.msra.mxu0 0.0
    %1154 = vmatprep.subr.mxu0 0.0
    %1155 = vmatpush2.msra.mxu0 0.0
    %1156 = vmatprep.subr.mxu0 0.0
    %1157 = vmatpush2.msra.mxu0 0.0
    %1158 = vmatprep.subr.mxu0 0.0
    %1159 = vmatpush2.msra.mxu0 0.0
    %1160 = vmatprep.subr.mxu0 0.0
    %1161 = vmatpush2.msra.mxu0 0.0
    %1162 = vmatprep.subr.mxu0 0.0
    %1163 = vmatpush2.msra.mxu0 0.0
    %1164 = vmatprep.subr.mxu0 0.0
    %1165 = vmatpush2.msra.mxu0 0.0
    %1166 = vmatprep.subr.mxu0 0.0
    %1167 = vmatpush2.msra.mxu0 0.0
    %1168 = vmatprep.mubr.f32.mxu0 0.0
    %1169 = vmatmul.mubr.f32.gmra.mxu0 %v871
    %v1170 = vpop.f32.mrf.mxu0
    %v1171 = vadd.f32 %v487, %v1170
    %v1172 = vpop.f32.mrf.mxu0
    %1173 = vmatprep.mubr.f32.mxu0 0.0
    %1174 = vmatmul.mubr.f32.gmra.mxu0 %v874
    %v1175 = vpop.f32.mrf.mxu0
    %v1176 = vadd.f32 %v492, %v1175
    %v1177 = vpop.f32.mrf.mxu0
    %1178 = vmatprep.mubr.f32.mxu0 0.0
    %1179 = vmatmul.mubr.f32.gmra.mxu0 %v877
    %v1180 = vpop.f32.mrf.mxu0
    %v1181 = vadd.f32 %v497, %v1180
    %v1182 = vpop.f32.mrf.mxu0
    %1183 = vmatprep.mubr.f32.mxu0 0.0
    %1184 = vmatmul.mubr.f32.gmra.mxu0 %v880
    %v1185 = vpop.f32.mrf.mxu0
    %v1186 = vadd.f32 %v502, %v1185
    %v1187 = vpop.f32.mrf.mxu0
    %1188 = vmatprep.mubr.f32.mxu0 0.0
    %1189 = vmatmul.mubr.f32.gmra.mxu0 %v883
    %v1190 = vpop.f32.mrf.mxu0
    %v1191 = vadd.f32 %v507, %v1190
    %v1192 = vpop.f32.mrf.mxu0
    %1193 = vmatprep.mubr.f32.mxu0 0.0
    %1194 = vmatmul.mubr.f32.gmra.mxu0 %v886
    %v1195 = vpop.f32.mrf.mxu0
    %v1196 = vadd.f32 %v512, %v1195
    %v1197 = vpop.f32.mrf.mxu0
    %1198 = vmatprep.mubr.f32.mxu0 0.0
    %1199 = vmatmul.mubr.f32.gmra.mxu0 %v889
    %v1200 = vpop.f32.mrf.mxu0
    %v1201 = vadd.f32 %v517, %v1200
    %v1202 = vpop.f32.mrf.mxu0
    %1203 = vmatprep.mubr.f32.mxu0 0.0
    %1204 = vmatmul.mubr.f32.gmra.mxu0 %v892
    %v1205 = vpop.f32.mrf.mxu0
    %v1206 = vadd.f32 %v522, %v1205
    %v1207 = vpop.f32.mrf.mxu0
    %1208 = vmatprep.mubr.f32.mxu0 0.0
    %1209 = vmatmul.mubr.f32.gmra.mxu0 %v895
    %v1210 = vpop.f32.mrf.mxu0
    %v1211 = vadd.f32 %v527, %v1210
    %v1212 = vpop.f32.mrf.mxu0
    %1213 = vmatprep.mubr.f32.mxu0 0.0
    %1214 = vmatmul.mubr.f32.gmra.mxu0 %v898
    %v1215 = vpop.f32.mrf.mxu0
    %v1216 = vadd.f32 %v532, %v1215
    %v1217 = vpop.f32.mrf.mxu0
    %1218 = vmatprep.mubr.f32.mxu0 0.0
    %1219 = vmatmul.mubr.f32.gmra.mxu0 %v901
    %v1220 = vpop.f32.mrf.mxu0
    %v1221 = vadd.f32 %v537, %v1220
    %v1222 = vpop.f32.mrf.mxu0
    %1223 = vmatprep.mubr.f32.mxu0 0.0
    %1224 = vmatmul.mubr.f32.gmra.mxu0 %v904
    %v1225 = vpop.f32.mrf.mxu0
    %v1226 = vadd.f32 %v542, %v1225
    %v1227 = vpop.f32.mrf.mxu0
    %1228 = vmatprep.mubr.f32.mxu0 0.0
    %1229 = vmatmul.mubr.f32.gmra.mxu0 %v907
    %v1230 = vpop.f32.mrf.mxu0
    %v1231 = vadd.f32 %v547, %v1230
    %v1232 = vpop.f32.mrf.mxu0
    %1233 = vmatprep.mubr.f32.mxu0 0.0
    %1234 = vmatmul.mubr.f32.gmra.mxu0 %v910
    %v1235 = vpop.f32.mrf.mxu0
    %v1236 = vadd.f32 %v552, %v1235
    %v1237 = vpop.f32.mrf.mxu0
    %1238 = vmatprep.mubr.f32.mxu0 0.0
    %1239 = vmatmul.mubr.f32.gmra.mxu0 %v913
    %v1240 = vpop.f32.mrf.mxu0
    %v1241 = vadd.f32 %v557, %v1240
    %v1242 = vpop.f32.mrf.mxu0
    %1243 = vmatprep.mubr.f32.mxu0 0.0
    %1244 = vmatmul.mubr.f32.gmra.mxu0 %v916
    %v1245 = vpop.f32.mrf.mxu0
    %v1246 = vadd.f32 %v562, %v1245
    %v1247 = vpop.f32.mrf.mxu0
    %1248 = vmatprep.mubr.f32.mxu0 0.0
    %1249 = vmatmul.mubr.f32.gmra.mxu0 %v919
    %v1250 = vpop.f32.mrf.mxu0
    %v1251 = vadd.f32 %v567, %v1250
    %v1252 = vpop.f32.mrf.mxu0
    %1253 = vmatprep.mubr.f32.mxu0 0.0
    %1254 = vmatmul.mubr.f32.gmra.mxu0 %v922
    %v1255 = vpop.f32.mrf.mxu0
    %v1256 = vadd.f32 %v572, %v1255
    %v1257 = vpop.f32.mrf.mxu0
    %1258 = vmatprep.mubr.f32.mxu0 0.0
    %1259 = vmatmul.mubr.f32.gmra.mxu0 %v925
    %v1260 = vpop.f32.mrf.mxu0
    %v1261 = vadd.f32 %v577, %v1260
    %v1262 = vpop.f32.mrf.mxu0
    %1263 = vmatprep.mubr.f32.mxu0 0.0
    %1264 = vmatmul.mubr.f32.gmra.mxu0 %v928
    %v1265 = vpop.f32.mrf.mxu0
    %v1266 = vadd.f32 %v582, %v1265
    %v1267 = vpop.f32.mrf.mxu0
    %1268 = vmatprep.mubr.f32.mxu0 0.0
    %1269 = vmatmul.mubr.f32.gmra.mxu0 %v931
    %v1270 = vpop.f32.mrf.mxu0
    %v1271 = vadd.f32 %v587, %v1270
    %v1272 = vpop.f32.mrf.mxu0
    %1273 = vmatprep.mubr.f32.mxu0 0.0
    %1274 = vmatmul.mubr.f32.gmra.mxu0 %v934
    %v1275 = vpop.f32.mrf.mxu0
    %v1276 = vadd.f32 %v592, %v1275
    %v1277 = vpop.f32.mrf.mxu0
    %1278 = vmatprep.mubr.f32.mxu0 0.0
    %1279 = vmatmul.mubr.f32.gmra.mxu0 %v937
    %v1280 = vpop.f32.mrf.mxu0
    %v1281 = vadd.f32 %v597, %v1280
    %v1282 = vpop.f32.mrf.mxu0
    %1283 = vmatprep.mubr.f32.mxu0 0.0
    %1284 = vmatmul.mubr.f32.gmra.mxu0 %v940
    %v1285 = vpop.f32.mrf.mxu0
    %v1286 = vadd.f32 %v602, %v1285
    %v1287 = vpop.f32.mrf.mxu0
    %1288 = vmatprep.mubr.f32.mxu0 0.0
    %1289 = vmatmul.mubr.f32.gmra.mxu0 %v943
    %v1290 = vpop.f32.mrf.mxu0
    %v1291 = vadd.f32 %v607, %v1290
    %v1292 = vpop.f32.mrf.mxu0
    %1293 = vmatprep.mubr.f32.mxu0 0.0
    %1294 = vmatmul.mubr.f32.gmra.mxu0 %v946
    %v1295 = vpop.f32.mrf.mxu0
    %v1296 = vadd.f32 %v612, %v1295
    %v1297 = vpop.f32.mrf.mxu0
    %1298 = vmatprep.mubr.f32.mxu0 0.0
    %1299 = vmatmul.mubr.f32.gmra.mxu0 %v949
    %v1300 = vpop.f32.mrf.mxu0
    %v1301 = vadd.f32 %v617, %v1300
    %v1302 = vpop.f32.mrf.mxu0
    %1303 = vmatprep.mubr.f32.mxu0 0.0
    %1304 = vmatmul.mubr.f32.gmra.mxu0 %v952
    %v1305 = vpop.f32.mrf.mxu0
    %v1306 = vadd.f32 %v622, %v1305
    %v1307 = vpop.f32.mrf.mxu0
    %1308 = vmatprep.mubr.f32.mxu0 0.0
    %1309 = vmatmul.mubr.f32.gmra.mxu0 %v955
    %v1310 = vpop.f32.mrf.mxu0
    %v1311 = vadd.f32 %v627, %v1310
    %v1312 = vpop.f32.mrf.mxu0
    %1313 = vmatprep.mubr.f32.mxu0 0.0
    %1314 = vmatmul.mubr.f32.gmra.mxu0 %v958
    %v1315 = vpop.f32.mrf.mxu0
    %v1316 = vadd.f32 %v632, %v1315
    %v1317 = vpop.f32.mrf.mxu0
    %1318 = vmatprep.mubr.f32.mxu0 0.0
    %1319 = vmatmul.mubr.f32.gmra.mxu0 %v961
    %v1320 = vpop.f32.mrf.mxu0
    %v1321 = vadd.f32 %v637, %v1320
    %v1322 = vpop.f32.mrf.mxu0
    %1323 = vmatprep.mubr.f32.mxu0 0.0
    %1324 = vmatmul.mubr.f32.gmra.mxu0 %v964
    %v1325 = vpop.f32.mrf.mxu0
    %v1326 = vadd.f32 %v642, %v1325
    %v1327 = vpop.f32.mrf.mxu0
    %1328 = vmatprep.mubr.f32.mxu0 0.0
    %1329 = vmatmul.mubr.f32.gmra.mxu0 %v967
    %v1330 = vpop.f32.mrf.mxu0
    %v1331 = vadd.f32 %v647, %v1330
    %v1332 = vpop.f32.mrf.mxu0
    %1333 = vmatprep.mubr.f32.mxu0 0.0
    %1334 = vmatmul.mubr.f32.gmra.mxu0 %v970
    %v1335 = vpop.f32.mrf.mxu0
    %v1336 = vadd.f32 %v652, %v1335
    %v1337 = vpop.f32.mrf.mxu0
    %1338 = vmatprep.mubr.f32.mxu0 0.0
    %1339 = vmatmul.mubr.f32.gmra.mxu0 %v973
    %v1340 = vpop.f32.mrf.mxu0
    %v1341 = vadd.f32 %v657, %v1340
    %v1342 = vpop.f32.mrf.mxu0
    %1343 = vmatprep.mubr.f32.mxu0 0.0
    %1344 = vmatmul.mubr.f32.gmra.mxu0 %v976
    %v1345 = vpop.f32.mrf.mxu0
    %v1346 = vadd.f32 %v662, %v1345
    %v1347 = vpop.f32.mrf.mxu0
    %1348 = vmatprep.mubr.f32.mxu0 0.0
    %1349 = vmatmul.mubr.f32.gmra.mxu0 %v979
    %v1350 = vpop.f32.mrf.mxu0
    %v1351 = vadd.f32 %v667, %v1350
    %v1352 = vpop.f32.mrf.mxu0
    %1353 = vmatprep.mubr.f32.mxu0 0.0
    %1354 = vmatmul.mubr.f32.gmra.mxu0 %v982
    %v1355 = vpop.f32.mrf.mxu0
    %v1356 = vadd.f32 %v672, %v1355
    %v1357 = vpop.f32.mrf.mxu0
    %1358 = vmatprep.mubr.f32.mxu0 0.0
    %1359 = vmatmul.mubr.f32.gmra.mxu0 %v985
    %v1360 = vpop.f32.mrf.mxu0
    %v1361 = vadd.f32 %v677, %v1360
    %v1362 = vpop.f32.mrf.mxu0
    %1363 = vmatprep.mubr.f32.mxu0 0.0
    %1364 = vmatmul.mubr.f32.gmra.mxu0 %v988
    %v1365 = vpop.f32.mrf.mxu0
    %v1366 = vadd.f32 %v682, %v1365
    %v1367 = vpop.f32.mrf.mxu0
    %1368 = vmatprep.mubr.f32.mxu0 0.0
    %1369 = vmatmul.mubr.f32.gmra.mxu0 %v991
    %v1370 = vpop.f32.mrf.mxu0
    %v1371 = vadd.f32 %v687, %v1370
    %v1372 = vpop.f32.mrf.mxu0
    %1373 = vmatprep.mubr.f32.mxu0 0.0
    %1374 = vmatmul.mubr.f32.gmra.mxu0 %v994
    %v1375 = vpop.f32.mrf.mxu0
    %v1376 = vadd.f32 %v692, %v1375
    %v1377 = vpop.f32.mrf.mxu0
    %1378 = vmatprep.mubr.f32.mxu0 0.0
    %1379 = vmatmul.mubr.f32.gmra.mxu0 %v997
    %v1380 = vpop.f32.mrf.mxu0
    %v1381 = vadd.f32 %v697, %v1380
    %v1382 = vpop.f32.mrf.mxu0
    %1383 = vmatprep.mubr.f32.mxu0 0.0
    %1384 = vmatmul.mubr.f32.gmra.mxu0 %v1000
    %v1385 = vpop.f32.mrf.mxu0
    %v1386 = vadd.f32 %v702, %v1385
    %v1387 = vpop.f32.mrf.mxu0
    %1388 = vmatprep.mubr.f32.mxu0 0.0
    %1389 = vmatmul.mubr.f32.gmra.mxu0 %v1003
    %v1390 = vpop.f32.mrf.mxu0
    %v1391 = vadd.f32 %v707, %v1390
    %v1392 = vpop.f32.mrf.mxu0
    %1393 = vmatprep.mubr.f32.mxu0 0.0
    %1394 = vmatmul.mubr.f32.gmra.mxu0 %v1006
    %v1395 = vpop.f32.mrf.mxu0
    %v1396 = vadd.f32 %v712, %v1395
    %v1397 = vpop.f32.mrf.mxu0
    %1398 = vmatprep.mubr.f32.mxu0 0.0
    %1399 = vmatmul.mubr.f32.gmra.mxu0 %v1009
    %v1400 = vpop.f32.mrf.mxu0
    %v1401 = vadd.f32 %v717, %v1400
    %v1402 = vpop.f32.mrf.mxu0
    %1403 = vmatprep.mubr.f32.mxu0 0.0
    %1404 = vmatmul.mubr.f32.gmra.mxu0 %v1012
    %v1405 = vpop.f32.mrf.mxu0
    %v1406 = vadd.f32 %v722, %v1405
    %v1407 = vpop.f32.mrf.mxu0
    %1408 = vmatprep.mubr.f32.mxu0 0.0
    %1409 = vmatmul.mubr.f32.gmra.mxu0 %v1015
    %v1410 = vpop.f32.mrf.mxu0
    %v1411 = vadd.f32 %v727, %v1410
    %v1412 = vpop.f32.mrf.mxu0
    %1413 = vmatprep.mubr.f32.mxu0 0.0
    %1414 = vmatmul.mubr.f32.gmra.mxu0 %v1018
    %v1415 = vpop.f32.mrf.mxu0
    %v1416 = vadd.f32 %v732, %v1415
    %v1417 = vpop.f32.mrf.mxu0
    %1418 = vmatprep.mubr.f32.mxu0 0.0
    %1419 = vmatmul.mubr.f32.gmra.mxu0 %v1021
    %v1420 = vpop.f32.mrf.mxu0
    %v1421 = vadd.f32 %v737, %v1420
    %v1422 = vpop.f32.mrf.mxu0
    %1423 = vmatprep.mubr.f32.mxu0 0.0
    %1424 = vmatmul.mubr.f32.gmra.mxu0 %v1024
    %v1425 = vpop.f32.mrf.mxu0
    %v1426 = vadd.f32 %v742, %v1425
    %v1427 = vpop.f32.mrf.mxu0
    %1428 = vmatprep.mubr.f32.mxu0 0.0
    %1429 = vmatmul.mubr.f32.gmra.mxu0 %v1027
    %v1430 = vpop.f32.mrf.mxu0
    %v1431 = vadd.f32 %v747, %v1430
    %v1432 = vpop.f32.mrf.mxu0
    %1433 = vmatprep.mubr.f32.mxu0 0.0
    %1434 = vmatmul.mubr.f32.gmra.mxu0 %v1030
    %v1435 = vpop.f32.mrf.mxu0
    %v1436 = vadd.f32 %v752, %v1435
    %v1437 = vpop.f32.mrf.mxu0
    %1438 = vmatprep.mubr.f32.mxu0 0.0
    %1439 = vmatmul.mubr.f32.gmra.mxu0 %v1033
    %v1440 = vpop.f32.mrf.mxu0
    %v1441 = vadd.f32 %v757, %v1440
    %v1442 = vpop.f32.mrf.mxu0
    %1443 = vmatprep.mubr.f32.mxu0 0.0
    %1444 = vmatmul.mubr.f32.gmra.mxu0 %v1036
    %v1445 = vpop.f32.mrf.mxu0
    %v1446 = vadd.f32 %v762, %v1445
    %v1447 = vpop.f32.mrf.mxu0
    %1448 = vmatprep.mubr.f32.mxu0 0.0
    %1449 = vmatmul.mubr.f32.gmra.mxu0 %v1039
    %v1450 = vpop.f32.mrf.mxu0
    %v1451 = vadd.f32 %v767, %v1450
    %v1452 = vpop.f32.mrf.mxu0
    %1453 = vmatprep.mubr.f32.mxu0 0.0
    %1454 = vmatmul.mubr.f32.gmra.mxu0 %v1042
    %v1455 = vpop.f32.mrf.mxu0
    %v1456 = vadd.f32 %v772, %v1455
    %v1457 = vpop.f32.mrf.mxu0
    %1458 = vmatprep.mubr.f32.mxu0 0.0
    %1459 = vmatmul.mubr.f32.gmra.mxu0 %v1045
    %v1460 = vpop.f32.mrf.mxu0
    %v1461 = vadd.f32 %v777, %v1460
    %v1462 = vpop.f32.mrf.mxu0
    %1463 = vmatprep.mubr.f32.mxu0 0.0
    %1464 = vmatmul.mubr.f32.gmra.mxu0 %v1048
    %v1465 = vpop.f32.mrf.mxu0
    %v1466 = vadd.f32 %v782, %v1465
    %v1467 = vpop.f32.mrf.mxu0
    %1468 = vmatprep.mubr.f32.mxu0 0.0
    %1469 = vmatmul.mubr.f32.gmra.mxu0 %v1051
    %v1470 = vpop.f32.mrf.mxu0
    %v1471 = vadd.f32 %v787, %v1470
    %v1472 = vpop.f32.mrf.mxu0
    %1473 = vmatprep.mubr.f32.mxu0 0.0
    %1474 = vmatmul.mubr.f32.gmra.mxu0 %v1054
    %v1475 = vpop.f32.mrf.mxu0
    %v1476 = vadd.f32 %v792, %v1475
    %v1477 = vpop.f32.mrf.mxu0
    %1478 = vmatprep.mubr.f32.mxu0 0.0
    %1479 = vmatmul.mubr.f32.gmra.mxu0 %v1057
    %v1480 = vpop.f32.mrf.mxu0
    %v1481 = vadd.f32 %v797, %v1480
    %v1482 = vpop.f32.mrf.mxu0
    %1483 = vmatprep.mubr.f32.mxu0 0.0
    %1484 = vmatmul.mubr.f32.gmra.mxu0 %v1060
    %v1485 = vpop.f32.mrf.mxu0
    %v1486 = vadd.f32 %v802, %v1485
    %v1487 = vpop.f32.mrf.mxu0
    %1488 = vmatprep.mubr.f32.mxu0 0.0
    %1489 = vmatmul.mubr.f32.gmra.mxu0 %v1063
    %v1490 = vpop.f32.mrf.mxu0
    %v1491 = vadd.f32 %v807, %v1490
    %v1492 = vpop.f32.mrf.mxu0
    %1493 = vmatprep.mubr.f32.mxu0 0.0
    %1494 = vmatmul.mubr.f32.gmra.mxu0 %v1066
    %v1495 = vpop.f32.mrf.mxu0
    %v1496 = vadd.f32 %v812, %v1495
    %v1497 = vpop.f32.mrf.mxu0
    %1498 = vmatprep.mubr.f32.mxu0 0.0
    %1499 = vmatmul.mubr.f32.gmra.mxu0 %v1069
    %v1500 = vpop.f32.mrf.mxu0
    %v1501 = vadd.f32 %v817, %v1500
    %v1502 = vpop.f32.mrf.mxu0
    %1503 = vmatprep.mubr.f32.mxu0 0.0
    %1504 = vmatmul.mubr.f32.gmra.mxu0 %v1072
    %v1505 = vpop.f32.mrf.mxu0
    %v1506 = vadd.f32 %v822, %v1505
    %v1507 = vpop.f32.mrf.mxu0
    %1508 = vmatprep.mubr.f32.mxu0 0.0
    %1509 = vmatmul.mubr.f32.gmra.mxu0 %v1075
    %v1510 = vpop.f32.mrf.mxu0
    %v1511 = vadd.f32 %v827, %v1510
    %v1512 = vpop.f32.mrf.mxu0
    %1513 = vmatprep.mubr.f32.mxu0 0.0
    %1514 = vmatmul.mubr.f32.gmra.mxu0 %v1078
    %v1515 = vpop.f32.mrf.mxu0
    %v1516 = vadd.f32 %v832, %v1515
    %v1517 = vpop.f32.mrf.mxu0
    %1518 = vmatprep.mubr.f32.mxu0 0.0
    %1519 = vmatmul.mubr.f32.gmra.mxu0 %v1081
    %v1520 = vpop.f32.mrf.mxu0
    %v1521 = vadd.f32 %v837, %v1520
    %v1522 = vpop.f32.mrf.mxu0
    %1523 = vmatprep.mubr.f32.mxu0 0.0
    %1524 = vmatmul.mubr.f32.gmra.mxu0 %v1084
    %v1525 = vpop.f32.mrf.mxu0
    %v1526 = vadd.f32 %v842, %v1525
    %v1527 = vpop.f32.mrf.mxu0
    %1528 = vmatprep.mubr.f32.mxu0 0.0
    %1529 = vmatmul.mubr.f32.gmra.mxu0 %v1087
    %v1530 = vpop.f32.mrf.mxu0
    %v1531 = vadd.f32 %v847, %v1530
    %v1532 = vpop.f32.mrf.mxu0
    %1533 = vmatprep.mubr.f32.mxu0 0.0
    %1534 = vmatmul.mubr.f32.gmra.mxu0 %v1090
    %v1535 = vpop.f32.mrf.mxu0
    %v1536 = vadd.f32 %v852, %v1535
    %v1537 = vpop.f32.mrf.mxu0
    %1538 = vmatprep.mubr.f32.mxu0 0.0
    %1539 = vmatmul.mubr.f32.gmra.mxu0 %v1093
    %v1540 = vpop.f32.mrf.mxu0
    %v1541 = vadd.f32 %v857, %v1540
    %v1542 = vpop.f32.mrf.mxu0
    %1543 = vmatprep.mubr.f32.mxu0 0.0
    %1544 = vmatmul.mubr.f32.gmra.mxu0 %v1096
    %v1545 = vpop.f32.mrf.mxu0
    %v1546 = vadd.f32 %v862, %v1545
    %v1547 = vpop.f32.mrf.mxu0
    %1548 = vmatprep.mubr.f32.mxu0 0.0
    %1549 = vmatmul.mubr.f32.gmra.mxu0 %v1099
    %v1550 = vpop.f32.mrf.mxu0
    %v1551 = vadd.f32 %v867, %v1550
    %v1552 = vpop.f32.mrf.mxu0
    %1553 = vdwg.mxu0
    %v1554 = vld [vmem:[%s0 + $0x2] sm:$0xff]
    %v1555 = vld [vmem:[%s0 + $0xa] sm:$0xff]
    %v1556 = vld [vmem:[%s0 + $0x12] sm:$0xff]
    %v1557 = vld [vmem:[%s0 + $0x1a] sm:$0xff]
    %v1558 = vld [vmem:[%s0 + $0x22] sm:$0xff]
    %v1559 = vld [vmem:[%s0 + $0x2a] sm:$0xff]
    %v1560 = vld [vmem:[%s0 + $0x32] sm:$0xff]
    %v1561 = vld [vmem:[%s0 + $0x3a] sm:$0xff]
    %v1562 = vld [vmem:[%s0 + $0x42] sm:$0xff]
    %v1563 = vld [vmem:[%s0 + $0x4a] sm:$0xff]
    %v1564 = vld [vmem:[%s0 + $0x52] sm:$0xff]
    %v1565 = vld [vmem:[%s0 + $0x5a] sm:$0xff]
    %v1566 = vld [vmem:[%s0 + $0x62] sm:$0xff]
    %v1567 = vld [vmem:[%s0 + $0x6a] sm:$0xff]
    %v1568 = vld [vmem:[%s0 + $0x72] sm:$0xff]
    %v1569 = vld [vmem:[%s0 + $0x7a] sm:$0xff]
    %v1570 = vld [vmem:[%s0 + $0x82] sm:$0xff]
    %v1571 = vld [vmem:[%s0 + $0x8a] sm:$0xff]
    %v1572 = vld [vmem:[%s0 + $0x92] sm:$0xff]
    %v1573 = vld [vmem:[%s0 + $0x9a] sm:$0xff]
    %v1574 = vld [vmem:[%s0 + $0xa2] sm:$0xff]
    %v1575 = vld [vmem:[%s0 + $0xaa] sm:$0xff]
    %v1576 = vld [vmem:[%s0 + $0xb2] sm:$0xff]
    %v1577 = vld [vmem:[%s0 + $0xba] sm:$0xff]
    %v1578 = vld [vmem:[%s0 + $0xc2] sm:$0xff]
    %v1579 = vld [vmem:[%s0 + $0xca] sm:$0xff]
    %v1580 = vld [vmem:[%s0 + $0xd2] sm:$0xff]
    %v1581 = vld [vmem:[%s0 + $0xda] sm:$0xff]
    %v1582 = vld [vmem:[%s0 + $0xe2] sm:$0xff]
    %v1583 = vld [vmem:[%s0 + $0xea] sm:$0xff]
    %v1584 = vld [vmem:[%s0 + $0xf2] sm:$0xff]
    %v1585 = vld [vmem:[%s0 + $0xfa] sm:$0xff]
    %v1586 = vld [vmem:[%s0 + $0x102] sm:$0xff]
    %v1587 = vld [vmem:[%s0 + $0x10a] sm:$0xff]
    %v1588 = vld [vmem:[%s0 + $0x112] sm:$0xff]
    %v1589 = vld [vmem:[%s0 + $0x11a] sm:$0xff]
    %v1590 = vld [vmem:[%s0 + $0x122] sm:$0xff]
    %v1591 = vld [vmem:[%s0 + $0x12a] sm:$0xff]
    %v1592 = vld [vmem:[%s0 + $0x132] sm:$0xff]
    %v1593 = vld [vmem:[%s0 + $0x13a] sm:$0xff]
    %v1594 = vld [vmem:[%s0 + $0x142] sm:$0xff]
    %v1595 = vld [vmem:[%s0 + $0x14a] sm:$0xff]
    %v1596 = vld [vmem:[%s0 + $0x152] sm:$0xff]
    %v1597 = vld [vmem:[%s0 + $0x15a] sm:$0xff]
    %v1598 = vld [vmem:[%s0 + $0x162] sm:$0xff]
    %v1599 = vld [vmem:[%s0 + $0x16a] sm:$0xff]
    %v1600 = vld [vmem:[%s0 + $0x172] sm:$0xff]
    %v1601 = vld [vmem:[%s0 + $0x17a] sm:$0xff]
    %v1602 = vld [vmem:[%s0 + $0x182] sm:$0xff]
    %v1603 = vld [vmem:[%s0 + $0x18a] sm:$0xff]
    %v1604 = vld [vmem:[%s0 + $0x192] sm:$0xff]
    %v1605 = vld [vmem:[%s0 + $0x19a] sm:$0xff]
    %v1606 = vld [vmem:[%s0 + $0x1a2] sm:$0xff]
    %v1607 = vld [vmem:[%s0 + $0x1aa] sm:$0xff]
    %v1608 = vld [vmem:[%s0 + $0x1b2] sm:$0xff]
    %v1609 = vld [vmem:[%s0 + $0x1ba] sm:$0xff]
    %v1610 = vld [vmem:[%s0 + $0x1c2] sm:$0xff]
    %v1611 = vld [vmem:[%s0 + $0x1ca] sm:$0xff]
    %v1612 = vld [vmem:[%s0 + $0x1d2] sm:$0xff]
    %v1613 = vld [vmem:[%s0 + $0x1da] sm:$0xff]
    %v1614 = vld [vmem:[%s0 + $0x1e2] sm:$0xff]
    %v1615 = vld [vmem:[%s0 + $0x1ea] sm:$0xff]
    %v1616 = vld [vmem:[%s0 + $0x1f2] sm:$0xff]
    %v1617 = vld [vmem:[%s0 + $0x1fa] sm:$0xff]
    %v1618 = vld [vmem:[%s0 + $0x202] sm:$0xff]
    %v1619 = vld [vmem:[%s0 + $0x20a] sm:$0xff]
    %v1620 = vld [vmem:[%s0 + $0x212] sm:$0xff]
    %v1621 = vld [vmem:[%s0 + $0x21a] sm:$0xff]
    %v1622 = vld [vmem:[%s0 + $0x222] sm:$0xff]
    %v1623 = vld [vmem:[%s0 + $0x22a] sm:$0xff]
    %v1624 = vld [vmem:[%s0 + $0x232] sm:$0xff]
    %v1625 = vld [vmem:[%s0 + $0x23a] sm:$0xff]
    %v1626 = vld [vmem:[%s0 + $0x242] sm:$0xff]
    %v1627 = vld [vmem:[%s0 + $0x24a] sm:$0xff]
    %v1628 = vld [vmem:[%s0 + $0x252] sm:$0xff]
    %v1629 = vld [vmem:[%s0 + $0x25a] sm:$0xff]
    %v1630 = vld [vmem:[%s0 + $0x262] sm:$0x3]
    %s1631 = scalar_lea.vmem %s1, 8
    %v1632 = vld [vmem:[%s1631] sm:$0xf]
    %v1634 = vsel %vm184, %v1554, 0
    %v1637 = vsel %vm184, %v1555, 0
    %v1640 = vsel %vm184, %v1556, 0
    %v1643 = vsel %vm184, %v1557, 0
    %v1646 = vsel %vm184, %v1558, 0
    %v1649 = vsel %vm184, %v1559, 0
    %v1652 = vsel %vm184, %v1560, 0
    %v1655 = vsel %vm184, %v1561, 0
    %v1658 = vsel %vm184, %v1562, 0
    %v1661 = vsel %vm184, %v1563, 0
    %v1664 = vsel %vm184, %v1564, 0
    %v1667 = vsel %vm184, %v1565, 0
    %v1670 = vsel %vm184, %v1566, 0
    %v1673 = vsel %vm184, %v1567, 0
    %v1676 = vsel %vm184, %v1568, 0
    %v1679 = vsel %vm184, %v1569, 0
    %v1682 = vsel %vm184, %v1570, 0
    %v1685 = vsel %vm184, %v1571, 0
    %v1688 = vsel %vm184, %v1572, 0
    %v1691 = vsel %vm184, %v1573, 0
    %v1694 = vsel %vm184, %v1574, 0
    %v1697 = vsel %vm184, %v1575, 0
    %v1700 = vsel %vm184, %v1576, 0
    %v1703 = vsel %vm184, %v1577, 0
    %v1706 = vsel %vm184, %v1578, 0
    %v1709 = vsel %vm184, %v1579, 0
    %v1712 = vsel %vm184, %v1580, 0
    %v1715 = vsel %vm184, %v1581, 0
    %v1718 = vsel %vm184, %v1582, 0
    %v1721 = vsel %vm184, %v1583, 0
    %v1724 = vsel %vm184, %v1584, 0
    %v1727 = vsel %vm184, %v1585, 0
    %v1730 = vsel %vm184, %v1586, 0
    %v1733 = vsel %vm184, %v1587, 0
    %v1736 = vsel %vm184, %v1588, 0
    %v1739 = vsel %vm184, %v1589, 0
    %v1742 = vsel %vm184, %v1590, 0
    %v1745 = vsel %vm184, %v1591, 0
    %v1748 = vsel %vm184, %v1592, 0
    %v1751 = vsel %vm184, %v1593, 0
    %v1754 = vsel %vm184, %v1594, 0
    %v1757 = vsel %vm184, %v1595, 0
    %v1760 = vsel %vm184, %v1596, 0
    %v1763 = vsel %vm184, %v1597, 0
    %v1766 = vsel %vm184, %v1598, 0
    %v1769 = vsel %vm184, %v1599, 0
    %v1772 = vsel %vm184, %v1600, 0
    %v1775 = vsel %vm184, %v1601, 0
    %v1778 = vsel %vm184, %v1602, 0
    %v1781 = vsel %vm184, %v1603, 0
    %v1784 = vsel %vm184, %v1604, 0
    %v1787 = vsel %vm184, %v1605, 0
    %v1790 = vsel %vm184, %v1606, 0
    %v1793 = vsel %vm184, %v1607, 0
    %v1796 = vsel %vm184, %v1608, 0
    %v1799 = vsel %vm184, %v1609, 0
    %v1802 = vsel %vm184, %v1610, 0
    %v1805 = vsel %vm184, %v1611, 0
    %v1808 = vsel %vm184, %v1612, 0
    %v1811 = vsel %vm184, %v1613, 0
    %v1814 = vsel %vm184, %v1614, 0
    %v1817 = vsel %vm184, %v1615, 0
    %v1820 = vsel %vm184, %v1616, 0
    %v1823 = vsel %vm184, %v1617, 0
    %v1826 = vsel %vm184, %v1618, 0
    %v1829 = vsel %vm184, %v1619, 0
    %v1832 = vsel %vm184, %v1620, 0
    %v1835 = vsel %vm184, %v1621, 0
    %v1838 = vsel %vm184, %v1622, 0
    %v1841 = vsel %vm184, %v1623, 0
    %v1844 = vsel %vm184, %v1624, 0
    %v1847 = vsel %vm184, %v1625, 0
    %v1850 = vsel %vm184, %v1626, 0
    %v1853 = vsel %vm184, %v1627, 0
    %v1856 = vsel %vm184, %v1628, 0
    %v1859 = vsel %vm184, %v1629, 0
    %v1862 = vsel %vm184, %v1630, 0
    %v1865 = vsel %vm416, %v1632, 0
    %1867 = vmatprep.subr.mxu0 0.0
    %1868 = vmatpush1.msra.mxu0 0.0
    %1869 = vmatprep.subr.mxu0 0.0
    %1870 = vmatpush1.msra.mxu0 0.0
    %1871 = vmatprep.subr.mxu0 0.0
    %1872 = vmatpush1.msra.mxu0 0.0
    %1873 = vmatprep.subr.mxu0 0.0
    %1874 = vmatpush1.msra.mxu0 0.0
    %1875 = vmatprep.subr.mxu0 0.0
    %1876 = vmatpush1.msra.mxu0 0.0
    %1877 = vmatprep.subr.mxu0 0.0
    %1878 = vmatpush1.msra.mxu0 0.0
    %1879 = vmatprep.subr.mxu0 0.0
    %1880 = vmatpush1.msra.mxu0 0.0
    %1881 = vmatprep.subr.mxu0 0.0
    %1882 = vmatpush1.msra.mxu0 0.0
    %1883 = vmatprep.subr.mxu0 0.0
    %1884 = vmatpush1.msra.mxu0 0.0
    %1885 = vmatprep.subr.mxu0 0.0
    %1886 = vmatpush1.msra.mxu0 0.0
    %1887 = vmatprep.subr.mxu0 0.0
    %1888 = vmatpush1.msra.mxu0 0.0
    %1889 = vmatprep.subr.mxu0 0.0
    %1890 = vmatpush1.msra.mxu0 0.0
    %1891 = vmatprep.subr.mxu0 0.0
    %1892 = vmatpush1.msra.mxu0 0.0
    %1893 = vmatprep.subr.mxu0 0.0
    %1894 = vmatpush1.msra.mxu0 0.0
    %1895 = vmatprep.subr.mxu0 0.0
    %1896 = vmatpush1.msra.mxu0 0.0
    %1897 = vmatprep.subr.mxu0 0.0
    %1898 = vmatpush1.msra.mxu0 %v1865
    %1899 = vmatprep.subr.mxu0 0.0
    %1900 = vmatpush2.msra.mxu0 0.0
    %1901 = vmatprep.subr.mxu0 0.0
    %1902 = vmatpush2.msra.mxu0 0.0
    %1903 = vmatprep.subr.mxu0 0.0
    %1904 = vmatpush2.msra.mxu0 0.0
    %1905 = vmatprep.subr.mxu0 0.0
    %1906 = vmatpush2.msra.mxu0 0.0
    %1907 = vmatprep.subr.mxu0 0.0
    %1908 = vmatpush2.msra.mxu0 0.0
    %1909 = vmatprep.subr.mxu0 0.0
    %1910 = vmatpush2.msra.mxu0 0.0
    %1911 = vmatprep.subr.mxu0 0.0
    %1912 = vmatpush2.msra.mxu0 0.0
    %1913 = vmatprep.subr.mxu0 0.0
    %1914 = vmatpush2.msra.mxu0 0.0
    %1915 = vmatprep.subr.mxu0 0.0
    %1916 = vmatpush2.msra.mxu0 0.0
    %1917 = vmatprep.subr.mxu0 0.0
    %1918 = vmatpush2.msra.mxu0 0.0
    %1919 = vmatprep.subr.mxu0 0.0
    %1920 = vmatpush2.msra.mxu0 0.0
    %1921 = vmatprep.subr.mxu0 0.0
    %1922 = vmatpush2.msra.mxu0 0.0
    %1923 = vmatprep.subr.mxu0 0.0
    %1924 = vmatpush2.msra.mxu0 0.0
    %1925 = vmatprep.subr.mxu0 0.0
    %1926 = vmatpush2.msra.mxu0 0.0
    %1927 = vmatprep.subr.mxu0 0.0
    %1928 = vmatpush2.msra.mxu0 0.0
    %1929 = vmatprep.subr.mxu0 0.0
    %1930 = vmatpush2.msra.mxu0 0.0
    %1931 = vmatprep.mubr.f32.mxu0 0.0
    %1932 = vmatmul.mubr.f32.gmra.mxu0 %v1634
    %v1933 = vpop.f32.mrf.mxu0
    %v1934 = vadd.f32 0.0, %v1933
    %v1935 = vpop.f32.mrf.mxu0
    %1936 = vmatprep.mubr.f32.mxu0 0.0
    %1937 = vmatmul.mubr.f32.gmra.mxu0 %v1637
    %v1938 = vpop.f32.mrf.mxu0
    %v1939 = vadd.f32 0.0, %v1938
    %v1940 = vpop.f32.mrf.mxu0
    %1941 = vmatprep.mubr.f32.mxu0 0.0
    %1942 = vmatmul.mubr.f32.gmra.mxu0 %v1640
    %v1943 = vpop.f32.mrf.mxu0
    %v1944 = vadd.f32 0.0, %v1943
    %v1945 = vpop.f32.mrf.mxu0
    %1946 = vmatprep.mubr.f32.mxu0 0.0
    %1947 = vmatmul.mubr.f32.gmra.mxu0 %v1643
    %v1948 = vpop.f32.mrf.mxu0
    %v1949 = vadd.f32 0.0, %v1948
    %v1950 = vpop.f32.mrf.mxu0
    %1951 = vmatprep.mubr.f32.mxu0 0.0
    %1952 = vmatmul.mubr.f32.gmra.mxu0 %v1646
    %v1953 = vpop.f32.mrf.mxu0
    %v1954 = vadd.f32 0.0, %v1953
    %v1955 = vpop.f32.mrf.mxu0
    %1956 = vmatprep.mubr.f32.mxu0 0.0
    %1957 = vmatmul.mubr.f32.gmra.mxu0 %v1649
    %v1958 = vpop.f32.mrf.mxu0
    %v1959 = vadd.f32 0.0, %v1958
    %v1960 = vpop.f32.mrf.mxu0
    %1961 = vmatprep.mubr.f32.mxu0 0.0
    %1962 = vmatmul.mubr.f32.gmra.mxu0 %v1652
    %v1963 = vpop.f32.mrf.mxu0
    %v1964 = vadd.f32 0.0, %v1963
    %v1965 = vpop.f32.mrf.mxu0
    %1966 = vmatprep.mubr.f32.mxu0 0.0
    %1967 = vmatmul.mubr.f32.gmra.mxu0 %v1655
    %v1968 = vpop.f32.mrf.mxu0
    %v1969 = vadd.f32 0.0, %v1968
    %v1970 = vpop.f32.mrf.mxu0
    %1971 = vmatprep.mubr.f32.mxu0 0.0
    %1972 = vmatmul.mubr.f32.gmra.mxu0 %v1658
    %v1973 = vpop.f32.mrf.mxu0
    %v1974 = vadd.f32 0.0, %v1973
    %v1975 = vpop.f32.mrf.mxu0
    %1976 = vmatprep.mubr.f32.mxu0 0.0
    %1977 = vmatmul.mubr.f32.gmra.mxu0 %v1661
    %v1978 = vpop.f32.mrf.mxu0
    %v1979 = vadd.f32 0.0, %v1978
    %v1980 = vpop.f32.mrf.mxu0
    %1981 = vmatprep.mubr.f32.mxu0 0.0
    %1982 = vmatmul.mubr.f32.gmra.mxu0 %v1664
    %v1983 = vpop.f32.mrf.mxu0
    %v1984 = vadd.f32 0.0, %v1983
    %v1985 = vpop.f32.mrf.mxu0
    %1986 = vmatprep.mubr.f32.mxu0 0.0
    %1987 = vmatmul.mubr.f32.gmra.mxu0 %v1667
    %v1988 = vpop.f32.mrf.mxu0
    %v1989 = vadd.f32 0.0, %v1988
    %v1990 = vpop.f32.mrf.mxu0
    %1991 = vmatprep.mubr.f32.mxu0 0.0
    %1992 = vmatmul.mubr.f32.gmra.mxu0 %v1670
    %v1993 = vpop.f32.mrf.mxu0
    %v1994 = vadd.f32 0.0, %v1993
    %v1995 = vpop.f32.mrf.mxu0
    %1996 = vmatprep.mubr.f32.mxu0 0.0
    %1997 = vmatmul.mubr.f32.gmra.mxu0 %v1673
    %v1998 = vpop.f32.mrf.mxu0
    %v1999 = vadd.f32 0.0, %v1998
    %v2000 = vpop.f32.mrf.mxu0
    %2001 = vmatprep.mubr.f32.mxu0 0.0
    %2002 = vmatmul.mubr.f32.gmra.mxu0 %v1676
    %v2003 = vpop.f32.mrf.mxu0
    %v2004 = vadd.f32 0.0, %v2003
    %v2005 = vpop.f32.mrf.mxu0
    %2006 = vmatprep.mubr.f32.mxu0 0.0
    %2007 = vmatmul.mubr.f32.gmra.mxu0 %v1679
    %v2008 = vpop.f32.mrf.mxu0
    %v2009 = vadd.f32 0.0, %v2008
    %v2010 = vpop.f32.mrf.mxu0
    %2011 = vmatprep.mubr.f32.mxu0 0.0
    %2012 = vmatmul.mubr.f32.gmra.mxu0 %v1682
    %v2013 = vpop.f32.mrf.mxu0
    %v2014 = vadd.f32 0.0, %v2013
    %v2015 = vpop.f32.mrf.mxu0
    %2016 = vmatprep.mubr.f32.mxu0 0.0
    %2017 = vmatmul.mubr.f32.gmra.mxu0 %v1685
    %v2018 = vpop.f32.mrf.mxu0
    %v2019 = vadd.f32 0.0, %v2018
    %v2020 = vpop.f32.mrf.mxu0
    %2021 = vmatprep.mubr.f32.mxu0 0.0
    %2022 = vmatmul.mubr.f32.gmra.mxu0 %v1688
    %v2023 = vpop.f32.mrf.mxu0
    %v2024 = vadd.f32 0.0, %v2023
    %v2025 = vpop.f32.mrf.mxu0
    %2026 = vmatprep.mubr.f32.mxu0 0.0
    %2027 = vmatmul.mubr.f32.gmra.mxu0 %v1691
    %v2028 = vpop.f32.mrf.mxu0
    %v2029 = vadd.f32 0.0, %v2028
    %v2030 = vpop.f32.mrf.mxu0
    %2031 = vmatprep.mubr.f32.mxu0 0.0
    %2032 = vmatmul.mubr.f32.gmra.mxu0 %v1694
    %v2033 = vpop.f32.mrf.mxu0
    %v2034 = vadd.f32 0.0, %v2033
    %v2035 = vpop.f32.mrf.mxu0
    %2036 = vmatprep.mubr.f32.mxu0 0.0
    %2037 = vmatmul.mubr.f32.gmra.mxu0 %v1697
    %v2038 = vpop.f32.mrf.mxu0
    %v2039 = vadd.f32 0.0, %v2038
    %v2040 = vpop.f32.mrf.mxu0
    %2041 = vmatprep.mubr.f32.mxu0 0.0
    %2042 = vmatmul.mubr.f32.gmra.mxu0 %v1700
    %v2043 = vpop.f32.mrf.mxu0
    %v2044 = vadd.f32 0.0, %v2043
    %v2045 = vpop.f32.mrf.mxu0
    %2046 = vmatprep.mubr.f32.mxu0 0.0
    %2047 = vmatmul.mubr.f32.gmra.mxu0 %v1703
    %v2048 = vpop.f32.mrf.mxu0
    %v2049 = vadd.f32 0.0, %v2048
    %v2050 = vpop.f32.mrf.mxu0
    %2051 = vmatprep.mubr.f32.mxu0 0.0
    %2052 = vmatmul.mubr.f32.gmra.mxu0 %v1706
    %v2053 = vpop.f32.mrf.mxu0
    %v2054 = vadd.f32 0.0, %v2053
    %v2055 = vpop.f32.mrf.mxu0
    %2056 = vmatprep.mubr.f32.mxu0 0.0
    %2057 = vmatmul.mubr.f32.gmra.mxu0 %v1709
    %v2058 = vpop.f32.mrf.mxu0
    %v2059 = vadd.f32 0.0, %v2058
    %v2060 = vpop.f32.mrf.mxu0
    %2061 = vmatprep.mubr.f32.mxu0 0.0
    %2062 = vmatmul.mubr.f32.gmra.mxu0 %v1712
    %v2063 = vpop.f32.mrf.mxu0
    %v2064 = vadd.f32 0.0, %v2063
    %v2065 = vpop.f32.mrf.mxu0
    %2066 = vmatprep.mubr.f32.mxu0 0.0
    %2067 = vmatmul.mubr.f32.gmra.mxu0 %v1715
    %v2068 = vpop.f32.mrf.mxu0
    %v2069 = vadd.f32 0.0, %v2068
    %v2070 = vpop.f32.mrf.mxu0
    %2071 = vmatprep.mubr.f32.mxu0 0.0
    %2072 = vmatmul.mubr.f32.gmra.mxu0 %v1718
    %v2073 = vpop.f32.mrf.mxu0
    %v2074 = vadd.f32 0.0, %v2073
    %v2075 = vpop.f32.mrf.mxu0
    %2076 = vmatprep.mubr.f32.mxu0 0.0
    %2077 = vmatmul.mubr.f32.gmra.mxu0 %v1721
    %v2078 = vpop.f32.mrf.mxu0
    %v2079 = vadd.f32 0.0, %v2078
    %v2080 = vpop.f32.mrf.mxu0
    %2081 = vmatprep.mubr.f32.mxu0 0.0
    %2082 = vmatmul.mubr.f32.gmra.mxu0 %v1724
    %v2083 = vpop.f32.mrf.mxu0
    %v2084 = vadd.f32 0.0, %v2083
    %v2085 = vpop.f32.mrf.mxu0
    %2086 = vmatprep.mubr.f32.mxu0 0.0
    %2087 = vmatmul.mubr.f32.gmra.mxu0 %v1727
    %v2088 = vpop.f32.mrf.mxu0
    %v2089 = vadd.f32 0.0, %v2088
    %v2090 = vpop.f32.mrf.mxu0
    %2091 = vmatprep.mubr.f32.mxu0 0.0
    %2092 = vmatmul.mubr.f32.gmra.mxu0 %v1730
    %v2093 = vpop.f32.mrf.mxu0
    %v2094 = vadd.f32 0.0, %v2093
    %v2095 = vpop.f32.mrf.mxu0
    %2096 = vmatprep.mubr.f32.mxu0 0.0
    %2097 = vmatmul.mubr.f32.gmra.mxu0 %v1733
    %v2098 = vpop.f32.mrf.mxu0
    %v2099 = vadd.f32 0.0, %v2098
    %v2100 = vpop.f32.mrf.mxu0
    %2101 = vmatprep.mubr.f32.mxu0 0.0
    %2102 = vmatmul.mubr.f32.gmra.mxu0 %v1736
    %v2103 = vpop.f32.mrf.mxu0
    %v2104 = vadd.f32 0.0, %v2103
    %v2105 = vpop.f32.mrf.mxu0
    %2106 = vmatprep.mubr.f32.mxu0 0.0
    %2107 = vmatmul.mubr.f32.gmra.mxu0 %v1739
    %v2108 = vpop.f32.mrf.mxu0
    %v2109 = vadd.f32 0.0, %v2108
    %v2110 = vpop.f32.mrf.mxu0
    %2111 = vmatprep.mubr.f32.mxu0 0.0
    %2112 = vmatmul.mubr.f32.gmra.mxu0 %v1742
    %v2113 = vpop.f32.mrf.mxu0
    %v2114 = vadd.f32 0.0, %v2113
    %v2115 = vpop.f32.mrf.mxu0
    %2116 = vmatprep.mubr.f32.mxu0 0.0
    %2117 = vmatmul.mubr.f32.gmra.mxu0 %v1745
    %v2118 = vpop.f32.mrf.mxu0
    %v2119 = vadd.f32 0.0, %v2118
    %v2120 = vpop.f32.mrf.mxu0
    %2121 = vmatprep.mubr.f32.mxu0 0.0
    %2122 = vmatmul.mubr.f32.gmra.mxu0 %v1748
    %v2123 = vpop.f32.mrf.mxu0
    %v2124 = vadd.f32 0.0, %v2123
    %v2125 = vpop.f32.mrf.mxu0
    %2126 = vmatprep.mubr.f32.mxu0 0.0
    %2127 = vmatmul.mubr.f32.gmra.mxu0 %v1751
    %v2128 = vpop.f32.mrf.mxu0
    %v2129 = vadd.f32 0.0, %v2128
    %v2130 = vpop.f32.mrf.mxu0
    %2131 = vmatprep.mubr.f32.mxu0 0.0
    %2132 = vmatmul.mubr.f32.gmra.mxu0 %v1754
    %v2133 = vpop.f32.mrf.mxu0
    %v2134 = vadd.f32 0.0, %v2133
    %v2135 = vpop.f32.mrf.mxu0
    %2136 = vmatprep.mubr.f32.mxu0 0.0
    %2137 = vmatmul.mubr.f32.gmra.mxu0 %v1757
    %v2138 = vpop.f32.mrf.mxu0
    %v2139 = vadd.f32 0.0, %v2138
    %v2140 = vpop.f32.mrf.mxu0
    %2141 = vmatprep.mubr.f32.mxu0 0.0
    %2142 = vmatmul.mubr.f32.gmra.mxu0 %v1760
    %v2143 = vpop.f32.mrf.mxu0
    %v2144 = vadd.f32 0.0, %v2143
    %v2145 = vpop.f32.mrf.mxu0
    %2146 = vmatprep.mubr.f32.mxu0 0.0
    %2147 = vmatmul.mubr.f32.gmra.mxu0 %v1763
    %v2148 = vpop.f32.mrf.mxu0
    %v2149 = vadd.f32 0.0, %v2148
    %v2150 = vpop.f32.mrf.mxu0
    %2151 = vmatprep.mubr.f32.mxu0 0.0
    %2152 = vmatmul.mubr.f32.gmra.mxu0 %v1766
    %v2153 = vpop.f32.mrf.mxu0
    %v2154 = vadd.f32 0.0, %v2153
    %v2155 = vpop.f32.mrf.mxu0
    %2156 = vmatprep.mubr.f32.mxu0 0.0
    %2157 = vmatmul.mubr.f32.gmra.mxu0 %v1769
    %v2158 = vpop.f32.mrf.mxu0
    %v2159 = vadd.f32 0.0, %v2158
    %v2160 = vpop.f32.mrf.mxu0
    %2161 = vmatprep.mubr.f32.mxu0 0.0
    %2162 = vmatmul.mubr.f32.gmra.mxu0 %v1772
    %v2163 = vpop.f32.mrf.mxu0
    %v2164 = vadd.f32 0.0, %v2163
    %v2165 = vpop.f32.mrf.mxu0
    %2166 = vmatprep.mubr.f32.mxu0 0.0
    %2167 = vmatmul.mubr.f32.gmra.mxu0 %v1775
    %v2168 = vpop.f32.mrf.mxu0
    %v2169 = vadd.f32 0.0, %v2168
    %v2170 = vpop.f32.mrf.mxu0
    %2171 = vmatprep.mubr.f32.mxu0 0.0
    %2172 = vmatmul.mubr.f32.gmra.mxu0 %v1778
    %v2173 = vpop.f32.mrf.mxu0
    %v2174 = vadd.f32 0.0, %v2173
    %v2175 = vpop.f32.mrf.mxu0
    %2176 = vmatprep.mubr.f32.mxu0 0.0
    %2177 = vmatmul.mubr.f32.gmra.mxu0 %v1781
    %v2178 = vpop.f32.mrf.mxu0
    %v2179 = vadd.f32 0.0, %v2178
    %v2180 = vpop.f32.mrf.mxu0
    %2181 = vmatprep.mubr.f32.mxu0 0.0
    %2182 = vmatmul.mubr.f32.gmra.mxu0 %v1784
    %v2183 = vpop.f32.mrf.mxu0
    %v2184 = vadd.f32 0.0, %v2183
    %v2185 = vpop.f32.mrf.mxu0
    %2186 = vmatprep.mubr.f32.mxu0 0.0
    %2187 = vmatmul.mubr.f32.gmra.mxu0 %v1787
    %v2188 = vpop.f32.mrf.mxu0
    %v2189 = vadd.f32 0.0, %v2188
    %v2190 = vpop.f32.mrf.mxu0
    %2191 = vmatprep.mubr.f32.mxu0 0.0
    %2192 = vmatmul.mubr.f32.gmra.mxu0 %v1790
    %v2193 = vpop.f32.mrf.mxu0
    %v2194 = vadd.f32 0.0, %v2193
    %v2195 = vpop.f32.mrf.mxu0
    %2196 = vmatprep.mubr.f32.mxu0 0.0
    %2197 = vmatmul.mubr.f32.gmra.mxu0 %v1793
    %v2198 = vpop.f32.mrf.mxu0
    %v2199 = vadd.f32 0.0, %v2198
    %v2200 = vpop.f32.mrf.mxu0
    %2201 = vmatprep.mubr.f32.mxu0 0.0
    %2202 = vmatmul.mubr.f32.gmra.mxu0 %v1796
    %v2203 = vpop.f32.mrf.mxu0
    %v2204 = vadd.f32 0.0, %v2203
    %v2205 = vpop.f32.mrf.mxu0
    %2206 = vmatprep.mubr.f32.mxu0 0.0
    %2207 = vmatmul.mubr.f32.gmra.mxu0 %v1799
    %v2208 = vpop.f32.mrf.mxu0
    %v2209 = vadd.f32 0.0, %v2208
    %v2210 = vpop.f32.mrf.mxu0
    %2211 = vmatprep.mubr.f32.mxu0 0.0
    %2212 = vmatmul.mubr.f32.gmra.mxu0 %v1802
    %v2213 = vpop.f32.mrf.mxu0
    %v2214 = vadd.f32 0.0, %v2213
    %v2215 = vpop.f32.mrf.mxu0
    %2216 = vmatprep.mubr.f32.mxu0 0.0
    %2217 = vmatmul.mubr.f32.gmra.mxu0 %v1805
    %v2218 = vpop.f32.mrf.mxu0
    %v2219 = vadd.f32 0.0, %v2218
    %v2220 = vpop.f32.mrf.mxu0
    %2221 = vmatprep.mubr.f32.mxu0 0.0
    %2222 = vmatmul.mubr.f32.gmra.mxu0 %v1808
    %v2223 = vpop.f32.mrf.mxu0
    %v2224 = vadd.f32 0.0, %v2223
    %v2225 = vpop.f32.mrf.mxu0
    %2226 = vmatprep.mubr.f32.mxu0 0.0
    %2227 = vmatmul.mubr.f32.gmra.mxu0 %v1811
    %v2228 = vpop.f32.mrf.mxu0
    %v2229 = vadd.f32 0.0, %v2228
    %v2230 = vpop.f32.mrf.mxu0
    %2231 = vmatprep.mubr.f32.mxu0 0.0
    %2232 = vmatmul.mubr.f32.gmra.mxu0 %v1814
    %v2233 = vpop.f32.mrf.mxu0
    %v2234 = vadd.f32 0.0, %v2233
    %v2235 = vpop.f32.mrf.mxu0
    %2236 = vmatprep.mubr.f32.mxu0 0.0
    %2237 = vmatmul.mubr.f32.gmra.mxu0 %v1817
    %v2238 = vpop.f32.mrf.mxu0
    %v2239 = vadd.f32 0.0, %v2238
    %v2240 = vpop.f32.mrf.mxu0
    %2241 = vmatprep.mubr.f32.mxu0 0.0
    %2242 = vmatmul.mubr.f32.gmra.mxu0 %v1820
    %v2243 = vpop.f32.mrf.mxu0
    %v2244 = vadd.f32 0.0, %v2243
    %v2245 = vpop.f32.mrf.mxu0
    %2246 = vmatprep.mubr.f32.mxu0 0.0
    %2247 = vmatmul.mubr.f32.gmra.mxu0 %v1823
    %v2248 = vpop.f32.mrf.mxu0
    %v2249 = vadd.f32 0.0, %v2248
    %v2250 = vpop.f32.mrf.mxu0
    %2251 = vmatprep.mubr.f32.mxu0 0.0
    %2252 = vmatmul.mubr.f32.gmra.mxu0 %v1826
    %v2253 = vpop.f32.mrf.mxu0
    %v2254 = vadd.f32 0.0, %v2253
    %v2255 = vpop.f32.mrf.mxu0
    %2256 = vmatprep.mubr.f32.mxu0 0.0
    %2257 = vmatmul.mubr.f32.gmra.mxu0 %v1829
    %v2258 = vpop.f32.mrf.mxu0
    %v2259 = vadd.f32 0.0, %v2258
    %v2260 = vpop.f32.mrf.mxu0
    %2261 = vmatprep.mubr.f32.mxu0 0.0
    %2262 = vmatmul.mubr.f32.gmra.mxu0 %v1832
    %v2263 = vpop.f32.mrf.mxu0
    %v2264 = vadd.f32 0.0, %v2263
    %v2265 = vpop.f32.mrf.mxu0
    %2266 = vmatprep.mubr.f32.mxu0 0.0
    %2267 = vmatmul.mubr.f32.gmra.mxu0 %v1835
    %v2268 = vpop.f32.mrf.mxu0
    %v2269 = vadd.f32 0.0, %v2268
    %v2270 = vpop.f32.mrf.mxu0
    %2271 = vmatprep.mubr.f32.mxu0 0.0
    %2272 = vmatmul.mubr.f32.gmra.mxu0 %v1838
    %v2273 = vpop.f32.mrf.mxu0
    %v2274 = vadd.f32 0.0, %v2273
    %v2275 = vpop.f32.mrf.mxu0
    %2276 = vmatprep.mubr.f32.mxu0 0.0
    %2277 = vmatmul.mubr.f32.gmra.mxu0 %v1841
    %v2278 = vpop.f32.mrf.mxu0
    %v2279 = vadd.f32 0.0, %v2278
    %v2280 = vpop.f32.mrf.mxu0
    %2281 = vmatprep.mubr.f32.mxu0 0.0
    %2282 = vmatmul.mubr.f32.gmra.mxu0 %v1844
    %v2283 = vpop.f32.mrf.mxu0
    %v2284 = vadd.f32 0.0, %v2283
    %v2285 = vpop.f32.mrf.mxu0
    %2286 = vmatprep.mubr.f32.mxu0 0.0
    %2287 = vmatmul.mubr.f32.gmra.mxu0 %v1847
    %v2288 = vpop.f32.mrf.mxu0
    %v2289 = vadd.f32 0.0, %v2288
    %v2290 = vpop.f32.mrf.mxu0
    %2291 = vmatprep.mubr.f32.mxu0 0.0
    %2292 = vmatmul.mubr.f32.gmra.mxu0 %v1850
    %v2293 = vpop.f32.mrf.mxu0
    %v2294 = vadd.f32 0.0, %v2293
    %v2295 = vpop.f32.mrf.mxu0
    %2296 = vmatprep.mubr.f32.mxu0 0.0
    %2297 = vmatmul.mubr.f32.gmra.mxu0 %v1853
    %v2298 = vpop.f32.mrf.mxu0
    %v2299 = vadd.f32 0.0, %v2298
    %v2300 = vpop.f32.mrf.mxu0
    %2301 = vmatprep.mubr.f32.mxu0 0.0
    %2302 = vmatmul.mubr.f32.gmra.mxu0 %v1856
    %v2303 = vpop.f32.mrf.mxu0
    %v2304 = vadd.f32 0.0, %v2303
    %v2305 = vpop.f32.mrf.mxu0
    %2306 = vmatprep.mubr.f32.mxu0 0.0
    %2307 = vmatmul.mubr.f32.gmra.mxu0 %v1859
    %v2308 = vpop.f32.mrf.mxu0
    %v2309 = vadd.f32 0.0, %v2308
    %v2310 = vpop.f32.mrf.mxu0
    %2311 = vmatprep.mubr.f32.mxu0 0.0
    %2312 = vmatmul.mubr.f32.gmra.mxu0 %v1862
    %v2313 = vpop.f32.mrf.mxu0
    %v2314 = vadd.f32 0.0, %v2313
    %v2315 = vpop.f32.mrf.mxu0
    %2316 = vdwg.mxu0
    %v2317 = vadd.f32 %v1171, %v1934
    %v2318 = vadd.f32 %v1176, %v1939
    %v2319 = vadd.f32 %v1181, %v1944
    %v2320 = vadd.f32 %v1186, %v1949
    %v2321 = vadd.f32 %v1191, %v1954
    %v2322 = vadd.f32 %v1196, %v1959
    %v2323 = vadd.f32 %v1201, %v1964
    %v2324 = vadd.f32 %v1206, %v1969
    %v2325 = vadd.f32 %v1211, %v1974
    %v2326 = vadd.f32 %v1216, %v1979
    %v2327 = vadd.f32 %v1221, %v1984
    %v2328 = vadd.f32 %v1226, %v1989
    %v2329 = vadd.f32 %v1231, %v1994
    %v2330 = vadd.f32 %v1236, %v1999
    %v2331 = vadd.f32 %v1241, %v2004
    %v2332 = vadd.f32 %v1246, %v2009
    %v2333 = vadd.f32 %v1251, %v2014
    %v2334 = vadd.f32 %v1256, %v2019
    %v2335 = vadd.f32 %v1261, %v2024
    %v2336 = vadd.f32 %v1266, %v2029
    %v2337 = vadd.f32 %v1271, %v2034
    %v2338 = vadd.f32 %v1276, %v2039
    %v2339 = vadd.f32 %v1281, %v2044
    %v2340 = vadd.f32 %v1286, %v2049
    %v2341 = vadd.f32 %v1291, %v2054
    %v2342 = vadd.f32 %v1296, %v2059
    %v2343 = vadd.f32 %v1301, %v2064
    %v2344 = vadd.f32 %v1306, %v2069
    %v2345 = vadd.f32 %v1311, %v2074
    %v2346 = vadd.f32 %v1316, %v2079
    %v2347 = vadd.f32 %v1321, %v2084
    %v2348 = vadd.f32 %v1326, %v2089
    %v2349 = vadd.f32 %v1331, %v2094
    %v2350 = vadd.f32 %v1336, %v2099
    %v2351 = vadd.f32 %v1341, %v2104
    %v2352 = vadd.f32 %v1346, %v2109
    %v2353 = vadd.f32 %v1351, %v2114
    %v2354 = vadd.f32 %v1356, %v2119
    %v2355 = vadd.f32 %v1361, %v2124
    %v2356 = vadd.f32 %v1366, %v2129
    %v2357 = vadd.f32 %v1371, %v2134
    %v2358 = vadd.f32 %v1376, %v2139
    %v2359 = vadd.f32 %v1381, %v2144
    %v2360 = vadd.f32 %v1386, %v2149
    %v2361 = vadd.f32 %v1391, %v2154
    %v2362 = vadd.f32 %v1396, %v2159
    %v2363 = vadd.f32 %v1401, %v2164
    %v2364 = vadd.f32 %v1406, %v2169
    %v2365 = vadd.f32 %v1411, %v2174
    %v2366 = vadd.f32 %v1416, %v2179
    %v2367 = vadd.f32 %v1421, %v2184
    %v2368 = vadd.f32 %v1426, %v2189
    %v2369 = vadd.f32 %v1431, %v2194
    %v2370 = vadd.f32 %v1436, %v2199
    %v2371 = vadd.f32 %v1441, %v2204
    %v2372 = vadd.f32 %v1446, %v2209
    %v2373 = vadd.f32 %v1451, %v2214
    %v2374 = vadd.f32 %v1456, %v2219
    %v2375 = vadd.f32 %v1461, %v2224
    %v2376 = vadd.f32 %v1466, %v2229
    %v2377 = vadd.f32 %v1471, %v2234
    %v2378 = vadd.f32 %v1476, %v2239
    %v2379 = vadd.f32 %v1481, %v2244
    %v2380 = vadd.f32 %v1486, %v2249
    %v2381 = vadd.f32 %v1491, %v2254
    %v2382 = vadd.f32 %v1496, %v2259
    %v2383 = vadd.f32 %v1501, %v2264
    %v2384 = vadd.f32 %v1506, %v2269
    %v2385 = vadd.f32 %v1511, %v2274
    %v2386 = vadd.f32 %v1516, %v2279
    %v2387 = vadd.f32 %v1521, %v2284
    %v2388 = vadd.f32 %v1526, %v2289
    %v2389 = vadd.f32 %v1531, %v2294
    %v2390 = vadd.f32 %v1536, %v2299
    %v2391 = vadd.f32 %v1541, %v2304
    %v2392 = vadd.f32 %v1546, %v2309
    %v2393 = vadd.f32 %v1551, %v2314
    %v2394 = vld [vmem:[%s0 + $0x12] sm:$0xff]
    %v2395 = vld [vmem:[%s0 + $0x1a] sm:$0xff]
    %v2396 = vld [vmem:[%s0 + $0x22] sm:$0xff]
    %v2397 = vld [vmem:[%s0 + $0x2a] sm:$0xff]
    %v2398 = vld [vmem:[%s0 + $0x32] sm:$0xff]
    %v2399 = vld [vmem:[%s0 + $0x3a] sm:$0xff]
    %v2400 = vld [vmem:[%s0 + $0x42] sm:$0xff]
    %v2401 = vld [vmem:[%s0 + $0x4a] sm:$0xff]
    %v2402 = vld [vmem:[%s0 + $0x52] sm:$0xff]
    %v2403 = vld [vmem:[%s0 + $0x5a] sm:$0xff]
    %v2404 = vld [vmem:[%s0 + $0x62] sm:$0xff]
    %v2405 = vld [vmem:[%s0 + $0x6a] sm:$0xff]
    %v2406 = vld [vmem:[%s0 + $0x72] sm:$0xff]
    %v2407 = vld [vmem:[%s0 + $0x7a] sm:$0xff]
    %v2408 = vld [vmem:[%s0 + $0x82] sm:$0xff]
    %v2409 = vld [vmem:[%s0 + $0x8a] sm:$0xff]
    %v2410 = vld [vmem:[%s0 + $0x92] sm:$0xff]
    %v2411 = vld [vmem:[%s0 + $0x9a] sm:$0xff]
    %v2412 = vld [vmem:[%s0 + $0xa2] sm:$0xff]
    %v2413 = vld [vmem:[%s0 + $0xaa] sm:$0xff]
    %v2414 = vld [vmem:[%s0 + $0xb2] sm:$0xff]
    %v2415 = vld [vmem:[%s0 + $0xba] sm:$0xff]
    %v2416 = vld [vmem:[%s0 + $0xc2] sm:$0xff]
    %v2417 = vld [vmem:[%s0 + $0xca] sm:$0xff]
    %v2418 = vld [vmem:[%s0 + $0xd2] sm:$0xff]
    %v2419 = vld [vmem:[%s0 + $0xda] sm:$0xff]
    %v2420 = vld [vmem:[%s0 + $0xe2] sm:$0xff]
    %v2421 = vld [vmem:[%s0 + $0xea] sm:$0xff]
    %v2422 = vld [vmem:[%s0 + $0xf2] sm:$0xff]
    %v2423 = vld [vmem:[%s0 + $0xfa] sm:$0xff]
    %v2424 = vld [vmem:[%s0 + $0x102] sm:$0xff]
    %v2425 = vld [vmem:[%s0 + $0x10a] sm:$0xff]
    %v2426 = vld [vmem:[%s0 + $0x112] sm:$0xff]
    %v2427 = vld [vmem:[%s0 + $0x11a] sm:$0xff]
    %v2428 = vld [vmem:[%s0 + $0x122] sm:$0xff]
    %v2429 = vld [vmem:[%s0 + $0x12a] sm:$0xff]
    %v2430 = vld [vmem:[%s0 + $0x132] sm:$0xff]
    %v2431 = vld [vmem:[%s0 + $0x13a] sm:$0xff]
    %v2432 = vld [vmem:[%s0 + $0x142] sm:$0xff]
    %v2433 = vld [vmem:[%s0 + $0x14a] sm:$0xff]
    %v2434 = vld [vmem:[%s0 + $0x152] sm:$0xff]
    %v2435 = vld [vmem:[%s0 + $0x15a] sm:$0xff]
    %v2436 = vld [vmem:[%s0 + $0x162] sm:$0xff]
    %v2437 = vld [vmem:[%s0 + $0x16a] sm:$0xff]
    %v2438 = vld [vmem:[%s0 + $0x172] sm:$0xff]
    %v2439 = vld [vmem:[%s0 + $0x17a] sm:$0xff]
    %v2440 = vld [vmem:[%s0 + $0x182] sm:$0xff]
    %v2441 = vld [vmem:[%s0 + $0x18a] sm:$0xff]
    %v2442 = vld [vmem:[%s0 + $0x192] sm:$0xff]
    %v2443 = vld [vmem:[%s0 + $0x19a] sm:$0xff]
    %v2444 = vld [vmem:[%s0 + $0x1a2] sm:$0xff]
    %v2445 = vld [vmem:[%s0 + $0x1aa] sm:$0xff]
    %v2446 = vld [vmem:[%s0 + $0x1b2] sm:$0xff]
    %v2447 = vld [vmem:[%s0 + $0x1ba] sm:$0xff]
    %v2448 = vld [vmem:[%s0 + $0x1c2] sm:$0xff]
    %v2449 = vld [vmem:[%s0 + $0x1ca] sm:$0xff]
    %v2450 = vld [vmem:[%s0 + $0x1d2] sm:$0xff]
    %v2451 = vld [vmem:[%s0 + $0x1da] sm:$0xff]
    %v2452 = vld [vmem:[%s0 + $0x1e2] sm:$0xff]
    %v2453 = vld [vmem:[%s0 + $0x1ea] sm:$0xff]
    %v2454 = vld [vmem:[%s0 + $0x1f2] sm:$0xff]
    %v2455 = vld [vmem:[%s0 + $0x1fa] sm:$0xff]
    %v2456 = vld [vmem:[%s0 + $0x202] sm:$0xff]
    %v2457 = vld [vmem:[%s0 + $0x20a] sm:$0xff]
    %v2458 = vld [vmem:[%s0 + $0x212] sm:$0xff]
    %v2459 = vld [vmem:[%s0 + $0x21a] sm:$0xff]
    %v2460 = vld [vmem:[%s0 + $0x222] sm:$0xff]
    %v2461 = vld [vmem:[%s0 + $0x22a] sm:$0xff]
    %v2462 = vld [vmem:[%s0 + $0x232] sm:$0xff]
    %v2463 = vld [vmem:[%s0 + $0x23a] sm:$0xff]
    %v2464 = vld [vmem:[%s0 + $0x242] sm:$0xff]
    %v2465 = vld [vmem:[%s0 + $0x24a] sm:$0xff]
    %v2466 = vld [vmem:[%s0 + $0x252] sm:$0xff]
    %v2467 = vld [vmem:[%s0 + $0x25a] sm:$0xff]
    %v2468 = vld [vmem:[%s0 + $0x262] sm:$0xff]
    %v2469 = vld [vmem:[%s0 + $0x26a] sm:$0xff]
    %v2470 = vld [vmem:[%s0 + $0x272] sm:$0x3]
    %s2471 = scalar_lea.vmem %s1, 12
    %v2472 = vld [vmem:[%s2471] sm:$0xf]
    %v2474 = vsel %vm184, %v2394, 0
    %v2477 = vsel %vm184, %v2395, 0
    %v2480 = vsel %vm184, %v2396, 0
    %v2483 = vsel %vm184, %v2397, 0
    %v2486 = vsel %vm184, %v2398, 0
    %v2489 = vsel %vm184, %v2399, 0
    %v2492 = vsel %vm184, %v2400, 0
    %v2495 = vsel %vm184, %v2401, 0
    %v2498 = vsel %vm184, %v2402, 0
    %v2501 = vsel %vm184, %v2403, 0
    %v2504 = vsel %vm184, %v2404, 0
    %v2507 = vsel %vm184, %v2405, 0
    %v2510 = vsel %vm184, %v2406, 0
    %v2513 = vsel %vm184, %v2407, 0
    %v2516 = vsel %vm184, %v2408, 0
    %v2519 = vsel %vm184, %v2409, 0
    %v2522 = vsel %vm184, %v2410, 0
    %v2525 = vsel %vm184, %v2411, 0
    %v2528 = vsel %vm184, %v2412, 0
    %v2531 = vsel %vm184, %v2413, 0
    %v2534 = vsel %vm184, %v2414, 0
    %v2537 = vsel %vm184, %v2415, 0
    %v2540 = vsel %vm184, %v2416, 0
    %v2543 = vsel %vm184, %v2417, 0
    %v2546 = vsel %vm184, %v2418, 0
    %v2549 = vsel %vm184, %v2419, 0
    %v2552 = vsel %vm184, %v2420, 0
    %v2555 = vsel %vm184, %v2421, 0
    %v2558 = vsel %vm184, %v2422, 0
    %v2561 = vsel %vm184, %v2423, 0
    %v2564 = vsel %vm184, %v2424, 0
    %v2567 = vsel %vm184, %v2425, 0
    %v2570 = vsel %vm184, %v2426, 0
    %v2573 = vsel %vm184, %v2427, 0
    %v2576 = vsel %vm184, %v2428, 0
    %v2579 = vsel %vm184, %v2429, 0
    %v2582 = vsel %vm184, %v2430, 0
    %v2585 = vsel %vm184, %v2431, 0
    %v2588 = vsel %vm184, %v2432, 0
    %v2591 = vsel %vm184, %v2433, 0
    %v2594 = vsel %vm184, %v2434, 0
    %v2597 = vsel %vm184, %v2435, 0
    %v2600 = vsel %vm184, %v2436, 0
    %v2603 = vsel %vm184, %v2437, 0
    %v2606 = vsel %vm184, %v2438, 0
    %v2609 = vsel %vm184, %v2439, 0
    %v2612 = vsel %vm184, %v2440, 0
    %v2615 = vsel %vm184, %v2441, 0
    %v2618 = vsel %vm184, %v2442, 0
    %v2621 = vsel %vm184, %v2443, 0
    %v2624 = vsel %vm184, %v2444, 0
    %v2627 = vsel %vm184, %v2445, 0
    %v2630 = vsel %vm184, %v2446, 0
    %v2633 = vsel %vm184, %v2447, 0
    %v2636 = vsel %vm184, %v2448, 0
    %v2639 = vsel %vm184, %v2449, 0
    %v2642 = vsel %vm184, %v2450, 0
    %v2645 = vsel %vm184, %v2451, 0
    %v2648 = vsel %vm184, %v2452, 0
    %v2651 = vsel %vm184, %v2453, 0
    %v2654 = vsel %vm184, %v2454, 0
    %v2657 = vsel %vm184, %v2455, 0
    %v2660 = vsel %vm184, %v2456, 0
    %v2663 = vsel %vm184, %v2457, 0
    %v2666 = vsel %vm184, %v2458, 0
    %v2669 = vsel %vm184, %v2459, 0
    %v2672 = vsel %vm184, %v2460, 0
    %v2675 = vsel %vm184, %v2461, 0
    %v2678 = vsel %vm184, %v2462, 0
    %v2681 = vsel %vm184, %v2463, 0
    %v2684 = vsel %vm184, %v2464, 0
    %v2687 = vsel %vm184, %v2465, 0
    %v2690 = vsel %vm184, %v2466, 0
    %v2693 = vsel %vm184, %v2467, 0
    %v2696 = vsel %vm184, %v2468, 0
    %v2699 = vsel %vm184, %v2469, 0
    %v2702 = vsel %vm184, %v2470, 0
    %v2705 = vsel %vm416, %v2472, 0
    %2707 = vmatprep.subr.mxu0 0.0
    %2708 = vmatpush1.msra.mxu0 0.0
    %2709 = vmatprep.subr.mxu0 0.0
    %2710 = vmatpush1.msra.mxu0 0.0
    %2711 = vmatprep.subr.mxu0 0.0
    %2712 = vmatpush1.msra.mxu0 0.0
    %2713 = vmatprep.subr.mxu0 0.0
    %2714 = vmatpush1.msra.mxu0 0.0
    %2715 = vmatprep.subr.mxu0 0.0
    %2716 = vmatpush1.msra.mxu0 0.0
    %2717 = vmatprep.subr.mxu0 0.0
    %2718 = vmatpush1.msra.mxu0 0.0
    %2719 = vmatprep.subr.mxu0 0.0
    %2720 = vmatpush1.msra.mxu0 0.0
    %2721 = vmatprep.subr.mxu0 0.0
    %2722 = vmatpush1.msra.mxu0 0.0
    %2723 = vmatprep.subr.mxu0 0.0
    %2724 = vmatpush1.msra.mxu0 0.0
    %2725 = vmatprep.subr.mxu0 0.0
    %2726 = vmatpush1.msra.mxu0 0.0
    %2727 = vmatprep.subr.mxu0 0.0
    %2728 = vmatpush1.msra.mxu0 0.0
    %2729 = vmatprep.subr.mxu0 0.0
    %2730 = vmatpush1.msra.mxu0 0.0
    %2731 = vmatprep.subr.mxu0 0.0
    %2732 = vmatpush1.msra.mxu0 0.0
    %2733 = vmatprep.subr.mxu0 0.0
    %2734 = vmatpush1.msra.mxu0 0.0
    %2735 = vmatprep.subr.mxu0 0.0
    %2736 = vmatpush1.msra.mxu0 0.0
    %2737 = vmatprep.subr.mxu0 0.0
    %2738 = vmatpush1.msra.mxu0 %v2705
    %2739 = vmatprep.subr.mxu0 0.0
    %2740 = vmatpush2.msra.mxu0 0.0
    %2741 = vmatprep.subr.mxu0 0.0
    %2742 = vmatpush2.msra.mxu0 0.0
    %2743 = vmatprep.subr.mxu0 0.0
    %2744 = vmatpush2.msra.mxu0 0.0
    %2745 = vmatprep.subr.mxu0 0.0
    %2746 = vmatpush2.msra.mxu0 0.0
    %2747 = vmatprep.subr.mxu0 0.0
    %2748 = vmatpush2.msra.mxu0 0.0
    %2749 = vmatprep.subr.mxu0 0.0
    %2750 = vmatpush2.msra.mxu0 0.0
    %2751 = vmatprep.subr.mxu0 0.0
    %2752 = vmatpush2.msra.mxu0 0.0
    %2753 = vmatprep.subr.mxu0 0.0
    %2754 = vmatpush2.msra.mxu0 0.0
    %2755 = vmatprep.subr.mxu0 0.0
    %2756 = vmatpush2.msra.mxu0 0.0
    %2757 = vmatprep.subr.mxu0 0.0
    %2758 = vmatpush2.msra.mxu0 0.0
    %2759 = vmatprep.subr.mxu0 0.0
    %2760 = vmatpush2.msra.mxu0 0.0
    %2761 = vmatprep.subr.mxu0 0.0
    %2762 = vmatpush2.msra.mxu0 0.0
    %2763 = vmatprep.subr.mxu0 0.0
    %2764 = vmatpush2.msra.mxu0 0.0
    %2765 = vmatprep.subr.mxu0 0.0
    %2766 = vmatpush2.msra.mxu0 0.0
    %2767 = vmatprep.subr.mxu0 0.0
    %2768 = vmatpush2.msra.mxu0 0.0
    %2769 = vmatprep.subr.mxu0 0.0
    %2770 = vmatpush2.msra.mxu0 0.0
    %2771 = vmatprep.mubr.f32.mxu0 0.0
    %2772 = vmatmul.mubr.f32.gmra.mxu0 %v2474
    %v2773 = vpop.f32.mrf.mxu0
    %v2774 = vadd.f32 0.0, %v2773
    %v2775 = vpop.f32.mrf.mxu0
    %2776 = vmatprep.mubr.f32.mxu0 0.0
    %2777 = vmatmul.mubr.f32.gmra.mxu0 %v2477
    %v2778 = vpop.f32.mrf.mxu0
    %v2779 = vadd.f32 0.0, %v2778
    %v2780 = vpop.f32.mrf.mxu0
    %2781 = vmatprep.mubr.f32.mxu0 0.0
    %2782 = vmatmul.mubr.f32.gmra.mxu0 %v2480
    %v2783 = vpop.f32.mrf.mxu0
    %v2784 = vadd.f32 0.0, %v2783
    %v2785 = vpop.f32.mrf.mxu0
    %2786 = vmatprep.mubr.f32.mxu0 0.0
    %2787 = vmatmul.mubr.f32.gmra.mxu0 %v2483
    %v2788 = vpop.f32.mrf.mxu0
    %v2789 = vadd.f32 0.0, %v2788
    %v2790 = vpop.f32.mrf.mxu0
    %2791 = vmatprep.mubr.f32.mxu0 0.0
    %2792 = vmatmul.mubr.f32.gmra.mxu0 %v2486
    %v2793 = vpop.f32.mrf.mxu0
    %v2794 = vadd.f32 0.0, %v2793
    %v2795 = vpop.f32.mrf.mxu0
    %2796 = vmatprep.mubr.f32.mxu0 0.0
    %2797 = vmatmul.mubr.f32.gmra.mxu0 %v2489
    %v2798 = vpop.f32.mrf.mxu0
    %v2799 = vadd.f32 0.0, %v2798
    %v2800 = vpop.f32.mrf.mxu0
    %2801 = vmatprep.mubr.f32.mxu0 0.0
    %2802 = vmatmul.mubr.f32.gmra.mxu0 %v2492
    %v2803 = vpop.f32.mrf.mxu0
    %v2804 = vadd.f32 0.0, %v2803
    %v2805 = vpop.f32.mrf.mxu0
    %2806 = vmatprep.mubr.f32.mxu0 0.0
    %2807 = vmatmul.mubr.f32.gmra.mxu0 %v2495
    %v2808 = vpop.f32.mrf.mxu0
    %v2809 = vadd.f32 0.0, %v2808
    %v2810 = vpop.f32.mrf.mxu0
    %2811 = vmatprep.mubr.f32.mxu0 0.0
    %2812 = vmatmul.mubr.f32.gmra.mxu0 %v2498
    %v2813 = vpop.f32.mrf.mxu0
    %v2814 = vadd.f32 0.0, %v2813
    %v2815 = vpop.f32.mrf.mxu0
    %2816 = vmatprep.mubr.f32.mxu0 0.0
    %2817 = vmatmul.mubr.f32.gmra.mxu0 %v2501
    %v2818 = vpop.f32.mrf.mxu0
    %v2819 = vadd.f32 0.0, %v2818
    %v2820 = vpop.f32.mrf.mxu0
    %2821 = vmatprep.mubr.f32.mxu0 0.0
    %2822 = vmatmul.mubr.f32.gmra.mxu0 %v2504
    %v2823 = vpop.f32.mrf.mxu0
    %v2824 = vadd.f32 0.0, %v2823
    %v2825 = vpop.f32.mrf.mxu0
    %2826 = vmatprep.mubr.f32.mxu0 0.0
    %2827 = vmatmul.mubr.f32.gmra.mxu0 %v2507
    %v2828 = vpop.f32.mrf.mxu0
    %v2829 = vadd.f32 0.0, %v2828
    %v2830 = vpop.f32.mrf.mxu0
    %2831 = vmatprep.mubr.f32.mxu0 0.0
    %2832 = vmatmul.mubr.f32.gmra.mxu0 %v2510
    %v2833 = vpop.f32.mrf.mxu0
    %v2834 = vadd.f32 0.0, %v2833
    %v2835 = vpop.f32.mrf.mxu0
    %2836 = vmatprep.mubr.f32.mxu0 0.0
    %2837 = vmatmul.mubr.f32.gmra.mxu0 %v2513
    %v2838 = vpop.f32.mrf.mxu0
    %v2839 = vadd.f32 0.0, %v2838
    %v2840 = vpop.f32.mrf.mxu0
    %2841 = vmatprep.mubr.f32.mxu0 0.0
    %2842 = vmatmul.mubr.f32.gmra.mxu0 %v2516
    %v2843 = vpop.f32.mrf.mxu0
    %v2844 = vadd.f32 0.0, %v2843
    %v2845 = vpop.f32.mrf.mxu0
    %2846 = vmatprep.mubr.f32.mxu0 0.0
    %2847 = vmatmul.mubr.f32.gmra.mxu0 %v2519
    %v2848 = vpop.f32.mrf.mxu0
    %v2849 = vadd.f32 0.0, %v2848
    %v2850 = vpop.f32.mrf.mxu0
    %2851 = vmatprep.mubr.f32.mxu0 0.0
    %2852 = vmatmul.mubr.f32.gmra.mxu0 %v2522
    %v2853 = vpop.f32.mrf.mxu0
    %v2854 = vadd.f32 0.0, %v2853
    %v2855 = vpop.f32.mrf.mxu0
    %2856 = vmatprep.mubr.f32.mxu0 0.0
    %2857 = vmatmul.mubr.f32.gmra.mxu0 %v2525
    %v2858 = vpop.f32.mrf.mxu0
    %v2859 = vadd.f32 0.0, %v2858
    %v2860 = vpop.f32.mrf.mxu0
    %2861 = vmatprep.mubr.f32.mxu0 0.0
    %2862 = vmatmul.mubr.f32.gmra.mxu0 %v2528
    %v2863 = vpop.f32.mrf.mxu0
    %v2864 = vadd.f32 0.0, %v2863
    %v2865 = vpop.f32.mrf.mxu0
    %2866 = vmatprep.mubr.f32.mxu0 0.0
    %2867 = vmatmul.mubr.f32.gmra.mxu0 %v2531
    %v2868 = vpop.f32.mrf.mxu0
    %v2869 = vadd.f32 0.0, %v2868
    %v2870 = vpop.f32.mrf.mxu0
    %2871 = vmatprep.mubr.f32.mxu0 0.0
    %2872 = vmatmul.mubr.f32.gmra.mxu0 %v2534
    %v2873 = vpop.f32.mrf.mxu0
    %v2874 = vadd.f32 0.0, %v2873
    %v2875 = vpop.f32.mrf.mxu0
    %2876 = vmatprep.mubr.f32.mxu0 0.0
    %2877 = vmatmul.mubr.f32.gmra.mxu0 %v2537
    %v2878 = vpop.f32.mrf.mxu0
    %v2879 = vadd.f32 0.0, %v2878
    %v2880 = vpop.f32.mrf.mxu0
    %2881 = vmatprep.mubr.f32.mxu0 0.0
    %2882 = vmatmul.mubr.f32.gmra.mxu0 %v2540
    %v2883 = vpop.f32.mrf.mxu0
    %v2884 = vadd.f32 0.0, %v2883
    %v2885 = vpop.f32.mrf.mxu0
    %2886 = vmatprep.mubr.f32.mxu0 0.0
    %2887 = vmatmul.mubr.f32.gmra.mxu0 %v2543
    %v2888 = vpop.f32.mrf.mxu0
    %v2889 = vadd.f32 0.0, %v2888
    %v2890 = vpop.f32.mrf.mxu0
    %2891 = vmatprep.mubr.f32.mxu0 0.0
    %2892 = vmatmul.mubr.f32.gmra.mxu0 %v2546
    %v2893 = vpop.f32.mrf.mxu0
    %v2894 = vadd.f32 0.0, %v2893
    %v2895 = vpop.f32.mrf.mxu0
    %2896 = vmatprep.mubr.f32.mxu0 0.0
    %2897 = vmatmul.mubr.f32.gmra.mxu0 %v2549
    %v2898 = vpop.f32.mrf.mxu0
    %v2899 = vadd.f32 0.0, %v2898
    %v2900 = vpop.f32.mrf.mxu0
    %2901 = vmatprep.mubr.f32.mxu0 0.0
    %2902 = vmatmul.mubr.f32.gmra.mxu0 %v2552
    %v2903 = vpop.f32.mrf.mxu0
    %v2904 = vadd.f32 0.0, %v2903
    %v2905 = vpop.f32.mrf.mxu0
    %2906 = vmatprep.mubr.f32.mxu0 0.0
    %2907 = vmatmul.mubr.f32.gmra.mxu0 %v2555
    %v2908 = vpop.f32.mrf.mxu0
    %v2909 = vadd.f32 0.0, %v2908
    %v2910 = vpop.f32.mrf.mxu0
    %2911 = vmatprep.mubr.f32.mxu0 0.0
    %2912 = vmatmul.mubr.f32.gmra.mxu0 %v2558
    %v2913 = vpop.f32.mrf.mxu0
    %v2914 = vadd.f32 0.0, %v2913
    %v2915 = vpop.f32.mrf.mxu0
    %2916 = vmatprep.mubr.f32.mxu0 0.0
    %2917 = vmatmul.mubr.f32.gmra.mxu0 %v2561
    %v2918 = vpop.f32.mrf.mxu0
    %v2919 = vadd.f32 0.0, %v2918
    %v2920 = vpop.f32.mrf.mxu0
    %2921 = vmatprep.mubr.f32.mxu0 0.0
    %2922 = vmatmul.mubr.f32.gmra.mxu0 %v2564
    %v2923 = vpop.f32.mrf.mxu0
    %v2924 = vadd.f32 0.0, %v2923
    %v2925 = vpop.f32.mrf.mxu0
    %2926 = vmatprep.mubr.f32.mxu0 0.0
    %2927 = vmatmul.mubr.f32.gmra.mxu0 %v2567
    %v2928 = vpop.f32.mrf.mxu0
    %v2929 = vadd.f32 0.0, %v2928
    %v2930 = vpop.f32.mrf.mxu0
    %2931 = vmatprep.mubr.f32.mxu0 0.0
    %2932 = vmatmul.mubr.f32.gmra.mxu0 %v2570
    %v2933 = vpop.f32.mrf.mxu0
    %v2934 = vadd.f32 0.0, %v2933
    %v2935 = vpop.f32.mrf.mxu0
    %2936 = vmatprep.mubr.f32.mxu0 0.0
    %2937 = vmatmul.mubr.f32.gmra.mxu0 %v2573
    %v2938 = vpop.f32.mrf.mxu0
    %v2939 = vadd.f32 0.0, %v2938
    %v2940 = vpop.f32.mrf.mxu0
    %2941 = vmatprep.mubr.f32.mxu0 0.0
    %2942 = vmatmul.mubr.f32.gmra.mxu0 %v2576
    %v2943 = vpop.f32.mrf.mxu0
    %v2944 = vadd.f32 0.0, %v2943
    %v2945 = vpop.f32.mrf.mxu0
    %2946 = vmatprep.mubr.f32.mxu0 0.0
    %2947 = vmatmul.mubr.f32.gmra.mxu0 %v2579
    %v2948 = vpop.f32.mrf.mxu0
    %v2949 = vadd.f32 0.0, %v2948
    %v2950 = vpop.f32.mrf.mxu0
    %2951 = vmatprep.mubr.f32.mxu0 0.0
    %2952 = vmatmul.mubr.f32.gmra.mxu0 %v2582
    %v2953 = vpop.f32.mrf.mxu0
    %v2954 = vadd.f32 0.0, %v2953
    %v2955 = vpop.f32.mrf.mxu0
    %2956 = vmatprep.mubr.f32.mxu0 0.0
    %2957 = vmatmul.mubr.f32.gmra.mxu0 %v2585
    %v2958 = vpop.f32.mrf.mxu0
    %v2959 = vadd.f32 0.0, %v2958
    %v2960 = vpop.f32.mrf.mxu0
    %2961 = vmatprep.mubr.f32.mxu0 0.0
    %2962 = vmatmul.mubr.f32.gmra.mxu0 %v2588
    %v2963 = vpop.f32.mrf.mxu0
    %v2964 = vadd.f32 0.0, %v2963
    %v2965 = vpop.f32.mrf.mxu0
    %2966 = vmatprep.mubr.f32.mxu0 0.0
    %2967 = vmatmul.mubr.f32.gmra.mxu0 %v2591
    %v2968 = vpop.f32.mrf.mxu0
    %v2969 = vadd.f32 0.0, %v2968
    %v2970 = vpop.f32.mrf.mxu0
    %2971 = vmatprep.mubr.f32.mxu0 0.0
    %2972 = vmatmul.mubr.f32.gmra.mxu0 %v2594
    %v2973 = vpop.f32.mrf.mxu0
    %v2974 = vadd.f32 0.0, %v2973
    %v2975 = vpop.f32.mrf.mxu0
    %2976 = vmatprep.mubr.f32.mxu0 0.0
    %2977 = vmatmul.mubr.f32.gmra.mxu0 %v2597
    %v2978 = vpop.f32.mrf.mxu0
    %v2979 = vadd.f32 0.0, %v2978
    %v2980 = vpop.f32.mrf.mxu0
    %2981 = vmatprep.mubr.f32.mxu0 0.0
    %2982 = vmatmul.mubr.f32.gmra.mxu0 %v2600
    %v2983 = vpop.f32.mrf.mxu0
    %v2984 = vadd.f32 0.0, %v2983
    %v2985 = vpop.f32.mrf.mxu0
    %2986 = vmatprep.mubr.f32.mxu0 0.0
    %2987 = vmatmul.mubr.f32.gmra.mxu0 %v2603
    %v2988 = vpop.f32.mrf.mxu0
    %v2989 = vadd.f32 0.0, %v2988
    %v2990 = vpop.f32.mrf.mxu0
    %2991 = vmatprep.mubr.f32.mxu0 0.0
    %2992 = vmatmul.mubr.f32.gmra.mxu0 %v2606
    %v2993 = vpop.f32.mrf.mxu0
    %v2994 = vadd.f32 0.0, %v2993
    %v2995 = vpop.f32.mrf.mxu0
    %2996 = vmatprep.mubr.f32.mxu0 0.0
    %2997 = vmatmul.mubr.f32.gmra.mxu0 %v2609
    %v2998 = vpop.f32.mrf.mxu0
    %v2999 = vadd.f32 0.0, %v2998
    %v3000 = vpop.f32.mrf.mxu0
    %3001 = vmatprep.mubr.f32.mxu0 0.0
    %3002 = vmatmul.mubr.f32.gmra.mxu0 %v2612
    %v3003 = vpop.f32.mrf.mxu0
    %v3004 = vadd.f32 0.0, %v3003
    %v3005 = vpop.f32.mrf.mxu0
    %3006 = vmatprep.mubr.f32.mxu0 0.0
    %3007 = vmatmul.mubr.f32.gmra.mxu0 %v2615
    %v3008 = vpop.f32.mrf.mxu0
    %v3009 = vadd.f32 0.0, %v3008
    %v3010 = vpop.f32.mrf.mxu0
    %3011 = vmatprep.mubr.f32.mxu0 0.0
    %3012 = vmatmul.mubr.f32.gmra.mxu0 %v2618
    %v3013 = vpop.f32.mrf.mxu0
    %v3014 = vadd.f32 0.0, %v3013
    %v3015 = vpop.f32.mrf.mxu0
    %3016 = vmatprep.mubr.f32.mxu0 0.0
    %3017 = vmatmul.mubr.f32.gmra.mxu0 %v2621
    %v3018 = vpop.f32.mrf.mxu0
    %v3019 = vadd.f32 0.0, %v3018
    %v3020 = vpop.f32.mrf.mxu0
    %3021 = vmatprep.mubr.f32.mxu0 0.0
    %3022 = vmatmul.mubr.f32.gmra.mxu0 %v2624
    %v3023 = vpop.f32.mrf.mxu0
    %v3024 = vadd.f32 0.0, %v3023
    %v3025 = vpop.f32.mrf.mxu0
    %3026 = vmatprep.mubr.f32.mxu0 0.0
    %3027 = vmatmul.mubr.f32.gmra.mxu0 %v2627
    %v3028 = vpop.f32.mrf.mxu0
    %v3029 = vadd.f32 0.0, %v3028
    %v3030 = vpop.f32.mrf.mxu0
    %3031 = vmatprep.mubr.f32.mxu0 0.0
    %3032 = vmatmul.mubr.f32.gmra.mxu0 %v2630
    %v3033 = vpop.f32.mrf.mxu0
    %v3034 = vadd.f32 0.0, %v3033
    %v3035 = vpop.f32.mrf.mxu0
    %3036 = vmatprep.mubr.f32.mxu0 0.0
    %3037 = vmatmul.mubr.f32.gmra.mxu0 %v2633
    %v3038 = vpop.f32.mrf.mxu0
    %v3039 = vadd.f32 0.0, %v3038
    %v3040 = vpop.f32.mrf.mxu0
    %3041 = vmatprep.mubr.f32.mxu0 0.0
    %3042 = vmatmul.mubr.f32.gmra.mxu0 %v2636
    %v3043 = vpop.f32.mrf.mxu0
    %v3044 = vadd.f32 0.0, %v3043
    %v3045 = vpop.f32.mrf.mxu0
    %3046 = vmatprep.mubr.f32.mxu0 0.0
    %3047 = vmatmul.mubr.f32.gmra.mxu0 %v2639
    %v3048 = vpop.f32.mrf.mxu0
    %v3049 = vadd.f32 0.0, %v3048
    %v3050 = vpop.f32.mrf.mxu0
    %3051 = vmatprep.mubr.f32.mxu0 0.0
    %3052 = vmatmul.mubr.f32.gmra.mxu0 %v2642
    %v3053 = vpop.f32.mrf.mxu0
    %v3054 = vadd.f32 0.0, %v3053
    %v3055 = vpop.f32.mrf.mxu0
    %3056 = vmatprep.mubr.f32.mxu0 0.0
    %3057 = vmatmul.mubr.f32.gmra.mxu0 %v2645
    %v3058 = vpop.f32.mrf.mxu0
    %v3059 = vadd.f32 0.0, %v3058
    %v3060 = vpop.f32.mrf.mxu0
    %3061 = vmatprep.mubr.f32.mxu0 0.0
    %3062 = vmatmul.mubr.f32.gmra.mxu0 %v2648
    %v3063 = vpop.f32.mrf.mxu0
    %v3064 = vadd.f32 0.0, %v3063
    %v3065 = vpop.f32.mrf.mxu0
    %3066 = vmatprep.mubr.f32.mxu0 0.0
    %3067 = vmatmul.mubr.f32.gmra.mxu0 %v2651
    %v3068 = vpop.f32.mrf.mxu0
    %v3069 = vadd.f32 0.0, %v3068
    %v3070 = vpop.f32.mrf.mxu0
    %3071 = vmatprep.mubr.f32.mxu0 0.0
    %3072 = vmatmul.mubr.f32.gmra.mxu0 %v2654
    %v3073 = vpop.f32.mrf.mxu0
    %v3074 = vadd.f32 0.0, %v3073
    %v3075 = vpop.f32.mrf.mxu0
    %3076 = vmatprep.mubr.f32.mxu0 0.0
    %3077 = vmatmul.mubr.f32.gmra.mxu0 %v2657
    %v3078 = vpop.f32.mrf.mxu0
    %v3079 = vadd.f32 0.0, %v3078
    %v3080 = vpop.f32.mrf.mxu0
    %3081 = vmatprep.mubr.f32.mxu0 0.0
    %3082 = vmatmul.mubr.f32.gmra.mxu0 %v2660
    %v3083 = vpop.f32.mrf.mxu0
    %v3084 = vadd.f32 0.0, %v3083
    %v3085 = vpop.f32.mrf.mxu0
    %3086 = vmatprep.mubr.f32.mxu0 0.0
    %3087 = vmatmul.mubr.f32.gmra.mxu0 %v2663
    %v3088 = vpop.f32.mrf.mxu0
    %v3089 = vadd.f32 0.0, %v3088
    %v3090 = vpop.f32.mrf.mxu0
    %3091 = vmatprep.mubr.f32.mxu0 0.0
    %3092 = vmatmul.mubr.f32.gmra.mxu0 %v2666
    %v3093 = vpop.f32.mrf.mxu0
    %v3094 = vadd.f32 0.0, %v3093
    %v3095 = vpop.f32.mrf.mxu0
    %3096 = vmatprep.mubr.f32.mxu0 0.0
    %3097 = vmatmul.mubr.f32.gmra.mxu0 %v2669
    %v3098 = vpop.f32.mrf.mxu0
    %v3099 = vadd.f32 0.0, %v3098
    %v3100 = vpop.f32.mrf.mxu0
    %3101 = vmatprep.mubr.f32.mxu0 0.0
    %3102 = vmatmul.mubr.f32.gmra.mxu0 %v2672
    %v3103 = vpop.f32.mrf.mxu0
    %v3104 = vadd.f32 0.0, %v3103
    %v3105 = vpop.f32.mrf.mxu0
    %3106 = vmatprep.mubr.f32.mxu0 0.0
    %3107 = vmatmul.mubr.f32.gmra.mxu0 %v2675
    %v3108 = vpop.f32.mrf.mxu0
    %v3109 = vadd.f32 0.0, %v3108
    %v3110 = vpop.f32.mrf.mxu0
    %3111 = vmatprep.mubr.f32.mxu0 0.0
    %3112 = vmatmul.mubr.f32.gmra.mxu0 %v2678
    %v3113 = vpop.f32.mrf.mxu0
    %v3114 = vadd.f32 0.0, %v3113
    %v3115 = vpop.f32.mrf.mxu0
    %3116 = vmatprep.mubr.f32.mxu0 0.0
    %3117 = vmatmul.mubr.f32.gmra.mxu0 %v2681
    %v3118 = vpop.f32.mrf.mxu0
    %v3119 = vadd.f32 0.0, %v3118
    %v3120 = vpop.f32.mrf.mxu0
    %3121 = vmatprep.mubr.f32.mxu0 0.0
    %3122 = vmatmul.mubr.f32.gmra.mxu0 %v2684
    %v3123 = vpop.f32.mrf.mxu0
    %v3124 = vadd.f32 0.0, %v3123
    %v3125 = vpop.f32.mrf.mxu0
    %3126 = vmatprep.mubr.f32.mxu0 0.0
    %3127 = vmatmul.mubr.f32.gmra.mxu0 %v2687
    %v3128 = vpop.f32.mrf.mxu0
    %v3129 = vadd.f32 0.0, %v3128
    %v3130 = vpop.f32.mrf.mxu0
    %3131 = vmatprep.mubr.f32.mxu0 0.0
    %3132 = vmatmul.mubr.f32.gmra.mxu0 %v2690
    %v3133 = vpop.f32.mrf.mxu0
    %v3134 = vadd.f32 0.0, %v3133
    %v3135 = vpop.f32.mrf.mxu0
    %3136 = vmatprep.mubr.f32.mxu0 0.0
    %3137 = vmatmul.mubr.f32.gmra.mxu0 %v2693
    %v3138 = vpop.f32.mrf.mxu0
    %v3139 = vadd.f32 0.0, %v3138
    %v3140 = vpop.f32.mrf.mxu0
    %3141 = vmatprep.mubr.f32.mxu0 0.0
    %3142 = vmatmul.mubr.f32.gmra.mxu0 %v2696
    %v3143 = vpop.f32.mrf.mxu0
    %v3144 = vadd.f32 0.0, %v3143
    %v3145 = vpop.f32.mrf.mxu0
    %3146 = vmatprep.mubr.f32.mxu0 0.0
    %3147 = vmatmul.mubr.f32.gmra.mxu0 %v2699
    %v3148 = vpop.f32.mrf.mxu0
    %v3149 = vadd.f32 0.0, %v3148
    %v3150 = vpop.f32.mrf.mxu0
    %3151 = vmatprep.mubr.f32.mxu0 0.0
    %3152 = vmatmul.mubr.f32.gmra.mxu0 %v2702
    %v3153 = vpop.f32.mrf.mxu0
    %v3154 = vadd.f32 0.0, %v3153
    %v3155 = vpop.f32.mrf.mxu0
    %3156 = vdwg.mxu0
    %v3157 = vadd.f32 %v2317, %v2774
    %v3158 = vadd.f32 %v2318, %v2779
    %v3159 = vadd.f32 %v2319, %v2784
    %v3160 = vadd.f32 %v2320, %v2789
    %v3161 = vadd.f32 %v2321, %v2794
    %v3162 = vadd.f32 %v2322, %v2799
    %v3163 = vadd.f32 %v2323, %v2804
    %v3164 = vadd.f32 %v2324, %v2809
    %v3165 = vadd.f32 %v2325, %v2814
    %v3166 = vadd.f32 %v2326, %v2819
    %v3167 = vadd.f32 %v2327, %v2824
    %v3168 = vadd.f32 %v2328, %v2829
    %v3169 = vadd.f32 %v2329, %v2834
    %v3170 = vadd.f32 %v2330, %v2839
    %v3171 = vadd.f32 %v2331, %v2844
    %v3172 = vadd.f32 %v2332, %v2849
    %v3173 = vadd.f32 %v2333, %v2854
    %v3174 = vadd.f32 %v2334, %v2859
    %v3175 = vadd.f32 %v2335, %v2864
    %v3176 = vadd.f32 %v2336, %v2869
    %v3177 = vadd.f32 %v2337, %v2874
    %v3178 = vadd.f32 %v2338, %v2879
    %v3179 = vadd.f32 %v2339, %v2884
    %v3180 = vadd.f32 %v2340, %v2889
    %v3181 = vadd.f32 %v2341, %v2894
    %v3182 = vadd.f32 %v2342, %v2899
    %v3183 = vadd.f32 %v2343, %v2904
    %v3184 = vadd.f32 %v2344, %v2909
    %v3185 = vadd.f32 %v2345, %v2914
    %v3186 = vadd.f32 %v2346, %v2919
    %v3187 = vadd.f32 %v2347, %v2924
    %v3188 = vadd.f32 %v2348, %v2929
    %v3189 = vadd.f32 %v2349, %v2934
    %v3190 = vadd.f32 %v2350, %v2939
    %v3191 = vadd.f32 %v2351, %v2944
    %v3192 = vadd.f32 %v2352, %v2949
    %v3193 = vadd.f32 %v2353, %v2954
    %v3194 = vadd.f32 %v2354, %v2959
    %v3195 = vadd.f32 %v2355, %v2964
    %v3196 = vadd.f32 %v2356, %v2969
    %v3197 = vadd.f32 %v2357, %v2974
    %v3198 = vadd.f32 %v2358, %v2979
    %v3199 = vadd.f32 %v2359, %v2984
    %v3200 = vadd.f32 %v2360, %v2989
    %v3201 = vadd.f32 %v2361, %v2994
    %v3202 = vadd.f32 %v2362, %v2999
    %v3203 = vadd.f32 %v2363, %v3004
    %v3204 = vadd.f32 %v2364, %v3009
    %v3205 = vadd.f32 %v2365, %v3014
    %v3206 = vadd.f32 %v2366, %v3019
    %v3207 = vadd.f32 %v2367, %v3024
    %v3208 = vadd.f32 %v2368, %v3029
    %v3209 = vadd.f32 %v2369, %v3034
    %v3210 = vadd.f32 %v2370, %v3039
    %v3211 = vadd.f32 %v2371, %v3044
    %v3212 = vadd.f32 %v2372, %v3049
    %v3213 = vadd.f32 %v2373, %v3054
    %v3214 = vadd.f32 %v2374, %v3059
    %v3215 = vadd.f32 %v2375, %v3064
    %v3216 = vadd.f32 %v2376, %v3069
    %v3217 = vadd.f32 %v2377, %v3074
    %v3218 = vadd.f32 %v2378, %v3079
    %v3219 = vadd.f32 %v2379, %v3084
    %v3220 = vadd.f32 %v2380, %v3089
    %v3221 = vadd.f32 %v2381, %v3094
    %v3222 = vadd.f32 %v2382, %v3099
    %v3223 = vadd.f32 %v2383, %v3104
    %v3224 = vadd.f32 %v2384, %v3109
    %v3225 = vadd.f32 %v2385, %v3114
    %v3226 = vadd.f32 %v2386, %v3119
    %v3227 = vadd.f32 %v2387, %v3124
    %v3228 = vadd.f32 %v2388, %v3129
    %v3229 = vadd.f32 %v2389, %v3134
    %v3230 = vadd.f32 %v2390, %v3139
    %v3231 = vadd.f32 %v2391, %v3144
    %v3232 = vadd.f32 %v2392, %v3149
    %v3233 = vadd.f32 %v2393, %v3154
    %v3234 = vld [vmem:[%s0 + $0x13] sm:$0xff]
    %v3235 = vld [vmem:[%s0 + $0x1b] sm:$0xff]
    %v3236 = vld [vmem:[%s0 + $0x23] sm:$0xff]
    %v3237 = vld [vmem:[%s0 + $0x2b] sm:$0xff]
    %v3238 = vld [vmem:[%s0 + $0x33] sm:$0xff]
    %v3239 = vld [vmem:[%s0 + $0x3b] sm:$0xff]
    %v3240 = vld [vmem:[%s0 + $0x43] sm:$0xff]
    %v3241 = vld [vmem:[%s0 + $0x4b] sm:$0xff]
    %v3242 = vld [vmem:[%s0 + $0x53] sm:$0xff]
    %v3243 = vld [vmem:[%s0 + $0x5b] sm:$0xff]
    %v3244 = vld [vmem:[%s0 + $0x63] sm:$0xff]
    %v3245 = vld [vmem:[%s0 + $0x6b] sm:$0xff]
    %v3246 = vld [vmem:[%s0 + $0x73] sm:$0xff]
    %v3247 = vld [vmem:[%s0 + $0x7b] sm:$0xff]
    %v3248 = vld [vmem:[%s0 + $0x83] sm:$0xff]
    %v3249 = vld [vmem:[%s0 + $0x8b] sm:$0xff]
    %v3250 = vld [vmem:[%s0 + $0x93] sm:$0xff]
    %v3251 = vld [vmem:[%s0 + $0x9b] sm:$0xff]
    %v3252 = vld [vmem:[%s0 + $0xa3] sm:$0xff]
    %v3253 = vld [vmem:[%s0 + $0xab] sm:$0xff]
    %v3254 = vld [vmem:[%s0 + $0xb3] sm:$0xff]
    %v3255 = vld [vmem:[%s0 + $0xbb] sm:$0xff]
    %v3256 = vld [vmem:[%s0 + $0xc3] sm:$0xff]
    %v3257 = vld [vmem:[%s0 + $0xcb] sm:$0xff]
    %v3258 = vld [vmem:[%s0 + $0xd3] sm:$0xff]
    %v3259 = vld [vmem:[%s0 + $0xdb] sm:$0xff]
    %v3260 = vld [vmem:[%s0 + $0xe3] sm:$0xff]
    %v3261 = vld [vmem:[%s0 + $0xeb] sm:$0xff]
    %v3262 = vld [vmem:[%s0 + $0xf3] sm:$0xff]
    %v3263 = vld [vmem:[%s0 + $0xfb] sm:$0xff]
    %v3264 = vld [vmem:[%s0 + $0x103] sm:$0xff]
    %v3265 = vld [vmem:[%s0 + $0x10b] sm:$0xff]
    %v3266 = vld [vmem:[%s0 + $0x113] sm:$0xff]
    %v3267 = vld [vmem:[%s0 + $0x11b] sm:$0xff]
    %v3268 = vld [vmem:[%s0 + $0x123] sm:$0xff]
    %v3269 = vld [vmem:[%s0 + $0x12b] sm:$0xff]
    %v3270 = vld [vmem:[%s0 + $0x133] sm:$0xff]
    %v3271 = vld [vmem:[%s0 + $0x13b] sm:$0xff]
    %v3272 = vld [vmem:[%s0 + $0x143] sm:$0xff]
    %v3273 = vld [vmem:[%s0 + $0x14b] sm:$0xff]
    %v3274 = vld [vmem:[%s0 + $0x153] sm:$0xff]
    %v3275 = vld [vmem:[%s0 + $0x15b] sm:$0xff]
    %v3276 = vld [vmem:[%s0 + $0x163] sm:$0xff]
    %v3277 = vld [vmem:[%s0 + $0x16b] sm:$0xff]
    %v3278 = vld [vmem:[%s0 + $0x173] sm:$0xff]
    %v3279 = vld [vmem:[%s0 + $0x17b] sm:$0xff]
    %v3280 = vld [vmem:[%s0 + $0x183] sm:$0xff]
    %v3281 = vld [vmem:[%s0 + $0x18b] sm:$0xff]
    %v3282 = vld [vmem:[%s0 + $0x193] sm:$0xff]
    %v3283 = vld [vmem:[%s0 + $0x19b] sm:$0xff]
    %v3284 = vld [vmem:[%s0 + $0x1a3] sm:$0xff]
    %v3285 = vld [vmem:[%s0 + $0x1ab] sm:$0xff]
    %v3286 = vld [vmem:[%s0 + $0x1b3] sm:$0xff]
    %v3287 = vld [vmem:[%s0 + $0x1bb] sm:$0xff]
    %v3288 = vld [vmem:[%s0 + $0x1c3] sm:$0xff]
    %v3289 = vld [vmem:[%s0 + $0x1cb] sm:$0xff]
    %v3290 = vld [vmem:[%s0 + $0x1d3] sm:$0xff]
    %v3291 = vld [vmem:[%s0 + $0x1db] sm:$0xff]
    %v3292 = vld [vmem:[%s0 + $0x1e3] sm:$0xff]
    %v3293 = vld [vmem:[%s0 + $0x1eb] sm:$0xff]
    %v3294 = vld [vmem:[%s0 + $0x1f3] sm:$0xff]
    %v3295 = vld [vmem:[%s0 + $0x1fb] sm:$0xff]
    %v3296 = vld [vmem:[%s0 + $0x203] sm:$0xff]
    %v3297 = vld [vmem:[%s0 + $0x20b] sm:$0xff]
    %v3298 = vld [vmem:[%s0 + $0x213] sm:$0xff]
    %v3299 = vld [vmem:[%s0 + $0x21b] sm:$0xff]
    %v3300 = vld [vmem:[%s0 + $0x223] sm:$0xff]
    %v3301 = vld [vmem:[%s0 + $0x22b] sm:$0xff]
    %v3302 = vld [vmem:[%s0 + $0x233] sm:$0xff]
    %v3303 = vld [vmem:[%s0 + $0x23b] sm:$0xff]
    %v3304 = vld [vmem:[%s0 + $0x243] sm:$0xff]
    %v3305 = vld [vmem:[%s0 + $0x24b] sm:$0xff]
    %v3306 = vld [vmem:[%s0 + $0x253] sm:$0xff]
    %v3307 = vld [vmem:[%s0 + $0x25b] sm:$0xff]
    %v3308 = vld [vmem:[%s0 + $0x263] sm:$0xff]
    %v3309 = vld [vmem:[%s0 + $0x26b] sm:$0xff]
    %v3310 = vld [vmem:[%s0 + $0x273] sm:$0x3]
    %s3311 = scalar_lea.vmem %s1, 16
    %v3312 = vld [vmem:[%s3311] sm:$0xf]
    %v3314 = vsel %vm184, %v3234, 0
    %v3317 = vsel %vm184, %v3235, 0
    %v3320 = vsel %vm184, %v3236, 0
    %v3323 = vsel %vm184, %v3237, 0
    %v3326 = vsel %vm184, %v3238, 0
    %v3329 = vsel %vm184, %v3239, 0
    %v3332 = vsel %vm184, %v3240, 0
    %v3335 = vsel %vm184, %v3241, 0
    %v3338 = vsel %vm184, %v3242, 0
    %v3341 = vsel %vm184, %v3243, 0
    %v3344 = vsel %vm184, %v3244, 0
    %v3347 = vsel %vm184, %v3245, 0
    %v3350 = vsel %vm184, %v3246, 0
    %v3353 = vsel %vm184, %v3247, 0
    %v3356 = vsel %vm184, %v3248, 0
    %v3359 = vsel %vm184, %v3249, 0
    %v3362 = vsel %vm184, %v3250, 0
    %v3365 = vsel %vm184, %v3251, 0
    %v3368 = vsel %vm184, %v3252, 0
    %v3371 = vsel %vm184, %v3253, 0
    %v3374 = vsel %vm184, %v3254, 0
    %v3377 = vsel %vm184, %v3255, 0
    %v3380 = vsel %vm184, %v3256, 0
    %v3383 = vsel %vm184, %v3257, 0
    %v3386 = vsel %vm184, %v3258, 0
    %v3389 = vsel %vm184, %v3259, 0
    %v3392 = vsel %vm184, %v3260, 0
    %v3395 = vsel %vm184, %v3261, 0
    %v3398 = vsel %vm184, %v3262, 0
    %v3401 = vsel %vm184, %v3263, 0
    %v3404 = vsel %vm184, %v3264, 0
    %v3407 = vsel %vm184, %v3265, 0
    %v3410 = vsel %vm184, %v3266, 0
    %v3413 = vsel %vm184, %v3267, 0
    %v3416 = vsel %vm184, %v3268, 0
    %v3419 = vsel %vm184, %v3269, 0
    %v3422 = vsel %vm184, %v3270, 0
    %v3425 = vsel %vm184, %v3271, 0
    %v3428 = vsel %vm184, %v3272, 0
    %v3431 = vsel %vm184, %v3273, 0
    %v3434 = vsel %vm184, %v3274, 0
    %v3437 = vsel %vm184, %v3275, 0
    %v3440 = vsel %vm184, %v3276, 0
    %v3443 = vsel %vm184, %v3277, 0
    %v3446 = vsel %vm184, %v3278, 0
    %v3449 = vsel %vm184, %v3279, 0
    %v3452 = vsel %vm184, %v3280, 0
    %v3455 = vsel %vm184, %v3281, 0
    %v3458 = vsel %vm184, %v3282, 0
    %v3461 = vsel %vm184, %v3283, 0
    %v3464 = vsel %vm184, %v3284, 0
    %v3467 = vsel %vm184, %v3285, 0
    %v3470 = vsel %vm184, %v3286, 0
    %v3473 = vsel %vm184, %v3287, 0
    %v3476 = vsel %vm184, %v3288, 0
    %v3479 = vsel %vm184, %v3289, 0
    %v3482 = vsel %vm184, %v3290, 0
    %v3485 = vsel %vm184, %v3291, 0
    %v3488 = vsel %vm184, %v3292, 0
    %v3491 = vsel %vm184, %v3293, 0
    %v3494 = vsel %vm184, %v3294, 0
    %v3497 = vsel %vm184, %v3295, 0
    %v3500 = vsel %vm184, %v3296, 0
    %v3503 = vsel %vm184, %v3297, 0
    %v3506 = vsel %vm184, %v3298, 0
    %v3509 = vsel %vm184, %v3299, 0
    %v3512 = vsel %vm184, %v3300, 0
    %v3515 = vsel %vm184, %v3301, 0
    %v3518 = vsel %vm184, %v3302, 0
    %v3521 = vsel %vm184, %v3303, 0
    %v3524 = vsel %vm184, %v3304, 0
    %v3527 = vsel %vm184, %v3305, 0
    %v3530 = vsel %vm184, %v3306, 0
    %v3533 = vsel %vm184, %v3307, 0
    %v3536 = vsel %vm184, %v3308, 0
    %v3539 = vsel %vm184, %v3309, 0
    %v3542 = vsel %vm184, %v3310, 0
    %v3545 = vsel %vm416, %v3312, 0
    %3547 = vmatprep.subr.mxu0 0.0
    %3548 = vmatpush1.msra.mxu0 0.0
    %3549 = vmatprep.subr.mxu0 0.0
    %3550 = vmatpush1.msra.mxu0 0.0
    %3551 = vmatprep.subr.mxu0 0.0
    %3552 = vmatpush1.msra.mxu0 0.0
    %3553 = vmatprep.subr.mxu0 0.0
    %3554 = vmatpush1.msra.mxu0 0.0
    %3555 = vmatprep.subr.mxu0 0.0
    %3556 = vmatpush1.msra.mxu0 0.0
    %3557 = vmatprep.subr.mxu0 0.0
    %3558 = vmatpush1.msra.mxu0 0.0
    %3559 = vmatprep.subr.mxu0 0.0
    %3560 = vmatpush1.msra.mxu0 0.0
    %3561 = vmatprep.subr.mxu0 0.0
    %3562 = vmatpush1.msra.mxu0 0.0
    %3563 = vmatprep.subr.mxu0 0.0
    %3564 = vmatpush1.msra.mxu0 0.0
    %3565 = vmatprep.subr.mxu0 0.0
    %3566 = vmatpush1.msra.mxu0 0.0
    %3567 = vmatprep.subr.mxu0 0.0
    %3568 = vmatpush1.msra.mxu0 0.0
    %3569 = vmatprep.subr.mxu0 0.0
    %3570 = vmatpush1.msra.mxu0 0.0
    %3571 = vmatprep.subr.mxu0 0.0
    %3572 = vmatpush1.msra.mxu0 0.0
    %3573 = vmatprep.subr.mxu0 0.0
    %3574 = vmatpush1.msra.mxu0 0.0
    %3575 = vmatprep.subr.mxu0 0.0
    %3576 = vmatpush1.msra.mxu0 0.0
    %3577 = vmatprep.subr.mxu0 0.0
    %3578 = vmatpush1.msra.mxu0 %v3545
    %3579 = vmatprep.subr.mxu0 0.0
    %3580 = vmatpush2.msra.mxu0 0.0
    %3581 = vmatprep.subr.mxu0 0.0
    %3582 = vmatpush2.msra.mxu0 0.0
    %3583 = vmatprep.subr.mxu0 0.0
    %3584 = vmatpush2.msra.mxu0 0.0
    %3585 = vmatprep.subr.mxu0 0.0
    %3586 = vmatpush2.msra.mxu0 0.0
    %3587 = vmatprep.subr.mxu0 0.0
    %3588 = vmatpush2.msra.mxu0 0.0
    %3589 = vmatprep.subr.mxu0 0.0
    %3590 = vmatpush2.msra.mxu0 0.0
    %3591 = vmatprep.subr.mxu0 0.0
    %3592 = vmatpush2.msra.mxu0 0.0
    %3593 = vmatprep.subr.mxu0 0.0
    %3594 = vmatpush2.msra.mxu0 0.0
    %3595 = vmatprep.subr.mxu0 0.0
    %3596 = vmatpush2.msra.mxu0 0.0
    %3597 = vmatprep.subr.mxu0 0.0
    %3598 = vmatpush2.msra.mxu0 0.0
    %3599 = vmatprep.subr.mxu0 0.0
    %3600 = vmatpush2.msra.mxu0 0.0
    %3601 = vmatprep.subr.mxu0 0.0
    %3602 = vmatpush2.msra.mxu0 0.0
    %3603 = vmatprep.subr.mxu0 0.0
    %3604 = vmatpush2.msra.mxu0 0.0
    %3605 = vmatprep.subr.mxu0 0.0
    %3606 = vmatpush2.msra.mxu0 0.0
    %3607 = vmatprep.subr.mxu0 0.0
    %3608 = vmatpush2.msra.mxu0 0.0
    %3609 = vmatprep.subr.mxu0 0.0
    %3610 = vmatpush2.msra.mxu0 0.0
    %3611 = vmatprep.mubr.f32.mxu0 0.0
    %3612 = vmatmul.mubr.f32.gmra.mxu0 %v3314
    %v3613 = vpop.f32.mrf.mxu0
    %v3614 = vadd.f32 0.0, %v3613
    %v3615 = vpop.f32.mrf.mxu0
    %3616 = vmatprep.mubr.f32.mxu0 0.0
    %3617 = vmatmul.mubr.f32.gmra.mxu0 %v3317
    %v3618 = vpop.f32.mrf.mxu0
    %v3619 = vadd.f32 0.0, %v3618
    %v3620 = vpop.f32.mrf.mxu0
    %3621 = vmatprep.mubr.f32.mxu0 0.0
    %3622 = vmatmul.mubr.f32.gmra.mxu0 %v3320
    %v3623 = vpop.f32.mrf.mxu0
    %v3624 = vadd.f32 0.0, %v3623
    %v3625 = vpop.f32.mrf.mxu0
    %3626 = vmatprep.mubr.f32.mxu0 0.0
    %3627 = vmatmul.mubr.f32.gmra.mxu0 %v3323
    %v3628 = vpop.f32.mrf.mxu0
    %v3629 = vadd.f32 0.0, %v3628
    %v3630 = vpop.f32.mrf.mxu0
    %3631 = vmatprep.mubr.f32.mxu0 0.0
    %3632 = vmatmul.mubr.f32.gmra.mxu0 %v3326
    %v3633 = vpop.f32.mrf.mxu0
    %v3634 = vadd.f32 0.0, %v3633
    %v3635 = vpop.f32.mrf.mxu0
    %3636 = vmatprep.mubr.f32.mxu0 0.0
    %3637 = vmatmul.mubr.f32.gmra.mxu0 %v3329
    %v3638 = vpop.f32.mrf.mxu0
    %v3639 = vadd.f32 0.0, %v3638
    %v3640 = vpop.f32.mrf.mxu0
    %3641 = vmatprep.mubr.f32.mxu0 0.0
    %3642 = vmatmul.mubr.f32.gmra.mxu0 %v3332
    %v3643 = vpop.f32.mrf.mxu0
    %v3644 = vadd.f32 0.0, %v3643
    %v3645 = vpop.f32.mrf.mxu0
    %3646 = vmatprep.mubr.f32.mxu0 0.0
    %3647 = vmatmul.mubr.f32.gmra.mxu0 %v3335
    %v3648 = vpop.f32.mrf.mxu0
    %v3649 = vadd.f32 0.0, %v3648
    %v3650 = vpop.f32.mrf.mxu0
    %3651 = vmatprep.mubr.f32.mxu0 0.0
    %3652 = vmatmul.mubr.f32.gmra.mxu0 %v3338
    %v3653 = vpop.f32.mrf.mxu0
    %v3654 = vadd.f32 0.0, %v3653
    %v3655 = vpop.f32.mrf.mxu0
    %3656 = vmatprep.mubr.f32.mxu0 0.0
    %3657 = vmatmul.mubr.f32.gmra.mxu0 %v3341
    %v3658 = vpop.f32.mrf.mxu0
    %v3659 = vadd.f32 0.0, %v3658
    %v3660 = vpop.f32.mrf.mxu0
    %3661 = vmatprep.mubr.f32.mxu0 0.0
    %3662 = vmatmul.mubr.f32.gmra.mxu0 %v3344
    %v3663 = vpop.f32.mrf.mxu0
    %v3664 = vadd.f32 0.0, %v3663
    %v3665 = vpop.f32.mrf.mxu0
    %3666 = vmatprep.mubr.f32.mxu0 0.0
    %3667 = vmatmul.mubr.f32.gmra.mxu0 %v3347
    %v3668 = vpop.f32.mrf.mxu0
    %v3669 = vadd.f32 0.0, %v3668
    %v3670 = vpop.f32.mrf.mxu0
    %3671 = vmatprep.mubr.f32.mxu0 0.0
    %3672 = vmatmul.mubr.f32.gmra.mxu0 %v3350
    %v3673 = vpop.f32.mrf.mxu0
    %v3674 = vadd.f32 0.0, %v3673
    %v3675 = vpop.f32.mrf.mxu0
    %3676 = vmatprep.mubr.f32.mxu0 0.0
    %3677 = vmatmul.mubr.f32.gmra.mxu0 %v3353
    %v3678 = vpop.f32.mrf.mxu0
    %v3679 = vadd.f32 0.0, %v3678
    %v3680 = vpop.f32.mrf.mxu0
    %3681 = vmatprep.mubr.f32.mxu0 0.0
    %3682 = vmatmul.mubr.f32.gmra.mxu0 %v3356
    %v3683 = vpop.f32.mrf.mxu0
    %v3684 = vadd.f32 0.0, %v3683
    %v3685 = vpop.f32.mrf.mxu0
    %3686 = vmatprep.mubr.f32.mxu0 0.0
    %3687 = vmatmul.mubr.f32.gmra.mxu0 %v3359
    %v3688 = vpop.f32.mrf.mxu0
    %v3689 = vadd.f32 0.0, %v3688
    %v3690 = vpop.f32.mrf.mxu0
    %3691 = vmatprep.mubr.f32.mxu0 0.0
    %3692 = vmatmul.mubr.f32.gmra.mxu0 %v3362
    %v3693 = vpop.f32.mrf.mxu0
    %v3694 = vadd.f32 0.0, %v3693
    %v3695 = vpop.f32.mrf.mxu0
    %3696 = vmatprep.mubr.f32.mxu0 0.0
    %3697 = vmatmul.mubr.f32.gmra.mxu0 %v3365
    %v3698 = vpop.f32.mrf.mxu0
    %v3699 = vadd.f32 0.0, %v3698
    %v3700 = vpop.f32.mrf.mxu0
    %3701 = vmatprep.mubr.f32.mxu0 0.0
    %3702 = vmatmul.mubr.f32.gmra.mxu0 %v3368
    %v3703 = vpop.f32.mrf.mxu0
    %v3704 = vadd.f32 0.0, %v3703
    %v3705 = vpop.f32.mrf.mxu0
    %3706 = vmatprep.mubr.f32.mxu0 0.0
    %3707 = vmatmul.mubr.f32.gmra.mxu0 %v3371
    %v3708 = vpop.f32.mrf.mxu0
    %v3709 = vadd.f32 0.0, %v3708
    %v3710 = vpop.f32.mrf.mxu0
    %3711 = vmatprep.mubr.f32.mxu0 0.0
    %3712 = vmatmul.mubr.f32.gmra.mxu0 %v3374
    %v3713 = vpop.f32.mrf.mxu0
    %v3714 = vadd.f32 0.0, %v3713
    %v3715 = vpop.f32.mrf.mxu0
    %3716 = vmatprep.mubr.f32.mxu0 0.0
    %3717 = vmatmul.mubr.f32.gmra.mxu0 %v3377
    %v3718 = vpop.f32.mrf.mxu0
    %v3719 = vadd.f32 0.0, %v3718
    %v3720 = vpop.f32.mrf.mxu0
    %3721 = vmatprep.mubr.f32.mxu0 0.0
    %3722 = vmatmul.mubr.f32.gmra.mxu0 %v3380
    %v3723 = vpop.f32.mrf.mxu0
    %v3724 = vadd.f32 0.0, %v3723
    %v3725 = vpop.f32.mrf.mxu0
    %3726 = vmatprep.mubr.f32.mxu0 0.0
    %3727 = vmatmul.mubr.f32.gmra.mxu0 %v3383
    %v3728 = vpop.f32.mrf.mxu0
    %v3729 = vadd.f32 0.0, %v3728
    %v3730 = vpop.f32.mrf.mxu0
    %3731 = vmatprep.mubr.f32.mxu0 0.0
    %3732 = vmatmul.mubr.f32.gmra.mxu0 %v3386
    %v3733 = vpop.f32.mrf.mxu0
    %v3734 = vadd.f32 0.0, %v3733
    %v3735 = vpop.f32.mrf.mxu0
    %3736 = vmatprep.mubr.f32.mxu0 0.0
    %3737 = vmatmul.mubr.f32.gmra.mxu0 %v3389
    %v3738 = vpop.f32.mrf.mxu0
    %v3739 = vadd.f32 0.0, %v3738
    %v3740 = vpop.f32.mrf.mxu0
    %3741 = vmatprep.mubr.f32.mxu0 0.0
    %3742 = vmatmul.mubr.f32.gmra.mxu0 %v3392
    %v3743 = vpop.f32.mrf.mxu0
    %v3744 = vadd.f32 0.0, %v3743
    %v3745 = vpop.f32.mrf.mxu0
    %3746 = vmatprep.mubr.f32.mxu0 0.0
    %3747 = vmatmul.mubr.f32.gmra.mxu0 %v3395
    %v3748 = vpop.f32.mrf.mxu0
    %v3749 = vadd.f32 0.0, %v3748
    %v3750 = vpop.f32.mrf.mxu0
    %3751 = vmatprep.mubr.f32.mxu0 0.0
    %3752 = vmatmul.mubr.f32.gmra.mxu0 %v3398
    %v3753 = vpop.f32.mrf.mxu0
    %v3754 = vadd.f32 0.0, %v3753
    %v3755 = vpop.f32.mrf.mxu0
    %3756 = vmatprep.mubr.f32.mxu0 0.0
    %3757 = vmatmul.mubr.f32.gmra.mxu0 %v3401
    %v3758 = vpop.f32.mrf.mxu0
    %v3759 = vadd.f32 0.0, %v3758
    %v3760 = vpop.f32.mrf.mxu0
    %3761 = vmatprep.mubr.f32.mxu0 0.0
    %3762 = vmatmul.mubr.f32.gmra.mxu0 %v3404
    %v3763 = vpop.f32.mrf.mxu0
    %v3764 = vadd.f32 0.0, %v3763
    %v3765 = vpop.f32.mrf.mxu0
    %3766 = vmatprep.mubr.f32.mxu0 0.0
    %3767 = vmatmul.mubr.f32.gmra.mxu0 %v3407
    %v3768 = vpop.f32.mrf.mxu0
    %v3769 = vadd.f32 0.0, %v3768
    %v3770 = vpop.f32.mrf.mxu0
    %3771 = vmatprep.mubr.f32.mxu0 0.0
    %3772 = vmatmul.mubr.f32.gmra.mxu0 %v3410
    %v3773 = vpop.f32.mrf.mxu0
    %v3774 = vadd.f32 0.0, %v3773
    %v3775 = vpop.f32.mrf.mxu0
    %3776 = vmatprep.mubr.f32.mxu0 0.0
    %3777 = vmatmul.mubr.f32.gmra.mxu0 %v3413
    %v3778 = vpop.f32.mrf.mxu0
    %v3779 = vadd.f32 0.0, %v3778
    %v3780 = vpop.f32.mrf.mxu0
    %3781 = vmatprep.mubr.f32.mxu0 0.0
    %3782 = vmatmul.mubr.f32.gmra.mxu0 %v3416
    %v3783 = vpop.f32.mrf.mxu0
    %v3784 = vadd.f32 0.0, %v3783
    %v3785 = vpop.f32.mrf.mxu0
    %3786 = vmatprep.mubr.f32.mxu0 0.0
    %3787 = vmatmul.mubr.f32.gmra.mxu0 %v3419
    %v3788 = vpop.f32.mrf.mxu0
    %v3789 = vadd.f32 0.0, %v3788
    %v3790 = vpop.f32.mrf.mxu0
    %3791 = vmatprep.mubr.f32.mxu0 0.0
    %3792 = vmatmul.mubr.f32.gmra.mxu0 %v3422
    %v3793 = vpop.f32.mrf.mxu0
    %v3794 = vadd.f32 0.0, %v3793
    %v3795 = vpop.f32.mrf.mxu0
    %3796 = vmatprep.mubr.f32.mxu0 0.0
    %3797 = vmatmul.mubr.f32.gmra.mxu0 %v3425
    %v3798 = vpop.f32.mrf.mxu0
    %v3799 = vadd.f32 0.0, %v3798
    %v3800 = vpop.f32.mrf.mxu0
    %3801 = vmatprep.mubr.f32.mxu0 0.0
    %3802 = vmatmul.mubr.f32.gmra.mxu0 %v3428
    %v3803 = vpop.f32.mrf.mxu0
    %v3804 = vadd.f32 0.0, %v3803
    %v3805 = vpop.f32.mrf.mxu0
    %3806 = vmatprep.mubr.f32.mxu0 0.0
    %3807 = vmatmul.mubr.f32.gmra.mxu0 %v3431
    %v3808 = vpop.f32.mrf.mxu0
    %v3809 = vadd.f32 0.0, %v3808
    %v3810 = vpop.f32.mrf.mxu0
    %3811 = vmatprep.mubr.f32.mxu0 0.0
    %3812 = vmatmul.mubr.f32.gmra.mxu0 %v3434
    %v3813 = vpop.f32.mrf.mxu0
    %v3814 = vadd.f32 0.0, %v3813
    %v3815 = vpop.f32.mrf.mxu0
    %3816 = vmatprep.mubr.f32.mxu0 0.0
    %3817 = vmatmul.mubr.f32.gmra.mxu0 %v3437
    %v3818 = vpop.f32.mrf.mxu0
    %v3819 = vadd.f32 0.0, %v3818
    %v3820 = vpop.f32.mrf.mxu0
    %3821 = vmatprep.mubr.f32.mxu0 0.0
    %3822 = vmatmul.mubr.f32.gmra.mxu0 %v3440
    %v3823 = vpop.f32.mrf.mxu0
    %v3824 = vadd.f32 0.0, %v3823
    %v3825 = vpop.f32.mrf.mxu0
    %3826 = vmatprep.mubr.f32.mxu0 0.0
    %3827 = vmatmul.mubr.f32.gmra.mxu0 %v3443
    %v3828 = vpop.f32.mrf.mxu0
    %v3829 = vadd.f32 0.0, %v3828
    %v3830 = vpop.f32.mrf.mxu0
    %3831 = vmatprep.mubr.f32.mxu0 0.0
    %3832 = vmatmul.mubr.f32.gmra.mxu0 %v3446
    %v3833 = vpop.f32.mrf.mxu0
    %v3834 = vadd.f32 0.0, %v3833
    %v3835 = vpop.f32.mrf.mxu0
    %3836 = vmatprep.mubr.f32.mxu0 0.0
    %3837 = vmatmul.mubr.f32.gmra.mxu0 %v3449
    %v3838 = vpop.f32.mrf.mxu0
    %v3839 = vadd.f32 0.0, %v3838
    %v3840 = vpop.f32.mrf.mxu0
    %3841 = vmatprep.mubr.f32.mxu0 0.0
    %3842 = vmatmul.mubr.f32.gmra.mxu0 %v3452
    %v3843 = vpop.f32.mrf.mxu0
    %v3844 = vadd.f32 0.0, %v3843
    %v3845 = vpop.f32.mrf.mxu0
    %3846 = vmatprep.mubr.f32.mxu0 0.0
    %3847 = vmatmul.mubr.f32.gmra.mxu0 %v3455
    %v3848 = vpop.f32.mrf.mxu0
    %v3849 = vadd.f32 0.0, %v3848
    %v3850 = vpop.f32.mrf.mxu0
    %3851 = vmatprep.mubr.f32.mxu0 0.0
    %3852 = vmatmul.mubr.f32.gmra.mxu0 %v3458
    %v3853 = vpop.f32.mrf.mxu0
    %v3854 = vadd.f32 0.0, %v3853
    %v3855 = vpop.f32.mrf.mxu0
    %3856 = vmatprep.mubr.f32.mxu0 0.0
    %3857 = vmatmul.mubr.f32.gmra.mxu0 %v3461
    %v3858 = vpop.f32.mrf.mxu0
    %v3859 = vadd.f32 0.0, %v3858
    %v3860 = vpop.f32.mrf.mxu0
    %3861 = vmatprep.mubr.f32.mxu0 0.0
    %3862 = vmatmul.mubr.f32.gmra.mxu0 %v3464
    %v3863 = vpop.f32.mrf.mxu0
    %v3864 = vadd.f32 0.0, %v3863
    %v3865 = vpop.f32.mrf.mxu0
    %3866 = vmatprep.mubr.f32.mxu0 0.0
    %3867 = vmatmul.mubr.f32.gmra.mxu0 %v3467
    %v3868 = vpop.f32.mrf.mxu0
    %v3869 = vadd.f32 0.0, %v3868
    %v3870 = vpop.f32.mrf.mxu0
    %3871 = vmatprep.mubr.f32.mxu0 0.0
    %3872 = vmatmul.mubr.f32.gmra.mxu0 %v3470
    %v3873 = vpop.f32.mrf.mxu0
    %v3874 = vadd.f32 0.0, %v3873
    %v3875 = vpop.f32.mrf.mxu0
    %3876 = vmatprep.mubr.f32.mxu0 0.0
    %3877 = vmatmul.mubr.f32.gmra.mxu0 %v3473
    %v3878 = vpop.f32.mrf.mxu0
    %v3879 = vadd.f32 0.0, %v3878
    %v3880 = vpop.f32.mrf.mxu0
    %3881 = vmatprep.mubr.f32.mxu0 0.0
    %3882 = vmatmul.mubr.f32.gmra.mxu0 %v3476
    %v3883 = vpop.f32.mrf.mxu0
    %v3884 = vadd.f32 0.0, %v3883
    %v3885 = vpop.f32.mrf.mxu0
    %3886 = vmatprep.mubr.f32.mxu0 0.0
    %3887 = vmatmul.mubr.f32.gmra.mxu0 %v3479
    %v3888 = vpop.f32.mrf.mxu0
    %v3889 = vadd.f32 0.0, %v3888
    %v3890 = vpop.f32.mrf.mxu0
    %3891 = vmatprep.mubr.f32.mxu0 0.0
    %3892 = vmatmul.mubr.f32.gmra.mxu0 %v3482
    %v3893 = vpop.f32.mrf.mxu0
    %v3894 = vadd.f32 0.0, %v3893
    %v3895 = vpop.f32.mrf.mxu0
    %3896 = vmatprep.mubr.f32.mxu0 0.0
    %3897 = vmatmul.mubr.f32.gmra.mxu0 %v3485
    %v3898 = vpop.f32.mrf.mxu0
    %v3899 = vadd.f32 0.0, %v3898
    %v3900 = vpop.f32.mrf.mxu0
    %3901 = vmatprep.mubr.f32.mxu0 0.0
    %3902 = vmatmul.mubr.f32.gmra.mxu0 %v3488
    %v3903 = vpop.f32.mrf.mxu0
    %v3904 = vadd.f32 0.0, %v3903
    %v3905 = vpop.f32.mrf.mxu0
    %3906 = vmatprep.mubr.f32.mxu0 0.0
    %3907 = vmatmul.mubr.f32.gmra.mxu0 %v3491
    %v3908 = vpop.f32.mrf.mxu0
    %v3909 = vadd.f32 0.0, %v3908
    %v3910 = vpop.f32.mrf.mxu0
    %3911 = vmatprep.mubr.f32.mxu0 0.0
    %3912 = vmatmul.mubr.f32.gmra.mxu0 %v3494
    %v3913 = vpop.f32.mrf.mxu0
    %v3914 = vadd.f32 0.0, %v3913
    %v3915 = vpop.f32.mrf.mxu0
    %3916 = vmatprep.mubr.f32.mxu0 0.0
    %3917 = vmatmul.mubr.f32.gmra.mxu0 %v3497
    %v3918 = vpop.f32.mrf.mxu0
    %v3919 = vadd.f32 0.0, %v3918
    %v3920 = vpop.f32.mrf.mxu0
    %3921 = vmatprep.mubr.f32.mxu0 0.0
    %3922 = vmatmul.mubr.f32.gmra.mxu0 %v3500
    %v3923 = vpop.f32.mrf.mxu0
    %v3924 = vadd.f32 0.0, %v3923
    %v3925 = vpop.f32.mrf.mxu0
    %3926 = vmatprep.mubr.f32.mxu0 0.0
    %3927 = vmatmul.mubr.f32.gmra.mxu0 %v3503
    %v3928 = vpop.f32.mrf.mxu0
    %v3929 = vadd.f32 0.0, %v3928
    %v3930 = vpop.f32.mrf.mxu0
    %3931 = vmatprep.mubr.f32.mxu0 0.0
    %3932 = vmatmul.mubr.f32.gmra.mxu0 %v3506
    %v3933 = vpop.f32.mrf.mxu0
    %v3934 = vadd.f32 0.0, %v3933
    %v3935 = vpop.f32.mrf.mxu0
    %3936 = vmatprep.mubr.f32.mxu0 0.0
    %3937 = vmatmul.mubr.f32.gmra.mxu0 %v3509
    %v3938 = vpop.f32.mrf.mxu0
    %v3939 = vadd.f32 0.0, %v3938
    %v3940 = vpop.f32.mrf.mxu0
    %3941 = vmatprep.mubr.f32.mxu0 0.0
    %3942 = vmatmul.mubr.f32.gmra.mxu0 %v3512
    %v3943 = vpop.f32.mrf.mxu0
    %v3944 = vadd.f32 0.0, %v3943
    %v3945 = vpop.f32.mrf.mxu0
    %3946 = vmatprep.mubr.f32.mxu0 0.0
    %3947 = vmatmul.mubr.f32.gmra.mxu0 %v3515
    %v3948 = vpop.f32.mrf.mxu0
    %v3949 = vadd.f32 0.0, %v3948
    %v3950 = vpop.f32.mrf.mxu0
    %3951 = vmatprep.mubr.f32.mxu0 0.0
    %3952 = vmatmul.mubr.f32.gmra.mxu0 %v3518
    %v3953 = vpop.f32.mrf.mxu0
    %v3954 = vadd.f32 0.0, %v3953
    %v3955 = vpop.f32.mrf.mxu0
    %3956 = vmatprep.mubr.f32.mxu0 0.0
    %3957 = vmatmul.mubr.f32.gmra.mxu0 %v3521
    %v3958 = vpop.f32.mrf.mxu0
    %v3959 = vadd.f32 0.0, %v3958
    %v3960 = vpop.f32.mrf.mxu0
    %3961 = vmatprep.mubr.f32.mxu0 0.0
    %3962 = vmatmul.mubr.f32.gmra.mxu0 %v3524
    %v3963 = vpop.f32.mrf.mxu0
    %v3964 = vadd.f32 0.0, %v3963
    %v3965 = vpop.f32.mrf.mxu0
    %3966 = vmatprep.mubr.f32.mxu0 0.0
    %3967 = vmatmul.mubr.f32.gmra.mxu0 %v3527
    %v3968 = vpop.f32.mrf.mxu0
    %v3969 = vadd.f32 0.0, %v3968
    %v3970 = vpop.f32.mrf.mxu0
    %3971 = vmatprep.mubr.f32.mxu0 0.0
    %3972 = vmatmul.mubr.f32.gmra.mxu0 %v3530
    %v3973 = vpop.f32.mrf.mxu0
    %v3974 = vadd.f32 0.0, %v3973
    %v3975 = vpop.f32.mrf.mxu0
    %3976 = vmatprep.mubr.f32.mxu0 0.0
    %3977 = vmatmul.mubr.f32.gmra.mxu0 %v3533
    %v3978 = vpop.f32.mrf.mxu0
    %v3979 = vadd.f32 0.0, %v3978
    %v3980 = vpop.f32.mrf.mxu0
    %3981 = vmatprep.mubr.f32.mxu0 0.0
    %3982 = vmatmul.mubr.f32.gmra.mxu0 %v3536
    %v3983 = vpop.f32.mrf.mxu0
    %v3984 = vadd.f32 0.0, %v3983
    %v3985 = vpop.f32.mrf.mxu0
    %3986 = vmatprep.mubr.f32.mxu0 0.0
    %3987 = vmatmul.mubr.f32.gmra.mxu0 %v3539
    %v3988 = vpop.f32.mrf.mxu0
    %v3989 = vadd.f32 0.0, %v3988
    %v3990 = vpop.f32.mrf.mxu0
    %3991 = vmatprep.mubr.f32.mxu0 0.0
    %3992 = vmatmul.mubr.f32.gmra.mxu0 %v3542
    %v3993 = vpop.f32.mrf.mxu0
    %v3994 = vadd.f32 0.0, %v3993
    %v3995 = vpop.f32.mrf.mxu0
    %3996 = vdwg.mxu0
    %v3997 = vadd.f32 %v3157, %v3614
    %v3998 = vadd.f32 %v3158, %v3619
    %v3999 = vadd.f32 %v3159, %v3624
    %v4000 = vadd.f32 %v3160, %v3629
    %v4001 = vadd.f32 %v3161, %v3634
    %v4002 = vadd.f32 %v3162, %v3639
    %v4003 = vadd.f32 %v3163, %v3644
    %v4004 = vadd.f32 %v3164, %v3649
    %v4005 = vadd.f32 %v3165, %v3654
    %v4006 = vadd.f32 %v3166, %v3659
    %v4007 = vadd.f32 %v3167, %v3664
    %v4008 = vadd.f32 %v3168, %v3669
    %v4009 = vadd.f32 %v3169, %v3674
    %v4010 = vadd.f32 %v3170, %v3679
    %v4011 = vadd.f32 %v3171, %v3684
    %v4012 = vadd.f32 %v3172, %v3689
    %v4013 = vadd.f32 %v3173, %v3694
    %v4014 = vadd.f32 %v3174, %v3699
    %v4015 = vadd.f32 %v3175, %v3704
    %v4016 = vadd.f32 %v3176, %v3709
    %v4017 = vadd.f32 %v3177, %v3714
    %v4018 = vadd.f32 %v3178, %v3719
    %v4019 = vadd.f32 %v3179, %v3724
    %v4020 = vadd.f32 %v3180, %v3729
    %v4021 = vadd.f32 %v3181, %v3734
    %v4022 = vadd.f32 %v3182, %v3739
    %v4023 = vadd.f32 %v3183, %v3744
    %v4024 = vadd.f32 %v3184, %v3749
    %v4025 = vadd.f32 %v3185, %v3754
    %v4026 = vadd.f32 %v3186, %v3759
    %v4027 = vadd.f32 %v3187, %v3764
    %v4028 = vadd.f32 %v3188, %v3769
    %v4029 = vadd.f32 %v3189, %v3774
    %v4030 = vadd.f32 %v3190, %v3779
    %v4031 = vadd.f32 %v3191, %v3784
    %v4032 = vadd.f32 %v3192, %v3789
    %v4033 = vadd.f32 %v3193, %v3794
    %v4034 = vadd.f32 %v3194, %v3799
    %v4035 = vadd.f32 %v3195, %v3804
    %v4036 = vadd.f32 %v3196, %v3809
    %v4037 = vadd.f32 %v3197, %v3814
    %v4038 = vadd.f32 %v3198, %v3819
    %v4039 = vadd.f32 %v3199, %v3824
    %v4040 = vadd.f32 %v3200, %v3829
    %v4041 = vadd.f32 %v3201, %v3834
    %v4042 = vadd.f32 %v3202, %v3839
    %v4043 = vadd.f32 %v3203, %v3844
    %v4044 = vadd.f32 %v3204, %v3849
    %v4045 = vadd.f32 %v3205, %v3854
    %v4046 = vadd.f32 %v3206, %v3859
    %v4047 = vadd.f32 %v3207, %v3864
    %v4048 = vadd.f32 %v3208, %v3869
    %v4049 = vadd.f32 %v3209, %v3874
    %v4050 = vadd.f32 %v3210, %v3879
    %v4051 = vadd.f32 %v3211, %v3884
    %v4052 = vadd.f32 %v3212, %v3889
    %v4053 = vadd.f32 %v3213, %v3894
    %v4054 = vadd.f32 %v3214, %v3899
    %v4055 = vadd.f32 %v3215, %v3904
    %v4056 = vadd.f32 %v3216, %v3909
    %v4057 = vadd.f32 %v3217, %v3914
    %v4058 = vadd.f32 %v3218, %v3919
    %v4059 = vadd.f32 %v3219, %v3924
    %v4060 = vadd.f32 %v3220, %v3929
    %v4061 = vadd.f32 %v3221, %v3934
    %v4062 = vadd.f32 %v3222, %v3939
    %v4063 = vadd.f32 %v3223, %v3944
    %v4064 = vadd.f32 %v3224, %v3949
    %v4065 = vadd.f32 %v3225, %v3954
    %v4066 = vadd.f32 %v3226, %v3959
    %v4067 = vadd.f32 %v3227, %v3964
    %v4068 = vadd.f32 %v3228, %v3969
    %v4069 = vadd.f32 %v3229, %v3974
    %v4070 = vadd.f32 %v3230, %v3979
    %v4071 = vadd.f32 %v3231, %v3984
    %v4072 = vadd.f32 %v3232, %v3989
    %v4073 = vadd.f32 %v3233, %v3994
    %v4074 = vld [vmem:[%s0 + $0x14] sm:$0xff]
    %v4075 = vld [vmem:[%s0 + $0x1c] sm:$0xff]
    %v4076 = vld [vmem:[%s0 + $0x24] sm:$0xff]
    %v4077 = vld [vmem:[%s0 + $0x2c] sm:$0xff]
    %v4078 = vld [vmem:[%s0 + $0x34] sm:$0xff]
    %v4079 = vld [vmem:[%s0 + $0x3c] sm:$0xff]
    %v4080 = vld [vmem:[%s0 + $0x44] sm:$0xff]
    %v4081 = vld [vmem:[%s0 + $0x4c] sm:$0xff]
    %v4082 = vld [vmem:[%s0 + $0x54] sm:$0xff]
    %v4083 = vld [vmem:[%s0 + $0x5c] sm:$0xff]
    %v4084 = vld [vmem:[%s0 + $0x64] sm:$0xff]
    %v4085 = vld [vmem:[%s0 + $0x6c] sm:$0xff]
    %v4086 = vld [vmem:[%s0 + $0x74] sm:$0xff]
    %v4087 = vld [vmem:[%s0 + $0x7c] sm:$0xff]
    %v4088 = vld [vmem:[%s0 + $0x84] sm:$0xff]
    %v4089 = vld [vmem:[%s0 + $0x8c] sm:$0xff]
    %v4090 = vld [vmem:[%s0 + $0x94] sm:$0xff]
    %v4091 = vld [vmem:[%s0 + $0x9c] sm:$0xff]
    %v4092 = vld [vmem:[%s0 + $0xa4] sm:$0xff]
    %v4093 = vld [vmem:[%s0 + $0xac] sm:$0xff]
    %v4094 = vld [vmem:[%s0 + $0xb4] sm:$0xff]
    %v4095 = vld [vmem:[%s0 + $0xbc] sm:$0xff]
    %v4096 = vld [vmem:[%s0 + $0xc4] sm:$0xff]
    %v4097 = vld [vmem:[%s0 + $0xcc] sm:$0xff]
    %v4098 = vld [vmem:[%s0 + $0xd4] sm:$0xff]
    %v4099 = vld [vmem:[%s0 + $0xdc] sm:$0xff]
    %v4100 = vld [vmem:[%s0 + $0xe4] sm:$0xff]
    %v4101 = vld [vmem:[%s0 + $0xec] sm:$0xff]
    %v4102 = vld [vmem:[%s0 + $0xf4] sm:$0xff]
    %v4103 = vld [vmem:[%s0 + $0xfc] sm:$0xff]
    %v4104 = vld [vmem:[%s0 + $0x104] sm:$0xff]
    %v4105 = vld [vmem:[%s0 + $0x10c] sm:$0xff]
    %v4106 = vld [vmem:[%s0 + $0x114] sm:$0xff]
    %v4107 = vld [vmem:[%s0 + $0x11c] sm:$0xff]
    %v4108 = vld [vmem:[%s0 + $0x124] sm:$0xff]
    %v4109 = vld [vmem:[%s0 + $0x12c] sm:$0xff]
    %v4110 = vld [vmem:[%s0 + $0x134] sm:$0xff]
    %v4111 = vld [vmem:[%s0 + $0x13c] sm:$0xff]
    %v4112 = vld [vmem:[%s0 + $0x144] sm:$0xff]
    %v4113 = vld [vmem:[%s0 + $0x14c] sm:$0xff]
    %v4114 = vld [vmem:[%s0 + $0x154] sm:$0xff]
    %v4115 = vld [vmem:[%s0 + $0x15c] sm:$0xff]
    %v4116 = vld [vmem:[%s0 + $0x164] sm:$0xff]
    %v4117 = vld [vmem:[%s0 + $0x16c] sm:$0xff]
    %v4118 = vld [vmem:[%s0 + $0x174] sm:$0xff]
    %v4119 = vld [vmem:[%s0 + $0x17c] sm:$0xff]
    %v4120 = vld [vmem:[%s0 + $0x184] sm:$0xff]
    %v4121 = vld [vmem:[%s0 + $0x18c] sm:$0xff]
    %v4122 = vld [vmem:[%s0 + $0x194] sm:$0xff]
    %v4123 = vld [vmem:[%s0 + $0x19c] sm:$0xff]
    %v4124 = vld [vmem:[%s0 + $0x1a4] sm:$0xff]
    %v4125 = vld [vmem:[%s0 + $0x1ac] sm:$0xff]
    %v4126 = vld [vmem:[%s0 + $0x1b4] sm:$0xff]
    %v4127 = vld [vmem:[%s0 + $0x1bc] sm:$0xff]
    %v4128 = vld [vmem:[%s0 + $0x1c4] sm:$0xff]
    %v4129 = vld [vmem:[%s0 + $0x1cc] sm:$0xff]
    %v4130 = vld [vmem:[%s0 + $0x1d4] sm:$0xff]
    %v4131 = vld [vmem:[%s0 + $0x1dc] sm:$0xff]
    %v4132 = vld [vmem:[%s0 + $0x1e4] sm:$0xff]
    %v4133 = vld [vmem:[%s0 + $0x1ec] sm:$0xff]
    %v4134 = vld [vmem:[%s0 + $0x1f4] sm:$0xff]
    %v4135 = vld [vmem:[%s0 + $0x1fc] sm:$0xff]
    %v4136 = vld [vmem:[%s0 + $0x204] sm:$0xff]
    %v4137 = vld [vmem:[%s0 + $0x20c] sm:$0xff]
    %v4138 = vld [vmem:[%s0 + $0x214] sm:$0xff]
    %v4139 = vld [vmem:[%s0 + $0x21c] sm:$0xff]
    %v4140 = vld [vmem:[%s0 + $0x224] sm:$0xff]
    %v4141 = vld [vmem:[%s0 + $0x22c] sm:$0xff]
    %v4142 = vld [vmem:[%s0 + $0x234] sm:$0xff]
    %v4143 = vld [vmem:[%s0 + $0x23c] sm:$0xff]
    %v4144 = vld [vmem:[%s0 + $0x244] sm:$0xff]
    %v4145 = vld [vmem:[%s0 + $0x24c] sm:$0xff]
    %v4146 = vld [vmem:[%s0 + $0x254] sm:$0xff]
    %v4147 = vld [vmem:[%s0 + $0x25c] sm:$0xff]
    %v4148 = vld [vmem:[%s0 + $0x264] sm:$0xff]
    %v4149 = vld [vmem:[%s0 + $0x26c] sm:$0xff]
    %v4150 = vld [vmem:[%s0 + $0x274] sm:$0x3]
    %s4151 = scalar_lea.vmem %s1, 20
    %v4152 = vld [vmem:[%s4151] sm:$0xf]
    %v4154 = vsel %vm184, %v4074, 0
    %v4157 = vsel %vm184, %v4075, 0
    %v4160 = vsel %vm184, %v4076, 0
    %v4163 = vsel %vm184, %v4077, 0
    %v4166 = vsel %vm184, %v4078, 0
    %v4169 = vsel %vm184, %v4079, 0
    %v4172 = vsel %vm184, %v4080, 0
    %v4175 = vsel %vm184, %v4081, 0
    %v4178 = vsel %vm184, %v4082, 0
    %v4181 = vsel %vm184, %v4083, 0
    %v4184 = vsel %vm184, %v4084, 0
    %v4187 = vsel %vm184, %v4085, 0
    %v4190 = vsel %vm184, %v4086, 0
    %v4193 = vsel %vm184, %v4087, 0
    %v4196 = vsel %vm184, %v4088, 0
    %v4199 = vsel %vm184, %v4089, 0
    %v4202 = vsel %vm184, %v4090, 0
    %v4205 = vsel %vm184, %v4091, 0
    %v4208 = vsel %vm184, %v4092, 0
    %v4211 = vsel %vm184, %v4093, 0
    %v4214 = vsel %vm184, %v4094, 0
    %v4217 = vsel %vm184, %v4095, 0
    %v4220 = vsel %vm184, %v4096, 0
    %v4223 = vsel %vm184, %v4097, 0
    %v4226 = vsel %vm184, %v4098, 0
    %v4229 = vsel %vm184, %v4099, 0
    %v4232 = vsel %vm184, %v4100, 0
    %v4235 = vsel %vm184, %v4101, 0
    %v4238 = vsel %vm184, %v4102, 0
    %v4241 = vsel %vm184, %v4103, 0
    %v4244 = vsel %vm184, %v4104, 0
    %v4247 = vsel %vm184, %v4105, 0
    %v4250 = vsel %vm184, %v4106, 0
    %v4253 = vsel %vm184, %v4107, 0
    %v4256 = vsel %vm184, %v4108, 0
    %v4259 = vsel %vm184, %v4109, 0
    %v4262 = vsel %vm184, %v4110, 0
    %v4265 = vsel %vm184, %v4111, 0
    %v4268 = vsel %vm184, %v4112, 0
    %v4271 = vsel %vm184, %v4113, 0
    %v4274 = vsel %vm184, %v4114, 0
    %v4277 = vsel %vm184, %v4115, 0
    %v4280 = vsel %vm184, %v4116, 0
    %v4283 = vsel %vm184, %v4117, 0
    %v4286 = vsel %vm184, %v4118, 0
    %v4289 = vsel %vm184, %v4119, 0
    %v4292 = vsel %vm184, %v4120, 0
    %v4295 = vsel %vm184, %v4121, 0
    %v4298 = vsel %vm184, %v4122, 0
    %v4301 = vsel %vm184, %v4123, 0
    %v4304 = vsel %vm184, %v4124, 0
    %v4307 = vsel %vm184, %v4125, 0
    %v4310 = vsel %vm184, %v4126, 0
    %v4313 = vsel %vm184, %v4127, 0
    %v4316 = vsel %vm184, %v4128, 0
    %v4319 = vsel %vm184, %v4129, 0
    %v4322 = vsel %vm184, %v4130, 0
    %v4325 = vsel %vm184, %v4131, 0
    %v4328 = vsel %vm184, %v4132, 0
    %v4331 = vsel %vm184, %v4133, 0
    %v4334 = vsel %vm184, %v4134, 0
    %v4337 = vsel %vm184, %v4135, 0
    %v4340 = vsel %vm184, %v4136, 0
    %v4343 = vsel %vm184, %v4137, 0
    %v4346 = vsel %vm184, %v4138, 0
    %v4349 = vsel %vm184, %v4139, 0
    %v4352 = vsel %vm184, %v4140, 0
    %v4355 = vsel %vm184, %v4141, 0
    %v4358 = vsel %vm184, %v4142, 0
    %v4361 = vsel %vm184, %v4143, 0
    %v4364 = vsel %vm184, %v4144, 0
    %v4367 = vsel %vm184, %v4145, 0
    %v4370 = vsel %vm184, %v4146, 0
    %v4373 = vsel %vm184, %v4147, 0
    %v4376 = vsel %vm184, %v4148, 0
    %v4379 = vsel %vm184, %v4149, 0
    %v4382 = vsel %vm184, %v4150, 0
    %v4385 = vsel %vm416, %v4152, 0
    %4387 = vmatprep.subr.mxu0 0.0
    %4388 = vmatpush1.msra.mxu0 0.0
    %4389 = vmatprep.subr.mxu0 0.0
    %4390 = vmatpush1.msra.mxu0 0.0
    %4391 = vmatprep.subr.mxu0 0.0
    %4392 = vmatpush1.msra.mxu0 0.0
    %4393 = vmatprep.subr.mxu0 0.0
    %4394 = vmatpush1.msra.mxu0 0.0
    %4395 = vmatprep.subr.mxu0 0.0
    %4396 = vmatpush1.msra.mxu0 0.0
    %4397 = vmatprep.subr.mxu0 0.0
    %4398 = vmatpush1.msra.mxu0 0.0
    %4399 = vmatprep.subr.mxu0 0.0
    %4400 = vmatpush1.msra.mxu0 0.0
    %4401 = vmatprep.subr.mxu0 0.0
    %4402 = vmatpush1.msra.mxu0 0.0
    %4403 = vmatprep.subr.mxu0 0.0
    %4404 = vmatpush1.msra.mxu0 0.0
    %4405 = vmatprep.subr.mxu0 0.0
    %4406 = vmatpush1.msra.mxu0 0.0
    %4407 = vmatprep.subr.mxu0 0.0
    %4408 = vmatpush1.msra.mxu0 0.0
    %4409 = vmatprep.subr.mxu0 0.0
    %4410 = vmatpush1.msra.mxu0 0.0
    %4411 = vmatprep.subr.mxu0 0.0
    %4412 = vmatpush1.msra.mxu0 0.0
    %4413 = vmatprep.subr.mxu0 0.0
    %4414 = vmatpush1.msra.mxu0 0.0
    %4415 = vmatprep.subr.mxu0 0.0
    %4416 = vmatpush1.msra.mxu0 0.0
    %4417 = vmatprep.subr.mxu0 0.0
    %4418 = vmatpush1.msra.mxu0 %v4385
    %4419 = vmatprep.subr.mxu0 0.0
    %4420 = vmatpush2.msra.mxu0 0.0
    %4421 = vmatprep.subr.mxu0 0.0
    %4422 = vmatpush2.msra.mxu0 0.0
    %4423 = vmatprep.subr.mxu0 0.0
    %4424 = vmatpush2.msra.mxu0 0.0
    %4425 = vmatprep.subr.mxu0 0.0
    %4426 = vmatpush2.msra.mxu0 0.0
    %4427 = vmatprep.subr.mxu0 0.0
    %4428 = vmatpush2.msra.mxu0 0.0
    %4429 = vmatprep.subr.mxu0 0.0
    %4430 = vmatpush2.msra.mxu0 0.0
    %4431 = vmatprep.subr.mxu0 0.0
    %4432 = vmatpush2.msra.mxu0 0.0
    %4433 = vmatprep.subr.mxu0 0.0
    %4434 = vmatpush2.msra.mxu0 0.0
    %4435 = vmatprep.subr.mxu0 0.0
    %4436 = vmatpush2.msra.mxu0 0.0
    %4437 = vmatprep.subr.mxu0 0.0
    %4438 = vmatpush2.msra.mxu0 0.0
    %4439 = vmatprep.subr.mxu0 0.0
    %4440 = vmatpush2.msra.mxu0 0.0
    %4441 = vmatprep.subr.mxu0 0.0
    %4442 = vmatpush2.msra.mxu0 0.0
    %4443 = vmatprep.subr.mxu0 0.0
    %4444 = vmatpush2.msra.mxu0 0.0
    %4445 = vmatprep.subr.mxu0 0.0
    %4446 = vmatpush2.msra.mxu0 0.0
    %4447 = vmatprep.subr.mxu0 0.0
    %4448 = vmatpush2.msra.mxu0 0.0
    %4449 = vmatprep.subr.mxu0 0.0
    %4450 = vmatpush2.msra.mxu0 0.0
    %4451 = vmatprep.mubr.f32.mxu0 0.0
    %4452 = vmatmul.mubr.f32.gmra.mxu0 %v4154
    %v4453 = vpop.f32.mrf.mxu0
    %v4454 = vadd.f32 0.0, %v4453
    %v4455 = vpop.f32.mrf.mxu0
    %4456 = vmatprep.mubr.f32.mxu0 0.0
    %4457 = vmatmul.mubr.f32.gmra.mxu0 %v4157
    %v4458 = vpop.f32.mrf.mxu0
    %v4459 = vadd.f32 0.0, %v4458
    %v4460 = vpop.f32.mrf.mxu0
    %4461 = vmatprep.mubr.f32.mxu0 0.0
    %4462 = vmatmul.mubr.f32.gmra.mxu0 %v4160
    %v4463 = vpop.f32.mrf.mxu0
    %v4464 = vadd.f32 0.0, %v4463
    %v4465 = vpop.f32.mrf.mxu0
    %4466 = vmatprep.mubr.f32.mxu0 0.0
    %4467 = vmatmul.mubr.f32.gmra.mxu0 %v4163
    %v4468 = vpop.f32.mrf.mxu0
    %v4469 = vadd.f32 0.0, %v4468
    %v4470 = vpop.f32.mrf.mxu0
    %4471 = vmatprep.mubr.f32.mxu0 0.0
    %4472 = vmatmul.mubr.f32.gmra.mxu0 %v4166
    %v4473 = vpop.f32.mrf.mxu0
    %v4474 = vadd.f32 0.0, %v4473
    %v4475 = vpop.f32.mrf.mxu0
    %4476 = vmatprep.mubr.f32.mxu0 0.0
    %4477 = vmatmul.mubr.f32.gmra.mxu0 %v4169
    %v4478 = vpop.f32.mrf.mxu0
    %v4479 = vadd.f32 0.0, %v4478
    %v4480 = vpop.f32.mrf.mxu0
    %4481 = vmatprep.mubr.f32.mxu0 0.0
    %4482 = vmatmul.mubr.f32.gmra.mxu0 %v4172
    %v4483 = vpop.f32.mrf.mxu0
    %v4484 = vadd.f32 0.0, %v4483
    %v4485 = vpop.f32.mrf.mxu0
    %4486 = vmatprep.mubr.f32.mxu0 0.0
    %4487 = vmatmul.mubr.f32.gmra.mxu0 %v4175
    %v4488 = vpop.f32.mrf.mxu0
    %v4489 = vadd.f32 0.0, %v4488
    %v4490 = vpop.f32.mrf.mxu0
    %4491 = vmatprep.mubr.f32.mxu0 0.0
    %4492 = vmatmul.mubr.f32.gmra.mxu0 %v4178
    %v4493 = vpop.f32.mrf.mxu0
    %v4494 = vadd.f32 0.0, %v4493
    %v4495 = vpop.f32.mrf.mxu0
    %4496 = vmatprep.mubr.f32.mxu0 0.0
    %4497 = vmatmul.mubr.f32.gmra.mxu0 %v4181
    %v4498 = vpop.f32.mrf.mxu0
    %v4499 = vadd.f32 0.0, %v4498
    %v4500 = vpop.f32.mrf.mxu0
    %4501 = vmatprep.mubr.f32.mxu0 0.0
    %4502 = vmatmul.mubr.f32.gmra.mxu0 %v4184
    %v4503 = vpop.f32.mrf.mxu0
    %v4504 = vadd.f32 0.0, %v4503
    %v4505 = vpop.f32.mrf.mxu0
    %4506 = vmatprep.mubr.f32.mxu0 0.0
    %4507 = vmatmul.mubr.f32.gmra.mxu0 %v4187
    %v4508 = vpop.f32.mrf.mxu0
    %v4509 = vadd.f32 0.0, %v4508
    %v4510 = vpop.f32.mrf.mxu0
    %4511 = vmatprep.mubr.f32.mxu0 0.0
    %4512 = vmatmul.mubr.f32.gmra.mxu0 %v4190
    %v4513 = vpop.f32.mrf.mxu0
    %v4514 = vadd.f32 0.0, %v4513
    %v4515 = vpop.f32.mrf.mxu0
    %4516 = vmatprep.mubr.f32.mxu0 0.0
    %4517 = vmatmul.mubr.f32.gmra.mxu0 %v4193
    %v4518 = vpop.f32.mrf.mxu0
    %v4519 = vadd.f32 0.0, %v4518
    %v4520 = vpop.f32.mrf.mxu0
    %4521 = vmatprep.mubr.f32.mxu0 0.0
    %4522 = vmatmul.mubr.f32.gmra.mxu0 %v4196
    %v4523 = vpop.f32.mrf.mxu0
    %v4524 = vadd.f32 0.0, %v4523
    %v4525 = vpop.f32.mrf.mxu0
    %4526 = vmatprep.mubr.f32.mxu0 0.0
    %4527 = vmatmul.mubr.f32.gmra.mxu0 %v4199
    %v4528 = vpop.f32.mrf.mxu0
    %v4529 = vadd.f32 0.0, %v4528
    %v4530 = vpop.f32.mrf.mxu0
    %4531 = vmatprep.mubr.f32.mxu0 0.0
    %4532 = vmatmul.mubr.f32.gmra.mxu0 %v4202
    %v4533 = vpop.f32.mrf.mxu0
    %v4534 = vadd.f32 0.0, %v4533
    %v4535 = vpop.f32.mrf.mxu0
    %4536 = vmatprep.mubr.f32.mxu0 0.0
    %4537 = vmatmul.mubr.f32.gmra.mxu0 %v4205
    %v4538 = vpop.f32.mrf.mxu0
    %v4539 = vadd.f32 0.0, %v4538
    %v4540 = vpop.f32.mrf.mxu0
    %4541 = vmatprep.mubr.f32.mxu0 0.0
    %4542 = vmatmul.mubr.f32.gmra.mxu0 %v4208
    %v4543 = vpop.f32.mrf.mxu0
    %v4544 = vadd.f32 0.0, %v4543
    %v4545 = vpop.f32.mrf.mxu0
    %4546 = vmatprep.mubr.f32.mxu0 0.0
    %4547 = vmatmul.mubr.f32.gmra.mxu0 %v4211
    %v4548 = vpop.f32.mrf.mxu0
    %v4549 = vadd.f32 0.0, %v4548
    %v4550 = vpop.f32.mrf.mxu0
    %4551 = vmatprep.mubr.f32.mxu0 0.0
    %4552 = vmatmul.mubr.f32.gmra.mxu0 %v4214
    %v4553 = vpop.f32.mrf.mxu0
    %v4554 = vadd.f32 0.0, %v4553
    %v4555 = vpop.f32.mrf.mxu0
    %4556 = vmatprep.mubr.f32.mxu0 0.0
    %4557 = vmatmul.mubr.f32.gmra.mxu0 %v4217
    %v4558 = vpop.f32.mrf.mxu0
    %v4559 = vadd.f32 0.0, %v4558
    %v4560 = vpop.f32.mrf.mxu0
    %4561 = vmatprep.mubr.f32.mxu0 0.0
    %4562 = vmatmul.mubr.f32.gmra.mxu0 %v4220
    %v4563 = vpop.f32.mrf.mxu0
    %v4564 = vadd.f32 0.0, %v4563
    %v4565 = vpop.f32.mrf.mxu0
    %4566 = vmatprep.mubr.f32.mxu0 0.0
    %4567 = vmatmul.mubr.f32.gmra.mxu0 %v4223
    %v4568 = vpop.f32.mrf.mxu0
    %v4569 = vadd.f32 0.0, %v4568
    %v4570 = vpop.f32.mrf.mxu0
    %4571 = vmatprep.mubr.f32.mxu0 0.0
    %4572 = vmatmul.mubr.f32.gmra.mxu0 %v4226
    %v4573 = vpop.f32.mrf.mxu0
    %v4574 = vadd.f32 0.0, %v4573
    %v4575 = vpop.f32.mrf.mxu0
    %4576 = vmatprep.mubr.f32.mxu0 0.0
    %4577 = vmatmul.mubr.f32.gmra.mxu0 %v4229
    %v4578 = vpop.f32.mrf.mxu0
    %v4579 = vadd.f32 0.0, %v4578
    %v4580 = vpop.f32.mrf.mxu0
    %4581 = vmatprep.mubr.f32.mxu0 0.0
    %4582 = vmatmul.mubr.f32.gmra.mxu0 %v4232
    %v4583 = vpop.f32.mrf.mxu0
    %v4584 = vadd.f32 0.0, %v4583
    %v4585 = vpop.f32.mrf.mxu0
    %4586 = vmatprep.mubr.f32.mxu0 0.0
    %4587 = vmatmul.mubr.f32.gmra.mxu0 %v4235
    %v4588 = vpop.f32.mrf.mxu0
    %v4589 = vadd.f32 0.0, %v4588
    %v4590 = vpop.f32.mrf.mxu0
    %4591 = vmatprep.mubr.f32.mxu0 0.0
    %4592 = vmatmul.mubr.f32.gmra.mxu0 %v4238
    %v4593 = vpop.f32.mrf.mxu0
    %v4594 = vadd.f32 0.0, %v4593
    %v4595 = vpop.f32.mrf.mxu0
    %4596 = vmatprep.mubr.f32.mxu0 0.0
    %4597 = vmatmul.mubr.f32.gmra.mxu0 %v4241
    %v4598 = vpop.f32.mrf.mxu0
    %v4599 = vadd.f32 0.0, %v4598
    %v4600 = vpop.f32.mrf.mxu0
    %4601 = vmatprep.mubr.f32.mxu0 0.0
    %4602 = vmatmul.mubr.f32.gmra.mxu0 %v4244
    %v4603 = vpop.f32.mrf.mxu0
    %v4604 = vadd.f32 0.0, %v4603
    %v4605 = vpop.f32.mrf.mxu0
    %4606 = vmatprep.mubr.f32.mxu0 0.0
    %4607 = vmatmul.mubr.f32.gmra.mxu0 %v4247
    %v4608 = vpop.f32.mrf.mxu0
    %v4609 = vadd.f32 0.0, %v4608
    %v4610 = vpop.f32.mrf.mxu0
    %4611 = vmatprep.mubr.f32.mxu0 0.0
    %4612 = vmatmul.mubr.f32.gmra.mxu0 %v4250
    %v4613 = vpop.f32.mrf.mxu0
    %v4614 = vadd.f32 0.0, %v4613
    %v4615 = vpop.f32.mrf.mxu0
    %4616 = vmatprep.mubr.f32.mxu0 0.0
    %4617 = vmatmul.mubr.f32.gmra.mxu0 %v4253
    %v4618 = vpop.f32.mrf.mxu0
    %v4619 = vadd.f32 0.0, %v4618
    %v4620 = vpop.f32.mrf.mxu0
    %4621 = vmatprep.mubr.f32.mxu0 0.0
    %4622 = vmatmul.mubr.f32.gmra.mxu0 %v4256
    %v4623 = vpop.f32.mrf.mxu0
    %v4624 = vadd.f32 0.0, %v4623
    %v4625 = vpop.f32.mrf.mxu0
    %4626 = vmatprep.mubr.f32.mxu0 0.0
    %4627 = vmatmul.mubr.f32.gmra.mxu0 %v4259
    %v4628 = vpop.f32.mrf.mxu0
    %v4629 = vadd.f32 0.0, %v4628
    %v4630 = vpop.f32.mrf.mxu0
    %4631 = vmatprep.mubr.f32.mxu0 0.0
    %4632 = vmatmul.mubr.f32.gmra.mxu0 %v4262
    %v4633 = vpop.f32.mrf.mxu0
    %v4634 = vadd.f32 0.0, %v4633
    %v4635 = vpop.f32.mrf.mxu0
    %4636 = vmatprep.mubr.f32.mxu0 0.0
    %4637 = vmatmul.mubr.f32.gmra.mxu0 %v4265
    %v4638 = vpop.f32.mrf.mxu0
    %v4639 = vadd.f32 0.0, %v4638
    %v4640 = vpop.f32.mrf.mxu0
    %4641 = vmatprep.mubr.f32.mxu0 0.0
    %4642 = vmatmul.mubr.f32.gmra.mxu0 %v4268
    %v4643 = vpop.f32.mrf.mxu0
    %v4644 = vadd.f32 0.0, %v4643
    %v4645 = vpop.f32.mrf.mxu0
    %4646 = vmatprep.mubr.f32.mxu0 0.0
    %4647 = vmatmul.mubr.f32.gmra.mxu0 %v4271
    %v4648 = vpop.f32.mrf.mxu0
    %v4649 = vadd.f32 0.0, %v4648
    %v4650 = vpop.f32.mrf.mxu0
    %4651 = vmatprep.mubr.f32.mxu0 0.0
    %4652 = vmatmul.mubr.f32.gmra.mxu0 %v4274
    %v4653 = vpop.f32.mrf.mxu0
    %v4654 = vadd.f32 0.0, %v4653
    %v4655 = vpop.f32.mrf.mxu0
    %4656 = vmatprep.mubr.f32.mxu0 0.0
    %4657 = vmatmul.mubr.f32.gmra.mxu0 %v4277
    %v4658 = vpop.f32.mrf.mxu0
    %v4659 = vadd.f32 0.0, %v4658
    %v4660 = vpop.f32.mrf.mxu0
    %4661 = vmatprep.mubr.f32.mxu0 0.0
    %4662 = vmatmul.mubr.f32.gmra.mxu0 %v4280
    %v4663 = vpop.f32.mrf.mxu0
    %v4664 = vadd.f32 0.0, %v4663
    %v4665 = vpop.f32.mrf.mxu0
    %4666 = vmatprep.mubr.f32.mxu0 0.0
    %4667 = vmatmul.mubr.f32.gmra.mxu0 %v4283
    %v4668 = vpop.f32.mrf.mxu0
    %v4669 = vadd.f32 0.0, %v4668
    %v4670 = vpop.f32.mrf.mxu0
    %4671 = vmatprep.mubr.f32.mxu0 0.0
    %4672 = vmatmul.mubr.f32.gmra.mxu0 %v4286
    %v4673 = vpop.f32.mrf.mxu0
    %v4674 = vadd.f32 0.0, %v4673
    %v4675 = vpop.f32.mrf.mxu0
    %4676 = vmatprep.mubr.f32.mxu0 0.0
    %4677 = vmatmul.mubr.f32.gmra.mxu0 %v4289
    %v4678 = vpop.f32.mrf.mxu0
    %v4679 = vadd.f32 0.0, %v4678
    %v4680 = vpop.f32.mrf.mxu0
    %4681 = vmatprep.mubr.f32.mxu0 0.0
    %4682 = vmatmul.mubr.f32.gmra.mxu0 %v4292
    %v4683 = vpop.f32.mrf.mxu0
    %v4684 = vadd.f32 0.0, %v4683
    %v4685 = vpop.f32.mrf.mxu0
    %4686 = vmatprep.mubr.f32.mxu0 0.0
    %4687 = vmatmul.mubr.f32.gmra.mxu0 %v4295
    %v4688 = vpop.f32.mrf.mxu0
    %v4689 = vadd.f32 0.0, %v4688
    %v4690 = vpop.f32.mrf.mxu0
    %4691 = vmatprep.mubr.f32.mxu0 0.0
    %4692 = vmatmul.mubr.f32.gmra.mxu0 %v4298
    %v4693 = vpop.f32.mrf.mxu0
    %v4694 = vadd.f32 0.0, %v4693
    %v4695 = vpop.f32.mrf.mxu0
    %4696 = vmatprep.mubr.f32.mxu0 0.0
    %4697 = vmatmul.mubr.f32.gmra.mxu0 %v4301
    %v4698 = vpop.f32.mrf.mxu0
    %v4699 = vadd.f32 0.0, %v4698
    %v4700 = vpop.f32.mrf.mxu0
    %4701 = vmatprep.mubr.f32.mxu0 0.0
    %4702 = vmatmul.mubr.f32.gmra.mxu0 %v4304
    %v4703 = vpop.f32.mrf.mxu0
    %v4704 = vadd.f32 0.0, %v4703
    %v4705 = vpop.f32.mrf.mxu0
    %4706 = vmatprep.mubr.f32.mxu0 0.0
    %4707 = vmatmul.mubr.f32.gmra.mxu0 %v4307
    %v4708 = vpop.f32.mrf.mxu0
    %v4709 = vadd.f32 0.0, %v4708
    %v4710 = vpop.f32.mrf.mxu0
    %4711 = vmatprep.mubr.f32.mxu0 0.0
    %4712 = vmatmul.mubr.f32.gmra.mxu0 %v4310
    %v4713 = vpop.f32.mrf.mxu0
    %v4714 = vadd.f32 0.0, %v4713
    %v4715 = vpop.f32.mrf.mxu0
    %4716 = vmatprep.mubr.f32.mxu0 0.0
    %4717 = vmatmul.mubr.f32.gmra.mxu0 %v4313
    %v4718 = vpop.f32.mrf.mxu0
    %v4719 = vadd.f32 0.0, %v4718
    %v4720 = vpop.f32.mrf.mxu0
    %4721 = vmatprep.mubr.f32.mxu0 0.0
    %4722 = vmatmul.mubr.f32.gmra.mxu0 %v4316
    %v4723 = vpop.f32.mrf.mxu0
    %v4724 = vadd.f32 0.0, %v4723
    %v4725 = vpop.f32.mrf.mxu0
    %4726 = vmatprep.mubr.f32.mxu0 0.0
    %4727 = vmatmul.mubr.f32.gmra.mxu0 %v4319
    %v4728 = vpop.f32.mrf.mxu0
    %v4729 = vadd.f32 0.0, %v4728
    %v4730 = vpop.f32.mrf.mxu0
    %4731 = vmatprep.mubr.f32.mxu0 0.0
    %4732 = vmatmul.mubr.f32.gmra.mxu0 %v4322
    %v4733 = vpop.f32.mrf.mxu0
    %v4734 = vadd.f32 0.0, %v4733
    %v4735 = vpop.f32.mrf.mxu0
    %4736 = vmatprep.mubr.f32.mxu0 0.0
    %4737 = vmatmul.mubr.f32.gmra.mxu0 %v4325
    %v4738 = vpop.f32.mrf.mxu0
    %v4739 = vadd.f32 0.0, %v4738
    %v4740 = vpop.f32.mrf.mxu0
    %4741 = vmatprep.mubr.f32.mxu0 0.0
    %4742 = vmatmul.mubr.f32.gmra.mxu0 %v4328
    %v4743 = vpop.f32.mrf.mxu0
    %v4744 = vadd.f32 0.0, %v4743
    %v4745 = vpop.f32.mrf.mxu0
    %4746 = vmatprep.mubr.f32.mxu0 0.0
    %4747 = vmatmul.mubr.f32.gmra.mxu0 %v4331
    %v4748 = vpop.f32.mrf.mxu0
    %v4749 = vadd.f32 0.0, %v4748
    %v4750 = vpop.f32.mrf.mxu0
    %4751 = vmatprep.mubr.f32.mxu0 0.0
    %4752 = vmatmul.mubr.f32.gmra.mxu0 %v4334
    %v4753 = vpop.f32.mrf.mxu0
    %v4754 = vadd.f32 0.0, %v4753
    %v4755 = vpop.f32.mrf.mxu0
    %4756 = vmatprep.mubr.f32.mxu0 0.0
    %4757 = vmatmul.mubr.f32.gmra.mxu0 %v4337
    %v4758 = vpop.f32.mrf.mxu0
    %v4759 = vadd.f32 0.0, %v4758
    %v4760 = vpop.f32.mrf.mxu0
    %4761 = vmatprep.mubr.f32.mxu0 0.0
    %4762 = vmatmul.mubr.f32.gmra.mxu0 %v4340
    %v4763 = vpop.f32.mrf.mxu0
    %v4764 = vadd.f32 0.0, %v4763
    %v4765 = vpop.f32.mrf.mxu0
    %4766 = vmatprep.mubr.f32.mxu0 0.0
    %4767 = vmatmul.mubr.f32.gmra.mxu0 %v4343
    %v4768 = vpop.f32.mrf.mxu0
    %v4769 = vadd.f32 0.0, %v4768
    %v4770 = vpop.f32.mrf.mxu0
    %4771 = vmatprep.mubr.f32.mxu0 0.0
    %4772 = vmatmul.mubr.f32.gmra.mxu0 %v4346
    %v4773 = vpop.f32.mrf.mxu0
    %v4774 = vadd.f32 0.0, %v4773
    %v4775 = vpop.f32.mrf.mxu0
    %4776 = vmatprep.mubr.f32.mxu0 0.0
    %4777 = vmatmul.mubr.f32.gmra.mxu0 %v4349
    %v4778 = vpop.f32.mrf.mxu0
    %v4779 = vadd.f32 0.0, %v4778
    %v4780 = vpop.f32.mrf.mxu0
    %4781 = vmatprep.mubr.f32.mxu0 0.0
    %4782 = vmatmul.mubr.f32.gmra.mxu0 %v4352
    %v4783 = vpop.f32.mrf.mxu0
    %v4784 = vadd.f32 0.0, %v4783
    %v4785 = vpop.f32.mrf.mxu0
    %4786 = vmatprep.mubr.f32.mxu0 0.0
    %4787 = vmatmul.mubr.f32.gmra.mxu0 %v4355
    %v4788 = vpop.f32.mrf.mxu0
    %v4789 = vadd.f32 0.0, %v4788
    %v4790 = vpop.f32.mrf.mxu0
    %4791 = vmatprep.mubr.f32.mxu0 0.0
    %4792 = vmatmul.mubr.f32.gmra.mxu0 %v4358
    %v4793 = vpop.f32.mrf.mxu0
    %v4794 = vadd.f32 0.0, %v4793
    %v4795 = vpop.f32.mrf.mxu0
    %4796 = vmatprep.mubr.f32.mxu0 0.0
    %4797 = vmatmul.mubr.f32.gmra.mxu0 %v4361
    %v4798 = vpop.f32.mrf.mxu0
    %v4799 = vadd.f32 0.0, %v4798
    %v4800 = vpop.f32.mrf.mxu0
    %4801 = vmatprep.mubr.f32.mxu0 0.0
    %4802 = vmatmul.mubr.f32.gmra.mxu0 %v4364
    %v4803 = vpop.f32.mrf.mxu0
    %v4804 = vadd.f32 0.0, %v4803
    %v4805 = vpop.f32.mrf.mxu0
    %4806 = vmatprep.mubr.f32.mxu0 0.0
    %4807 = vmatmul.mubr.f32.gmra.mxu0 %v4367
    %v4808 = vpop.f32.mrf.mxu0
    %v4809 = vadd.f32 0.0, %v4808
    %v4810 = vpop.f32.mrf.mxu0
    %4811 = vmatprep.mubr.f32.mxu0 0.0
    %4812 = vmatmul.mubr.f32.gmra.mxu0 %v4370
    %v4813 = vpop.f32.mrf.mxu0
    %v4814 = vadd.f32 0.0, %v4813
    %v4815 = vpop.f32.mrf.mxu0
    %4816 = vmatprep.mubr.f32.mxu0 0.0
    %4817 = vmatmul.mubr.f32.gmra.mxu0 %v4373
    %v4818 = vpop.f32.mrf.mxu0
    %v4819 = vadd.f32 0.0, %v4818
    %v4820 = vpop.f32.mrf.mxu0
    %4821 = vmatprep.mubr.f32.mxu0 0.0
    %4822 = vmatmul.mubr.f32.gmra.mxu0 %v4376
    %v4823 = vpop.f32.mrf.mxu0
    %v4824 = vadd.f32 0.0, %v4823
    %v4825 = vpop.f32.mrf.mxu0
    %4826 = vmatprep.mubr.f32.mxu0 0.0
    %4827 = vmatmul.mubr.f32.gmra.mxu0 %v4379
    %v4828 = vpop.f32.mrf.mxu0
    %v4829 = vadd.f32 0.0, %v4828
    %v4830 = vpop.f32.mrf.mxu0
    %4831 = vmatprep.mubr.f32.mxu0 0.0
    %4832 = vmatmul.mubr.f32.gmra.mxu0 %v4382
    %v4833 = vpop.f32.mrf.mxu0
    %v4834 = vadd.f32 0.0, %v4833
    %v4835 = vpop.f32.mrf.mxu0
    %4836 = vdwg.mxu0
    %v4837 = vadd.f32 %v3997, %v4454
    %v4838 = vadd.f32 %v3998, %v4459
    %v4839 = vadd.f32 %v3999, %v4464
    %v4840 = vadd.f32 %v4000, %v4469
    %v4841 = vadd.f32 %v4001, %v4474
    %v4842 = vadd.f32 %v4002, %v4479
    %v4843 = vadd.f32 %v4003, %v4484
    %v4844 = vadd.f32 %v4004, %v4489
    %v4845 = vadd.f32 %v4005, %v4494
    %v4846 = vadd.f32 %v4006, %v4499
    %v4847 = vadd.f32 %v4007, %v4504
    %v4848 = vadd.f32 %v4008, %v4509
    %v4849 = vadd.f32 %v4009, %v4514
    %v4850 = vadd.f32 %v4010, %v4519
    %v4851 = vadd.f32 %v4011, %v4524
    %v4852 = vadd.f32 %v4012, %v4529
    %v4853 = vadd.f32 %v4013, %v4534
    %v4854 = vadd.f32 %v4014, %v4539
    %v4855 = vadd.f32 %v4015, %v4544
    %v4856 = vadd.f32 %v4016, %v4549
    %v4857 = vadd.f32 %v4017, %v4554
    %v4858 = vadd.f32 %v4018, %v4559
    %v4859 = vadd.f32 %v4019, %v4564
    %v4860 = vadd.f32 %v4020, %v4569
    %v4861 = vadd.f32 %v4021, %v4574
    %v4862 = vadd.f32 %v4022, %v4579
    %v4863 = vadd.f32 %v4023, %v4584
    %v4864 = vadd.f32 %v4024, %v4589
    %v4865 = vadd.f32 %v4025, %v4594
    %v4866 = vadd.f32 %v4026, %v4599
    %v4867 = vadd.f32 %v4027, %v4604
    %v4868 = vadd.f32 %v4028, %v4609
    %v4869 = vadd.f32 %v4029, %v4614
    %v4870 = vadd.f32 %v4030, %v4619
    %v4871 = vadd.f32 %v4031, %v4624
    %v4872 = vadd.f32 %v4032, %v4629
    %v4873 = vadd.f32 %v4033, %v4634
    %v4874 = vadd.f32 %v4034, %v4639
    %v4875 = vadd.f32 %v4035, %v4644
    %v4876 = vadd.f32 %v4036, %v4649
    %v4877 = vadd.f32 %v4037, %v4654
    %v4878 = vadd.f32 %v4038, %v4659
    %v4879 = vadd.f32 %v4039, %v4664
    %v4880 = vadd.f32 %v4040, %v4669
    %v4881 = vadd.f32 %v4041, %v4674
    %v4882 = vadd.f32 %v4042, %v4679
    %v4883 = vadd.f32 %v4043, %v4684
    %v4884 = vadd.f32 %v4044, %v4689
    %v4885 = vadd.f32 %v4045, %v4694
    %v4886 = vadd.f32 %v4046, %v4699
    %v4887 = vadd.f32 %v4047, %v4704
    %v4888 = vadd.f32 %v4048, %v4709
    %v4889 = vadd.f32 %v4049, %v4714
    %v4890 = vadd.f32 %v4050, %v4719
    %v4891 = vadd.f32 %v4051, %v4724
    %v4892 = vadd.f32 %v4052, %v4729
    %v4893 = vadd.f32 %v4053, %v4734
    %v4894 = vadd.f32 %v4054, %v4739
    %v4895 = vadd.f32 %v4055, %v4744
    %v4896 = vadd.f32 %v4056, %v4749
    %v4897 = vadd.f32 %v4057, %v4754
    %v4898 = vadd.f32 %v4058, %v4759
    %v4899 = vadd.f32 %v4059, %v4764
    %v4900 = vadd.f32 %v4060, %v4769
    %v4901 = vadd.f32 %v4061, %v4774
    %v4902 = vadd.f32 %v4062, %v4779
    %v4903 = vadd.f32 %v4063, %v4784
    %v4904 = vadd.f32 %v4064, %v4789
    %v4905 = vadd.f32 %v4065, %v4794
    %v4906 = vadd.f32 %v4066, %v4799
    %v4907 = vadd.f32 %v4067, %v4804
    %v4908 = vadd.f32 %v4068, %v4809
    %v4909 = vadd.f32 %v4069, %v4814
    %v4910 = vadd.f32 %v4070, %v4819
    %v4911 = vadd.f32 %v4071, %v4824
    %v4912 = vadd.f32 %v4072, %v4829
    %v4913 = vadd.f32 %v4073, %v4834
    %v4914 = vld [vmem:[%s0 + $0x24] sm:$0xff]
    %v4915 = vld [vmem:[%s0 + $0x2c] sm:$0xff]
    %v4916 = vld [vmem:[%s0 + $0x34] sm:$0xff]
    %v4917 = vld [vmem:[%s0 + $0x3c] sm:$0xff]
    %v4918 = vld [vmem:[%s0 + $0x44] sm:$0xff]
    %v4919 = vld [vmem:[%s0 + $0x4c] sm:$0xff]
    %v4920 = vld [vmem:[%s0 + $0x54] sm:$0xff]
    %v4921 = vld [vmem:[%s0 + $0x5c] sm:$0xff]
    %v4922 = vld [vmem:[%s0 + $0x64] sm:$0xff]
    %v4923 = vld [vmem:[%s0 + $0x6c] sm:$0xff]
    %v4924 = vld [vmem:[%s0 + $0x74] sm:$0xff]
    %v4925 = vld [vmem:[%s0 + $0x7c] sm:$0xff]
    %v4926 = vld [vmem:[%s0 + $0x84] sm:$0xff]
    %v4927 = vld [vmem:[%s0 + $0x8c] sm:$0xff]
    %v4928 = vld [vmem:[%s0 + $0x94] sm:$0xff]
    %v4929 = vld [vmem:[%s0 + $0x9c] sm:$0xff]
    %v4930 = vld [vmem:[%s0 + $0xa4] sm:$0xff]
    %v4931 = vld [vmem:[%s0 + $0xac] sm:$0xff]
    %v4932 = vld [vmem:[%s0 + $0xb4] sm:$0xff]
    %v4933 = vld [vmem:[%s0 + $0xbc] sm:$0xff]
    %v4934 = vld [vmem:[%s0 + $0xc4] sm:$0xff]
    %v4935 = vld [vmem:[%s0 + $0xcc] sm:$0xff]
    %v4936 = vld [vmem:[%s0 + $0xd4] sm:$0xff]
    %v4937 = vld [vmem:[%s0 + $0xdc] sm:$0xff]
    %v4938 = vld [vmem:[%s0 + $0xe4] sm:$0xff]
    %v4939 = vld [vmem:[%s0 + $0xec] sm:$0xff]
    %v4940 = vld [vmem:[%s0 + $0xf4] sm:$0xff]
    %v4941 = vld [vmem:[%s0 + $0xfc] sm:$0xff]
    %v4942 = vld [vmem:[%s0 + $0x104] sm:$0xff]
    %v4943 = vld [vmem:[%s0 + $0x10c] sm:$0xff]
    %v4944 = vld [vmem:[%s0 + $0x114] sm:$0xff]
    %v4945 = vld [vmem:[%s0 + $0x11c] sm:$0xff]
    %v4946 = vld [vmem:[%s0 + $0x124] sm:$0xff]
    %v4947 = vld [vmem:[%s0 + $0x12c] sm:$0xff]
    %v4948 = vld [vmem:[%s0 + $0x134] sm:$0xff]
    %v4949 = vld [vmem:[%s0 + $0x13c] sm:$0xff]
    %v4950 = vld [vmem:[%s0 + $0x144] sm:$0xff]
    %v4951 = vld [vmem:[%s0 + $0x14c] sm:$0xff]
    %v4952 = vld [vmem:[%s0 + $0x154] sm:$0xff]
    %v4953 = vld [vmem:[%s0 + $0x15c] sm:$0xff]
    %v4954 = vld [vmem:[%s0 + $0x164] sm:$0xff]
    %v4955 = vld [vmem:[%s0 + $0x16c] sm:$0xff]
    %v4956 = vld [vmem:[%s0 + $0x174] sm:$0xff]
    %v4957 = vld [vmem:[%s0 + $0x17c] sm:$0xff]
    %v4958 = vld [vmem:[%s0 + $0x184] sm:$0xff]
    %v4959 = vld [vmem:[%s0 + $0x18c] sm:$0xff]
    %v4960 = vld [vmem:[%s0 + $0x194] sm:$0xff]
    %v4961 = vld [vmem:[%s0 + $0x19c] sm:$0xff]
    %v4962 = vld [vmem:[%s0 + $0x1a4] sm:$0xff]
    %v4963 = vld [vmem:[%s0 + $0x1ac] sm:$0xff]
    %v4964 = vld [vmem:[%s0 + $0x1b4] sm:$0xff]
    %v4965 = vld [vmem:[%s0 + $0x1bc] sm:$0xff]
    %v4966 = vld [vmem:[%s0 + $0x1c4] sm:$0xff]
    %v4967 = vld [vmem:[%s0 + $0x1cc] sm:$0xff]
    %v4968 = vld [vmem:[%s0 + $0x1d4] sm:$0xff]
    %v4969 = vld [vmem:[%s0 + $0x1dc] sm:$0xff]
    %v4970 = vld [vmem:[%s0 + $0x1e4] sm:$0xff]
    %v4971 = vld [vmem:[%s0 + $0x1ec] sm:$0xff]
    %v4972 = vld [vmem:[%s0 + $0x1f4] sm:$0xff]
    %v4973 = vld [vmem:[%s0 + $0x1fc] sm:$0xff]
    %v4974 = vld [vmem:[%s0 + $0x204] sm:$0xff]
    %v4975 = vld [vmem:[%s0 + $0x20c] sm:$0xff]
    %v4976 = vld [vmem:[%s0 + $0x214] sm:$0xff]
    %v4977 = vld [vmem:[%s0 + $0x21c] sm:$0xff]
    %v4978 = vld [vmem:[%s0 + $0x224] sm:$0xff]
    %v4979 = vld [vmem:[%s0 + $0x22c] sm:$0xff]
    %v4980 = vld [vmem:[%s0 + $0x234] sm:$0xff]
    %v4981 = vld [vmem:[%s0 + $0x23c] sm:$0xff]
    %v4982 = vld [vmem:[%s0 + $0x244] sm:$0xff]
    %v4983 = vld [vmem:[%s0 + $0x24c] sm:$0xff]
    %v4984 = vld [vmem:[%s0 + $0x254] sm:$0xff]
    %v4985 = vld [vmem:[%s0 + $0x25c] sm:$0xff]
    %v4986 = vld [vmem:[%s0 + $0x264] sm:$0xff]
    %v4987 = vld [vmem:[%s0 + $0x26c] sm:$0xff]
    %v4988 = vld [vmem:[%s0 + $0x274] sm:$0xff]
    %v4989 = vld [vmem:[%s0 + $0x27c] sm:$0xff]
    %v4990 = vld [vmem:[%s0 + $0x284] sm:$0x3]
    %s4991 = scalar_lea.vmem %s1, 24
    %v4992 = vld [vmem:[%s4991] sm:$0xf]
    %v4994 = vsel %vm184, %v4914, 0
    %v4997 = vsel %vm184, %v4915, 0
    %v5000 = vsel %vm184, %v4916, 0
    %v5003 = vsel %vm184, %v4917, 0
    %v5006 = vsel %vm184, %v4918, 0
    %v5009 = vsel %vm184, %v4919, 0
    %v5012 = vsel %vm184, %v4920, 0
    %v5015 = vsel %vm184, %v4921, 0
    %v5018 = vsel %vm184, %v4922, 0
    %v5021 = vsel %vm184, %v4923, 0
    %v5024 = vsel %vm184, %v4924, 0
    %v5027 = vsel %vm184, %v4925, 0
    %v5030 = vsel %vm184, %v4926, 0
    %v5033 = vsel %vm184, %v4927, 0
    %v5036 = vsel %vm184, %v4928, 0
    %v5039 = vsel %vm184, %v4929, 0
    %v5042 = vsel %vm184, %v4930, 0
    %v5045 = vsel %vm184, %v4931, 0
    %v5048 = vsel %vm184, %v4932, 0
    %v5051 = vsel %vm184, %v4933, 0
    %v5054 = vsel %vm184, %v4934, 0
    %v5057 = vsel %vm184, %v4935, 0
    %v5060 = vsel %vm184, %v4936, 0
    %v5063 = vsel %vm184, %v4937, 0
    %v5066 = vsel %vm184, %v4938, 0
    %v5069 = vsel %vm184, %v4939, 0
    %v5072 = vsel %vm184, %v4940, 0
    %v5075 = vsel %vm184, %v4941, 0
    %v5078 = vsel %vm184, %v4942, 0
    %v5081 = vsel %vm184, %v4943, 0
    %v5084 = vsel %vm184, %v4944, 0
    %v5087 = vsel %vm184, %v4945, 0
    %v5090 = vsel %vm184, %v4946, 0
    %v5093 = vsel %vm184, %v4947, 0
    %v5096 = vsel %vm184, %v4948, 0
    %v5099 = vsel %vm184, %v4949, 0
    %v5102 = vsel %vm184, %v4950, 0
    %v5105 = vsel %vm184, %v4951, 0
    %v5108 = vsel %vm184, %v4952, 0
    %v5111 = vsel %vm184, %v4953, 0
    %v5114 = vsel %vm184, %v4954, 0
    %v5117 = vsel %vm184, %v4955, 0
    %v5120 = vsel %vm184, %v4956, 0
    %v5123 = vsel %vm184, %v4957, 0
    %v5126 = vsel %vm184, %v4958, 0
    %v5129 = vsel %vm184, %v4959, 0
    %v5132 = vsel %vm184, %v4960, 0
    %v5135 = vsel %vm184, %v4961, 0
    %v5138 = vsel %vm184, %v4962, 0
    %v5141 = vsel %vm184, %v4963, 0
    %v5144 = vsel %vm184, %v4964, 0
    %v5147 = vsel %vm184, %v4965, 0
    %v5150 = vsel %vm184, %v4966, 0
    %v5153 = vsel %vm184, %v4967, 0
    %v5156 = vsel %vm184, %v4968, 0
    %v5159 = vsel %vm184, %v4969, 0
    %v5162 = vsel %vm184, %v4970, 0
    %v5165 = vsel %vm184, %v4971, 0
    %v5168 = vsel %vm184, %v4972, 0
    %v5171 = vsel %vm184, %v4973, 0
    %v5174 = vsel %vm184, %v4974, 0
    %v5177 = vsel %vm184, %v4975, 0
    %v5180 = vsel %vm184, %v4976, 0
    %v5183 = vsel %vm184, %v4977, 0
    %v5186 = vsel %vm184, %v4978, 0
    %v5189 = vsel %vm184, %v4979, 0
    %v5192 = vsel %vm184, %v4980, 0
    %v5195 = vsel %vm184, %v4981, 0
    %v5198 = vsel %vm184, %v4982, 0
    %v5201 = vsel %vm184, %v4983, 0
    %v5204 = vsel %vm184, %v4984, 0
    %v5207 = vsel %vm184, %v4985, 0
    %v5210 = vsel %vm184, %v4986, 0
    %v5213 = vsel %vm184, %v4987, 0
    %v5216 = vsel %vm184, %v4988, 0
    %v5219 = vsel %vm184, %v4989, 0
    %v5222 = vsel %vm184, %v4990, 0
    %v5225 = vsel %vm416, %v4992, 0
    %5227 = vmatprep.subr.mxu0 0.0
    %5228 = vmatpush1.msra.mxu0 0.0
    %5229 = vmatprep.subr.mxu0 0.0
    %5230 = vmatpush1.msra.mxu0 0.0
    %5231 = vmatprep.subr.mxu0 0.0
    %5232 = vmatpush1.msra.mxu0 0.0
    %5233 = vmatprep.subr.mxu0 0.0
    %5234 = vmatpush1.msra.mxu0 0.0
    %5235 = vmatprep.subr.mxu0 0.0
    %5236 = vmatpush1.msra.mxu0 0.0
    %5237 = vmatprep.subr.mxu0 0.0
    %5238 = vmatpush1.msra.mxu0 0.0
    %5239 = vmatprep.subr.mxu0 0.0
    %5240 = vmatpush1.msra.mxu0 0.0
    %5241 = vmatprep.subr.mxu0 0.0
    %5242 = vmatpush1.msra.mxu0 0.0
    %5243 = vmatprep.subr.mxu0 0.0
    %5244 = vmatpush1.msra.mxu0 0.0
    %5245 = vmatprep.subr.mxu0 0.0
    %5246 = vmatpush1.msra.mxu0 0.0
    %5247 = vmatprep.subr.mxu0 0.0
    %5248 = vmatpush1.msra.mxu0 0.0
    %5249 = vmatprep.subr.mxu0 0.0
    %5250 = vmatpush1.msra.mxu0 0.0
    %5251 = vmatprep.subr.mxu0 0.0
    %5252 = vmatpush1.msra.mxu0 0.0
    %5253 = vmatprep.subr.mxu0 0.0
    %5254 = vmatpush1.msra.mxu0 0.0
    %5255 = vmatprep.subr.mxu0 0.0
    %5256 = vmatpush1.msra.mxu0 0.0
    %5257 = vmatprep.subr.mxu0 0.0
    %5258 = vmatpush1.msra.mxu0 %v5225
    %5259 = vmatprep.subr.mxu0 0.0
    %5260 = vmatpush2.msra.mxu0 0.0
    %5261 = vmatprep.subr.mxu0 0.0
    %5262 = vmatpush2.msra.mxu0 0.0
    %5263 = vmatprep.subr.mxu0 0.0
    %5264 = vmatpush2.msra.mxu0 0.0
    %5265 = vmatprep.subr.mxu0 0.0
    %5266 = vmatpush2.msra.mxu0 0.0
    %5267 = vmatprep.subr.mxu0 0.0
    %5268 = vmatpush2.msra.mxu0 0.0
    %5269 = vmatprep.subr.mxu0 0.0
    %5270 = vmatpush2.msra.mxu0 0.0
    %5271 = vmatprep.subr.mxu0 0.0
    %5272 = vmatpush2.msra.mxu0 0.0
    %5273 = vmatprep.subr.mxu0 0.0
    %5274 = vmatpush2.msra.mxu0 0.0
    %5275 = vmatprep.subr.mxu0 0.0
    %5276 = vmatpush2.msra.mxu0 0.0
    %5277 = vmatprep.subr.mxu0 0.0
    %5278 = vmatpush2.msra.mxu0 0.0
    %5279 = vmatprep.subr.mxu0 0.0
    %5280 = vmatpush2.msra.mxu0 0.0
    %5281 = vmatprep.subr.mxu0 0.0
    %5282 = vmatpush2.msra.mxu0 0.0
    %5283 = vmatprep.subr.mxu0 0.0
    %5284 = vmatpush2.msra.mxu0 0.0
    %5285 = vmatprep.subr.mxu0 0.0
    %5286 = vmatpush2.msra.mxu0 0.0
    %5287 = vmatprep.subr.mxu0 0.0
    %5288 = vmatpush2.msra.mxu0 0.0
    %5289 = vmatprep.subr.mxu0 0.0
    %5290 = vmatpush2.msra.mxu0 0.0
    %5291 = vmatprep.mubr.f32.mxu0 0.0
    %5292 = vmatmul.mubr.f32.gmra.mxu0 %v4994
    %v5293 = vpop.f32.mrf.mxu0
    %v5294 = vadd.f32 0.0, %v5293
    %v5295 = vpop.f32.mrf.mxu0
    %5296 = vmatprep.mubr.f32.mxu0 0.0
    %5297 = vmatmul.mubr.f32.gmra.mxu0 %v4997
    %v5298 = vpop.f32.mrf.mxu0
    %v5299 = vadd.f32 0.0, %v5298
    %v5300 = vpop.f32.mrf.mxu0
    %5301 = vmatprep.mubr.f32.mxu0 0.0
    %5302 = vmatmul.mubr.f32.gmra.mxu0 %v5000
    %v5303 = vpop.f32.mrf.mxu0
    %v5304 = vadd.f32 0.0, %v5303
    %v5305 = vpop.f32.mrf.mxu0
    %5306 = vmatprep.mubr.f32.mxu0 0.0
    %5307 = vmatmul.mubr.f32.gmra.mxu0 %v5003
    %v5308 = vpop.f32.mrf.mxu0
    %v5309 = vadd.f32 0.0, %v5308
    %v5310 = vpop.f32.mrf.mxu0
    %5311 = vmatprep.mubr.f32.mxu0 0.0
    %5312 = vmatmul.mubr.f32.gmra.mxu0 %v5006
    %v5313 = vpop.f32.mrf.mxu0
    %v5314 = vadd.f32 0.0, %v5313
    %v5315 = vpop.f32.mrf.mxu0
    %5316 = vmatprep.mubr.f32.mxu0 0.0
    %5317 = vmatmul.mubr.f32.gmra.mxu0 %v5009
    %v5318 = vpop.f32.mrf.mxu0
    %v5319 = vadd.f32 0.0, %v5318
    %v5320 = vpop.f32.mrf.mxu0
    %5321 = vmatprep.mubr.f32.mxu0 0.0
    %5322 = vmatmul.mubr.f32.gmra.mxu0 %v5012
    %v5323 = vpop.f32.mrf.mxu0
    %v5324 = vadd.f32 0.0, %v5323
    %v5325 = vpop.f32.mrf.mxu0
    %5326 = vmatprep.mubr.f32.mxu0 0.0
    %5327 = vmatmul.mubr.f32.gmra.mxu0 %v5015
    %v5328 = vpop.f32.mrf.mxu0
    %v5329 = vadd.f32 0.0, %v5328
    %v5330 = vpop.f32.mrf.mxu0
    %5331 = vmatprep.mubr.f32.mxu0 0.0
    %5332 = vmatmul.mubr.f32.gmra.mxu0 %v5018
    %v5333 = vpop.f32.mrf.mxu0
    %v5334 = vadd.f32 0.0, %v5333
    %v5335 = vpop.f32.mrf.mxu0
    %5336 = vmatprep.mubr.f32.mxu0 0.0
    %5337 = vmatmul.mubr.f32.gmra.mxu0 %v5021
    %v5338 = vpop.f32.mrf.mxu0
    %v5339 = vadd.f32 0.0, %v5338
    %v5340 = vpop.f32.mrf.mxu0
    %5341 = vmatprep.mubr.f32.mxu0 0.0
    %5342 = vmatmul.mubr.f32.gmra.mxu0 %v5024
    %v5343 = vpop.f32.mrf.mxu0
    %v5344 = vadd.f32 0.0, %v5343
    %v5345 = vpop.f32.mrf.mxu0
    %5346 = vmatprep.mubr.f32.mxu0 0.0
    %5347 = vmatmul.mubr.f32.gmra.mxu0 %v5027
    %v5348 = vpop.f32.mrf.mxu0
    %v5349 = vadd.f32 0.0, %v5348
    %v5350 = vpop.f32.mrf.mxu0
    %5351 = vmatprep.mubr.f32.mxu0 0.0
    %5352 = vmatmul.mubr.f32.gmra.mxu0 %v5030
    %v5353 = vpop.f32.mrf.mxu0
    %v5354 = vadd.f32 0.0, %v5353
    %v5355 = vpop.f32.mrf.mxu0
    %5356 = vmatprep.mubr.f32.mxu0 0.0
    %5357 = vmatmul.mubr.f32.gmra.mxu0 %v5033
    %v5358 = vpop.f32.mrf.mxu0
    %v5359 = vadd.f32 0.0, %v5358
    %v5360 = vpop.f32.mrf.mxu0
    %5361 = vmatprep.mubr.f32.mxu0 0.0
    %5362 = vmatmul.mubr.f32.gmra.mxu0 %v5036
    %v5363 = vpop.f32.mrf.mxu0
    %v5364 = vadd.f32 0.0, %v5363
    %v5365 = vpop.f32.mrf.mxu0
    %5366 = vmatprep.mubr.f32.mxu0 0.0
    %5367 = vmatmul.mubr.f32.gmra.mxu0 %v5039
    %v5368 = vpop.f32.mrf.mxu0
    %v5369 = vadd.f32 0.0, %v5368
    %v5370 = vpop.f32.mrf.mxu0
    %5371 = vmatprep.mubr.f32.mxu0 0.0
    %5372 = vmatmul.mubr.f32.gmra.mxu0 %v5042
    %v5373 = vpop.f32.mrf.mxu0
    %v5374 = vadd.f32 0.0, %v5373
    %v5375 = vpop.f32.mrf.mxu0
    %5376 = vmatprep.mubr.f32.mxu0 0.0
    %5377 = vmatmul.mubr.f32.gmra.mxu0 %v5045
    %v5378 = vpop.f32.mrf.mxu0
    %v5379 = vadd.f32 0.0, %v5378
    %v5380 = vpop.f32.mrf.mxu0
    %5381 = vmatprep.mubr.f32.mxu0 0.0
    %5382 = vmatmul.mubr.f32.gmra.mxu0 %v5048
    %v5383 = vpop.f32.mrf.mxu0
    %v5384 = vadd.f32 0.0, %v5383
    %v5385 = vpop.f32.mrf.mxu0
    %5386 = vmatprep.mubr.f32.mxu0 0.0
    %5387 = vmatmul.mubr.f32.gmra.mxu0 %v5051
    %v5388 = vpop.f32.mrf.mxu0
    %v5389 = vadd.f32 0.0, %v5388
    %v5390 = vpop.f32.mrf.mxu0
    %5391 = vmatprep.mubr.f32.mxu0 0.0
    %5392 = vmatmul.mubr.f32.gmra.mxu0 %v5054
    %v5393 = vpop.f32.mrf.mxu0
    %v5394 = vadd.f32 0.0, %v5393
    %v5395 = vpop.f32.mrf.mxu0
    %5396 = vmatprep.mubr.f32.mxu0 0.0
    %5397 = vmatmul.mubr.f32.gmra.mxu0 %v5057
    %v5398 = vpop.f32.mrf.mxu0
    %v5399 = vadd.f32 0.0, %v5398
    %v5400 = vpop.f32.mrf.mxu0
    %5401 = vmatprep.mubr.f32.mxu0 0.0
    %5402 = vmatmul.mubr.f32.gmra.mxu0 %v5060
    %v5403 = vpop.f32.mrf.mxu0
    %v5404 = vadd.f32 0.0, %v5403
    %v5405 = vpop.f32.mrf.mxu0
    %5406 = vmatprep.mubr.f32.mxu0 0.0
    %5407 = vmatmul.mubr.f32.gmra.mxu0 %v5063
    %v5408 = vpop.f32.mrf.mxu0
    %v5409 = vadd.f32 0.0, %v5408
    %v5410 = vpop.f32.mrf.mxu0
    %5411 = vmatprep.mubr.f32.mxu0 0.0
    %5412 = vmatmul.mubr.f32.gmra.mxu0 %v5066
    %v5413 = vpop.f32.mrf.mxu0
    %v5414 = vadd.f32 0.0, %v5413
    %v5415 = vpop.f32.mrf.mxu0
    %5416 = vmatprep.mubr.f32.mxu0 0.0
    %5417 = vmatmul.mubr.f32.gmra.mxu0 %v5069
    %v5418 = vpop.f32.mrf.mxu0
    %v5419 = vadd.f32 0.0, %v5418
    %v5420 = vpop.f32.mrf.mxu0
    %5421 = vmatprep.mubr.f32.mxu0 0.0
    %5422 = vmatmul.mubr.f32.gmra.mxu0 %v5072
    %v5423 = vpop.f32.mrf.mxu0
    %v5424 = vadd.f32 0.0, %v5423
    %v5425 = vpop.f32.mrf.mxu0
    %5426 = vmatprep.mubr.f32.mxu0 0.0
    %5427 = vmatmul.mubr.f32.gmra.mxu0 %v5075
    %v5428 = vpop.f32.mrf.mxu0
    %v5429 = vadd.f32 0.0, %v5428
    %v5430 = vpop.f32.mrf.mxu0
    %5431 = vmatprep.mubr.f32.mxu0 0.0
    %5432 = vmatmul.mubr.f32.gmra.mxu0 %v5078
    %v5433 = vpop.f32.mrf.mxu0
    %v5434 = vadd.f32 0.0, %v5433
    %v5435 = vpop.f32.mrf.mxu0
    %5436 = vmatprep.mubr.f32.mxu0 0.0
    %5437 = vmatmul.mubr.f32.gmra.mxu0 %v5081
    %v5438 = vpop.f32.mrf.mxu0
    %v5439 = vadd.f32 0.0, %v5438
    %v5440 = vpop.f32.mrf.mxu0
    %5441 = vmatprep.mubr.f32.mxu0 0.0
    %5442 = vmatmul.mubr.f32.gmra.mxu0 %v5084
    %v5443 = vpop.f32.mrf.mxu0
    %v5444 = vadd.f32 0.0, %v5443
    %v5445 = vpop.f32.mrf.mxu0
    %5446 = vmatprep.mubr.f32.mxu0 0.0
    %5447 = vmatmul.mubr.f32.gmra.mxu0 %v5087
    %v5448 = vpop.f32.mrf.mxu0
    %v5449 = vadd.f32 0.0, %v5448
    %v5450 = vpop.f32.mrf.mxu0
    %5451 = vmatprep.mubr.f32.mxu0 0.0
    %5452 = vmatmul.mubr.f32.gmra.mxu0 %v5090
    %v5453 = vpop.f32.mrf.mxu0
    %v5454 = vadd.f32 0.0, %v5453
    %v5455 = vpop.f32.mrf.mxu0
    %5456 = vmatprep.mubr.f32.mxu0 0.0
    %5457 = vmatmul.mubr.f32.gmra.mxu0 %v5093
    %v5458 = vpop.f32.mrf.mxu0
    %v5459 = vadd.f32 0.0, %v5458
    %v5460 = vpop.f32.mrf.mxu0
    %5461 = vmatprep.mubr.f32.mxu0 0.0
    %5462 = vmatmul.mubr.f32.gmra.mxu0 %v5096
    %v5463 = vpop.f32.mrf.mxu0
    %v5464 = vadd.f32 0.0, %v5463
    %v5465 = vpop.f32.mrf.mxu0
    %5466 = vmatprep.mubr.f32.mxu0 0.0
    %5467 = vmatmul.mubr.f32.gmra.mxu0 %v5099
    %v5468 = vpop.f32.mrf.mxu0
    %v5469 = vadd.f32 0.0, %v5468
    %v5470 = vpop.f32.mrf.mxu0
    %5471 = vmatprep.mubr.f32.mxu0 0.0
    %5472 = vmatmul.mubr.f32.gmra.mxu0 %v5102
    %v5473 = vpop.f32.mrf.mxu0
    %v5474 = vadd.f32 0.0, %v5473
    %v5475 = vpop.f32.mrf.mxu0
    %5476 = vmatprep.mubr.f32.mxu0 0.0
    %5477 = vmatmul.mubr.f32.gmra.mxu0 %v5105
    %v5478 = vpop.f32.mrf.mxu0
    %v5479 = vadd.f32 0.0, %v5478
    %v5480 = vpop.f32.mrf.mxu0
    %5481 = vmatprep.mubr.f32.mxu0 0.0
    %5482 = vmatmul.mubr.f32.gmra.mxu0 %v5108
    %v5483 = vpop.f32.mrf.mxu0
    %v5484 = vadd.f32 0.0, %v5483
    %v5485 = vpop.f32.mrf.mxu0
    %5486 = vmatprep.mubr.f32.mxu0 0.0
    %5487 = vmatmul.mubr.f32.gmra.mxu0 %v5111
    %v5488 = vpop.f32.mrf.mxu0
    %v5489 = vadd.f32 0.0, %v5488
    %v5490 = vpop.f32.mrf.mxu0
    %5491 = vmatprep.mubr.f32.mxu0 0.0
    %5492 = vmatmul.mubr.f32.gmra.mxu0 %v5114
    %v5493 = vpop.f32.mrf.mxu0
    %v5494 = vadd.f32 0.0, %v5493
    %v5495 = vpop.f32.mrf.mxu0
    %5496 = vmatprep.mubr.f32.mxu0 0.0
    %5497 = vmatmul.mubr.f32.gmra.mxu0 %v5117
    %v5498 = vpop.f32.mrf.mxu0
    %v5499 = vadd.f32 0.0, %v5498
    %v5500 = vpop.f32.mrf.mxu0
    %5501 = vmatprep.mubr.f32.mxu0 0.0
    %5502 = vmatmul.mubr.f32.gmra.mxu0 %v5120
    %v5503 = vpop.f32.mrf.mxu0
    %v5504 = vadd.f32 0.0, %v5503
    %v5505 = vpop.f32.mrf.mxu0
    %5506 = vmatprep.mubr.f32.mxu0 0.0
    %5507 = vmatmul.mubr.f32.gmra.mxu0 %v5123
    %v5508 = vpop.f32.mrf.mxu0
    %v5509 = vadd.f32 0.0, %v5508
    %v5510 = vpop.f32.mrf.mxu0
    %5511 = vmatprep.mubr.f32.mxu0 0.0
    %5512 = vmatmul.mubr.f32.gmra.mxu0 %v5126
    %v5513 = vpop.f32.mrf.mxu0
    %v5514 = vadd.f32 0.0, %v5513
    %v5515 = vpop.f32.mrf.mxu0
    %5516 = vmatprep.mubr.f32.mxu0 0.0
    %5517 = vmatmul.mubr.f32.gmra.mxu0 %v5129
    %v5518 = vpop.f32.mrf.mxu0
    %v5519 = vadd.f32 0.0, %v5518
    %v5520 = vpop.f32.mrf.mxu0
    %5521 = vmatprep.mubr.f32.mxu0 0.0
    %5522 = vmatmul.mubr.f32.gmra.mxu0 %v5132
    %v5523 = vpop.f32.mrf.mxu0
    %v5524 = vadd.f32 0.0, %v5523
    %v5525 = vpop.f32.mrf.mxu0
    %5526 = vmatprep.mubr.f32.mxu0 0.0
    %5527 = vmatmul.mubr.f32.gmra.mxu0 %v5135
    %v5528 = vpop.f32.mrf.mxu0
    %v5529 = vadd.f32 0.0, %v5528
    %v5530 = vpop.f32.mrf.mxu0
    %5531 = vmatprep.mubr.f32.mxu0 0.0
    %5532 = vmatmul.mubr.f32.gmra.mxu0 %v5138
    %v5533 = vpop.f32.mrf.mxu0
    %v5534 = vadd.f32 0.0, %v5533
    %v5535 = vpop.f32.mrf.mxu0
    %5536 = vmatprep.mubr.f32.mxu0 0.0
    %5537 = vmatmul.mubr.f32.gmra.mxu0 %v5141
    %v5538 = vpop.f32.mrf.mxu0
    %v5539 = vadd.f32 0.0, %v5538
    %v5540 = vpop.f32.mrf.mxu0
    %5541 = vmatprep.mubr.f32.mxu0 0.0
    %5542 = vmatmul.mubr.f32.gmra.mxu0 %v5144
    %v5543 = vpop.f32.mrf.mxu0
    %v5544 = vadd.f32 0.0, %v5543
    %v5545 = vpop.f32.mrf.mxu0
    %5546 = vmatprep.mubr.f32.mxu0 0.0
    %5547 = vmatmul.mubr.f32.gmra.mxu0 %v5147
    %v5548 = vpop.f32.mrf.mxu0
    %v5549 = vadd.f32 0.0, %v5548
    %v5550 = vpop.f32.mrf.mxu0
    %5551 = vmatprep.mubr.f32.mxu0 0.0
    %5552 = vmatmul.mubr.f32.gmra.mxu0 %v5150
    %v5553 = vpop.f32.mrf.mxu0
    %v5554 = vadd.f32 0.0, %v5553
    %v5555 = vpop.f32.mrf.mxu0
    %5556 = vmatprep.mubr.f32.mxu0 0.0
    %5557 = vmatmul.mubr.f32.gmra.mxu0 %v5153
    %v5558 = vpop.f32.mrf.mxu0
    %v5559 = vadd.f32 0.0, %v5558
    %v5560 = vpop.f32.mrf.mxu0
    %5561 = vmatprep.mubr.f32.mxu0 0.0
    %5562 = vmatmul.mubr.f32.gmra.mxu0 %v5156
    %v5563 = vpop.f32.mrf.mxu0
    %v5564 = vadd.f32 0.0, %v5563
    %v5565 = vpop.f32.mrf.mxu0
    %5566 = vmatprep.mubr.f32.mxu0 0.0
    %5567 = vmatmul.mubr.f32.gmra.mxu0 %v5159
    %v5568 = vpop.f32.mrf.mxu0
    %v5569 = vadd.f32 0.0, %v5568
    %v5570 = vpop.f32.mrf.mxu0
    %5571 = vmatprep.mubr.f32.mxu0 0.0
    %5572 = vmatmul.mubr.f32.gmra.mxu0 %v5162
    %v5573 = vpop.f32.mrf.mxu0
    %v5574 = vadd.f32 0.0, %v5573
    %v5575 = vpop.f32.mrf.mxu0
    %5576 = vmatprep.mubr.f32.mxu0 0.0
    %5577 = vmatmul.mubr.f32.gmra.mxu0 %v5165
    %v5578 = vpop.f32.mrf.mxu0
    %v5579 = vadd.f32 0.0, %v5578
    %v5580 = vpop.f32.mrf.mxu0
    %5581 = vmatprep.mubr.f32.mxu0 0.0
    %5582 = vmatmul.mubr.f32.gmra.mxu0 %v5168
    %v5583 = vpop.f32.mrf.mxu0
    %v5584 = vadd.f32 0.0, %v5583
    %v5585 = vpop.f32.mrf.mxu0
    %5586 = vmatprep.mubr.f32.mxu0 0.0
    %5587 = vmatmul.mubr.f32.gmra.mxu0 %v5171
    %v5588 = vpop.f32.mrf.mxu0
    %v5589 = vadd.f32 0.0, %v5588
    %v5590 = vpop.f32.mrf.mxu0
    %5591 = vmatprep.mubr.f32.mxu0 0.0
    %5592 = vmatmul.mubr.f32.gmra.mxu0 %v5174
    %v5593 = vpop.f32.mrf.mxu0
    %v5594 = vadd.f32 0.0, %v5593
    %v5595 = vpop.f32.mrf.mxu0
    %5596 = vmatprep.mubr.f32.mxu0 0.0
    %5597 = vmatmul.mubr.f32.gmra.mxu0 %v5177
    %v5598 = vpop.f32.mrf.mxu0
    %v5599 = vadd.f32 0.0, %v5598
    %v5600 = vpop.f32.mrf.mxu0
    %5601 = vmatprep.mubr.f32.mxu0 0.0
    %5602 = vmatmul.mubr.f32.gmra.mxu0 %v5180
    %v5603 = vpop.f32.mrf.mxu0
    %v5604 = vadd.f32 0.0, %v5603
    %v5605 = vpop.f32.mrf.mxu0
    %5606 = vmatprep.mubr.f32.mxu0 0.0
    %5607 = vmatmul.mubr.f32.gmra.mxu0 %v5183
    %v5608 = vpop.f32.mrf.mxu0
    %v5609 = vadd.f32 0.0, %v5608
    %v5610 = vpop.f32.mrf.mxu0
    %5611 = vmatprep.mubr.f32.mxu0 0.0
    %5612 = vmatmul.mubr.f32.gmra.mxu0 %v5186
    %v5613 = vpop.f32.mrf.mxu0
    %v5614 = vadd.f32 0.0, %v5613
    %v5615 = vpop.f32.mrf.mxu0
    %5616 = vmatprep.mubr.f32.mxu0 0.0
    %5617 = vmatmul.mubr.f32.gmra.mxu0 %v5189
    %v5618 = vpop.f32.mrf.mxu0
    %v5619 = vadd.f32 0.0, %v5618
    %v5620 = vpop.f32.mrf.mxu0
    %5621 = vmatprep.mubr.f32.mxu0 0.0
    %5622 = vmatmul.mubr.f32.gmra.mxu0 %v5192
    %v5623 = vpop.f32.mrf.mxu0
    %v5624 = vadd.f32 0.0, %v5623
    %v5625 = vpop.f32.mrf.mxu0
    %5626 = vmatprep.mubr.f32.mxu0 0.0
    %5627 = vmatmul.mubr.f32.gmra.mxu0 %v5195
    %v5628 = vpop.f32.mrf.mxu0
    %v5629 = vadd.f32 0.0, %v5628
    %v5630 = vpop.f32.mrf.mxu0
    %5631 = vmatprep.mubr.f32.mxu0 0.0
    %5632 = vmatmul.mubr.f32.gmra.mxu0 %v5198
    %v5633 = vpop.f32.mrf.mxu0
    %v5634 = vadd.f32 0.0, %v5633
    %v5635 = vpop.f32.mrf.mxu0
    %5636 = vmatprep.mubr.f32.mxu0 0.0
    %5637 = vmatmul.mubr.f32.gmra.mxu0 %v5201
    %v5638 = vpop.f32.mrf.mxu0
    %v5639 = vadd.f32 0.0, %v5638
    %v5640 = vpop.f32.mrf.mxu0
    %5641 = vmatprep.mubr.f32.mxu0 0.0
    %5642 = vmatmul.mubr.f32.gmra.mxu0 %v5204
    %v5643 = vpop.f32.mrf.mxu0
    %v5644 = vadd.f32 0.0, %v5643
    %v5645 = vpop.f32.mrf.mxu0
    %5646 = vmatprep.mubr.f32.mxu0 0.0
    %5647 = vmatmul.mubr.f32.gmra.mxu0 %v5207
    %v5648 = vpop.f32.mrf.mxu0
    %v5649 = vadd.f32 0.0, %v5648
    %v5650 = vpop.f32.mrf.mxu0
    %5651 = vmatprep.mubr.f32.mxu0 0.0
    %5652 = vmatmul.mubr.f32.gmra.mxu0 %v5210
    %v5653 = vpop.f32.mrf.mxu0
    %v5654 = vadd.f32 0.0, %v5653
    %v5655 = vpop.f32.mrf.mxu0
    %5656 = vmatprep.mubr.f32.mxu0 0.0
    %5657 = vmatmul.mubr.f32.gmra.mxu0 %v5213
    %v5658 = vpop.f32.mrf.mxu0
    %v5659 = vadd.f32 0.0, %v5658
    %v5660 = vpop.f32.mrf.mxu0
    %5661 = vmatprep.mubr.f32.mxu0 0.0
    %5662 = vmatmul.mubr.f32.gmra.mxu0 %v5216
    %v5663 = vpop.f32.mrf.mxu0
    %v5664 = vadd.f32 0.0, %v5663
    %v5665 = vpop.f32.mrf.mxu0
    %5666 = vmatprep.mubr.f32.mxu0 0.0
    %5667 = vmatmul.mubr.f32.gmra.mxu0 %v5219
    %v5668 = vpop.f32.mrf.mxu0
    %v5669 = vadd.f32 0.0, %v5668
    %v5670 = vpop.f32.mrf.mxu0
    %5671 = vmatprep.mubr.f32.mxu0 0.0
    %5672 = vmatmul.mubr.f32.gmra.mxu0 %v5222
    %v5673 = vpop.f32.mrf.mxu0
    %v5674 = vadd.f32 0.0, %v5673
    %v5675 = vpop.f32.mrf.mxu0
    %5676 = vdwg.mxu0
    %v5677 = vadd.f32 %v4837, %v5294
    %v5678 = vadd.f32 %v4838, %v5299
    %v5679 = vadd.f32 %v4839, %v5304
    %v5680 = vadd.f32 %v4840, %v5309
    %v5681 = vadd.f32 %v4841, %v5314
    %v5682 = vadd.f32 %v4842, %v5319
    %v5683 = vadd.f32 %v4843, %v5324
    %v5684 = vadd.f32 %v4844, %v5329
    %v5685 = vadd.f32 %v4845, %v5334
    %v5686 = vadd.f32 %v4846, %v5339
    %v5687 = vadd.f32 %v4847, %v5344
    %v5688 = vadd.f32 %v4848, %v5349
    %v5689 = vadd.f32 %v4849, %v5354
    %v5690 = vadd.f32 %v4850, %v5359
    %v5691 = vadd.f32 %v4851, %v5364
    %v5692 = vadd.f32 %v4852, %v5369
    %v5693 = vadd.f32 %v4853, %v5374
    %v5694 = vadd.f32 %v4854, %v5379
    %v5695 = vadd.f32 %v4855, %v5384
    %v5696 = vadd.f32 %v4856, %v5389
    %v5697 = vadd.f32 %v4857, %v5394
    %v5698 = vadd.f32 %v4858, %v5399
    %v5699 = vadd.f32 %v4859, %v5404
    %v5700 = vadd.f32 %v4860, %v5409
    %v5701 = vadd.f32 %v4861, %v5414
    %v5702 = vadd.f32 %v4862, %v5419
    %v5703 = vadd.f32 %v4863, %v5424
    %v5704 = vadd.f32 %v4864, %v5429
    %v5705 = vadd.f32 %v4865, %v5434
    %v5706 = vadd.f32 %v4866, %v5439
    %v5707 = vadd.f32 %v4867, %v5444
    %v5708 = vadd.f32 %v4868, %v5449
    %v5709 = vadd.f32 %v4869, %v5454
    %v5710 = vadd.f32 %v4870, %v5459
    %v5711 = vadd.f32 %v4871, %v5464
    %v5712 = vadd.f32 %v4872, %v5469
    %v5713 = vadd.f32 %v4873, %v5474
    %v5714 = vadd.f32 %v4874, %v5479
    %v5715 = vadd.f32 %v4875, %v5484
    %v5716 = vadd.f32 %v4876, %v5489
    %v5717 = vadd.f32 %v4877, %v5494
    %v5718 = vadd.f32 %v4878, %v5499
    %v5719 = vadd.f32 %v4879, %v5504
    %v5720 = vadd.f32 %v4880, %v5509
    %v5721 = vadd.f32 %v4881, %v5514
    %v5722 = vadd.f32 %v4882, %v5519
    %v5723 = vadd.f32 %v4883, %v5524
    %v5724 = vadd.f32 %v4884, %v5529
    %v5725 = vadd.f32 %v4885, %v5534
    %v5726 = vadd.f32 %v4886, %v5539
    %v5727 = vadd.f32 %v4887, %v5544
    %v5728 = vadd.f32 %v4888, %v5549
    %v5729 = vadd.f32 %v4889, %v5554
    %v5730 = vadd.f32 %v4890, %v5559
    %v5731 = vadd.f32 %v4891, %v5564
    %v5732 = vadd.f32 %v4892, %v5569
    %v5733 = vadd.f32 %v4893, %v5574
    %v5734 = vadd.f32 %v4894, %v5579
    %v5735 = vadd.f32 %v4895, %v5584
    %v5736 = vadd.f32 %v4896, %v5589
    %v5737 = vadd.f32 %v4897, %v5594
    %v5738 = vadd.f32 %v4898, %v5599
    %v5739 = vadd.f32 %v4899, %v5604
    %v5740 = vadd.f32 %v4900, %v5609
    %v5741 = vadd.f32 %v4901, %v5614
    %v5742 = vadd.f32 %v4902, %v5619
    %v5743 = vadd.f32 %v4903, %v5624
    %v5744 = vadd.f32 %v4904, %v5629
    %v5745 = vadd.f32 %v4905, %v5634
    %v5746 = vadd.f32 %v4906, %v5639
    %v5747 = vadd.f32 %v4907, %v5644
    %v5748 = vadd.f32 %v4908, %v5649
    %v5749 = vadd.f32 %v4909, %v5654
    %v5750 = vadd.f32 %v4910, %v5659
    %v5751 = vadd.f32 %v4911, %v5664
    %v5752 = vadd.f32 %v4912, %v5669
    %v5753 = vadd.f32 %v4913, %v5674
    %v5754 = vld [vmem:[%s0 + $0x25] sm:$0xff]
    %v5755 = vld [vmem:[%s0 + $0x2d] sm:$0xff]
    %v5756 = vld [vmem:[%s0 + $0x35] sm:$0xff]
    %v5757 = vld [vmem:[%s0 + $0x3d] sm:$0xff]
    %v5758 = vld [vmem:[%s0 + $0x45] sm:$0xff]
    %v5759 = vld [vmem:[%s0 + $0x4d] sm:$0xff]
    %v5760 = vld [vmem:[%s0 + $0x55] sm:$0xff]
    %v5761 = vld [vmem:[%s0 + $0x5d] sm:$0xff]
    %v5762 = vld [vmem:[%s0 + $0x65] sm:$0xff]
    %v5763 = vld [vmem:[%s0 + $0x6d] sm:$0xff]
    %v5764 = vld [vmem:[%s0 + $0x75] sm:$0xff]
    %v5765 = vld [vmem:[%s0 + $0x7d] sm:$0xff]
    %v5766 = vld [vmem:[%s0 + $0x85] sm:$0xff]
    %v5767 = vld [vmem:[%s0 + $0x8d] sm:$0xff]
    %v5768 = vld [vmem:[%s0 + $0x95] sm:$0xff]
    %v5769 = vld [vmem:[%s0 + $0x9d] sm:$0xff]
    %v5770 = vld [vmem:[%s0 + $0xa5] sm:$0xff]
    %v5771 = vld [vmem:[%s0 + $0xad] sm:$0xff]
    %v5772 = vld [vmem:[%s0 + $0xb5] sm:$0xff]
    %v5773 = vld [vmem:[%s0 + $0xbd] sm:$0xff]
    %v5774 = vld [vmem:[%s0 + $0xc5] sm:$0xff]
    %v5775 = vld [vmem:[%s0 + $0xcd] sm:$0xff]
    %v5776 = vld [vmem:[%s0 + $0xd5] sm:$0xff]
    %v5777 = vld [vmem:[%s0 + $0xdd] sm:$0xff]
    %v5778 = vld [vmem:[%s0 + $0xe5] sm:$0xff]
    %v5779 = vld [vmem:[%s0 + $0xed] sm:$0xff]
    %v5780 = vld [vmem:[%s0 + $0xf5] sm:$0xff]
    %v5781 = vld [vmem:[%s0 + $0xfd] sm:$0xff]
    %v5782 = vld [vmem:[%s0 + $0x105] sm:$0xff]
    %v5783 = vld [vmem:[%s0 + $0x10d] sm:$0xff]
    %v5784 = vld [vmem:[%s0 + $0x115] sm:$0xff]
    %v5785 = vld [vmem:[%s0 + $0x11d] sm:$0xff]
    %v5786 = vld [vmem:[%s0 + $0x125] sm:$0xff]
    %v5787 = vld [vmem:[%s0 + $0x12d] sm:$0xff]
    %v5788 = vld [vmem:[%s0 + $0x135] sm:$0xff]
    %v5789 = vld [vmem:[%s0 + $0x13d] sm:$0xff]
    %v5790 = vld [vmem:[%s0 + $0x145] sm:$0xff]
    %v5791 = vld [vmem:[%s0 + $0x14d] sm:$0xff]
    %v5792 = vld [vmem:[%s0 + $0x155] sm:$0xff]
    %v5793 = vld [vmem:[%s0 + $0x15d] sm:$0xff]
    %v5794 = vld [vmem:[%s0 + $0x165] sm:$0xff]
    %v5795 = vld [vmem:[%s0 + $0x16d] sm:$0xff]
    %v5796 = vld [vmem:[%s0 + $0x175] sm:$0xff]
    %v5797 = vld [vmem:[%s0 + $0x17d] sm:$0xff]
    %v5798 = vld [vmem:[%s0 + $0x185] sm:$0xff]
    %v5799 = vld [vmem:[%s0 + $0x18d] sm:$0xff]
    %v5800 = vld [vmem:[%s0 + $0x195] sm:$0xff]
    %v5801 = vld [vmem:[%s0 + $0x19d] sm:$0xff]
    %v5802 = vld [vmem:[%s0 + $0x1a5] sm:$0xff]
    %v5803 = vld [vmem:[%s0 + $0x1ad] sm:$0xff]
    %v5804 = vld [vmem:[%s0 + $0x1b5] sm:$0xff]
    %v5805 = vld [vmem:[%s0 + $0x1bd] sm:$0xff]
    %v5806 = vld [vmem:[%s0 + $0x1c5] sm:$0xff]
    %v5807 = vld [vmem:[%s0 + $0x1cd] sm:$0xff]
    %v5808 = vld [vmem:[%s0 + $0x1d5] sm:$0xff]
    %v5809 = vld [vmem:[%s0 + $0x1dd] sm:$0xff]
    %v5810 = vld [vmem:[%s0 + $0x1e5] sm:$0xff]
    %v5811 = vld [vmem:[%s0 + $0x1ed] sm:$0xff]
    %v5812 = vld [vmem:[%s0 + $0x1f5] sm:$0xff]
    %v5813 = vld [vmem:[%s0 + $0x1fd] sm:$0xff]
    %v5814 = vld [vmem:[%s0 + $0x205] sm:$0xff]
    %v5815 = vld [vmem:[%s0 + $0x20d] sm:$0xff]
    %v5816 = vld [vmem:[%s0 + $0x215] sm:$0xff]
    %v5817 = vld [vmem:[%s0 + $0x21d] sm:$0xff]
    %v5818 = vld [vmem:[%s0 + $0x225] sm:$0xff]
    %v5819 = vld [vmem:[%s0 + $0x22d] sm:$0xff]
    %v5820 = vld [vmem:[%s0 + $0x235] sm:$0xff]
    %v5821 = vld [vmem:[%s0 + $0x23d] sm:$0xff]
    %v5822 = vld [vmem:[%s0 + $0x245] sm:$0xff]
    %v5823 = vld [vmem:[%s0 + $0x24d] sm:$0xff]
    %v5824 = vld [vmem:[%s0 + $0x255] sm:$0xff]
    %v5825 = vld [vmem:[%s0 + $0x25d] sm:$0xff]
    %v5826 = vld [vmem:[%s0 + $0x265] sm:$0xff]
    %v5827 = vld [vmem:[%s0 + $0x26d] sm:$0xff]
    %v5828 = vld [vmem:[%s0 + $0x275] sm:$0xff]
    %v5829 = vld [vmem:[%s0 + $0x27d] sm:$0xff]
    %v5830 = vld [vmem:[%s0 + $0x285] sm:$0x3]
    %s5831 = scalar_lea.vmem %s1, 28
    %v5832 = vld [vmem:[%s5831] sm:$0xf]
    %v5834 = vsel %vm184, %v5754, 0
    %v5837 = vsel %vm184, %v5755, 0
    %v5840 = vsel %vm184, %v5756, 0
    %v5843 = vsel %vm184, %v5757, 0
    %v5846 = vsel %vm184, %v5758, 0
    %v5849 = vsel %vm184, %v5759, 0
    %v5852 = vsel %vm184, %v5760, 0
    %v5855 = vsel %vm184, %v5761, 0
    %v5858 = vsel %vm184, %v5762, 0
    %v5861 = vsel %vm184, %v5763, 0
    %v5864 = vsel %vm184, %v5764, 0
    %v5867 = vsel %vm184, %v5765, 0
    %v5870 = vsel %vm184, %v5766, 0
    %v5873 = vsel %vm184, %v5767, 0
    %v5876 = vsel %vm184, %v5768, 0
    %v5879 = vsel %vm184, %v5769, 0
    %v5882 = vsel %vm184, %v5770, 0
    %v5885 = vsel %vm184, %v5771, 0
    %v5888 = vsel %vm184, %v5772, 0
    %v5891 = vsel %vm184, %v5773, 0
    %v5894 = vsel %vm184, %v5774, 0
    %v5897 = vsel %vm184, %v5775, 0
    %v5900 = vsel %vm184, %v5776, 0
    %v5903 = vsel %vm184, %v5777, 0
    %v5906 = vsel %vm184, %v5778, 0
    %v5909 = vsel %vm184, %v5779, 0
    %v5912 = vsel %vm184, %v5780, 0
    %v5915 = vsel %vm184, %v5781, 0
    %v5918 = vsel %vm184, %v5782, 0
    %v5921 = vsel %vm184, %v5783, 0
    %v5924 = vsel %vm184, %v5784, 0
    %v5927 = vsel %vm184, %v5785, 0
    %v5930 = vsel %vm184, %v5786, 0
    %v5933 = vsel %vm184, %v5787, 0
    %v5936 = vsel %vm184, %v5788, 0
    %v5939 = vsel %vm184, %v5789, 0
    %v5942 = vsel %vm184, %v5790, 0
    %v5945 = vsel %vm184, %v5791, 0
    %v5948 = vsel %vm184, %v5792, 0
    %v5951 = vsel %vm184, %v5793, 0
    %v5954 = vsel %vm184, %v5794, 0
    %v5957 = vsel %vm184, %v5795, 0
    %v5960 = vsel %vm184, %v5796, 0
    %v5963 = vsel %vm184, %v5797, 0
    %v5966 = vsel %vm184, %v5798, 0
    %v5969 = vsel %vm184, %v5799, 0
    %v5972 = vsel %vm184, %v5800, 0
    %v5975 = vsel %vm184, %v5801, 0
    %v5978 = vsel %vm184, %v5802, 0
    %v5981 = vsel %vm184, %v5803, 0
    %v5984 = vsel %vm184, %v5804, 0
    %v5987 = vsel %vm184, %v5805, 0
    %v5990 = vsel %vm184, %v5806, 0
    %v5993 = vsel %vm184, %v5807, 0
    %v5996 = vsel %vm184, %v5808, 0
    %v5999 = vsel %vm184, %v5809, 0
    %v6002 = vsel %vm184, %v5810, 0
    %v6005 = vsel %vm184, %v5811, 0
    %v6008 = vsel %vm184, %v5812, 0
    %v6011 = vsel %vm184, %v5813, 0
    %v6014 = vsel %vm184, %v5814, 0
    %v6017 = vsel %vm184, %v5815, 0
    %v6020 = vsel %vm184, %v5816, 0
    %v6023 = vsel %vm184, %v5817, 0
    %v6026 = vsel %vm184, %v5818, 0
    %v6029 = vsel %vm184, %v5819, 0
    %v6032 = vsel %vm184, %v5820, 0
    %v6035 = vsel %vm184, %v5821, 0
    %v6038 = vsel %vm184, %v5822, 0
    %v6041 = vsel %vm184, %v5823, 0
    %v6044 = vsel %vm184, %v5824, 0
    %v6047 = vsel %vm184, %v5825, 0
    %v6050 = vsel %vm184, %v5826, 0
    %v6053 = vsel %vm184, %v5827, 0
    %v6056 = vsel %vm184, %v5828, 0
    %v6059 = vsel %vm184, %v5829, 0
    %v6062 = vsel %vm184, %v5830, 0
    %v6065 = vsel %vm416, %v5832, 0
    %6067 = vmatprep.subr.mxu0 0.0
    %6068 = vmatpush1.msra.mxu0 0.0
    %6069 = vmatprep.subr.mxu0 0.0
    %6070 = vmatpush1.msra.mxu0 0.0
    %6071 = vmatprep.subr.mxu0 0.0
    %6072 = vmatpush1.msra.mxu0 0.0
    %6073 = vmatprep.subr.mxu0 0.0
    %6074 = vmatpush1.msra.mxu0 0.0
    %6075 = vmatprep.subr.mxu0 0.0
    %6076 = vmatpush1.msra.mxu0 0.0
    %6077 = vmatprep.subr.mxu0 0.0
    %6078 = vmatpush1.msra.mxu0 0.0
    %6079 = vmatprep.subr.mxu0 0.0
    %6080 = vmatpush1.msra.mxu0 0.0
    %6081 = vmatprep.subr.mxu0 0.0
    %6082 = vmatpush1.msra.mxu0 0.0
    %6083 = vmatprep.subr.mxu0 0.0
    %6084 = vmatpush1.msra.mxu0 0.0
    %6085 = vmatprep.subr.mxu0 0.0
    %6086 = vmatpush1.msra.mxu0 0.0
    %6087 = vmatprep.subr.mxu0 0.0
    %6088 = vmatpush1.msra.mxu0 0.0
    %6089 = vmatprep.subr.mxu0 0.0
    %6090 = vmatpush1.msra.mxu0 0.0
    %6091 = vmatprep.subr.mxu0 0.0
    %6092 = vmatpush1.msra.mxu0 0.0
    %6093 = vmatprep.subr.mxu0 0.0
    %6094 = vmatpush1.msra.mxu0 0.0
    %6095 = vmatprep.subr.mxu0 0.0
    %6096 = vmatpush1.msra.mxu0 0.0
    %6097 = vmatprep.subr.mxu0 0.0
    %6098 = vmatpush1.msra.mxu0 %v6065
    %6099 = vmatprep.subr.mxu0 0.0
    %6100 = vmatpush2.msra.mxu0 0.0
    %6101 = vmatprep.subr.mxu0 0.0
    %6102 = vmatpush2.msra.mxu0 0.0
    %6103 = vmatprep.subr.mxu0 0.0
    %6104 = vmatpush2.msra.mxu0 0.0
    %6105 = vmatprep.subr.mxu0 0.0
    %6106 = vmatpush2.msra.mxu0 0.0
    %6107 = vmatprep.subr.mxu0 0.0
    %6108 = vmatpush2.msra.mxu0 0.0
    %6109 = vmatprep.subr.mxu0 0.0
    %6110 = vmatpush2.msra.mxu0 0.0
    %6111 = vmatprep.subr.mxu0 0.0
    %6112 = vmatpush2.msra.mxu0 0.0
    %6113 = vmatprep.subr.mxu0 0.0
    %6114 = vmatpush2.msra.mxu0 0.0
    %6115 = vmatprep.subr.mxu0 0.0
    %6116 = vmatpush2.msra.mxu0 0.0
    %6117 = vmatprep.subr.mxu0 0.0
    %6118 = vmatpush2.msra.mxu0 0.0
    %6119 = vmatprep.subr.mxu0 0.0
    %6120 = vmatpush2.msra.mxu0 0.0
    %6121 = vmatprep.subr.mxu0 0.0
    %6122 = vmatpush2.msra.mxu0 0.0
    %6123 = vmatprep.subr.mxu0 0.0
    %6124 = vmatpush2.msra.mxu0 0.0
    %6125 = vmatprep.subr.mxu0 0.0
    %6126 = vmatpush2.msra.mxu0 0.0
    %6127 = vmatprep.subr.mxu0 0.0
    %6128 = vmatpush2.msra.mxu0 0.0
    %6129 = vmatprep.subr.mxu0 0.0
    %6130 = vmatpush2.msra.mxu0 0.0
    %6131 = vmatprep.mubr.f32.mxu0 0.0
    %6132 = vmatmul.mubr.f32.gmra.mxu0 %v5834
    %v6133 = vpop.f32.mrf.mxu0
    %v6134 = vadd.f32 0.0, %v6133
    %v6135 = vpop.f32.mrf.mxu0
    %6136 = vmatprep.mubr.f32.mxu0 0.0
    %6137 = vmatmul.mubr.f32.gmra.mxu0 %v5837
    %v6138 = vpop.f32.mrf.mxu0
    %v6139 = vadd.f32 0.0, %v6138
    %v6140 = vpop.f32.mrf.mxu0
    %6141 = vmatprep.mubr.f32.mxu0 0.0
    %6142 = vmatmul.mubr.f32.gmra.mxu0 %v5840
    %v6143 = vpop.f32.mrf.mxu0
    %v6144 = vadd.f32 0.0, %v6143
    %v6145 = vpop.f32.mrf.mxu0
    %6146 = vmatprep.mubr.f32.mxu0 0.0
    %6147 = vmatmul.mubr.f32.gmra.mxu0 %v5843
    %v6148 = vpop.f32.mrf.mxu0
    %v6149 = vadd.f32 0.0, %v6148
    %v6150 = vpop.f32.mrf.mxu0
    %6151 = vmatprep.mubr.f32.mxu0 0.0
    %6152 = vmatmul.mubr.f32.gmra.mxu0 %v5846
    %v6153 = vpop.f32.mrf.mxu0
    %v6154 = vadd.f32 0.0, %v6153
    %v6155 = vpop.f32.mrf.mxu0
    %6156 = vmatprep.mubr.f32.mxu0 0.0
    %6157 = vmatmul.mubr.f32.gmra.mxu0 %v5849
    %v6158 = vpop.f32.mrf.mxu0
    %v6159 = vadd.f32 0.0, %v6158
    %v6160 = vpop.f32.mrf.mxu0
    %6161 = vmatprep.mubr.f32.mxu0 0.0
    %6162 = vmatmul.mubr.f32.gmra.mxu0 %v5852
    %v6163 = vpop.f32.mrf.mxu0
    %v6164 = vadd.f32 0.0, %v6163
    %v6165 = vpop.f32.mrf.mxu0
    %6166 = vmatprep.mubr.f32.mxu0 0.0
    %6167 = vmatmul.mubr.f32.gmra.mxu0 %v5855
    %v6168 = vpop.f32.mrf.mxu0
    %v6169 = vadd.f32 0.0, %v6168
    %v6170 = vpop.f32.mrf.mxu0
    %6171 = vmatprep.mubr.f32.mxu0 0.0
    %6172 = vmatmul.mubr.f32.gmra.mxu0 %v5858
    %v6173 = vpop.f32.mrf.mxu0
    %v6174 = vadd.f32 0.0, %v6173
    %v6175 = vpop.f32.mrf.mxu0
    %6176 = vmatprep.mubr.f32.mxu0 0.0
    %6177 = vmatmul.mubr.f32.gmra.mxu0 %v5861
    %v6178 = vpop.f32.mrf.mxu0
    %v6179 = vadd.f32 0.0, %v6178
    %v6180 = vpop.f32.mrf.mxu0
    %6181 = vmatprep.mubr.f32.mxu0 0.0
    %6182 = vmatmul.mubr.f32.gmra.mxu0 %v5864
    %v6183 = vpop.f32.mrf.mxu0
    %v6184 = vadd.f32 0.0, %v6183
    %v6185 = vpop.f32.mrf.mxu0
    %6186 = vmatprep.mubr.f32.mxu0 0.0
    %6187 = vmatmul.mubr.f32.gmra.mxu0 %v5867
    %v6188 = vpop.f32.mrf.mxu0
    %v6189 = vadd.f32 0.0, %v6188
    %v6190 = vpop.f32.mrf.mxu0
    %6191 = vmatprep.mubr.f32.mxu0 0.0
    %6192 = vmatmul.mubr.f32.gmra.mxu0 %v5870
    %v6193 = vpop.f32.mrf.mxu0
    %v6194 = vadd.f32 0.0, %v6193
    %v6195 = vpop.f32.mrf.mxu0
    %6196 = vmatprep.mubr.f32.mxu0 0.0
    %6197 = vmatmul.mubr.f32.gmra.mxu0 %v5873
    %v6198 = vpop.f32.mrf.mxu0
    %v6199 = vadd.f32 0.0, %v6198
    %v6200 = vpop.f32.mrf.mxu0
    %6201 = vmatprep.mubr.f32.mxu0 0.0
    %6202 = vmatmul.mubr.f32.gmra.mxu0 %v5876
    %v6203 = vpop.f32.mrf.mxu0
    %v6204 = vadd.f32 0.0, %v6203
    %v6205 = vpop.f32.mrf.mxu0
    %6206 = vmatprep.mubr.f32.mxu0 0.0
    %6207 = vmatmul.mubr.f32.gmra.mxu0 %v5879
    %v6208 = vpop.f32.mrf.mxu0
    %v6209 = vadd.f32 0.0, %v6208
    %v6210 = vpop.f32.mrf.mxu0
    %6211 = vmatprep.mubr.f32.mxu0 0.0
    %6212 = vmatmul.mubr.f32.gmra.mxu0 %v5882
    %v6213 = vpop.f32.mrf.mxu0
    %v6214 = vadd.f32 0.0, %v6213
    %v6215 = vpop.f32.mrf.mxu0
    %6216 = vmatprep.mubr.f32.mxu0 0.0
    %6217 = vmatmul.mubr.f32.gmra.mxu0 %v5885
    %v6218 = vpop.f32.mrf.mxu0
    %v6219 = vadd.f32 0.0, %v6218
    %v6220 = vpop.f32.mrf.mxu0
    %6221 = vmatprep.mubr.f32.mxu0 0.0
    %6222 = vmatmul.mubr.f32.gmra.mxu0 %v5888
    %v6223 = vpop.f32.mrf.mxu0
    %v6224 = vadd.f32 0.0, %v6223
    %v6225 = vpop.f32.mrf.mxu0
    %6226 = vmatprep.mubr.f32.mxu0 0.0
    %6227 = vmatmul.mubr.f32.gmra.mxu0 %v5891
    %v6228 = vpop.f32.mrf.mxu0
    %v6229 = vadd.f32 0.0, %v6228
    %v6230 = vpop.f32.mrf.mxu0
    %6231 = vmatprep.mubr.f32.mxu0 0.0
    %6232 = vmatmul.mubr.f32.gmra.mxu0 %v5894
    %v6233 = vpop.f32.mrf.mxu0
    %v6234 = vadd.f32 0.0, %v6233
    %v6235 = vpop.f32.mrf.mxu0
    %6236 = vmatprep.mubr.f32.mxu0 0.0
    %6237 = vmatmul.mubr.f32.gmra.mxu0 %v5897
    %v6238 = vpop.f32.mrf.mxu0
    %v6239 = vadd.f32 0.0, %v6238
    %v6240 = vpop.f32.mrf.mxu0
    %6241 = vmatprep.mubr.f32.mxu0 0.0
    %6242 = vmatmul.mubr.f32.gmra.mxu0 %v5900
    %v6243 = vpop.f32.mrf.mxu0
    %v6244 = vadd.f32 0.0, %v6243
    %v6245 = vpop.f32.mrf.mxu0
    %6246 = vmatprep.mubr.f32.mxu0 0.0
    %6247 = vmatmul.mubr.f32.gmra.mxu0 %v5903
    %v6248 = vpop.f32.mrf.mxu0
    %v6249 = vadd.f32 0.0, %v6248
    %v6250 = vpop.f32.mrf.mxu0
    %6251 = vmatprep.mubr.f32.mxu0 0.0
    %6252 = vmatmul.mubr.f32.gmra.mxu0 %v5906
    %v6253 = vpop.f32.mrf.mxu0
    %v6254 = vadd.f32 0.0, %v6253
    %v6255 = vpop.f32.mrf.mxu0
    %6256 = vmatprep.mubr.f32.mxu0 0.0
    %6257 = vmatmul.mubr.f32.gmra.mxu0 %v5909
    %v6258 = vpop.f32.mrf.mxu0
    %v6259 = vadd.f32 0.0, %v6258
    %v6260 = vpop.f32.mrf.mxu0
    %6261 = vmatprep.mubr.f32.mxu0 0.0
    %6262 = vmatmul.mubr.f32.gmra.mxu0 %v5912
    %v6263 = vpop.f32.mrf.mxu0
    %v6264 = vadd.f32 0.0, %v6263
    %v6265 = vpop.f32.mrf.mxu0
    %6266 = vmatprep.mubr.f32.mxu0 0.0
    %6267 = vmatmul.mubr.f32.gmra.mxu0 %v5915
    %v6268 = vpop.f32.mrf.mxu0
    %v6269 = vadd.f32 0.0, %v6268
    %v6270 = vpop.f32.mrf.mxu0
    %6271 = vmatprep.mubr.f32.mxu0 0.0
    %6272 = vmatmul.mubr.f32.gmra.mxu0 %v5918
    %v6273 = vpop.f32.mrf.mxu0
    %v6274 = vadd.f32 0.0, %v6273
    %v6275 = vpop.f32.mrf.mxu0
    %6276 = vmatprep.mubr.f32.mxu0 0.0
    %6277 = vmatmul.mubr.f32.gmra.mxu0 %v5921
    %v6278 = vpop.f32.mrf.mxu0
    %v6279 = vadd.f32 0.0, %v6278
    %v6280 = vpop.f32.mrf.mxu0
    %6281 = vmatprep.mubr.f32.mxu0 0.0
    %6282 = vmatmul.mubr.f32.gmra.mxu0 %v5924
    %v6283 = vpop.f32.mrf.mxu0
    %v6284 = vadd.f32 0.0, %v6283
    %v6285 = vpop.f32.mrf.mxu0
    %6286 = vmatprep.mubr.f32.mxu0 0.0
    %6287 = vmatmul.mubr.f32.gmra.mxu0 %v5927
    %v6288 = vpop.f32.mrf.mxu0
    %v6289 = vadd.f32 0.0, %v6288
    %v6290 = vpop.f32.mrf.mxu0
    %6291 = vmatprep.mubr.f32.mxu0 0.0
    %6292 = vmatmul.mubr.f32.gmra.mxu0 %v5930
    %v6293 = vpop.f32.mrf.mxu0
    %v6294 = vadd.f32 0.0, %v6293
    %v6295 = vpop.f32.mrf.mxu0
    %6296 = vmatprep.mubr.f32.mxu0 0.0
    %6297 = vmatmul.mubr.f32.gmra.mxu0 %v5933
    %v6298 = vpop.f32.mrf.mxu0
    %v6299 = vadd.f32 0.0, %v6298
    %v6300 = vpop.f32.mrf.mxu0
    %6301 = vmatprep.mubr.f32.mxu0 0.0
    %6302 = vmatmul.mubr.f32.gmra.mxu0 %v5936
    %v6303 = vpop.f32.mrf.mxu0
    %v6304 = vadd.f32 0.0, %v6303
    %v6305 = vpop.f32.mrf.mxu0
    %6306 = vmatprep.mubr.f32.mxu0 0.0
    %6307 = vmatmul.mubr.f32.gmra.mxu0 %v5939
    %v6308 = vpop.f32.mrf.mxu0
    %v6309 = vadd.f32 0.0, %v6308
    %v6310 = vpop.f32.mrf.mxu0
    %6311 = vmatprep.mubr.f32.mxu0 0.0
    %6312 = vmatmul.mubr.f32.gmra.mxu0 %v5942
    %v6313 = vpop.f32.mrf.mxu0
    %v6314 = vadd.f32 0.0, %v6313
    %v6315 = vpop.f32.mrf.mxu0
    %6316 = vmatprep.mubr.f32.mxu0 0.0
    %6317 = vmatmul.mubr.f32.gmra.mxu0 %v5945
    %v6318 = vpop.f32.mrf.mxu0
    %v6319 = vadd.f32 0.0, %v6318
    %v6320 = vpop.f32.mrf.mxu0
    %6321 = vmatprep.mubr.f32.mxu0 0.0
    %6322 = vmatmul.mubr.f32.gmra.mxu0 %v5948
    %v6323 = vpop.f32.mrf.mxu0
    %v6324 = vadd.f32 0.0, %v6323
    %v6325 = vpop.f32.mrf.mxu0
    %6326 = vmatprep.mubr.f32.mxu0 0.0
    %6327 = vmatmul.mubr.f32.gmra.mxu0 %v5951
    %v6328 = vpop.f32.mrf.mxu0
    %v6329 = vadd.f32 0.0, %v6328
    %v6330 = vpop.f32.mrf.mxu0
    %6331 = vmatprep.mubr.f32.mxu0 0.0
    %6332 = vmatmul.mubr.f32.gmra.mxu0 %v5954
    %v6333 = vpop.f32.mrf.mxu0
    %v6334 = vadd.f32 0.0, %v6333
    %v6335 = vpop.f32.mrf.mxu0
    %6336 = vmatprep.mubr.f32.mxu0 0.0
    %6337 = vmatmul.mubr.f32.gmra.mxu0 %v5957
    %v6338 = vpop.f32.mrf.mxu0
    %v6339 = vadd.f32 0.0, %v6338
    %v6340 = vpop.f32.mrf.mxu0
    %6341 = vmatprep.mubr.f32.mxu0 0.0
    %6342 = vmatmul.mubr.f32.gmra.mxu0 %v5960
    %v6343 = vpop.f32.mrf.mxu0
    %v6344 = vadd.f32 0.0, %v6343
    %v6345 = vpop.f32.mrf.mxu0
    %6346 = vmatprep.mubr.f32.mxu0 0.0
    %6347 = vmatmul.mubr.f32.gmra.mxu0 %v5963
    %v6348 = vpop.f32.mrf.mxu0
    %v6349 = vadd.f32 0.0, %v6348
    %v6350 = vpop.f32.mrf.mxu0
    %6351 = vmatprep.mubr.f32.mxu0 0.0
    %6352 = vmatmul.mubr.f32.gmra.mxu0 %v5966
    %v6353 = vpop.f32.mrf.mxu0
    %v6354 = vadd.f32 0.0, %v6353
    %v6355 = vpop.f32.mrf.mxu0
    %6356 = vmatprep.mubr.f32.mxu0 0.0
    %6357 = vmatmul.mubr.f32.gmra.mxu0 %v5969
    %v6358 = vpop.f32.mrf.mxu0
    %v6359 = vadd.f32 0.0, %v6358
    %v6360 = vpop.f32.mrf.mxu0
    %6361 = vmatprep.mubr.f32.mxu0 0.0
    %6362 = vmatmul.mubr.f32.gmra.mxu0 %v5972
    %v6363 = vpop.f32.mrf.mxu0
    %v6364 = vadd.f32 0.0, %v6363
    %v6365 = vpop.f32.mrf.mxu0
    %6366 = vmatprep.mubr.f32.mxu0 0.0
    %6367 = vmatmul.mubr.f32.gmra.mxu0 %v5975
    %v6368 = vpop.f32.mrf.mxu0
    %v6369 = vadd.f32 0.0, %v6368
    %v6370 = vpop.f32.mrf.mxu0
    %6371 = vmatprep.mubr.f32.mxu0 0.0
    %6372 = vmatmul.mubr.f32.gmra.mxu0 %v5978
    %v6373 = vpop.f32.mrf.mxu0
    %v6374 = vadd.f32 0.0, %v6373
    %v6375 = vpop.f32.mrf.mxu0
    %6376 = vmatprep.mubr.f32.mxu0 0.0
    %6377 = vmatmul.mubr.f32.gmra.mxu0 %v5981
    %v6378 = vpop.f32.mrf.mxu0
    %v6379 = vadd.f32 0.0, %v6378
    %v6380 = vpop.f32.mrf.mxu0
    %6381 = vmatprep.mubr.f32.mxu0 0.0
    %6382 = vmatmul.mubr.f32.gmra.mxu0 %v5984
    %v6383 = vpop.f32.mrf.mxu0
    %v6384 = vadd.f32 0.0, %v6383
    %v6385 = vpop.f32.mrf.mxu0
    %6386 = vmatprep.mubr.f32.mxu0 0.0
    %6387 = vmatmul.mubr.f32.gmra.mxu0 %v5987
    %v6388 = vpop.f32.mrf.mxu0
    %v6389 = vadd.f32 0.0, %v6388
    %v6390 = vpop.f32.mrf.mxu0
    %6391 = vmatprep.mubr.f32.mxu0 0.0
    %6392 = vmatmul.mubr.f32.gmra.mxu0 %v5990
    %v6393 = vpop.f32.mrf.mxu0
    %v6394 = vadd.f32 0.0, %v6393
    %v6395 = vpop.f32.mrf.mxu0
    %6396 = vmatprep.mubr.f32.mxu0 0.0
    %6397 = vmatmul.mubr.f32.gmra.mxu0 %v5993
    %v6398 = vpop.f32.mrf.mxu0
    %v6399 = vadd.f32 0.0, %v6398
    %v6400 = vpop.f32.mrf.mxu0
    %6401 = vmatprep.mubr.f32.mxu0 0.0
    %6402 = vmatmul.mubr.f32.gmra.mxu0 %v5996
    %v6403 = vpop.f32.mrf.mxu0
    %v6404 = vadd.f32 0.0, %v6403
    %v6405 = vpop.f32.mrf.mxu0
    %6406 = vmatprep.mubr.f32.mxu0 0.0
    %6407 = vmatmul.mubr.f32.gmra.mxu0 %v5999
    %v6408 = vpop.f32.mrf.mxu0
    %v6409 = vadd.f32 0.0, %v6408
    %v6410 = vpop.f32.mrf.mxu0
    %6411 = vmatprep.mubr.f32.mxu0 0.0
    %6412 = vmatmul.mubr.f32.gmra.mxu0 %v6002
    %v6413 = vpop.f32.mrf.mxu0
    %v6414 = vadd.f32 0.0, %v6413
    %v6415 = vpop.f32.mrf.mxu0
    %6416 = vmatprep.mubr.f32.mxu0 0.0
    %6417 = vmatmul.mubr.f32.gmra.mxu0 %v6005
    %v6418 = vpop.f32.mrf.mxu0
    %v6419 = vadd.f32 0.0, %v6418
    %v6420 = vpop.f32.mrf.mxu0
    %6421 = vmatprep.mubr.f32.mxu0 0.0
    %6422 = vmatmul.mubr.f32.gmra.mxu0 %v6008
    %v6423 = vpop.f32.mrf.mxu0
    %v6424 = vadd.f32 0.0, %v6423
    %v6425 = vpop.f32.mrf.mxu0
    %6426 = vmatprep.mubr.f32.mxu0 0.0
    %6427 = vmatmul.mubr.f32.gmra.mxu0 %v6011
    %v6428 = vpop.f32.mrf.mxu0
    %v6429 = vadd.f32 0.0, %v6428
    %v6430 = vpop.f32.mrf.mxu0
    %6431 = vmatprep.mubr.f32.mxu0 0.0
    %6432 = vmatmul.mubr.f32.gmra.mxu0 %v6014
    %v6433 = vpop.f32.mrf.mxu0
    %v6434 = vadd.f32 0.0, %v6433
    %v6435 = vpop.f32.mrf.mxu0
    %6436 = vmatprep.mubr.f32.mxu0 0.0
    %6437 = vmatmul.mubr.f32.gmra.mxu0 %v6017
    %v6438 = vpop.f32.mrf.mxu0
    %v6439 = vadd.f32 0.0, %v6438
    %v6440 = vpop.f32.mrf.mxu0
    %6441 = vmatprep.mubr.f32.mxu0 0.0
    %6442 = vmatmul.mubr.f32.gmra.mxu0 %v6020
    %v6443 = vpop.f32.mrf.mxu0
    %v6444 = vadd.f32 0.0, %v6443
    %v6445 = vpop.f32.mrf.mxu0
    %6446 = vmatprep.mubr.f32.mxu0 0.0
    %6447 = vmatmul.mubr.f32.gmra.mxu0 %v6023
    %v6448 = vpop.f32.mrf.mxu0
    %v6449 = vadd.f32 0.0, %v6448
    %v6450 = vpop.f32.mrf.mxu0
    %6451 = vmatprep.mubr.f32.mxu0 0.0
    %6452 = vmatmul.mubr.f32.gmra.mxu0 %v6026
    %v6453 = vpop.f32.mrf.mxu0
    %v6454 = vadd.f32 0.0, %v6453
    %v6455 = vpop.f32.mrf.mxu0
    %6456 = vmatprep.mubr.f32.mxu0 0.0
    %6457 = vmatmul.mubr.f32.gmra.mxu0 %v6029
    %v6458 = vpop.f32.mrf.mxu0
    %v6459 = vadd.f32 0.0, %v6458
    %v6460 = vpop.f32.mrf.mxu0
    %6461 = vmatprep.mubr.f32.mxu0 0.0
    %6462 = vmatmul.mubr.f32.gmra.mxu0 %v6032
    %v6463 = vpop.f32.mrf.mxu0
    %v6464 = vadd.f32 0.0, %v6463
    %v6465 = vpop.f32.mrf.mxu0
    %6466 = vmatprep.mubr.f32.mxu0 0.0
    %6467 = vmatmul.mubr.f32.gmra.mxu0 %v6035
    %v6468 = vpop.f32.mrf.mxu0
    %v6469 = vadd.f32 0.0, %v6468
    %v6470 = vpop.f32.mrf.mxu0
    %6471 = vmatprep.mubr.f32.mxu0 0.0
    %6472 = vmatmul.mubr.f32.gmra.mxu0 %v6038
    %v6473 = vpop.f32.mrf.mxu0
    %v6474 = vadd.f32 0.0, %v6473
    %v6475 = vpop.f32.mrf.mxu0
    %6476 = vmatprep.mubr.f32.mxu0 0.0
    %6477 = vmatmul.mubr.f32.gmra.mxu0 %v6041
    %v6478 = vpop.f32.mrf.mxu0
    %v6479 = vadd.f32 0.0, %v6478
    %v6480 = vpop.f32.mrf.mxu0
    %6481 = vmatprep.mubr.f32.mxu0 0.0
    %6482 = vmatmul.mubr.f32.gmra.mxu0 %v6044
    %v6483 = vpop.f32.mrf.mxu0
    %v6484 = vadd.f32 0.0, %v6483
    %v6485 = vpop.f32.mrf.mxu0
    %6486 = vmatprep.mubr.f32.mxu0 0.0
    %6487 = vmatmul.mubr.f32.gmra.mxu0 %v6047
    %v6488 = vpop.f32.mrf.mxu0
    %v6489 = vadd.f32 0.0, %v6488
    %v6490 = vpop.f32.mrf.mxu0
    %6491 = vmatprep.mubr.f32.mxu0 0.0
    %6492 = vmatmul.mubr.f32.gmra.mxu0 %v6050
    %v6493 = vpop.f32.mrf.mxu0
    %v6494 = vadd.f32 0.0, %v6493
    %v6495 = vpop.f32.mrf.mxu0
    %6496 = vmatprep.mubr.f32.mxu0 0.0
    %6497 = vmatmul.mubr.f32.gmra.mxu0 %v6053
    %v6498 = vpop.f32.mrf.mxu0
    %v6499 = vadd.f32 0.0, %v6498
    %v6500 = vpop.f32.mrf.mxu0
    %6501 = vmatprep.mubr.f32.mxu0 0.0
    %6502 = vmatmul.mubr.f32.gmra.mxu0 %v6056
    %v6503 = vpop.f32.mrf.mxu0
    %v6504 = vadd.f32 0.0, %v6503
    %v6505 = vpop.f32.mrf.mxu0
    %6506 = vmatprep.mubr.f32.mxu0 0.0
    %6507 = vmatmul.mubr.f32.gmra.mxu0 %v6059
    %v6508 = vpop.f32.mrf.mxu0
    %v6509 = vadd.f32 0.0, %v6508
    %v6510 = vpop.f32.mrf.mxu0
    %6511 = vmatprep.mubr.f32.mxu0 0.0
    %6512 = vmatmul.mubr.f32.gmra.mxu0 %v6062
    %v6513 = vpop.f32.mrf.mxu0
    %v6514 = vadd.f32 0.0, %v6513
    %v6515 = vpop.f32.mrf.mxu0
    %6516 = vdwg.mxu0
    %v6517 = vadd.f32 %v5677, %v6134
    %v6518 = vadd.f32 %v5678, %v6139
    %v6519 = vadd.f32 %v5679, %v6144
    %v6520 = vadd.f32 %v5680, %v6149
    %v6521 = vadd.f32 %v5681, %v6154
    %v6522 = vadd.f32 %v5682, %v6159
    %v6523 = vadd.f32 %v5683, %v6164
    %v6524 = vadd.f32 %v5684, %v6169
    %v6525 = vadd.f32 %v5685, %v6174
    %v6526 = vadd.f32 %v5686, %v6179
    %v6527 = vadd.f32 %v5687, %v6184
    %v6528 = vadd.f32 %v5688, %v6189
    %v6529 = vadd.f32 %v5689, %v6194
    %v6530 = vadd.f32 %v5690, %v6199
    %v6531 = vadd.f32 %v5691, %v6204
    %v6532 = vadd.f32 %v5692, %v6209
    %v6533 = vadd.f32 %v5693, %v6214
    %v6534 = vadd.f32 %v5694, %v6219
    %v6535 = vadd.f32 %v5695, %v6224
    %v6536 = vadd.f32 %v5696, %v6229
    %v6537 = vadd.f32 %v5697, %v6234
    %v6538 = vadd.f32 %v5698, %v6239
    %v6539 = vadd.f32 %v5699, %v6244
    %v6540 = vadd.f32 %v5700, %v6249
    %v6541 = vadd.f32 %v5701, %v6254
    %v6542 = vadd.f32 %v5702, %v6259
    %v6543 = vadd.f32 %v5703, %v6264
    %v6544 = vadd.f32 %v5704, %v6269
    %v6545 = vadd.f32 %v5705, %v6274
    %v6546 = vadd.f32 %v5706, %v6279
    %v6547 = vadd.f32 %v5707, %v6284
    %v6548 = vadd.f32 %v5708, %v6289
    %v6549 = vadd.f32 %v5709, %v6294
    %v6550 = vadd.f32 %v5710, %v6299
    %v6551 = vadd.f32 %v5711, %v6304
    %v6552 = vadd.f32 %v5712, %v6309
    %v6553 = vadd.f32 %v5713, %v6314
    %v6554 = vadd.f32 %v5714, %v6319
    %v6555 = vadd.f32 %v5715, %v6324
    %v6556 = vadd.f32 %v5716, %v6329
    %v6557 = vadd.f32 %v5717, %v6334
    %v6558 = vadd.f32 %v5718, %v6339
    %v6559 = vadd.f32 %v5719, %v6344
    %v6560 = vadd.f32 %v5720, %v6349
    %v6561 = vadd.f32 %v5721, %v6354
    %v6562 = vadd.f32 %v5722, %v6359
    %v6563 = vadd.f32 %v5723, %v6364
    %v6564 = vadd.f32 %v5724, %v6369
    %v6565 = vadd.f32 %v5725, %v6374
    %v6566 = vadd.f32 %v5726, %v6379
    %v6567 = vadd.f32 %v5727, %v6384
    %v6568 = vadd.f32 %v5728, %v6389
    %v6569 = vadd.f32 %v5729, %v6394
    %v6570 = vadd.f32 %v5730, %v6399
    %v6571 = vadd.f32 %v5731, %v6404
    %v6572 = vadd.f32 %v5732, %v6409
    %v6573 = vadd.f32 %v5733, %v6414
    %v6574 = vadd.f32 %v5734, %v6419
    %v6575 = vadd.f32 %v5735, %v6424
    %v6576 = vadd.f32 %v5736, %v6429
    %v6577 = vadd.f32 %v5737, %v6434
    %v6578 = vadd.f32 %v5738, %v6439
    %v6579 = vadd.f32 %v5739, %v6444
    %v6580 = vadd.f32 %v5740, %v6449
    %v6581 = vadd.f32 %v5741, %v6454
    %v6582 = vadd.f32 %v5742, %v6459
    %v6583 = vadd.f32 %v5743, %v6464
    %v6584 = vadd.f32 %v5744, %v6469
    %v6585 = vadd.f32 %v5745, %v6474
    %v6586 = vadd.f32 %v5746, %v6479
    %v6587 = vadd.f32 %v5747, %v6484
    %v6588 = vadd.f32 %v5748, %v6489
    %v6589 = vadd.f32 %v5749, %v6494
    %v6590 = vadd.f32 %v5750, %v6499
    %v6591 = vadd.f32 %v5751, %v6504
    %v6592 = vadd.f32 %v5752, %v6509
    %v6593 = vadd.f32 %v5753, %v6514
    %v6594 = vld [vmem:[%s0 + $0x26] sm:$0xff]
    %v6595 = vld [vmem:[%s0 + $0x2e] sm:$0xff]
    %v6596 = vld [vmem:[%s0 + $0x36] sm:$0xff]
    %v6597 = vld [vmem:[%s0 + $0x3e] sm:$0xff]
    %v6598 = vld [vmem:[%s0 + $0x46] sm:$0xff]
    %v6599 = vld [vmem:[%s0 + $0x4e] sm:$0xff]
    %v6600 = vld [vmem:[%s0 + $0x56] sm:$0xff]
    %v6601 = vld [vmem:[%s0 + $0x5e] sm:$0xff]
    %v6602 = vld [vmem:[%s0 + $0x66] sm:$0xff]
    %v6603 = vld [vmem:[%s0 + $0x6e] sm:$0xff]
    %v6604 = vld [vmem:[%s0 + $0x76] sm:$0xff]
    %v6605 = vld [vmem:[%s0 + $0x7e] sm:$0xff]
    %v6606 = vld [vmem:[%s0 + $0x86] sm:$0xff]
    %v6607 = vld [vmem:[%s0 + $0x8e] sm:$0xff]
    %v6608 = vld [vmem:[%s0 + $0x96] sm:$0xff]
    %v6609 = vld [vmem:[%s0 + $0x9e] sm:$0xff]
    %v6610 = vld [vmem:[%s0 + $0xa6] sm:$0xff]
    %v6611 = vld [vmem:[%s0 + $0xae] sm:$0xff]
    %v6612 = vld [vmem:[%s0 + $0xb6] sm:$0xff]
    %v6613 = vld [vmem:[%s0 + $0xbe] sm:$0xff]
    %v6614 = vld [vmem:[%s0 + $0xc6] sm:$0xff]
    %v6615 = vld [vmem:[%s0 + $0xce] sm:$0xff]
    %v6616 = vld [vmem:[%s0 + $0xd6] sm:$0xff]
    %v6617 = vld [vmem:[%s0 + $0xde] sm:$0xff]
    %v6618 = vld [vmem:[%s0 + $0xe6] sm:$0xff]
    %v6619 = vld [vmem:[%s0 + $0xee] sm:$0xff]
    %v6620 = vld [vmem:[%s0 + $0xf6] sm:$0xff]
    %v6621 = vld [vmem:[%s0 + $0xfe] sm:$0xff]
    %v6622 = vld [vmem:[%s0 + $0x106] sm:$0xff]
    %v6623 = vld [vmem:[%s0 + $0x10e] sm:$0xff]
    %v6624 = vld [vmem:[%s0 + $0x116] sm:$0xff]
    %v6625 = vld [vmem:[%s0 + $0x11e] sm:$0xff]
    %v6626 = vld [vmem:[%s0 + $0x126] sm:$0xff]
    %v6627 = vld [vmem:[%s0 + $0x12e] sm:$0xff]
    %v6628 = vld [vmem:[%s0 + $0x136] sm:$0xff]
    %v6629 = vld [vmem:[%s0 + $0x13e] sm:$0xff]
    %v6630 = vld [vmem:[%s0 + $0x146] sm:$0xff]
    %v6631 = vld [vmem:[%s0 + $0x14e] sm:$0xff]
    %v6632 = vld [vmem:[%s0 + $0x156] sm:$0xff]
    %v6633 = vld [vmem:[%s0 + $0x15e] sm:$0xff]
    %v6634 = vld [vmem:[%s0 + $0x166] sm:$0xff]
    %v6635 = vld [vmem:[%s0 + $0x16e] sm:$0xff]
    %v6636 = vld [vmem:[%s0 + $0x176] sm:$0xff]
    %v6637 = vld [vmem:[%s0 + $0x17e] sm:$0xff]
    %v6638 = vld [vmem:[%s0 + $0x186] sm:$0xff]
    %v6639 = vld [vmem:[%s0 + $0x18e] sm:$0xff]
    %v6640 = vld [vmem:[%s0 + $0x196] sm:$0xff]
    %v6641 = vld [vmem:[%s0 + $0x19e] sm:$0xff]
    %v6642 = vld [vmem:[%s0 + $0x1a6] sm:$0xff]
    %v6643 = vld [vmem:[%s0 + $0x1ae] sm:$0xff]
    %v6644 = vld [vmem:[%s0 + $0x1b6] sm:$0xff]
    %v6645 = vld [vmem:[%s0 + $0x1be] sm:$0xff]
    %v6646 = vld [vmem:[%s0 + $0x1c6] sm:$0xff]
    %v6647 = vld [vmem:[%s0 + $0x1ce] sm:$0xff]
    %v6648 = vld [vmem:[%s0 + $0x1d6] sm:$0xff]
    %v6649 = vld [vmem:[%s0 + $0x1de] sm:$0xff]
    %v6650 = vld [vmem:[%s0 + $0x1e6] sm:$0xff]
    %v6651 = vld [vmem:[%s0 + $0x1ee] sm:$0xff]
    %v6652 = vld [vmem:[%s0 + $0x1f6] sm:$0xff]
    %v6653 = vld [vmem:[%s0 + $0x1fe] sm:$0xff]
    %v6654 = vld [vmem:[%s0 + $0x206] sm:$0xff]
    %v6655 = vld [vmem:[%s0 + $0x20e] sm:$0xff]
    %v6656 = vld [vmem:[%s0 + $0x216] sm:$0xff]
    %v6657 = vld [vmem:[%s0 + $0x21e] sm:$0xff]
    %v6658 = vld [vmem:[%s0 + $0x226] sm:$0xff]
    %v6659 = vld [vmem:[%s0 + $0x22e] sm:$0xff]
    %v6660 = vld [vmem:[%s0 + $0x236] sm:$0xff]
    %v6661 = vld [vmem:[%s0 + $0x23e] sm:$0xff]
    %v6662 = vld [vmem:[%s0 + $0x246] sm:$0xff]
    %v6663 = vld [vmem:[%s0 + $0x24e] sm:$0xff]
    %v6664 = vld [vmem:[%s0 + $0x256] sm:$0xff]
    %v6665 = vld [vmem:[%s0 + $0x25e] sm:$0xff]
    %v6666 = vld [vmem:[%s0 + $0x266] sm:$0xff]
    %v6667 = vld [vmem:[%s0 + $0x26e] sm:$0xff]
    %v6668 = vld [vmem:[%s0 + $0x276] sm:$0xff]
    %v6669 = vld [vmem:[%s0 + $0x27e] sm:$0xff]
    %v6670 = vld [vmem:[%s0 + $0x286] sm:$0x3]
    %s6671 = scalar_lea.vmem %s1, 32
    %v6672 = vld [vmem:[%s6671] sm:$0xf]
    %v6674 = vsel %vm184, %v6594, 0
    %v6677 = vsel %vm184, %v6595, 0
    %v6680 = vsel %vm184, %v6596, 0
    %v6683 = vsel %vm184, %v6597, 0
    %v6686 = vsel %vm184, %v6598, 0
    %v6689 = vsel %vm184, %v6599, 0
    %v6692 = vsel %vm184, %v6600, 0
    %v6695 = vsel %vm184, %v6601, 0
    %v6698 = vsel %vm184, %v6602, 0
    %v6701 = vsel %vm184, %v6603, 0
    %v6704 = vsel %vm184, %v6604, 0
    %v6707 = vsel %vm184, %v6605, 0
    %v6710 = vsel %vm184, %v6606, 0
    %v6713 = vsel %vm184, %v6607, 0
    %v6716 = vsel %vm184, %v6608, 0
    %v6719 = vsel %vm184, %v6609, 0
    %v6722 = vsel %vm184, %v6610, 0
    %v6725 = vsel %vm184, %v6611, 0
    %v6728 = vsel %vm184, %v6612, 0
    %v6731 = vsel %vm184, %v6613, 0
    %v6734 = vsel %vm184, %v6614, 0
    %v6737 = vsel %vm184, %v6615, 0
    %v6740 = vsel %vm184, %v6616, 0
    %v6743 = vsel %vm184, %v6617, 0
    %v6746 = vsel %vm184, %v6618, 0
    %v6749 = vsel %vm184, %v6619, 0
    %v6752 = vsel %vm184, %v6620, 0
    %v6755 = vsel %vm184, %v6621, 0
    %v6758 = vsel %vm184, %v6622, 0
    %v6761 = vsel %vm184, %v6623, 0
    %v6764 = vsel %vm184, %v6624, 0
    %v6767 = vsel %vm184, %v6625, 0
    %v6770 = vsel %vm184, %v6626, 0
    %v6773 = vsel %vm184, %v6627, 0
    %v6776 = vsel %vm184, %v6628, 0
    %v6779 = vsel %vm184, %v6629, 0
    %v6782 = vsel %vm184, %v6630, 0
    %v6785 = vsel %vm184, %v6631, 0
    %v6788 = vsel %vm184, %v6632, 0
    %v6791 = vsel %vm184, %v6633, 0
    %v6794 = vsel %vm184, %v6634, 0
    %v6797 = vsel %vm184, %v6635, 0
    %v6800 = vsel %vm184, %v6636, 0
    %v6803 = vsel %vm184, %v6637, 0
    %v6806 = vsel %vm184, %v6638, 0
    %v6809 = vsel %vm184, %v6639, 0
    %v6812 = vsel %vm184, %v6640, 0
    %v6815 = vsel %vm184, %v6641, 0
    %v6818 = vsel %vm184, %v6642, 0
    %v6821 = vsel %vm184, %v6643, 0
    %v6824 = vsel %vm184, %v6644, 0
    %v6827 = vsel %vm184, %v6645, 0
    %v6830 = vsel %vm184, %v6646, 0
    %v6833 = vsel %vm184, %v6647, 0
    %v6836 = vsel %vm184, %v6648, 0
    %v6839 = vsel %vm184, %v6649, 0
    %v6842 = vsel %vm184, %v6650, 0
    %v6845 = vsel %vm184, %v6651, 0
    %v6848 = vsel %vm184, %v6652, 0
    %v6851 = vsel %vm184, %v6653, 0
    %v6854 = vsel %vm184, %v6654, 0
    %v6857 = vsel %vm184, %v6655, 0
    %v6860 = vsel %vm184, %v6656, 0
    %v6863 = vsel %vm184, %v6657, 0
    %v6866 = vsel %vm184, %v6658, 0
    %v6869 = vsel %vm184, %v6659, 0
    %v6872 = vsel %vm184, %v6660, 0
    %v6875 = vsel %vm184, %v6661, 0
    %v6878 = vsel %vm184, %v6662, 0
    %v6881 = vsel %vm184, %v6663, 0
    %v6884 = vsel %vm184, %v6664, 0
    %v6887 = vsel %vm184, %v6665, 0
    %v6890 = vsel %vm184, %v6666, 0
    %v6893 = vsel %vm184, %v6667, 0
    %v6896 = vsel %vm184, %v6668, 0
    %v6899 = vsel %vm184, %v6669, 0
    %v6902 = vsel %vm184, %v6670, 0
    %v6905 = vsel %vm416, %v6672, 0
    %6907 = vmatprep.subr.mxu0 0.0
    %6908 = vmatpush1.msra.mxu0 0.0
    %6909 = vmatprep.subr.mxu0 0.0
    %6910 = vmatpush1.msra.mxu0 0.0
    %6911 = vmatprep.subr.mxu0 0.0
    %6912 = vmatpush1.msra.mxu0 0.0
    %6913 = vmatprep.subr.mxu0 0.0
    %6914 = vmatpush1.msra.mxu0 0.0
    %6915 = vmatprep.subr.mxu0 0.0
    %6916 = vmatpush1.msra.mxu0 0.0
    %6917 = vmatprep.subr.mxu0 0.0
    %6918 = vmatpush1.msra.mxu0 0.0
    %6919 = vmatprep.subr.mxu0 0.0
    %6920 = vmatpush1.msra.mxu0 0.0
    %6921 = vmatprep.subr.mxu0 0.0
    %6922 = vmatpush1.msra.mxu0 0.0
    %6923 = vmatprep.subr.mxu0 0.0
    %6924 = vmatpush1.msra.mxu0 0.0
    %6925 = vmatprep.subr.mxu0 0.0
    %6926 = vmatpush1.msra.mxu0 0.0
    %6927 = vmatprep.subr.mxu0 0.0
    %6928 = vmatpush1.msra.mxu0 0.0
    %6929 = vmatprep.subr.mxu0 0.0
    %6930 = vmatpush1.msra.mxu0 0.0
    %6931 = vmatprep.subr.mxu0 0.0
    %6932 = vmatpush1.msra.mxu0 0.0
    %6933 = vmatprep.subr.mxu0 0.0
    %6934 = vmatpush1.msra.mxu0 0.0
    %6935 = vmatprep.subr.mxu0 0.0
    %6936 = vmatpush1.msra.mxu0 0.0
    %6937 = vmatprep.subr.mxu0 0.0
    %6938 = vmatpush1.msra.mxu0 %v6905
    %6939 = vmatprep.subr.mxu0 0.0
    %6940 = vmatpush2.msra.mxu0 0.0
    %6941 = vmatprep.subr.mxu0 0.0
    %6942 = vmatpush2.msra.mxu0 0.0
    %6943 = vmatprep.subr.mxu0 0.0
    %6944 = vmatpush2.msra.mxu0 0.0
    %6945 = vmatprep.subr.mxu0 0.0
    %6946 = vmatpush2.msra.mxu0 0.0
    %6947 = vmatprep.subr.mxu0 0.0
    %6948 = vmatpush2.msra.mxu0 0.0
    %6949 = vmatprep.subr.mxu0 0.0
    %6950 = vmatpush2.msra.mxu0 0.0
    %6951 = vmatprep.subr.mxu0 0.0
    %6952 = vmatpush2.msra.mxu0 0.0
    %6953 = vmatprep.subr.mxu0 0.0
    %6954 = vmatpush2.msra.mxu0 0.0
    %6955 = vmatprep.subr.mxu0 0.0
    %6956 = vmatpush2.msra.mxu0 0.0
    %6957 = vmatprep.subr.mxu0 0.0
    %6958 = vmatpush2.msra.mxu0 0.0
    %6959 = vmatprep.subr.mxu0 0.0
    %6960 = vmatpush2.msra.mxu0 0.0
    %6961 = vmatprep.subr.mxu0 0.0
    %6962 = vmatpush2.msra.mxu0 0.0
    %6963 = vmatprep.subr.mxu0 0.0
    %6964 = vmatpush2.msra.mxu0 0.0
    %6965 = vmatprep.subr.mxu0 0.0
    %6966 = vmatpush2.msra.mxu0 0.0
    %6967 = vmatprep.subr.mxu0 0.0
    %6968 = vmatpush2.msra.mxu0 0.0
    %6969 = vmatprep.subr.mxu0 0.0
    %6970 = vmatpush2.msra.mxu0 0.0
    %6971 = vmatprep.mubr.f32.mxu0 0.0
    %6972 = vmatmul.mubr.f32.gmra.mxu0 %v6674
    %v6973 = vpop.f32.mrf.mxu0
    %v6974 = vadd.f32 0.0, %v6973
    %v6975 = vpop.f32.mrf.mxu0
    %6976 = vmatprep.mubr.f32.mxu0 0.0
    %6977 = vmatmul.mubr.f32.gmra.mxu0 %v6677
    %v6978 = vpop.f32.mrf.mxu0
    %v6979 = vadd.f32 0.0, %v6978
    %v6980 = vpop.f32.mrf.mxu0
    %6981 = vmatprep.mubr.f32.mxu0 0.0
    %6982 = vmatmul.mubr.f32.gmra.mxu0 %v6680
    %v6983 = vpop.f32.mrf.mxu0
    %v6984 = vadd.f32 0.0, %v6983
    %v6985 = vpop.f32.mrf.mxu0
    %6986 = vmatprep.mubr.f32.mxu0 0.0
    %6987 = vmatmul.mubr.f32.gmra.mxu0 %v6683
    %v6988 = vpop.f32.mrf.mxu0
    %v6989 = vadd.f32 0.0, %v6988
    %v6990 = vpop.f32.mrf.mxu0
    %6991 = vmatprep.mubr.f32.mxu0 0.0
    %6992 = vmatmul.mubr.f32.gmra.mxu0 %v6686
    %v6993 = vpop.f32.mrf.mxu0
    %v6994 = vadd.f32 0.0, %v6993
    %v6995 = vpop.f32.mrf.mxu0
    %6996 = vmatprep.mubr.f32.mxu0 0.0
    %6997 = vmatmul.mubr.f32.gmra.mxu0 %v6689
    %v6998 = vpop.f32.mrf.mxu0
    %v6999 = vadd.f32 0.0, %v6998
    %v7000 = vpop.f32.mrf.mxu0
    %7001 = vmatprep.mubr.f32.mxu0 0.0
    %7002 = vmatmul.mubr.f32.gmra.mxu0 %v6692
    %v7003 = vpop.f32.mrf.mxu0
    %v7004 = vadd.f32 0.0, %v7003
    %v7005 = vpop.f32.mrf.mxu0
    %7006 = vmatprep.mubr.f32.mxu0 0.0
    %7007 = vmatmul.mubr.f32.gmra.mxu0 %v6695
    %v7008 = vpop.f32.mrf.mxu0
    %v7009 = vadd.f32 0.0, %v7008
    %v7010 = vpop.f32.mrf.mxu0
    %7011 = vmatprep.mubr.f32.mxu0 0.0
    %7012 = vmatmul.mubr.f32.gmra.mxu0 %v6698
    %v7013 = vpop.f32.mrf.mxu0
    %v7014 = vadd.f32 0.0, %v7013
    %v7015 = vpop.f32.mrf.mxu0
    %7016 = vmatprep.mubr.f32.mxu0 0.0
    %7017 = vmatmul.mubr.f32.gmra.mxu0 %v6701
    %v7018 = vpop.f32.mrf.mxu0
    %v7019 = vadd.f32 0.0, %v7018
    %v7020 = vpop.f32.mrf.mxu0
    %7021 = vmatprep.mubr.f32.mxu0 0.0
    %7022 = vmatmul.mubr.f32.gmra.mxu0 %v6704
    %v7023 = vpop.f32.mrf.mxu0
    %v7024 = vadd.f32 0.0, %v7023
    %v7025 = vpop.f32.mrf.mxu0
    %7026 = vmatprep.mubr.f32.mxu0 0.0
    %7027 = vmatmul.mubr.f32.gmra.mxu0 %v6707
    %v7028 = vpop.f32.mrf.mxu0
    %v7029 = vadd.f32 0.0, %v7028
    %v7030 = vpop.f32.mrf.mxu0
    %7031 = vmatprep.mubr.f32.mxu0 0.0
    %7032 = vmatmul.mubr.f32.gmra.mxu0 %v6710
    %v7033 = vpop.f32.mrf.mxu0
    %v7034 = vadd.f32 0.0, %v7033
    %v7035 = vpop.f32.mrf.mxu0
    %7036 = vmatprep.mubr.f32.mxu0 0.0
    %7037 = vmatmul.mubr.f32.gmra.mxu0 %v6713
    %v7038 = vpop.f32.mrf.mxu0
    %v7039 = vadd.f32 0.0, %v7038
    %v7040 = vpop.f32.mrf.mxu0
    %7041 = vmatprep.mubr.f32.mxu0 0.0
    %7042 = vmatmul.mubr.f32.gmra.mxu0 %v6716
    %v7043 = vpop.f32.mrf.mxu0
    %v7044 = vadd.f32 0.0, %v7043
    %v7045 = vpop.f32.mrf.mxu0
    %7046 = vmatprep.mubr.f32.mxu0 0.0
    %7047 = vmatmul.mubr.f32.gmra.mxu0 %v6719
    %v7048 = vpop.f32.mrf.mxu0
    %v7049 = vadd.f32 0.0, %v7048
    %v7050 = vpop.f32.mrf.mxu0
    %7051 = vmatprep.mubr.f32.mxu0 0.0
    %7052 = vmatmul.mubr.f32.gmra.mxu0 %v6722
    %v7053 = vpop.f32.mrf.mxu0
    %v7054 = vadd.f32 0.0, %v7053
    %v7055 = vpop.f32.mrf.mxu0
    %7056 = vmatprep.mubr.f32.mxu0 0.0
    %7057 = vmatmul.mubr.f32.gmra.mxu0 %v6725
    %v7058 = vpop.f32.mrf.mxu0
    %v7059 = vadd.f32 0.0, %v7058
    %v7060 = vpop.f32.mrf.mxu0
    %7061 = vmatprep.mubr.f32.mxu0 0.0
    %7062 = vmatmul.mubr.f32.gmra.mxu0 %v6728
    %v7063 = vpop.f32.mrf.mxu0
    %v7064 = vadd.f32 0.0, %v7063
    %v7065 = vpop.f32.mrf.mxu0
    %7066 = vmatprep.mubr.f32.mxu0 0.0
    %7067 = vmatmul.mubr.f32.gmra.mxu0 %v6731
    %v7068 = vpop.f32.mrf.mxu0
    %v7069 = vadd.f32 0.0, %v7068
    %v7070 = vpop.f32.mrf.mxu0
    %7071 = vmatprep.mubr.f32.mxu0 0.0
    %7072 = vmatmul.mubr.f32.gmra.mxu0 %v6734
    %v7073 = vpop.f32.mrf.mxu0
    %v7074 = vadd.f32 0.0, %v7073
    %v7075 = vpop.f32.mrf.mxu0
    %7076 = vmatprep.mubr.f32.mxu0 0.0
    %7077 = vmatmul.mubr.f32.gmra.mxu0 %v6737
    %v7078 = vpop.f32.mrf.mxu0
    %v7079 = vadd.f32 0.0, %v7078
    %v7080 = vpop.f32.mrf.mxu0
    %7081 = vmatprep.mubr.f32.mxu0 0.0
    %7082 = vmatmul.mubr.f32.gmra.mxu0 %v6740
    %v7083 = vpop.f32.mrf.mxu0
    %v7084 = vadd.f32 0.0, %v7083
    %v7085 = vpop.f32.mrf.mxu0
    %7086 = vmatprep.mubr.f32.mxu0 0.0
    %7087 = vmatmul.mubr.f32.gmra.mxu0 %v6743
    %v7088 = vpop.f32.mrf.mxu0
    %v7089 = vadd.f32 0.0, %v7088
    %v7090 = vpop.f32.mrf.mxu0
    %7091 = vmatprep.mubr.f32.mxu0 0.0
    %7092 = vmatmul.mubr.f32.gmra.mxu0 %v6746
    %v7093 = vpop.f32.mrf.mxu0
    %v7094 = vadd.f32 0.0, %v7093
    %v7095 = vpop.f32.mrf.mxu0
    %7096 = vmatprep.mubr.f32.mxu0 0.0
    %7097 = vmatmul.mubr.f32.gmra.mxu0 %v6749
    %v7098 = vpop.f32.mrf.mxu0
    %v7099 = vadd.f32 0.0, %v7098
    %v7100 = vpop.f32.mrf.mxu0
    %7101 = vmatprep.mubr.f32.mxu0 0.0
    %7102 = vmatmul.mubr.f32.gmra.mxu0 %v6752
    %v7103 = vpop.f32.mrf.mxu0
    %v7104 = vadd.f32 0.0, %v7103
    %v7105 = vpop.f32.mrf.mxu0
    %7106 = vmatprep.mubr.f32.mxu0 0.0
    %7107 = vmatmul.mubr.f32.gmra.mxu0 %v6755
    %v7108 = vpop.f32.mrf.mxu0
    %v7109 = vadd.f32 0.0, %v7108
    %v7110 = vpop.f32.mrf.mxu0
    %7111 = vmatprep.mubr.f32.mxu0 0.0
    %7112 = vmatmul.mubr.f32.gmra.mxu0 %v6758
    %v7113 = vpop.f32.mrf.mxu0
    %v7114 = vadd.f32 0.0, %v7113
    %v7115 = vpop.f32.mrf.mxu0
    %7116 = vmatprep.mubr.f32.mxu0 0.0
    %7117 = vmatmul.mubr.f32.gmra.mxu0 %v6761
    %v7118 = vpop.f32.mrf.mxu0
    %v7119 = vadd.f32 0.0, %v7118
    %v7120 = vpop.f32.mrf.mxu0
    %7121 = vmatprep.mubr.f32.mxu0 0.0
    %7122 = vmatmul.mubr.f32.gmra.mxu0 %v6764
    %v7123 = vpop.f32.mrf.mxu0
    %v7124 = vadd.f32 0.0, %v7123
    %v7125 = vpop.f32.mrf.mxu0
    %7126 = vmatprep.mubr.f32.mxu0 0.0
    %7127 = vmatmul.mubr.f32.gmra.mxu0 %v6767
    %v7128 = vpop.f32.mrf.mxu0
    %v7129 = vadd.f32 0.0, %v7128
    %v7130 = vpop.f32.mrf.mxu0
    %7131 = vmatprep.mubr.f32.mxu0 0.0
    %7132 = vmatmul.mubr.f32.gmra.mxu0 %v6770
    %v7133 = vpop.f32.mrf.mxu0
    %v7134 = vadd.f32 0.0, %v7133
    %v7135 = vpop.f32.mrf.mxu0
    %7136 = vmatprep.mubr.f32.mxu0 0.0
    %7137 = vmatmul.mubr.f32.gmra.mxu0 %v6773
    %v7138 = vpop.f32.mrf.mxu0
    %v7139 = vadd.f32 0.0, %v7138
    %v7140 = vpop.f32.mrf.mxu0
    %7141 = vmatprep.mubr.f32.mxu0 0.0
    %7142 = vmatmul.mubr.f32.gmra.mxu0 %v6776
    %v7143 = vpop.f32.mrf.mxu0
    %v7144 = vadd.f32 0.0, %v7143
    %v7145 = vpop.f32.mrf.mxu0
    %7146 = vmatprep.mubr.f32.mxu0 0.0
    %7147 = vmatmul.mubr.f32.gmra.mxu0 %v6779
    %v7148 = vpop.f32.mrf.mxu0
    %v7149 = vadd.f32 0.0, %v7148
    %v7150 = vpop.f32.mrf.mxu0
    %7151 = vmatprep.mubr.f32.mxu0 0.0
    %7152 = vmatmul.mubr.f32.gmra.mxu0 %v6782
    %v7153 = vpop.f32.mrf.mxu0
    %v7154 = vadd.f32 0.0, %v7153
    %v7155 = vpop.f32.mrf.mxu0
    %7156 = vmatprep.mubr.f32.mxu0 0.0
    %7157 = vmatmul.mubr.f32.gmra.mxu0 %v6785
    %v7158 = vpop.f32.mrf.mxu0
    %v7159 = vadd.f32 0.0, %v7158
    %v7160 = vpop.f32.mrf.mxu0
    %7161 = vmatprep.mubr.f32.mxu0 0.0
    %7162 = vmatmul.mubr.f32.gmra.mxu0 %v6788
    %v7163 = vpop.f32.mrf.mxu0
    %v7164 = vadd.f32 0.0, %v7163
    %v7165 = vpop.f32.mrf.mxu0
    %7166 = vmatprep.mubr.f32.mxu0 0.0
    %7167 = vmatmul.mubr.f32.gmra.mxu0 %v6791
    %v7168 = vpop.f32.mrf.mxu0
    %v7169 = vadd.f32 0.0, %v7168
    %v7170 = vpop.f32.mrf.mxu0
    %7171 = vmatprep.mubr.f32.mxu0 0.0
    %7172 = vmatmul.mubr.f32.gmra.mxu0 %v6794
    %v7173 = vpop.f32.mrf.mxu0
    %v7174 = vadd.f32 0.0, %v7173
    %v7175 = vpop.f32.mrf.mxu0
    %7176 = vmatprep.mubr.f32.mxu0 0.0
    %7177 = vmatmul.mubr.f32.gmra.mxu0 %v6797
    %v7178 = vpop.f32.mrf.mxu0
    %v7179 = vadd.f32 0.0, %v7178
    %v7180 = vpop.f32.mrf.mxu0
    %7181 = vmatprep.mubr.f32.mxu0 0.0
    %7182 = vmatmul.mubr.f32.gmra.mxu0 %v6800
    %v7183 = vpop.f32.mrf.mxu0
    %v7184 = vadd.f32 0.0, %v7183
    %v7185 = vpop.f32.mrf.mxu0
    %7186 = vmatprep.mubr.f32.mxu0 0.0
    %7187 = vmatmul.mubr.f32.gmra.mxu0 %v6803
    %v7188 = vpop.f32.mrf.mxu0
    %v7189 = vadd.f32 0.0, %v7188
    %v7190 = vpop.f32.mrf.mxu0
    %7191 = vmatprep.mubr.f32.mxu0 0.0
    %7192 = vmatmul.mubr.f32.gmra.mxu0 %v6806
    %v7193 = vpop.f32.mrf.mxu0
    %v7194 = vadd.f32 0.0, %v7193
    %v7195 = vpop.f32.mrf.mxu0
    %7196 = vmatprep.mubr.f32.mxu0 0.0
    %7197 = vmatmul.mubr.f32.gmra.mxu0 %v6809
    %v7198 = vpop.f32.mrf.mxu0
    %v7199 = vadd.f32 0.0, %v7198
    %v7200 = vpop.f32.mrf.mxu0
    %7201 = vmatprep.mubr.f32.mxu0 0.0
    %7202 = vmatmul.mubr.f32.gmra.mxu0 %v6812
    %v7203 = vpop.f32.mrf.mxu0
    %v7204 = vadd.f32 0.0, %v7203
    %v7205 = vpop.f32.mrf.mxu0
    %7206 = vmatprep.mubr.f32.mxu0 0.0
    %7207 = vmatmul.mubr.f32.gmra.mxu0 %v6815
    %v7208 = vpop.f32.mrf.mxu0
    %v7209 = vadd.f32 0.0, %v7208
    %v7210 = vpop.f32.mrf.mxu0
    %7211 = vmatprep.mubr.f32.mxu0 0.0
    %7212 = vmatmul.mubr.f32.gmra.mxu0 %v6818
    %v7213 = vpop.f32.mrf.mxu0
    %v7214 = vadd.f32 0.0, %v7213
    %v7215 = vpop.f32.mrf.mxu0
    %7216 = vmatprep.mubr.f32.mxu0 0.0
    %7217 = vmatmul.mubr.f32.gmra.mxu0 %v6821
    %v7218 = vpop.f32.mrf.mxu0
    %v7219 = vadd.f32 0.0, %v7218
    %v7220 = vpop.f32.mrf.mxu0
    %7221 = vmatprep.mubr.f32.mxu0 0.0
    %7222 = vmatmul.mubr.f32.gmra.mxu0 %v6824
    %v7223 = vpop.f32.mrf.mxu0
    %v7224 = vadd.f32 0.0, %v7223
    %v7225 = vpop.f32.mrf.mxu0
    %7226 = vmatprep.mubr.f32.mxu0 0.0
    %7227 = vmatmul.mubr.f32.gmra.mxu0 %v6827
    %v7228 = vpop.f32.mrf.mxu0
    %v7229 = vadd.f32 0.0, %v7228
    %v7230 = vpop.f32.mrf.mxu0
    %7231 = vmatprep.mubr.f32.mxu0 0.0
    %7232 = vmatmul.mubr.f32.gmra.mxu0 %v6830
    %v7233 = vpop.f32.mrf.mxu0
    %v7234 = vadd.f32 0.0, %v7233
    %v7235 = vpop.f32.mrf.mxu0
    %7236 = vmatprep.mubr.f32.mxu0 0.0
    %7237 = vmatmul.mubr.f32.gmra.mxu0 %v6833
    %v7238 = vpop.f32.mrf.mxu0
    %v7239 = vadd.f32 0.0, %v7238
    %v7240 = vpop.f32.mrf.mxu0
    %7241 = vmatprep.mubr.f32.mxu0 0.0
    %7242 = vmatmul.mubr.f32.gmra.mxu0 %v6836
    %v7243 = vpop.f32.mrf.mxu0
    %v7244 = vadd.f32 0.0, %v7243
    %v7245 = vpop.f32.mrf.mxu0
    %7246 = vmatprep.mubr.f32.mxu0 0.0
    %7247 = vmatmul.mubr.f32.gmra.mxu0 %v6839
    %v7248 = vpop.f32.mrf.mxu0
    %v7249 = vadd.f32 0.0, %v7248
    %v7250 = vpop.f32.mrf.mxu0
    %7251 = vmatprep.mubr.f32.mxu0 0.0
    %7252 = vmatmul.mubr.f32.gmra.mxu0 %v6842
    %v7253 = vpop.f32.mrf.mxu0
    %v7254 = vadd.f32 0.0, %v7253
    %v7255 = vpop.f32.mrf.mxu0
    %7256 = vmatprep.mubr.f32.mxu0 0.0
    %7257 = vmatmul.mubr.f32.gmra.mxu0 %v6845
    %v7258 = vpop.f32.mrf.mxu0
    %v7259 = vadd.f32 0.0, %v7258
    %v7260 = vpop.f32.mrf.mxu0
    %7261 = vmatprep.mubr.f32.mxu0 0.0
    %7262 = vmatmul.mubr.f32.gmra.mxu0 %v6848
    %v7263 = vpop.f32.mrf.mxu0
    %v7264 = vadd.f32 0.0, %v7263
    %v7265 = vpop.f32.mrf.mxu0
    %7266 = vmatprep.mubr.f32.mxu0 0.0
    %7267 = vmatmul.mubr.f32.gmra.mxu0 %v6851
    %v7268 = vpop.f32.mrf.mxu0
    %v7269 = vadd.f32 0.0, %v7268
    %v7270 = vpop.f32.mrf.mxu0
    %7271 = vmatprep.mubr.f32.mxu0 0.0
    %7272 = vmatmul.mubr.f32.gmra.mxu0 %v6854
    %v7273 = vpop.f32.mrf.mxu0
    %v7274 = vadd.f32 0.0, %v7273
    %v7275 = vpop.f32.mrf.mxu0
    %7276 = vmatprep.mubr.f32.mxu0 0.0
    %7277 = vmatmul.mubr.f32.gmra.mxu0 %v6857
    %v7278 = vpop.f32.mrf.mxu0
    %v7279 = vadd.f32 0.0, %v7278
    %v7280 = vpop.f32.mrf.mxu0
    %7281 = vmatprep.mubr.f32.mxu0 0.0
    %7282 = vmatmul.mubr.f32.gmra.mxu0 %v6860
    %v7283 = vpop.f32.mrf.mxu0
    %v7284 = vadd.f32 0.0, %v7283
    %v7285 = vpop.f32.mrf.mxu0
    %7286 = vmatprep.mubr.f32.mxu0 0.0
    %7287 = vmatmul.mubr.f32.gmra.mxu0 %v6863
    %v7288 = vpop.f32.mrf.mxu0
    %v7289 = vadd.f32 0.0, %v7288
    %v7290 = vpop.f32.mrf.mxu0
    %7291 = vmatprep.mubr.f32.mxu0 0.0
    %7292 = vmatmul.mubr.f32.gmra.mxu0 %v6866
    %v7293 = vpop.f32.mrf.mxu0
    %v7294 = vadd.f32 0.0, %v7293
    %v7295 = vpop.f32.mrf.mxu0
    %7296 = vmatprep.mubr.f32.mxu0 0.0
    %7297 = vmatmul.mubr.f32.gmra.mxu0 %v6869
    %v7298 = vpop.f32.mrf.mxu0
    %v7299 = vadd.f32 0.0, %v7298
    %v7300 = vpop.f32.mrf.mxu0
    %7301 = vmatprep.mubr.f32.mxu0 0.0
    %7302 = vmatmul.mubr.f32.gmra.mxu0 %v6872
    %v7303 = vpop.f32.mrf.mxu0
    %v7304 = vadd.f32 0.0, %v7303
    %v7305 = vpop.f32.mrf.mxu0
    %7306 = vmatprep.mubr.f32.mxu0 0.0
    %7307 = vmatmul.mubr.f32.gmra.mxu0 %v6875
    %v7308 = vpop.f32.mrf.mxu0
    %v7309 = vadd.f32 0.0, %v7308
    %v7310 = vpop.f32.mrf.mxu0
    %7311 = vmatprep.mubr.f32.mxu0 0.0
    %7312 = vmatmul.mubr.f32.gmra.mxu0 %v6878
    %v7313 = vpop.f32.mrf.mxu0
    %v7314 = vadd.f32 0.0, %v7313
    %v7315 = vpop.f32.mrf.mxu0
    %7316 = vmatprep.mubr.f32.mxu0 0.0
    %7317 = vmatmul.mubr.f32.gmra.mxu0 %v6881
    %v7318 = vpop.f32.mrf.mxu0
    %v7319 = vadd.f32 0.0, %v7318
    %v7320 = vpop.f32.mrf.mxu0
    %7321 = vmatprep.mubr.f32.mxu0 0.0
    %7322 = vmatmul.mubr.f32.gmra.mxu0 %v6884
    %v7323 = vpop.f32.mrf.mxu0
    %v7324 = vadd.f32 0.0, %v7323
    %v7325 = vpop.f32.mrf.mxu0
    %7326 = vmatprep.mubr.f32.mxu0 0.0
    %7327 = vmatmul.mubr.f32.gmra.mxu0 %v6887
    %v7328 = vpop.f32.mrf.mxu0
    %v7329 = vadd.f32 0.0, %v7328
    %v7330 = vpop.f32.mrf.mxu0
    %7331 = vmatprep.mubr.f32.mxu0 0.0
    %7332 = vmatmul.mubr.f32.gmra.mxu0 %v6890
    %v7333 = vpop.f32.mrf.mxu0
    %v7334 = vadd.f32 0.0, %v7333
    %v7335 = vpop.f32.mrf.mxu0
    %7336 = vmatprep.mubr.f32.mxu0 0.0
    %7337 = vmatmul.mubr.f32.gmra.mxu0 %v6893
    %v7338 = vpop.f32.mrf.mxu0
    %v7339 = vadd.f32 0.0, %v7338
    %v7340 = vpop.f32.mrf.mxu0
    %7341 = vmatprep.mubr.f32.mxu0 0.0
    %7342 = vmatmul.mubr.f32.gmra.mxu0 %v6896
    %v7343 = vpop.f32.mrf.mxu0
    %v7344 = vadd.f32 0.0, %v7343
    %v7345 = vpop.f32.mrf.mxu0
    %7346 = vmatprep.mubr.f32.mxu0 0.0
    %7347 = vmatmul.mubr.f32.gmra.mxu0 %v6899
    %v7348 = vpop.f32.mrf.mxu0
    %v7349 = vadd.f32 0.0, %v7348
    %v7350 = vpop.f32.mrf.mxu0
    %7351 = vmatprep.mubr.f32.mxu0 0.0
    %7352 = vmatmul.mubr.f32.gmra.mxu0 %v6902
    %v7353 = vpop.f32.mrf.mxu0
    %v7354 = vadd.f32 0.0, %v7353
    %v7355 = vpop.f32.mrf.mxu0
    %7356 = vdwg.mxu0
    %v7357 = vadd.f32 %v6517, %v6974
    %v7358 = vadd.f32 %v6518, %v6979
    %v7359 = vadd.f32 %v6519, %v6984
    %v7360 = vadd.f32 %v6520, %v6989
    %v7361 = vadd.f32 %v6521, %v6994
    %v7362 = vadd.f32 %v6522, %v6999
    %v7363 = vadd.f32 %v6523, %v7004
    %v7364 = vadd.f32 %v6524, %v7009
    %v7365 = vadd.f32 %v6525, %v7014
    %v7366 = vadd.f32 %v6526, %v7019
    %v7367 = vadd.f32 %v6527, %v7024
    %v7368 = vadd.f32 %v6528, %v7029
    %v7369 = vadd.f32 %v6529, %v7034
    %v7370 = vadd.f32 %v6530, %v7039
    %v7371 = vadd.f32 %v6531, %v7044
    %v7372 = vadd.f32 %v6532, %v7049
    %v7373 = vadd.f32 %v6533, %v7054
    %v7374 = vadd.f32 %v6534, %v7059
    %v7375 = vadd.f32 %v6535, %v7064
    %v7376 = vadd.f32 %v6536, %v7069
    %v7377 = vadd.f32 %v6537, %v7074
    %v7378 = vadd.f32 %v6538, %v7079
    %v7379 = vadd.f32 %v6539, %v7084
    %v7380 = vadd.f32 %v6540, %v7089
    %v7381 = vadd.f32 %v6541, %v7094
    %v7382 = vadd.f32 %v6542, %v7099
    %v7383 = vadd.f32 %v6543, %v7104
    %v7384 = vadd.f32 %v6544, %v7109
    %v7385 = vadd.f32 %v6545, %v7114
    %v7386 = vadd.f32 %v6546, %v7119
    %v7387 = vadd.f32 %v6547, %v7124
    %v7388 = vadd.f32 %v6548, %v7129
    %v7389 = vadd.f32 %v6549, %v7134
    %v7390 = vadd.f32 %v6550, %v7139
    %v7391 = vadd.f32 %v6551, %v7144
    %v7392 = vadd.f32 %v6552, %v7149
    %v7393 = vadd.f32 %v6553, %v7154
    %v7394 = vadd.f32 %v6554, %v7159
    %v7395 = vadd.f32 %v6555, %v7164
    %v7396 = vadd.f32 %v6556, %v7169
    %v7397 = vadd.f32 %v6557, %v7174
    %v7398 = vadd.f32 %v6558, %v7179
    %v7399 = vadd.f32 %v6559, %v7184
    %v7400 = vadd.f32 %v6560, %v7189
    %v7401 = vadd.f32 %v6561, %v7194
    %v7402 = vadd.f32 %v6562, %v7199
    %v7403 = vadd.f32 %v6563, %v7204
    %v7404 = vadd.f32 %v6564, %v7209
    %v7405 = vadd.f32 %v6565, %v7214
    %v7406 = vadd.f32 %v6566, %v7219
    %v7407 = vadd.f32 %v6567, %v7224
    %v7408 = vadd.f32 %v6568, %v7229
    %v7409 = vadd.f32 %v6569, %v7234
    %v7410 = vadd.f32 %v6570, %v7239
    %v7411 = vadd.f32 %v6571, %v7244
    %v7412 = vadd.f32 %v6572, %v7249
    %v7413 = vadd.f32 %v6573, %v7254
    %v7414 = vadd.f32 %v6574, %v7259
    %v7415 = vadd.f32 %v6575, %v7264
    %v7416 = vadd.f32 %v6576, %v7269
    %v7417 = vadd.f32 %v6577, %v7274
    %v7418 = vadd.f32 %v6578, %v7279
    %v7419 = vadd.f32 %v6579, %v7284
    %v7420 = vadd.f32 %v6580, %v7289
    %v7421 = vadd.f32 %v6581, %v7294
    %v7422 = vadd.f32 %v6582, %v7299
    %v7423 = vadd.f32 %v6583, %v7304
    %v7424 = vadd.f32 %v6584, %v7309
    %v7425 = vadd.f32 %v6585, %v7314
    %v7426 = vadd.f32 %v6586, %v7319
    %v7427 = vadd.f32 %v6587, %v7324
    %v7428 = vadd.f32 %v6588, %v7329
    %v7429 = vadd.f32 %v6589, %v7334
    %v7430 = vadd.f32 %v6590, %v7339
    %v7431 = vadd.f32 %v6591, %v7344
    %v7432 = vadd.f32 %v6592, %v7349
    %v7433 = vadd.f32 %v6593, %v7354
    %v7434 = vld [vmem:[%s2] sm:$0x1]
    %v7436 = vlaneseq
    %v7437 = vshrl.u32 %v7436, 7
    %v7438 = vsub.s32 0, %v7437
    %v7439 = vrot.slane %v7434, %v7438
    %v7441 = vadd.f32 %v7357, %v7439
    %v7442 = vadd.f32 %v7358, %v7439
    %v7443 = vadd.f32 %v7359, %v7439
    %v7444 = vadd.f32 %v7360, %v7439
    %v7445 = vadd.f32 %v7361, %v7439
    %v7446 = vadd.f32 %v7362, %v7439
    %v7447 = vadd.f32 %v7363, %v7439
    %v7448 = vadd.f32 %v7364, %v7439
    %v7449 = vadd.f32 %v7365, %v7439
    %v7450 = vadd.f32 %v7366, %v7439
    %v7451 = vadd.f32 %v7367, %v7439
    %v7452 = vadd.f32 %v7368, %v7439
    %v7453 = vadd.f32 %v7369, %v7439
    %v7454 = vadd.f32 %v7370, %v7439
    %v7455 = vadd.f32 %v7371, %v7439
    %v7456 = vadd.f32 %v7372, %v7439
    %v7457 = vadd.f32 %v7373, %v7439
    %v7458 = vadd.f32 %v7374, %v7439
    %v7459 = vadd.f32 %v7375, %v7439
    %v7460 = vadd.f32 %v7376, %v7439
    %v7461 = vadd.f32 %v7377, %v7439
    %v7462 = vadd.f32 %v7378, %v7439
    %v7463 = vadd.f32 %v7379, %v7439
    %v7464 = vadd.f32 %v7380, %v7439
    %v7465 = vadd.f32 %v7381, %v7439
    %v7466 = vadd.f32 %v7382, %v7439
    %v7467 = vadd.f32 %v7383, %v7439
    %v7468 = vadd.f32 %v7384, %v7439
    %v7469 = vadd.f32 %v7385, %v7439
    %v7470 = vadd.f32 %v7386, %v7439
    %v7471 = vadd.f32 %v7387, %v7439
    %v7472 = vadd.f32 %v7388, %v7439
    %v7473 = vadd.f32 %v7389, %v7439
    %v7474 = vadd.f32 %v7390, %v7439
    %v7475 = vadd.f32 %v7391, %v7439
    %v7476 = vadd.f32 %v7392, %v7439
    %v7477 = vadd.f32 %v7393, %v7439
    %v7478 = vadd.f32 %v7394, %v7439
    %v7479 = vadd.f32 %v7395, %v7439
    %v7480 = vadd.f32 %v7396, %v7439
    %v7481 = vadd.f32 %v7397, %v7439
    %v7482 = vadd.f32 %v7398, %v7439
    %v7483 = vadd.f32 %v7399, %v7439
    %v7484 = vadd.f32 %v7400, %v7439
    %v7485 = vadd.f32 %v7401, %v7439
    %v7486 = vadd.f32 %v7402, %v7439
    %v7487 = vadd.f32 %v7403, %v7439
    %v7488 = vadd.f32 %v7404, %v7439
    %v7489 = vadd.f32 %v7405, %v7439
    %v7490 = vadd.f32 %v7406, %v7439
    %v7491 = vadd.f32 %v7407, %v7439
    %v7492 = vadd.f32 %v7408, %v7439
    %v7493 = vadd.f32 %v7409, %v7439
    %v7494 = vadd.f32 %v7410, %v7439
    %v7495 = vadd.f32 %v7411, %v7439
    %v7496 = vadd.f32 %v7412, %v7439
    %v7497 = vadd.f32 %v7413, %v7439
    %v7498 = vadd.f32 %v7414, %v7439
    %v7499 = vadd.f32 %v7415, %v7439
    %v7500 = vadd.f32 %v7416, %v7439
    %v7501 = vadd.f32 %v7417, %v7439
    %v7502 = vadd.f32 %v7418, %v7439
    %v7503 = vadd.f32 %v7419, %v7439
    %v7504 = vadd.f32 %v7420, %v7439
    %v7505 = vadd.f32 %v7421, %v7439
    %v7506 = vadd.f32 %v7422, %v7439
    %v7507 = vadd.f32 %v7423, %v7439
    %v7508 = vadd.f32 %v7424, %v7439
    %v7509 = vadd.f32 %v7425, %v7439
    %v7510 = vadd.f32 %v7426, %v7439
    %v7511 = vadd.f32 %v7427, %v7439
    %v7512 = vadd.f32 %v7428, %v7439
    %v7513 = vadd.f32 %v7429, %v7439
    %v7514 = vadd.f32 %v7430, %v7439
    %v7515 = vadd.f32 %v7431, %v7439
    %v7516 = vadd.f32 %v7432, %v7439
    %v7517 = vadd.f32 %v7433, %v7439
    %v7518 = vmax.f32 %v7441, 0.0
    %v7519 = vmax.f32 %v7442, 0.0
    %v7520 = vmax.f32 %v7443, 0.0
    %v7521 = vmax.f32 %v7444, 0.0
    %v7522 = vmax.f32 %v7445, 0.0
    %v7523 = vmax.f32 %v7446, 0.0
    %v7524 = vmax.f32 %v7447, 0.0
    %v7525 = vmax.f32 %v7448, 0.0
    %v7526 = vmax.f32 %v7449, 0.0
    %v7527 = vmax.f32 %v7450, 0.0
    %v7528 = vmax.f32 %v7451, 0.0
    %v7529 = vmax.f32 %v7452, 0.0
    %v7530 = vmax.f32 %v7453, 0.0
    %v7531 = vmax.f32 %v7454, 0.0
    %v7532 = vmax.f32 %v7455, 0.0
    %v7533 = vmax.f32 %v7456, 0.0
    %v7534 = vmax.f32 %v7457, 0.0
    %v7535 = vmax.f32 %v7458, 0.0
    %v7536 = vmax.f32 %v7459, 0.0
    %v7537 = vmax.f32 %v7460, 0.0
    %v7538 = vmax.f32 %v7461, 0.0
    %v7539 = vmax.f32 %v7462, 0.0
    %v7540 = vmax.f32 %v7463, 0.0
    %v7541 = vmax.f32 %v7464, 0.0
    %v7542 = vmax.f32 %v7465, 0.0
    %v7543 = vmax.f32 %v7466, 0.0
    %v7544 = vmax.f32 %v7467, 0.0
    %v7545 = vmax.f32 %v7468, 0.0
    %v7546 = vmax.f32 %v7469, 0.0
    %v7547 = vmax.f32 %v7470, 0.0
    %v7548 = vmax.f32 %v7471, 0.0
    %v7549 = vmax.f32 %v7472, 0.0
    %v7550 = vmax.f32 %v7473, 0.0
    %v7551 = vmax.f32 %v7474, 0.0
    %v7552 = vmax.f32 %v7475, 0.0
    %v7553 = vmax.f32 %v7476, 0.0
    %v7554 = vmax.f32 %v7477, 0.0
    %v7555 = vmax.f32 %v7478, 0.0
    %v7556 = vmax.f32 %v7479, 0.0
    %v7557 = vmax.f32 %v7480, 0.0
    %v7558 = vmax.f32 %v7481, 0.0
    %v7559 = vmax.f32 %v7482, 0.0
    %v7560 = vmax.f32 %v7483, 0.0
    %v7561 = vmax.f32 %v7484, 0.0
    %v7562 = vmax.f32 %v7485, 0.0
    %v7563 = vmax.f32 %v7486, 0.0
    %v7564 = vmax.f32 %v7487, 0.0
    %v7565 = vmax.f32 %v7488, 0.0
    %v7566 = vmax.f32 %v7489, 0.0
    %v7567 = vmax.f32 %v7490, 0.0
    %v7568 = vmax.f32 %v7491, 0.0
    %v7569 = vmax.f32 %v7492, 0.0
    %v7570 = vmax.f32 %v7493, 0.0
    %v7571 = vmax.f32 %v7494, 0.0
    %v7572 = vmax.f32 %v7495, 0.0
    %v7573 = vmax.f32 %v7496, 0.0
    %v7574 = vmax.f32 %v7497, 0.0
    %v7575 = vmax.f32 %v7498, 0.0
    %v7576 = vmax.f32 %v7499, 0.0
    %v7577 = vmax.f32 %v7500, 0.0
    %v7578 = vmax.f32 %v7501, 0.0
    %v7579 = vmax.f32 %v7502, 0.0
    %v7580 = vmax.f32 %v7503, 0.0
    %v7581 = vmax.f32 %v7504, 0.0
    %v7582 = vmax.f32 %v7505, 0.0
    %v7583 = vmax.f32 %v7506, 0.0
    %v7584 = vmax.f32 %v7507, 0.0
    %v7585 = vmax.f32 %v7508, 0.0
    %v7586 = vmax.f32 %v7509, 0.0
    %v7587 = vmax.f32 %v7510, 0.0
    %v7588 = vmax.f32 %v7511, 0.0
    %v7589 = vmax.f32 %v7512, 0.0
    %v7590 = vmax.f32 %v7513, 0.0
    %v7591 = vmax.f32 %v7514, 0.0
    %v7592 = vmax.f32 %v7515, 0.0
    %v7593 = vmax.f32 %v7516, 0.0
    %v7594 = vmax.f32 %v7517, 0.0
    %v7595 = vld [vmem:[%s3] sm:$0xff]
    %v7596 = vld [vmem:[%s3 + $0x8] sm:$0x3]
    %v7599 = vcombine.high %v7595, %v7595
    %v7601 = vunpack.c.l.s4 1983009808
    %v7602 = vunpack.c.0.s8 %v7601
    %v7603 = vlaneseq
    %v7604 = vshrl.u32 %v7603, 7
    %v7605 = vsub.s32 %v7602, %v7604
    %v7606 = vrot.slane %v7595, %v7605
    %v7608 = vunpack.c.l.s4 1983009808
    %v7609 = vunpack.c.0.s8 %v7608
    %v7610 = vlaneseq
    %v7611 = vshrl.u32 %v7610, 7
    %v7612 = vsub.s32 %v7609, %v7611
    %v7613 = vrot.slane %v7599, %v7612
    %v7614 = vcombine.high %v7606, %v7606
    %v7615 = vcombine.high %v7613, %v7613
    %v7617 = vunpack.c.l.s4 1983009808
    %v7618 = vunpack.c.0.s8 %v7617
    %v7619 = vlaneseq
    %v7620 = vshrl.u32 %v7619, 7
    %v7621 = vsub.s32 %v7618, %v7620
    %v7622 = vrot.slane %v7596, %v7621
    %vm7627 = vcmask 801792
    %v7628 = vsel %vm7627, %v7622, 0
    %vm7630 = vcmask 1041408
    %v7632 = vsel %vm7630, %v7594, 0
    %7634 = vmatprep.subr.mxu0 0.0
    %7635 = vmatpush1.msra.mxu0 %v7533
    %7636 = vmatprep.subr.mxu0 0.0
    %7637 = vmatpush1.msra.mxu0 %v7532
    %7638 = vmatprep.subr.mxu0 0.0
    %7639 = vmatpush1.msra.mxu0 %v7531
    %7640 = vmatprep.subr.mxu0 0.0
    %7641 = vmatpush1.msra.mxu0 %v7530
    %7642 = vmatprep.subr.mxu0 0.0
    %7643 = vmatpush1.msra.mxu0 %v7529
    %7644 = vmatprep.subr.mxu0 0.0
    %7645 = vmatpush1.msra.mxu0 %v7528
    %7646 = vmatprep.subr.mxu0 0.0
    %7647 = vmatpush1.msra.mxu0 %v7527
    %7648 = vmatprep.subr.mxu0 0.0
    %7649 = vmatpush1.msra.mxu0 %v7526
    %7650 = vmatprep.subr.mxu0 0.0
    %7651 = vmatpush1.msra.mxu0 %v7525
    %7652 = vmatprep.subr.mxu0 0.0
    %7653 = vmatpush1.msra.mxu0 %v7524
    %7654 = vmatprep.subr.mxu0 0.0
    %7655 = vmatpush1.msra.mxu0 %v7523
    %7656 = vmatprep.subr.mxu0 0.0
    %7657 = vmatpush1.msra.mxu0 %v7522
    %7658 = vmatprep.subr.mxu0 0.0
    %7659 = vmatpush1.msra.mxu0 %v7521
    %7660 = vmatprep.subr.mxu0 0.0
    %7661 = vmatpush1.msra.mxu0 %v7520
    %7662 = vmatprep.subr.mxu0 0.0
    %7663 = vmatpush1.msra.mxu0 %v7519
    %7664 = vmatprep.subr.mxu0 0.0
    %7665 = vmatpush1.msra.mxu0 %v7518
    %7666 = vmatprep.subr.mxu0 0.0
    %7667 = vmatpush2.msra.mxu0 %v7549
    %7668 = vmatprep.subr.mxu0 0.0
    %7669 = vmatpush2.msra.mxu0 %v7548
    %7670 = vmatprep.subr.mxu0 0.0
    %7671 = vmatpush2.msra.mxu0 %v7547
    %7672 = vmatprep.subr.mxu0 0.0
    %7673 = vmatpush2.msra.mxu0 %v7546
    %7674 = vmatprep.subr.mxu0 0.0
    %7675 = vmatpush2.msra.mxu0 %v7545
    %7676 = vmatprep.subr.mxu0 0.0
    %7677 = vmatpush2.msra.mxu0 %v7544
    %7678 = vmatprep.subr.mxu0 0.0
    %7679 = vmatpush2.msra.mxu0 %v7543
    %7680 = vmatprep.subr.mxu0 0.0
    %7681 = vmatpush2.msra.mxu0 %v7542
    %7682 = vmatprep.subr.mxu0 0.0
    %7683 = vmatpush2.msra.mxu0 %v7541
    %7684 = vmatprep.subr.mxu0 0.0
    %7685 = vmatpush2.msra.mxu0 %v7540
    %7686 = vmatprep.subr.mxu0 0.0
    %7687 = vmatpush2.msra.mxu0 %v7539
    %7688 = vmatprep.subr.mxu0 0.0
    %7689 = vmatpush2.msra.mxu0 %v7538
    %7690 = vmatprep.subr.mxu0 0.0
    %7691 = vmatpush2.msra.mxu0 %v7537
    %7692 = vmatprep.subr.mxu0 0.0
    %7693 = vmatpush2.msra.mxu0 %v7536
    %7694 = vmatprep.subr.mxu0 0.0
    %7695 = vmatpush2.msra.mxu0 %v7535
    %7696 = vmatprep.subr.mxu0 0.0
    %7697 = vmatpush2.msra.mxu0 %v7534
    %7698 = vmatprep.mubr.f32.mxu0 %v7614
    %7699 = vmatmul.mubr.f32.gmra.mxu0 %v7606
    %v7700 = vpop.f32.mrf.mxu0
    %v7701 = vadd.f32 0.0, %v7700
    %v7702 = vpop.f32.mrf.mxu0
    %7703 = vdwg.mxu0
    %7704 = vmatprep.subr.mxu0 0.0
    %7705 = vmatpush1.msra.mxu0 %v7565
    %7706 = vmatprep.subr.mxu0 0.0
    %7707 = vmatpush1.msra.mxu0 %v7564
    %7708 = vmatprep.subr.mxu0 0.0
    %7709 = vmatpush1.msra.mxu0 %v7563
    %7710 = vmatprep.subr.mxu0 0.0
    %7711 = vmatpush1.msra.mxu0 %v7562
    %7712 = vmatprep.subr.mxu0 0.0
    %7713 = vmatpush1.msra.mxu0 %v7561
    %7714 = vmatprep.subr.mxu0 0.0
    %7715 = vmatpush1.msra.mxu0 %v7560
    %7716 = vmatprep.subr.mxu0 0.0
    %7717 = vmatpush1.msra.mxu0 %v7559
    %7718 = vmatprep.subr.mxu0 0.0
    %7719 = vmatpush1.msra.mxu0 %v7558
    %7720 = vmatprep.subr.mxu0 0.0
    %7721 = vmatpush1.msra.mxu0 %v7557
    %7722 = vmatprep.subr.mxu0 0.0
    %7723 = vmatpush1.msra.mxu0 %v7556
    %7724 = vmatprep.subr.mxu0 0.0
    %7725 = vmatpush1.msra.mxu0 %v7555
    %7726 = vmatprep.subr.mxu0 0.0
    %7727 = vmatpush1.msra.mxu0 %v7554
    %7728 = vmatprep.subr.mxu0 0.0
    %7729 = vmatpush1.msra.mxu0 %v7553
    %7730 = vmatprep.subr.mxu0 0.0
    %7731 = vmatpush1.msra.mxu0 %v7552
    %7732 = vmatprep.subr.mxu0 0.0
    %7733 = vmatpush1.msra.mxu0 %v7551
    %7734 = vmatprep.subr.mxu0 0.0
    %7735 = vmatpush1.msra.mxu0 %v7550
    %7736 = vmatprep.subr.mxu0 0.0
    %7737 = vmatpush2.msra.mxu0 %v7581
    %7738 = vmatprep.subr.mxu0 0.0
    %7739 = vmatpush2.msra.mxu0 %v7580
    %7740 = vmatprep.subr.mxu0 0.0
    %7741 = vmatpush2.msra.mxu0 %v7579
    %7742 = vmatprep.subr.mxu0 0.0
    %7743 = vmatpush2.msra.mxu0 %v7578
    %7744 = vmatprep.subr.mxu0 0.0
    %7745 = vmatpush2.msra.mxu0 %v7577
    %7746 = vmatprep.subr.mxu0 0.0
    %7747 = vmatpush2.msra.mxu0 %v7576
    %7748 = vmatprep.subr.mxu0 0.0
    %7749 = vmatpush2.msra.mxu0 %v7575
    %7750 = vmatprep.subr.mxu0 0.0
    %7751 = vmatpush2.msra.mxu0 %v7574
    %7752 = vmatprep.subr.mxu0 0.0
    %7753 = vmatpush2.msra.mxu0 %v7573
    %7754 = vmatprep.subr.mxu0 0.0
    %7755 = vmatpush2.msra.mxu0 %v7572
    %7756 = vmatprep.subr.mxu0 0.0
    %7757 = vmatpush2.msra.mxu0 %v7571
    %7758 = vmatprep.subr.mxu0 0.0
    %7759 = vmatpush2.msra.mxu0 %v7570
    %7760 = vmatprep.subr.mxu0 0.0
    %7761 = vmatpush2.msra.mxu0 %v7569
    %7762 = vmatprep.subr.mxu0 0.0
    %7763 = vmatpush2.msra.mxu0 %v7568
    %7764 = vmatprep.subr.mxu0 0.0
    %7765 = vmatpush2.msra.mxu0 %v7567
    %7766 = vmatprep.subr.mxu0 0.0
    %7767 = vmatpush2.msra.mxu0 %v7566
    %7768 = vmatprep.mubr.f32.mxu0 %v7615
    %7769 = vmatmul.mubr.f32.gmra.mxu0 %v7613
    %v7770 = vpop.f32.mrf.mxu0
    %v7771 = vadd.f32 %v7701, %v7770
    %v7772 = vpop.f32.mrf.mxu0
    %7773 = vdwg.mxu0
    %7774 = vmatprep.subr.mxu0 0.0
    %7775 = vmatpush1.msra.mxu0 0.0
    %7776 = vmatprep.subr.mxu0 0.0
    %7777 = vmatpush1.msra.mxu0 0.0
    %7778 = vmatprep.subr.mxu0 0.0
    %7779 = vmatpush1.msra.mxu0 0.0
    %7780 = vmatprep.subr.mxu0 0.0
    %7781 = vmatpush1.msra.mxu0 %v7632
    %7782 = vmatprep.subr.mxu0 0.0
    %7783 = vmatpush1.msra.mxu0 %v7593
    %7784 = vmatprep.subr.mxu0 0.0
    %7785 = vmatpush1.msra.mxu0 %v7592
    %7786 = vmatprep.subr.mxu0 0.0
    %7787 = vmatpush1.msra.mxu0 %v7591
    %7788 = vmatprep.subr.mxu0 0.0
    %7789 = vmatpush1.msra.mxu0 %v7590
    %7790 = vmatprep.subr.mxu0 0.0
    %7791 = vmatpush1.msra.mxu0 %v7589
    %7792 = vmatprep.subr.mxu0 0.0
    %7793 = vmatpush1.msra.mxu0 %v7588
    %7794 = vmatprep.subr.mxu0 0.0
    %7795 = vmatpush1.msra.mxu0 %v7587
    %7796 = vmatprep.subr.mxu0 0.0
    %7797 = vmatpush1.msra.mxu0 %v7586
    %7798 = vmatprep.subr.mxu0 0.0
    %7799 = vmatpush1.msra.mxu0 %v7585
    %7800 = vmatprep.subr.mxu0 0.0
    %7801 = vmatpush1.msra.mxu0 %v7584
    %7802 = vmatprep.subr.mxu0 0.0
    %7803 = vmatpush1.msra.mxu0 %v7583
    %7804 = vmatprep.subr.mxu0 0.0
    %7805 = vmatpush1.msra.mxu0 %v7582
    %7806 = vmatprep.subr.mxu0 0.0
    %7807 = vmatpush2.msra.mxu0 0.0
    %7808 = vmatprep.subr.mxu0 0.0
    %7809 = vmatpush2.msra.mxu0 0.0
    %7810 = vmatprep.subr.mxu0 0.0
    %7811 = vmatpush2.msra.mxu0 0.0
    %7812 = vmatprep.subr.mxu0 0.0
    %7813 = vmatpush2.msra.mxu0 0.0
    %7814 = vmatprep.subr.mxu0 0.0
    %7815 = vmatpush2.msra.mxu0 0.0
    %7816 = vmatprep.subr.mxu0 0.0
    %7817 = vmatpush2.msra.mxu0 0.0
    %7818 = vmatprep.subr.mxu0 0.0
    %7819 = vmatpush2.msra.mxu0 0.0
    %7820 = vmatprep.subr.mxu0 0.0
    %7821 = vmatpush2.msra.mxu0 0.0
    %7822 = vmatprep.subr.mxu0 0.0
    %7823 = vmatpush2.msra.mxu0 0.0
    %7824 = vmatprep.subr.mxu0 0.0
    %7825 = vmatpush2.msra.mxu0 0.0
    %7826 = vmatprep.subr.mxu0 0.0
    %7827 = vmatpush2.msra.mxu0 0.0
    %7828 = vmatprep.subr.mxu0 0.0
    %7829 = vmatpush2.msra.mxu0 0.0
    %7830 = vmatprep.subr.mxu0 0.0
    %7831 = vmatpush2.msra.mxu0 0.0
    %7832 = vmatprep.subr.mxu0 0.0
    %7833 = vmatpush2.msra.mxu0 0.0
    %7834 = vmatprep.subr.mxu0 0.0
    %7835 = vmatpush2.msra.mxu0 0.0
    %7836 = vmatprep.subr.mxu0 0.0
    %7837 = vmatpush2.msra.mxu0 0.0
    %7838 = vmatprep.mubr.f32.mxu0 0.0
    %7839 = vmatmul.mubr.f32.gmra.mxu0 %v7628
    %v7840 = vpop.f32.mrf.mxu0
    %v7841 = vadd.f32 %v7771, %v7840
    %v7842 = vpop.f32.mrf.mxu0
    %7843 = vdwg.mxu0
    %vm7844 = vcmask 254976
    %7845 = vst.msk [vmem:[#allocation4] sm:$0x3] %vm7844, %v7841
    %v7846 = vld [vmem:[%s4] sm:$0xff]
    %v7847 = vld [vmem:[%s4 + $0x8] sm:$0xff]
    %v7848 = vld [vmem:[%s4 + $0x10] sm:$0xff]
    %v7849 = vld [vmem:[%s4 + $0x18] sm:$0xff]
    %v7850 = vld [vmem:[%s5] sm:$0x1]
    %v7852 = vlaneseq
    %v7853 = vshrl.u32 %v7852, 7
    %v7854 = vsub.s32 0, %v7853
    %v7855 = vrot.slane %v7850, %v7854
    %vm7857 = vcmask 261120
    %v7859 = vsel %vm7857, %v7841, 0
    %7861 = vmatprep.subr.mxu0 0.0
    %7862 = vmatpush1.msra.mxu0 0.0
    %7863 = vmatprep.subr.mxu0 0.0
    %7864 = vmatpush1.msra.mxu0 0.0
    %7865 = vmatprep.subr.mxu0 0.0
    %7866 = vmatpush1.msra.mxu0 0.0
    %7867 = vmatprep.subr.mxu0 0.0
    %7868 = vmatpush1.msra.mxu0 0.0
    %7869 = vmatprep.subr.mxu0 0.0
    %7870 = vmatpush1.msra.mxu0 0.0
    %7871 = vmatprep.subr.mxu0 0.0
    %7872 = vmatpush1.msra.mxu0 0.0
    %7873 = vmatprep.subr.mxu0 0.0
    %7874 = vmatpush1.msra.mxu0 0.0
    %7875 = vmatprep.subr.mxu0 0.0
    %7876 = vmatpush1.msra.mxu0 0.0
    %7877 = vmatprep.subr.mxu0 0.0
    %7878 = vmatpush1.msra.mxu0 0.0
    %7879 = vmatprep.subr.mxu0 0.0
    %7880 = vmatpush1.msra.mxu0 0.0
    %7881 = vmatprep.subr.mxu0 0.0
    %7882 = vmatpush1.msra.mxu0 0.0
    %7883 = vmatprep.subr.mxu0 0.0
    %7884 = vmatpush1.msra.mxu0 0.0
    %7885 = vmatprep.subr.mxu0 0.0
    %7886 = vmatpush1.msra.mxu0 %v7849
    %7887 = vmatprep.subr.mxu0 0.0
    %7888 = vmatpush1.msra.mxu0 %v7848
    %7889 = vmatprep.subr.mxu0 0.0
    %7890 = vmatpush1.msra.mxu0 %v7847
    %7891 = vmatprep.subr.mxu0 0.0
    %7892 = vmatpush1.msra.mxu0 %v7846
    %7893 = vmatprep.subr.mxu0 0.0
    %7894 = vmatpush2.msra.mxu0 0.0
    %7895 = vmatprep.subr.mxu0 0.0
    %7896 = vmatpush2.msra.mxu0 0.0
    %7897 = vmatprep.subr.mxu0 0.0
    %7898 = vmatpush2.msra.mxu0 0.0
    %7899 = vmatprep.subr.mxu0 0.0
    %7900 = vmatpush2.msra.mxu0 0.0
    %7901 = vmatprep.subr.mxu0 0.0
    %7902 = vmatpush2.msra.mxu0 0.0
    %7903 = vmatprep.subr.mxu0 0.0
    %7904 = vmatpush2.msra.mxu0 0.0
    %7905 = vmatprep.subr.mxu0 0.0
    %7906 = vmatpush2.msra.mxu0 0.0
    %7907 = vmatprep.subr.mxu0 0.0
    %7908 = vmatpush2.msra.mxu0 0.0
    %7909 = vmatprep.subr.mxu0 0.0
    %7910 = vmatpush2.msra.mxu0 0.0
    %7911 = vmatprep.subr.mxu0 0.0
    %7912 = vmatpush2.msra.mxu0 0.0
    %7913 = vmatprep.subr.mxu0 0.0
    %7914 = vmatpush2.msra.mxu0 0.0
    %7915 = vmatprep.subr.mxu0 0.0
    %7916 = vmatpush2.msra.mxu0 0.0
    %7917 = vmatprep.subr.mxu0 0.0
    %7918 = vmatpush2.msra.mxu0 0.0
    %7919 = vmatprep.subr.mxu0 0.0
    %7920 = vmatpush2.msra.mxu0 0.0
    %7921 = vmatprep.subr.mxu0 0.0
    %7922 = vmatpush2.msra.mxu0 0.0
    %7923 = vmatprep.subr.mxu0 0.0
    %7924 = vmatpush2.msra.mxu0 0.0
    %7925 = vmatprep.mubr.f32.mxu0 0.0
    %7926 = vmatmul.mubr.f32.gmra.mxu0 %v7859
    %v7927 = vpop.f32.mrf.mxu0
    %v7928 = vadd.f32 %v7855, %v7927
    %v7929 = vpop.f32.mrf.mxu0
    %7930 = vdwg.mxu0
    %vm7931 = vcmask 74752
    %7932 = vst.msk [vmem:[#allocation2] sm:$0x3] %vm7931, %v7928
    // Predicated region
    $region26: #{classifier_forward.1} parent=1 // pred_check
      _
    $region27: #{classifier_forward.1} parent=1 // pred_check_branch
      %7934 = sbr.rel (0) target = $region29
    $region28: #{classifier_forward.1} parent=1 // pred_region
      %s7936 = ssub.s32 32, 32
      %7937 = vsyncadd [#allocation3], %s7936
      %s7939 = sshll.u32 [#allocation2], 4
      %s7940 = int_to_ptr.vmem [resolvable:$true] %s7939
      %7942 = dma.vmem_to_hbm [thread:$0]  %s7940, 32, %s6, [#allocation3]
    $region29: #{classifier_forward.1} parent=1 // pred_fallthru
      _
    // Predicated region
    $region30: #{classifier_forward.1} parent=1 // pred_check
      _
    $region31: #{classifier_forward.1} parent=1 // pred_check_branch
      %7944 = sbr.rel (0) target = $region33
    $region32: #{classifier_forward.1} parent=1 // pred_region
      %s7946 = ssub.s32 32, 32
      %7947 = vsyncadd [#allocation5], %s7946
      %s7949 = sshll.u32 [#allocation4], 4
      %s7950 = int_to_ptr.vmem [resolvable:$true] %s7949
      %7952 = dma.vmem_to_hbm [thread:$0]  %s7950, 32, %s7, [#allocation5]
    $region33: #{classifier_forward.1} parent=1 // pred_fallthru
      _
    // Predicated region
    $region34: #{classifier_forward.1} parent=1 // pred_check
      _
    $region35: #{classifier_forward.1} parent=1 // pred_check_branch
      %7954 = sbr.rel (0) target = $region37
    $region36: #{classifier_forward.1} parent=1 // pred_region
      %7955 = dma.done [#allocation3], 32
    $region37: #{classifier_forward.1} parent=1 // pred_fallthru
      _
    // Predicated region
    $region38: #{classifier_forward.1} parent=1 // pred_check
      _
    $region39: #{classifier_forward.1} parent=1 // pred_check_branch
      %7957 = sbr.rel (0) target = $region41
    $region40: #{classifier_forward.1} parent=1 // pred_region
      %7958 = dma.done [#allocation5], 32
    $region41: #{classifier_forward.1} parent=1 // pred_fallthru
      _
    %7959 = vsyncpa [#allocation3], 1
    %7960 = vsyncpa [#allocation5], 1

</llo_original>
